<compile_context>
chip_gen: v7x
topology: tpu7x:2x2x1
jax: 0.10.0
libtpu: 0.0.40
codegen_flags: <defaults>
</compile_context>

<pallas_src>
import math

import jax
import jax.numpy as jnp
from jax.experimental import pallas as pl
from jax.experimental.pallas import tpu as pltpu

# ----------------------------- model hyper-params (small, synthetic) ---------
PATCH = 16          # backbone total stride (stand-in for ResNet-50's /32)
CB = 64             # backbone output channels (stand-in for 2048)
D_MODEL = 32        # transformer hidden size
N_HEADS = 4
D_HEAD = D_MODEL // N_HEADS
D_FFN = 64
N_QUERIES = 8
N_CLASSES = 4       # logits dim = N_CLASSES + 1 (no-object)

MM_DTYPE = jnp.bfloat16     # MXU input dtype; accumulation is f32

VMEM = pl.BlockSpec(memory_space=pltpu.MemorySpace.VMEM)


# ----------------------------- in-kernel helpers ------------------------------
def _mm(x, w):
    """MXU matmul: bf16 inputs, f32 accumulation."""
    return jnp.dot(x.astype(MM_DTYPE), w.astype(MM_DTYPE),
                   preferred_element_type=jnp.float32)


def _lin(x, w_ref, b_ref, act=None):
    y = _mm(x, w_ref[...]) + b_ref[...]
    if act == "relu":
        y = jnp.maximum(y, 0.0)
    return y


def _ln(x, g_ref, b_ref):
    """LayerNorm over last dim (pass x = residual-sum for fused residual+LN)."""
    mu = jnp.mean(x, axis=-1, keepdims=True)
    xc = x - mu
    var = jnp.mean(xc * xc, axis=-1, keepdims=True)
    return xc * jax.lax.rsqrt(var + 1e-5) * g_ref[...] + b_ref[...]


def _softmax_last(s):
    s = s - jnp.max(s, axis=-1, keepdims=True)
    p = jnp.exp(s)
    return p * pl.reciprocal(jnp.sum(p, axis=-1, keepdims=True), approx=True)


def _mha(q2, k2, v2, b, lq, lk, bias):
    """Multi-head attention on flattened projections.

    q2: [b*lq, D], k2/v2: [b*lk, D]; bias: additive [b, 1, lk] or None.
    Heads are processed with static lane slices (no HBM transpose round-trip).
    """
    scale = 1.0 / math.sqrt(D_HEAD)
    outs = []
    for h in range(N_HEADS):
        sl = slice(h * D_HEAD, (h + 1) * D_HEAD)
        qh = q2[:, sl].reshape(b, lq, D_HEAD)
        kh = k2[:, sl].reshape(b, lk, D_HEAD)
        vh = v2[:, sl].reshape(b, lk, D_HEAD)
        s = jnp.einsum("bqd,bkd->bqk", qh, kh,
                       preferred_element_type=jnp.float32) * scale
        if bias is not None:
            s = s + bias
        p = _softmax_last(s)
        oh = jnp.einsum("bqk,bkd->bqd", p, vh,
                        preferred_element_type=jnp.float32)
        outs.append(oh)
    return jnp.concatenate(outs, axis=-1).reshape(b * lq, N_HEADS * D_HEAD)


# ----------------------------- fused Pallas kernels ---------------------------
def _backbone_kernel(x_ref, wb_ref, bb_ref, wp_ref, bp_ref, out_ref):
    # patch-conv (as matmul) + relu + 1x1 input projection, all in VMEM.
    feat = _lin(x_ref[...], wb_ref, bb_ref, act="relu")
    out_ref[...] = _lin(feat, wp_ref, bp_ref)


def _encoder_kernel(src_ref, pos_ref, km_ref,
                    wqk_ref, bqk_ref, wv_ref, bv_ref, wo_ref, bo_ref,
                    ln1g_ref, ln1b_ref,
                    w1_ref, b1_ref, w2_ref, b2_ref,
                    ln2g_ref, ln2b_ref,
                    out_ref):
    b, s, d = src_ref.shape
    src = src_ref[...]
    pos = pos_ref[...]
    src2 = src.reshape(b * s, d)
    qin2 = (src + pos).reshape(b * s, d)

    # fused Q/K projection (shared input), separate V projection (input = src)
    qk = _lin(qin2, wqk_ref, bqk_ref)                    # [b*s, 2D]
    v2 = _lin(src2, wv_ref, bv_ref)                      # [b*s, D]

    # key-padding bias built in-kernel (1 = valid)
    bias = jnp.where(km_ref[...] > 0.0, 0.0, -1e9)[:, None, :]   # [b, 1, s]

    att = _mha(qk[:, :d], qk[:, d:], v2, b, s, s, bias)
    att = _lin(att, wo_ref, bo_ref)

    x1 = _ln(src2 + att, ln1g_ref, ln1b_ref)             # fused residual + LN
    ff = _lin(_lin(x1, w1_ref, b1_ref, act="relu"), w2_ref, b2_ref)
    x2 = _ln(x1 + ff, ln2g_ref, ln2b_ref)

    out_ref[...] = x2.reshape(b, s, d)


def _decoder_kernel(mem_ref, pos_ref, km_ref, qe_ref,
                    sa_wqk_ref, sa_bqk_ref, sa_wv_ref, sa_bv_ref,
                    sa_wo_ref, sa_bo_ref,
                    ln1g_ref, ln1b_ref,
                    ca_wq_ref, ca_bq_ref, ca_wk_ref, ca_bk_ref,
                    ca_wv_ref, ca_bv_ref, ca_wo_ref, ca_bo_ref,
                    ln2g_ref, ln2b_ref,
                    w1_ref, b1_ref, w2_ref, b2_ref,
                    ln3g_ref, ln3b_ref,
                    lnfg_ref, lnfb_ref,
                    cls_w_ref, cls_b_ref,
                    bb_w1_ref, bb_b1_ref, bb_w2_ref, bb_b2_ref,
                    bb_w3_ref, bb_b3_ref,
                    logits_ref, boxes_ref):
    b, s, d = mem_ref.shape
    q = N_QUERIES
    mem = mem_ref[...]
    pos = pos_ref[...]
    qpos2 = jnp.broadcast_to(qe_ref[...][None], (b, q, d)).reshape(b * q, d)
    tgt2 = jnp.zeros((b * q, d), jnp.float32)             # DETR: tgt starts at 0

    # ---- self-attention: q = k = tgt + query_pos, v = tgt, no mask ----
    qk = _lin(tgt2 + qpos2, sa_wqk_ref, sa_bqk_ref)
    v2 = _lin(tgt2, sa_wv_ref, sa_bv_ref)
    sa = _mha(qk[:, :d], qk[:, d:], v2, b, q, q, None)
    sa = _lin(sa, sa_wo_ref, sa_bo_ref)
    x1 = _ln(tgt2 + sa, ln1g_ref, ln1b_ref)

    # ---- cross-attention: q = x1 + query_pos, k = mem + pos, v = mem ----
    mem2 = mem.reshape(b * s, d)
    kin2 = (mem + pos).reshape(b * s, d)
    cq = _lin(x1 + qpos2, ca_wq_ref, ca_bq_ref)
    ck = _lin(kin2, ca_wk_ref, ca_bk_ref)
    cv = _lin(mem2, ca_wv_ref, ca_bv_ref)
    bias = jnp.where(km_ref[...] > 0.0, 0.0, -1e9)[:, None, :]   # [b, 1, s]
    ca = _mha(cq, ck, cv, b, q, s, bias)
    ca = _lin(ca, ca_wo_ref, ca_bo_ref)
    x2 = _ln(x1 + ca, ln2g_ref, ln2b_ref)

    # ---- FFN + final decoder norm ----
    ff = _lin(_lin(x2, w1_ref, b1_ref, act="relu"), w2_ref, b2_ref)
    x3 = _ln(x2 + ff, ln3g_ref, ln3b_ref)
    hs = _ln(x3, lnfg_ref, lnfb_ref)

    # ---- prediction heads (fused into the same kernel) ----
    logits = _lin(hs, cls_w_ref, cls_b_ref)
    bb = _lin(hs, bb_w1_ref, bb_b1_ref, act="relu")
    bb = _lin(bb, bb_w2_ref, bb_b2_ref, act="relu")
    bb = _mm(bb, bb_w3_ref[...]) + bb_b3_ref[...]
    boxes = 1.0 / (1.0 + jnp.exp(-bb))      # exact sigmoid keeps boxes in [0,1]

    logits_ref[...] = logits.reshape(b, q, N_CLASSES + 1)
    boxes_ref[...] = boxes.reshape(b, q, 4)


# ----------------------------- kernel wrappers --------------------------------
def _row(x):
    return x.reshape(1, -1)


def backbone_proj(x2, p):
    m = x2.shape[0]
    return pl.pallas_call(
        _backbone_kernel,
        out_shape=jax.ShapeDtypeStruct((m, D_MODEL), jnp.float32),
        in_specs=[VMEM] * 5,
        out_specs=VMEM,
    )(x2, p["backbone_w"], _row(p["backbone_b"]),
      p["inproj_w"], _row(p["inproj_b"]))


def encoder_layer(p, src, pos, key_mask):
    b, s, d = src.shape
    args = (src, pos, key_mask,
            p["enc_sa_wqk"], _row(p["enc_sa_bqk"]),
            p["enc_sa_wv"], _row(p["enc_sa_bv"]),
            p["enc_sa_wo"], _row(p["enc_sa_bo"]),
            _row(p["enc_ln1_g"]), _row(p["enc_ln1_b"]),
            p["enc_ffn_w1"], _row(p["enc_ffn_b1"]),
            p["enc_ffn_w2"], _row(p["enc_ffn_b2"]),
            _row(p["enc_ln2_g"]), _row(p["enc_ln2_b"]))
    return pl.pallas_call(
        _encoder_kernel,
        out_shape=jax.ShapeDtypeStruct((b, s, d), jnp.float32),
        in_specs=[VMEM] * len(args),
        out_specs=VMEM,
    )(*args)


def decoder_layer_and_heads(p, memory, pos, key_mask):
    b, s, d = memory.shape
    args = (memory, pos, key_mask, p["query_embed"],
            p["dec_sa_wqk"], _row(p["dec_sa_bqk"]),
            p["dec_sa_wv"], _row(p["dec_sa_bv"]),
            p["dec_sa_wo"], _row(p["dec_sa_bo"]),
            _row(p["dec_ln1_g"]), _row(p["dec_ln1_b"]),
            p["dec_ca_wq"], _row(p["dec_ca_bq"]),
            p["dec_ca_wk"], _row(p["dec_ca_bk"]),
            p["dec_ca_wv"], _row(p["dec_ca_bv"]),
            p["dec_ca_wo"], _row(p["dec_ca_bo"]),
            _row(p["dec_ln2_g"]), _row(p["dec_ln2_b"]),
            p["dec_ffn_w1"], _row(p["dec_ffn_b1"]),
            p["dec_ffn_w2"], _row(p["dec_ffn_b2"]),
            _row(p["dec_ln3_g"]), _row(p["dec_ln3_b"]),
            _row(p["dec_norm_g"]), _row(p["dec_norm_b"]),
            p["cls_w"], _row(p["cls_b"]),
            p["bbox_w1"], _row(p["bbox_b1"]),
            p["bbox_w2"], _row(p["bbox_b2"]),
            p["bbox_w3"], _row(p["bbox_b3"]))
    return pl.pallas_call(
        _decoder_kernel,
        out_shape=(jax.ShapeDtypeStruct((b, N_QUERIES, N_CLASSES + 1),
                                        jnp.float32),
                   jax.ShapeDtypeStruct((b, N_QUERIES, 4), jnp.float32)),
        in_specs=[VMEM] * len(args),
        out_specs=(VMEM, VMEM),
    )(*args)


# ----------------------------- positional encoding (glue, parameter-free) ----
def sine_pos_embed(mask_feat, d_model, temperature=10000.0):
    # mask_feat: [B, Hf, Wf], 1 = valid pixel
    b, hf, wf = mask_feat.shape
    eps = 1e-6
    scale = 2.0 * math.pi
    y_embed = jnp.cumsum(mask_feat, axis=1)
    x_embed = jnp.cumsum(mask_feat, axis=2)
    y_embed = y_embed / (y_embed[:, -1:, :] + eps) * scale
    x_embed = x_embed / (x_embed[:, :, -1:] + eps) * scale
    half = d_model // 2
    dim_t = jnp.arange(half, dtype=jnp.float32)
    dim_t = temperature ** (2.0 * (dim_t // 2) / half)
    pos_x = x_embed[..., None] / dim_t
    pos_y = y_embed[..., None] / dim_t
    pos_x = jnp.stack([jnp.sin(pos_x[..., 0::2]), jnp.cos(pos_x[..., 1::2])],
                      axis=-1).reshape(b, hf, wf, half)
    pos_y = jnp.stack([jnp.sin(pos_y[..., 0::2]), jnp.cos(pos_y[..., 1::2])],
                      axis=-1).reshape(b, hf, wf, half)
    pos = jnp.concatenate([pos_y, pos_x], axis=-1)  # [B, Hf, Wf, D]
    return pos.reshape(b, hf * wf, d_model)


# ----------------------------- parameter init (deterministic) ----------------
def init_params(key):
    keys = jax.random.split(key, 64)
    it = iter(keys)
    p = {}

    def w(shape):
        return 0.02 * jax.random.normal(next(it), shape, jnp.float32)

    def zeros(n):
        return jnp.zeros((n,), jnp.float32)

    def ones(n):
        return jnp.ones((n,), jnp.float32)

    # backbone (stand-in) + input projection (DETR's 1x1 conv)
    p["backbone_w"] = w((PATCH * PATCH * 3, CB)); p["backbone_b"] = zeros(CB)
    p["inproj_w"] = w((CB, D_MODEL));             p["inproj_b"] = zeros(D_MODEL)

    def attn_fused_qk(name):        # q/k share their input -> fused [D, 2D]
        p[f"{name}_wqk"] = w((D_MODEL, 2 * D_MODEL))
        p[f"{name}_bqk"] = zeros(2 * D_MODEL)
        p[f"{name}_wv"] = w((D_MODEL, D_MODEL)); p[f"{name}_bv"] = zeros(D_MODEL)
        p[f"{name}_wo"] = w((D_MODEL, D_MODEL)); p[f"{name}_bo"] = zeros(D_MODEL)

    def attn_sep(name):             # cross-attention: q and k inputs differ
        for s in ("q", "k", "v", "o"):
            p[f"{name}_w{s}"] = w((D_MODEL, D_MODEL))
            p[f"{name}_b{s}"] = zeros(D_MODEL)

    def ln(name):
        p[f"{name}_g"] = ones(D_MODEL)
        p[f"{name}_b"] = zeros(D_MODEL)

    def ffn(name):
        p[f"{name}_w1"] = w((D_MODEL, D_FFN)); p[f"{name}_b1"] = zeros(D_FFN)
        p[f"{name}_w2"] = w((D_FFN, D_MODEL)); p[f"{name}_b2"] = zeros(D_MODEL)

    # encoder layer
    attn_fused_qk("enc_sa"); ln("enc_ln1"); ffn("enc_ffn"); ln("enc_ln2")
    # decoder layer
    attn_fused_qk("dec_sa"); ln("dec_ln1")
    attn_sep("dec_ca"); ln("dec_ln2")
    ffn("dec_ffn"); ln("dec_ln3")
    ln("dec_norm")  # final decoder norm

    p["query_embed"] = w((N_QUERIES, D_MODEL))

    # heads
    p["cls_w"] = w((D_MODEL, N_CLASSES + 1)); p["cls_b"] = zeros(N_CLASSES + 1)
    p["bbox_w1"] = w((D_MODEL, D_MODEL)); p["bbox_b1"] = zeros(D_MODEL)
    p["bbox_w2"] = w((D_MODEL, D_MODEL)); p["bbox_b2"] = zeros(D_MODEL)
    p["bbox_w3"] = w((D_MODEL, 4));       p["bbox_b3"] = zeros(4)
    return p


# ----------------------------- full forward -----------------------------------
def detr_forward(params, pixel_values, pixel_mask, labels=None):
    b, c, h, w = pixel_values.shape
    hf, wf = h // PATCH, w // PATCH
    seq = hf * wf

    # --- backbone feature extraction ---
    # TODO(synk): pretrained ResNet-50 backbone replaced by a single strided
    # patch-conv feature extractor (conv expressed as a Pallas matmul).
    x = jnp.transpose(pixel_values, (0, 2, 3, 1))                     # NHWC
    x = (x.reshape(b, hf, PATCH, wf, PATCH, c)
          .transpose(0, 1, 3, 2, 4, 5)
          .reshape(b * seq, PATCH * PATCH * c))
    src = backbone_proj(x, params).reshape(b, seq, D_MODEL)           # [B,S,D]

    # --- mask + sine positional encoding ---
    mask_feat = pixel_mask[:, ::PATCH, ::PATCH].astype(jnp.float32)   # [B,Hf,Wf]
    pos = sine_pos_embed(mask_feat, D_MODEL)                          # [B,S,D]
    key_mask = mask_feat.reshape(b, seq)                              # 1 = valid

    # --- transformer encoder (1 layer, one fused kernel) ---
    memory = encoder_layer(params, src, pos, key_mask)

    # --- transformer decoder (1 layer) + final norm + heads (one fused kernel)
    logits, pred_boxes = decoder_layer_and_heads(params, memory, pos, key_mask)

    # TODO(synk): Hungarian matching + DETR set-prediction loss (CE + L1 + GIoU)
    # has no clean Pallas equivalent; labels are accepted but no loss is returned.
    del labels
    return {"logits": logits, "pred_boxes": pred_boxes}


# ----------------------------- main --------------------------------------------
if __name__ == "__main__":
    key = jax.random.PRNGKey(0)
    k_params, k_img = jax.random.split(key)

    params = init_params(k_params)

    B, H, W = 2, 64, 64
    pixel_values = jax.random.normal(k_img, (B, 3, H, W), jnp.float32)
    pixel_mask = jnp.ones((B, H, W), jnp.int32)
    pixel_mask = pixel_mask.at[1, :, 48:].set(0)   # exercise key-padding mask

    labels = {
        "class_labels": jnp.zeros((B, 3), jnp.int32),
        "boxes": jnp.full((B, 3, 4), 0.5, jnp.float32),
    }

    fwd = jax.jit(detr_forward)
    out = fwd(params, pixel_values, pixel_mask, labels)
    jax.block_until_ready(out)

    assert out["logits"].shape == (B, N_QUERIES, N_CLASSES + 1)
    assert out["pred_boxes"].shape == (B, N_QUERIES, 4)
    assert bool(jnp.all(jnp.isfinite(out["logits"])))
    assert bool(jnp.all((out["pred_boxes"] >= 0) & (out["pred_boxes"] <= 1)))
    print("KERNEL_OK")
</pallas_src>

<mosaic_0001>
module attributes {stable_mosaic.version = 11 : i64} {
  func.func @_backbone_kernel(%arg0: memref<32x768xf32, #tpu.memory_space<vmem>>, %arg1: memref<768x64xf32, #tpu.memory_space<vmem>>, %arg2: memref<1x64xf32, #tpu.memory_space<vmem>>, %arg3: memref<64x32xf32, #tpu.memory_space<vmem>>, %arg4: memref<1x32xf32, #tpu.memory_space<vmem>>, %arg5: memref<32x32xf32, #tpu.memory_space<vmem>>) attributes {dimension_semantics = [], scalar_prefetch = 0 : i64, scratch_operands = 0 : i64, tpu.core_type = #tpu.core_type<tc>} {
    %c0 = arith.constant 0 : index
    %c0_0 = arith.constant 0 : index
    %0 = vector.load %arg0[%c0, %c0_0] : memref<32x768xf32, #tpu.memory_space<vmem>>, vector<32x768xf32>
    %c0_1 = arith.constant 0 : index
    %c0_2 = arith.constant 0 : index
    %1 = vector.load %arg1[%c0_1, %c0_2] : memref<768x64xf32, #tpu.memory_space<vmem>>, vector<768x64xf32>
    %2 = arith.truncf %0 : vector<32x768xf32> to vector<32x768xbf16>
    %3 = arith.truncf %1 : vector<768x64xf32> to vector<768x64xbf16>
    %cst = arith.constant dense<0.000000e+00> : vector<32x64xf32>
    %4 = tpu.matmul %2, %3, %cst {dimension_numbers = #tpu.dot_dimension_numbers<[1], [0], [0], [1], [0, 0, 1, 1], [], []>} : vector<32x768xbf16>, vector<768x64xbf16>, vector<32x64xf32> -> vector<32x64xf32>
    %c0_3 = arith.constant 0 : index
    %c0_4 = arith.constant 0 : index
    %5 = vector.load %arg2[%c0_3, %c0_4] : memref<1x64xf32, #tpu.memory_space<vmem>>, vector<1x64xf32>
    %6 = vector.broadcast %5 : vector<1x64xf32> to vector<32x64xf32>
    %7 = arith.addf %4, %6 : vector<32x64xf32>
    %cst_5 = arith.constant 0.000000e+00 : f32
    %8 = vector.broadcast %cst_5 : f32 to vector<32x64xf32>
    %9 = arith.maximumf %7, %8 : vector<32x64xf32>
    %c0_6 = arith.constant 0 : index
    %c0_7 = arith.constant 0 : index
    %10 = vector.load %arg3[%c0_6, %c0_7] : memref<64x32xf32, #tpu.memory_space<vmem>>, vector<64x32xf32>
    %11 = arith.truncf %9 : vector<32x64xf32> to vector<32x64xbf16>
    %12 = arith.truncf %10 : vector<64x32xf32> to vector<64x32xbf16>
    %cst_8 = arith.constant dense<0.000000e+00> : vector<32x32xf32>
    %13 = tpu.matmul %11, %12, %cst_8 {dimension_numbers = #tpu.dot_dimension_numbers<[1], [0], [0], [1], [0, 0, 1, 1], [], []>} : vector<32x64xbf16>, vector<64x32xbf16>, vector<32x32xf32> -> vector<32x32xf32>
    %c0_9 = arith.constant 0 : index
    %c0_10 = arith.constant 0 : index
    %14 = vector.load %arg4[%c0_9, %c0_10] : memref<1x32xf32, #tpu.memory_space<vmem>>, vector<1x32xf32>
    %15 = vector.broadcast %14 : vector<1x32xf32> to vector<32x32xf32>
    %16 = arith.addf %13, %15 : vector<32x32xf32>
    %c0_11 = arith.constant 0 : index
    %c0_12 = arith.constant 0 : index
    %17 = vector.load %arg5[%c0_11, %c0_12] : memref<32x32xf32, #tpu.memory_space<vmem>>, vector<32x32xf32>
    tpu.vector_store %arg5[%c0_11, %c0_12], %16 {strides = array<i32>} : memref<32x32xf32, #tpu.memory_space<vmem>>, vector<32x32xf32>,
    return
  }
}

module attributes {stable_mosaic.version = 11 : i64} {
  func.func @_encoder_kernel(%arg0: memref<2x16x32xf32, #tpu.memory_space<vmem>>, %arg1: memref<2x16x32xf32, #tpu.memory_space<vmem>>, %arg2: memref<2x16xf32, #tpu.memory_space<vmem>>, %arg3: memref<32x64xf32, #tpu.memory_space<vmem>>, %arg4: memref<1x64xf32, #tpu.memory_space<vmem>>, %arg5: memref<32x32xf32, #tpu.memory_space<vmem>>, %arg6: memref<1x32xf32, #tpu.memory_space<vmem>>, %arg7: memref<32x32xf32, #tpu.memory_space<vmem>>, %arg8: memref<1x32xf32, #tpu.memory_space<vmem>>, %arg9: memref<1x32xf32, #tpu.memory_space<vmem>>, %arg10: memref<1x32xf32, #tpu.memory_space<vmem>>, %arg11: memref<32x64xf32, #tpu.memory_space<vmem>>, %arg12: memref<1x64xf32, #tpu.memory_space<vmem>>, %arg13: memref<64x32xf32, #tpu.memory_space<vmem>>, %arg14: memref<1x32xf32, #tpu.memory_space<vmem>>, %arg15: memref<1x32xf32, #tpu.memory_space<vmem>>, %arg16: memref<1x32xf32, #tpu.memory_space<vmem>>, %arg17: memref<2x16x32xf32, #tpu.memory_space<vmem>>) attributes {dimension_semantics = [], scalar_prefetch = 0 : i64, scratch_operands = 0 : i64, tpu.core_type = #tpu.core_type<tc>} {
    %c0 = arith.constant 0 : index
    %c0_0 = arith.constant 0 : index
    %c0_1 = arith.constant 0 : index
    %0 = vector.load %arg0[%c0, %c0_0, %c0_1] : memref<2x16x32xf32, #tpu.memory_space<vmem>>, vector<2x16x32xf32>
    %c0_2 = arith.constant 0 : index
    %c0_3 = arith.constant 0 : index
    %c0_4 = arith.constant 0 : index
    %1 = vector.load %arg1[%c0_2, %c0_3, %c0_4] : memref<2x16x32xf32, #tpu.memory_space<vmem>>, vector<2x16x32xf32>
    %2 = vector.shape_cast %0 : vector<2x16x32xf32> to vector<32x32xf32>
    %3 = arith.addf %0, %1 : vector<2x16x32xf32>
    %4 = vector.shape_cast %3 : vector<2x16x32xf32> to vector<32x32xf32>
    %c0_5 = arith.constant 0 : index
    %c0_6 = arith.constant 0 : index
    %5 = vector.load %arg3[%c0_5, %c0_6] : memref<32x64xf32, #tpu.memory_space<vmem>>, vector<32x64xf32>
    %6 = arith.truncf %4 : vector<32x32xf32> to vector<32x32xbf16>
    %7 = arith.truncf %5 : vector<32x64xf32> to vector<32x64xbf16>
    %cst = arith.constant dense<0.000000e+00> : vector<32x64xf32>
    %8 = tpu.matmul %6, %7, %cst {dimension_numbers = #tpu.dot_dimension_numbers<[1], [0], [0], [1], [0, 0, 1, 1], [], []>} : vector<32x32xbf16>, vector<32x64xbf16>, vector<32x64xf32> -> vector<32x64xf32>
    %c0_7 = arith.constant 0 : index
    %c0_8 = arith.constant 0 : index
    %9 = vector.load %arg4[%c0_7, %c0_8] : memref<1x64xf32, #tpu.memory_space<vmem>>, vector<1x64xf32>
    %10 = vector.broadcast %9 : vector<1x64xf32> to vector<32x64xf32>
    %11 = arith.addf %8, %10 : vector<32x64xf32>
    %c0_9 = arith.constant 0 : index
    %c0_10 = arith.constant 0 : index
    %12 = vector.load %arg5[%c0_9, %c0_10] : memref<32x32xf32, #tpu.memory_space<vmem>>, vector<32x32xf32>
    %13 = arith.truncf %2 : vector<32x32xf32> to vector<32x32xbf16>
    %14 = arith.truncf %12 : vector<32x32xf32> to vector<32x32xbf16>
    %cst_11 = arith.constant dense<0.000000e+00> : vector<32x32xf32>
    %15 = tpu.matmul %13, %14, %cst_11 {dimension_numbers = #tpu.dot_dimension_numbers<[1], [0], [0], [1], [0, 0, 1, 1], [], []>} : vector<32x32xbf16>, vector<32x32xbf16>, vector<32x32xf32> -> vector<32x32xf32>
    %c0_12 = arith.constant 0 : index
    %c0_13 = arith.constant 0 : index
    %16 = vector.load %arg6[%c0_12, %c0_13] : memref<1x32xf32, #tpu.memory_space<vmem>>, vector<1x32xf32>
    %17 = vector.broadcast %16 : vector<1x32xf32> to vector<32x32xf32>
    %18 = arith.addf %15, %17 : vector<32x32xf32>
    %c0_14 = arith.constant 0 : index
    %c0_15 = arith.constant 0 : index
    %19 = vector.load %arg2[%c0_14, %c0_15] : memref<2x16xf32, #tpu.memory_space<vmem>>, vector<2x16xf32>
    %cst_16 = arith.constant 0.000000e+00 : f32
    %20 = vector.broadcast %cst_16 : f32 to vector<2x16xf32>
    %21 = arith.cmpf ogt, %19, %20 : vector<2x16xf32>
    %cst_17 = arith.constant 0.000000e+00 : f32
    %cst_18 = arith.constant -1.000000e+09 : f32
    %22 = vector.broadcast %cst_17 : f32 to vector<2x16xf32>
    %23 = vector.broadcast %cst_18 : f32 to vector<2x16xf32>
    %24 = arith.select %21, %22, %23 : vector<2x16xi1>, vector<2x16xf32>
    %25 = vector.shape_cast %24 : vector<2x16xf32> to vector<2x1x16xf32>
    %26 = vector.extract_strided_slice %11 {offsets = [0, 0], sizes = [32, 32], strides = [1, 1]} : vector<32x64xf32> to vector<32x32xf32>
    %27 = vector.extract_strided_slice %11 {offsets = [0, 32], sizes = [32, 32], strides = [1, 1]} : vector<32x64xf32> to vector<32x32xf32>
    %28 = vector.extract_strided_slice %26 {offsets = [0, 0], sizes = [32, 8], strides = [1, 1]} : vector<32x32xf32> to vector<32x8xf32>
    %29 = vector.shape_cast %28 : vector<32x8xf32> to vector<2x16x8xf32>
    %30 = vector.extract_strided_slice %27 {offsets = [0, 0], sizes = [32, 8], strides = [1, 1]} : vector<32x32xf32> to vector<32x8xf32>
    %31 = vector.shape_cast %30 : vector<32x8xf32> to vector<2x16x8xf32>
    %32 = vector.extract_strided_slice %18 {offsets = [0, 0], sizes = [32, 8], strides = [1, 1]} : vector<32x32xf32> to vector<32x8xf32>
    %33 = vector.shape_cast %32 : vector<32x8xf32> to vector<2x16x8xf32>
    "tpu.trace_start"() <{level = 10 : i32, message = "bqd,bkd->bqk"}> : () -> ()
    %cst_19 = arith.constant dense<0.000000e+00> : vector<2x16x16xf32>
    %34 = tpu.matmul %29, %31, %cst_19 {dimension_numbers = #tpu.dot_dimension_numbers<[2], [2], [1], [1], [0, 0, 0, 1, 1, 1], [0], [0]>} : vector<2x16x8xf32>, vector<2x16x8xf32>, vector<2x16x16xf32> -> vector<2x16x16xf32>
    "tpu.trace_stop"() : () -> ()
    %cst_20 = arith.constant 0.353553385 : f32
    %35 = vector.broadcast %cst_20 : f32 to vector<2x16x16xf32>
    %36 = arith.mulf %34, %35 : vector<2x16x16xf32>
    %37 = vector.broadcast %25 : vector<2x1x16xf32> to vector<2x16x16xf32>
    %38 = arith.addf %36, %37 : vector<2x16x16xf32>
    %cst_21 = arith.constant dense<0xFF800000> : vector<2x16xf32>
    %39 = vector.multi_reduction <maximumf>, %38, %cst_21 [2] : vector<2x16x16xf32> to vector<2x16xf32>
    %40 = vector.shape_cast %39 : vector<2x16xf32> to vector<2x16x1xf32>
    %41 = vector.broadcast %40 : vector<2x16x1xf32> to vector<2x16x16xf32>
    %42 = arith.subf %38, %41 : vector<2x16x16xf32>
    %43 = math.exp %42 : vector<2x16x16xf32>
    %cst_22 = arith.constant dense<0.000000e+00> : vector<2x16xf32>
    %44 = vector.multi_reduction <add>, %43, %cst_22 [2] : vector<2x16x16xf32> to vector<2x16xf32>
    %45 = vector.shape_cast %44 : vector<2x16xf32> to vector<2x16x1xf32>
    %46 = tpu.reciprocal %45 {approx = true} : vector<2x16x1xf32> -> vector<2x16x1xf32>
    %47 = vector.broadcast %46 : vector<2x16x1xf32> to vector<2x16x16xf32>
    %48 = arith.mulf %43, %47 : vector<2x16x16xf32>
    "tpu.trace_start"() <{level = 10 : i32, message = "bqk,bkd->bqd"}> : () -> ()
    %cst_23 = arith.constant dense<0.000000e+00> : vector<2x16x8xf32>
    %49 = tpu.matmul %48, %33, %cst_23 {dimension_numbers = #tpu.dot_dimension_numbers<[2], [1], [1], [2], [0, 0, 0, 1, 1, 2], [0], [0]>} : vector<2x16x16xf32>, vector<2x16x8xf32>, vector<2x16x8xf32> -> vector<2x16x8xf32>
    "tpu.trace_stop"() : () -> ()
    %50 = vector.extract_strided_slice %26 {offsets = [0, 8], sizes = [32, 8], strides = [1, 1]} : vector<32x32xf32> to vector<32x8xf32>
    %51 = vector.shape_cast %50 : vector<32x8xf32> to vector<2x16x8xf32>
    %52 = vector.extract_strided_slice %27 {offsets = [0, 8], sizes = [32, 8], strides = [1, 1]} : vector<32x32xf32> to vector<32x8xf32>
    %53 = vector.shape_cast %52 : vector<32x8xf32> to vector<2x16x8xf32>
    %54 = vector.extract_strided_slice %18 {offsets = [0, 8], sizes = [32, 8], strides = [1, 1]} : vector<32x32xf32> to vector<32x8xf32>
    %55 = vector.shape_cast %54 : vector<32x8xf32> to vector<2x16x8xf32>
    "tpu.trace_start"() <{level = 10 : i32, message = "bqd,bkd->bqk"}> : () -> ()
    %cst_24 = arith.constant dense<0.000000e+00> : vector<2x16x16xf32>
    %56 = tpu.matmul %51, %53, %cst_24 {dimension_numbers = #tpu.dot_dimension_numbers<[2], [2], [1], [1], [0, 0, 0, 1, 1, 1], [0], [0]>} : vector<2x16x8xf32>, vector<2x16x8xf32>, vector<2x16x16xf32> -> vector<2x16x16xf32>
    "tpu.trace_stop"() : () -> ()
    %cst_25 = arith.constant 0.353553385 : f32
    %57 = vector.broadcast %cst_25 : f32 to vector<2x16x16xf32>
    %58 = arith.mulf %56, %57 : vector<2x16x16xf32>
    %59 = vector.broadcast %25 : vector<2x1x16xf32> to vector<2x16x16xf32>
    %60 = arith.addf %58, %59 : vector<2x16x16xf32>
    %cst_26 = arith.constant dense<0xFF800000> : vector<2x16xf32>
    %61 = vector.multi_reduction <maximumf>, %60, %cst_26 [2] : vector<2x16x16xf32> to vector<2x16xf32>
    %62 = vector.shape_cast %61 : vector<2x16xf32> to vector<2x16x1xf32>
    %63 = vector.broadcast %62 : vector<2x16x1xf32> to vector<2x16x16xf32>
    %64 = arith.subf %60, %63 : vector<2x16x16xf32>
    %65 = math.exp %64 : vector<2x16x16xf32>
    %cst_27 = arith.constant dense<0.000000e+00> : vector<2x16xf32>
    %66 = vector.multi_reduction <add>, %65, %cst_27 [2] : vector<2x16x16xf32> to vector<2x16xf32>
    %67 = vector.shape_cast %66 : vector<2x16xf32> to vector<2x16x1xf32>
    %68 = tpu.reciprocal %67 {approx = true} : vector<2x16x1xf32> -> vector<2x16x1xf32>
    %69 = vector.broadcast %68 : vector<2x16x1xf32> to vector<2x16x16xf32>
    %70 = arith.mulf %65, %69 : vector<2x16x16xf32>
    "tpu.trace_start"() <{level = 10 : i32, message = "bqk,bkd->bqd"}> : () -> ()
    %cst_28 = arith.constant dense<0.000000e+00> : vector<2x16x8xf32>
    %71 = tpu.matmul %70, %55, %cst_28 {dimension_numbers = #tpu.dot_dimension_numbers<[2], [1], [1], [2], [0, 0, 0, 1, 1, 2], [0], [0]>} : vector<2x16x16xf32>, vector<2x16x8xf32>, vector<2x16x8xf32> -> vector<2x16x8xf32>
    "tpu.trace_stop"() : () -> ()
    %72 = vector.extract_strided_slice %26 {offsets = [0, 16], sizes = [32, 8], strides = [1, 1]} : vector<32x32xf32> to vector<32x8xf32>
    %73 = vector.shape_cast %72 : vector<32x8xf32> to vector<2x16x8xf32>
    %74 = vector.extract_strided_slice %27 {offsets = [0, 16], sizes = [32, 8], strides = [1, 1]} : vector<32x32xf32> to vector<32x8xf32>
    %75 = vector.shape_cast %74 : vector<32x8xf32> to vector<2x16x8xf32>
    %76 = vector.extract_strided_slice %18 {offsets = [0, 16], sizes = [32, 8], strides = [1, 1]} : vector<32x32xf32> to vector<32x8xf32>
    %77 = vector.shape_cast %76 : vector<32x8xf32> to vector<2x16x8xf32>
    "tpu.trace_start"() <{level = 10 : i32, message = "bqd,bkd->bqk"}> : () -> ()
    %cst_29 = arith.constant dense<0.000000e+00> : vector<2x16x16xf32>
    %78 = tpu.matmul %73, %75, %cst_29 {dimension_numbers = #tpu.dot_dimension_numbers<[2], [2], [1], [1], [0, 0, 0, 1, 1, 1], [0], [0]>} : vector<2x16x8xf32>, vector<2x16x8xf32>, vector<2x16x16xf32> -> vector<2x16x16xf32>
    "tpu.trace_stop"() : () -> ()
    %cst_30 = arith.constant 0.353553385 : f32
    %79 = vector.broadcast %cst_30 : f32 to vector<2x16x16xf32>
    %80 = arith.mulf %78, %79 : vector<2x16x16xf32>
    %81 = vector.broadcast %25 : vector<2x1x16xf32> to vector<2x16x16xf32>
    %82 = arith.addf %80, %81 : vector<2x16x16xf32>
    %cst_31 = arith.constant dense<0xFF800000> : vector<2x16xf32>
    %83 = vector.multi_reduction <maximumf>, %82, %cst_31 [2] : vector<2x16x16xf32> to vector<2x16xf32>
    %84 = vector.shape_cast %83 : vector<2x16xf32> to vector<2x16x1xf32>
    %85 = vector.broadcast %84 : vector<2x16x1xf32> to vector<2x16x16xf32>
    %86 = arith.subf %82, %85 : vector<2x16x16xf32>
    %87 = math.exp %86 : vector<2x16x16xf32>
    %cst_32 = arith.constant dense<0.000000e+00> : vector<2x16xf32>
    %88 = vector.multi_reduction <add>, %87, %cst_32 [2] : vector<2x16x16xf32> to vector<2x16xf32>
    %89 = vector.shape_cast %88 : vector<2x16xf32> to vector<2x16x1xf32>
    %90 = tpu.reciprocal %89 {approx = true} : vector<2x16x1xf32> -> vector<2x16x1xf32>
    %91 = vector.broadcast %90 : vector<2x16x1xf32> to vector<2x16x16xf32>
    %92 = arith.mulf %87, %91 : vector<2x16x16xf32>
    "tpu.trace_start"() <{level = 10 : i32, message = "bqk,bkd->bqd"}> : () -> ()
    %cst_33 = arith.constant dense<0.000000e+00> : vector<2x16x8xf32>
    %93 = tpu.matmul %92, %77, %cst_33 {dimension_numbers = #tpu.dot_dimension_numbers<[2], [1], [1], [2], [0, 0, 0, 1, 1, 2], [0], [0]>} : vector<2x16x16xf32>, vector<2x16x8xf32>, vector<2x16x8xf32> -> vector<2x16x8xf32>
    "tpu.trace_stop"() : () -> ()
    %94 = vector.extract_strided_slice %26 {offsets = [0, 24], sizes = [32, 8], strides = [1, 1]} : vector<32x32xf32> to vector<32x8xf32>
    %95 = vector.shape_cast %94 : vector<32x8xf32> to vector<2x16x8xf32>
    %96 = vector.extract_strided_slice %27 {offsets = [0, 24], sizes = [32, 8], strides = [1, 1]} : vector<32x32xf32> to vector<32x8xf32>
    %97 = vector.shape_cast %96 : vector<32x8xf32> to vector<2x16x8xf32>
    %98 = vector.extract_strided_slice %18 {offsets = [0, 24], sizes = [32, 8], strides = [1, 1]} : vector<32x32xf32> to vector<32x8xf32>
    %99 = vector.shape_cast %98 : vector<32x8xf32> to vector<2x16x8xf32>
    "tpu.trace_start"() <{level = 10 : i32, message = "bqd,bkd->bqk"}> : () -> ()
    %cst_34 = arith.constant dense<0.000000e+00> : vector<2x16x16xf32>
    %100 = tpu.matmul %95, %97, %cst_34 {dimension_numbers = #tpu.dot_dimension_numbers<[2], [2], [1], [1], [0, 0, 0, 1, 1, 1], [0], [0]>} : vector<2x16x8xf32>, vector<2x16x8xf32>, vector<2x16x16xf32> -> vector<2x16x16xf32>
    "tpu.trace_stop"() : () -> ()
    %cst_35 = arith.constant 0.353553385 : f32
    %101 = vector.broadcast %cst_35 : f32 to vector<2x16x16xf32>
    %102 = arith.mulf %100, %101 : vector<2x16x16xf32>
    %103 = vector.broadcast %25 : vector<2x1x16xf32> to vector<2x16x16xf32>
    %104 = arith.addf %102, %103 : vector<2x16x16xf32>
    %cst_36 = arith.constant dense<0xFF800000> : vector<2x16xf32>
    %105 = vector.multi_reduction <maximumf>, %104, %cst_36 [2] : vector<2x16x16xf32> to vector<2x16xf32>
    %106 = vector.shape_cast %105 : vector<2x16xf32> to vector<2x16x1xf32>
    %107 = vector.broadcast %106 : vector<2x16x1xf32> to vector<2x16x16xf32>
    %108 = arith.subf %104, %107 : vector<2x16x16xf32>
    %109 = math.exp %108 : vector<2x16x16xf32>
    %cst_37 = arith.constant dense<0.000000e+00> : vector<2x16xf32>
    %110 = vector.multi_reduction <add>, %109, %cst_37 [2] : vector<2x16x16xf32> to vector<2x16xf32>
    %111 = vector.shape_cast %110 : vector<2x16xf32> to vector<2x16x1xf32>
    %112 = tpu.reciprocal %111 {approx = true} : vector<2x16x1xf32> -> vector<2x16x1xf32>
    %113 = vector.broadcast %112 : vector<2x16x1xf32> to vector<2x16x16xf32>
    %114 = arith.mulf %109, %113 : vector<2x16x16xf32>
    "tpu.trace_start"() <{level = 10 : i32, message = "bqk,bkd->bqd"}> : () -> ()
    %cst_38 = arith.constant dense<0.000000e+00> : vector<2x16x8xf32>
    %115 = tpu.matmul %114, %99, %cst_38 {dimension_numbers = #tpu.dot_dimension_numbers<[2], [1], [1], [2], [0, 0, 0, 1, 1, 2], [0], [0]>} : vector<2x16x16xf32>, vector<2x16x8xf32>, vector<2x16x8xf32> -> vector<2x16x8xf32>
    "tpu.trace_stop"() : () -> ()
    %116 = tpu.concatenate %49, %71, %93, %115 in 2 : vector<2x16x8xf32>, vector<2x16x8xf32>, vector<2x16x8xf32>, vector<2x16x8xf32> -> vector<2x16x32xf32>
    %117 = vector.shape_cast %116 : vector<2x16x32xf32> to vector<32x32xf32>
    %c0_39 = arith.constant 0 : index
    %c0_40 = arith.constant 0 : index
    %118 = vector.load %arg7[%c0_39, %c0_40] : memref<32x32xf32, #tpu.memory_space<vmem>>, vector<32x32xf32>
    %119 = arith.truncf %117 : vector<32x32xf32> to vector<32x32xbf16>
    %120 = arith.truncf %118 : vector<32x32xf32> to vector<32x32xbf16>
    %cst_41 = arith.constant dense<0.000000e+00> : vector<32x32xf32>
    %121 = tpu.matmul %119, %120, %cst_41 {dimension_numbers = #tpu.dot_dimension_numbers<[1], [0], [0], [1], [0, 0, 1, 1], [], []>} : vector<32x32xbf16>, vector<32x32xbf16>, vector<32x32xf32> -> vector<32x32xf32>
    %c0_42 = arith.constant 0 : index
    %c0_43 = arith.constant 0 : index
    %122 = vector.load %arg8[%c0_42, %c0_43] : memref<1x32xf32, #tpu.memory_space<vmem>>, vector<1x32xf32>
    %123 = vector.broadcast %122 : vector<1x32xf32> to vector<32x32xf32>
    %124 = arith.addf %121, %123 : vector<32x32xf32>
    %125 = arith.addf %2, %124 : vector<32x32xf32>
    %cst_44 = arith.constant dense<0.000000e+00> : vector<32xf32>
    %126 = vector.multi_reduction <add>, %125, %cst_44 [1] : vector<32x32xf32> to vector<32xf32>
    %127 = vector.shape_cast %126 : vector<32xf32> to vector<32x1xf32>
    %cst_45 = arith.constant 3.200000e+01 : f32
    %128 = vector.broadcast %cst_45 : f32 to vector<32x1xf32>
    %129 = arith.divf %127, %128 : vector<32x1xf32>
    %130 = vector.broadcast %129 : vector<32x1xf32> to vector<32x32xf32>
    %131 = arith.subf %125, %130 : vector<32x32xf32>
    %132 = arith.mulf %131, %131 : vector<32x32xf32>
    %cst_46 = arith.constant dense<0.000000e+00> : vector<32xf32>
    %133 = vector.multi_reduction <add>, %132, %cst_46 [1] : vector<32x32xf32> to vector<32xf32>
    %134 = vector.shape_cast %133 : vector<32xf32> to vector<32x1xf32>
    %cst_47 = arith.constant 3.200000e+01 : f32
    %135 = vector.broadcast %cst_47 : f32 to vector<32x1xf32>
    %136 = arith.divf %134, %135 : vector<32x1xf32>
    %cst_48 = arith.constant 9.99999974E-6 : f32
    %137 = vector.broadcast %cst_48 : f32 to vector<32x1xf32>
    %138 = arith.addf %136, %137 : vector<32x1xf32>
    %139 = math.rsqrt %138 : vector<32x1xf32>
    %140 = vector.broadcast %139 : vector<32x1xf32> to vector<32x32xf32>
    %141 = arith.mulf %131, %140 : vector<32x32xf32>
    %c0_49 = arith.constant 0 : index
    %c0_50 = arith.constant 0 : index
    %142 = vector.load %arg9[%c0_49, %c0_50] : memref<1x32xf32, #tpu.memory_space<vmem>>, vector<1x32xf32>
    %143 = vector.broadcast %142 : vector<1x32xf32> to vector<32x32xf32>
    %144 = arith.mulf %141, %143 : vector<32x32xf32>
    %c0_51 = arith.constant 0 : index
    %c0_52 = arith.constant 0 : index
    %145 = vector.load %arg10[%c0_51, %c0_52] : memref<1x32xf32, #tpu.memory_space<vmem>>, vector<1x32xf32>
    %146 = vector.broadcast %145 : vector<1x32xf32> to vector<32x32xf32>
    %147 = arith.addf %144, %146 : vector<32x32xf32>
    %c0_53 = arith.constant 0 : index
    %c0_54 = arith.constant 0 : index
    %148 = vector.load %arg11[%c0_53, %c0_54] : memref<32x64xf32, #tpu.memory_space<vmem>>, vector<32x64xf32>
    %149 = arith.truncf %147 : vector<32x32xf32> to vector<32x32xbf16>
    %150 = arith.truncf %148 : vector<32x64xf32> to vector<32x64xbf16>
    %cst_55 = arith.constant dense<0.000000e+00> : vector<32x64xf32>
    %151 = tpu.matmul %149, %150, %cst_55 {dimension_numbers = #tpu.dot_dimension_numbers<[1], [0], [0], [1], [0, 0, 1, 1], [], []>} : vector<32x32xbf16>, vector<32x64xbf16>, vector<32x64xf32> -> vector<32x64xf32>
    %c0_56 = arith.constant 0 : index
    %c0_57 = arith.constant 0 : index
    %152 = vector.load %arg12[%c0_56, %c0_57] : memref<1x64xf32, #tpu.memory_space<vmem>>, vector<1x64xf32>
    %153 = vector.broadcast %152 : vector<1x64xf32> to vector<32x64xf32>
    %154 = arith.addf %151, %153 : vector<32x64xf32>
    %cst_58 = arith.constant 0.000000e+00 : f32
    %155 = vector.broadcast %cst_58 : f32 to vector<32x64xf32>
    %156 = arith.maximumf %154, %155 : vector<32x64xf32>
    %c0_59 = arith.constant 0 : index
    %c0_60 = arith.constant 0 : index
    %157 = vector.load %arg13[%c0_59, %c0_60] : memref<64x32xf32, #tpu.memory_space<vmem>>, vector<64x32xf32>
    %158 = arith.truncf %156 : vector<32x64xf32> to vector<32x64xbf16>
    %159 = arith.truncf %157 : vector<64x32xf32> to vector<64x32xbf16>
    %cst_61 = arith.constant dense<0.000000e+00> : vector<32x32xf32>
    %160 = tpu.matmul %158, %159, %cst_61 {dimension_numbers = #tpu.dot_dimension_numbers<[1], [0], [0], [1], [0, 0, 1, 1], [], []>} : vector<32x64xbf16>, vector<64x32xbf16>, vector<32x32xf32> -> vector<32x32xf32>
    %c0_62 = arith.constant 0 : index
    %c0_63 = arith.constant 0 : index
    %161 = vector.load %arg14[%c0_62, %c0_63] : memref<1x32xf32, #tpu.memory_space<vmem>>, vector<1x32xf32>
    %162 = vector.broadcast %161 : vector<1x32xf32> to vector<32x32xf32>
    %163 = arith.addf %160, %162 : vector<32x32xf32>
    %164 = arith.addf %147, %163 : vector<32x32xf32>
    %cst_64 = arith.constant dense<0.000000e+00> : vector<32xf32>
    %165 = vector.multi_reduction <add>, %164, %cst_64 [1] : vector<32x32xf32> to vector<32xf32>
    %166 = vector.shape_cast %165 : vector<32xf32> to vector<32x1xf32>
    %cst_65 = arith.constant 3.200000e+01 : f32
    %167 = vector.broadcast %cst_65 : f32 to vector<32x1xf32>
    %168 = arith.divf %166, %167 : vector<32x1xf32>
    %169 = vector.broadcast %168 : vector<32x1xf32> to vector<32x32xf32>
    %170 = arith.subf %164, %169 : vector<32x32xf32>
    %171 = arith.mulf %170, %170 : vector<32x32xf32>
    %cst_66 = arith.constant dense<0.000000e+00> : vector<32xf32>
    %172 = vector.multi_reduction <add>, %171, %cst_66 [1] : vector<32x32xf32> to vector<32xf32>
    %173 = vector.shape_cast %172 : vector<32xf32> to vector<32x1xf32>
    %cst_67 = arith.constant 3.200000e+01 : f32
    %174 = vector.broadcast %cst_67 : f32 to vector<32x1xf32>
    %175 = arith.divf %173, %174 : vector<32x1xf32>
    %cst_68 = arith.constant 9.99999974E-6 : f32
    %176 = vector.broadcast %cst_68 : f32 to vector<32x1xf32>
    %177 = arith.addf %175, %176 : vector<32x1xf32>
    %178 = math.rsqrt %177 : vector<32x1xf32>
    %179 = vector.broadcast %178 : vector<32x1xf32> to vector<32x32xf32>
    %180 = arith.mulf %170, %179 : vector<32x32xf32>
    %c0_69 = arith.constant 0 : index
    %c0_70 = arith.constant 0 : index
    %181 = vector.load %arg15[%c0_69, %c0_70] : memref<1x32xf32, #tpu.memory_space<vmem>>, vector<1x32xf32>
    %182 = vector.broadcast %181 : vector<1x32xf32> to vector<32x32xf32>
    %183 = arith.mulf %180, %182 : vector<32x32xf32>
    %c0_71 = arith.constant 0 : index
    %c0_72 = arith.constant 0 : index
    %184 = vector.load %arg16[%c0_71, %c0_72] : memref<1x32xf32, #tpu.memory_space<vmem>>, vector<1x32xf32>
    %185 = vector.broadcast %184 : vector<1x32xf32> to vector<32x32xf32>
    %186 = arith.addf %183, %185 : vector<32x32xf32>
    %187 = vector.shape_cast %186 : vector<32x32xf32> to vector<2x16x32xf32>
    %c0_73 = arith.constant 0 : index
    %c0_74 = arith.constant 0 : index
    %c0_75 = arith.constant 0 : index
    %188 = vector.load %arg17[%c0_73, %c0_74, %c0_75] : memref<2x16x32xf32, #tpu.memory_space<vmem>>, vector<2x16x32xf32>
    tpu.vector_store %arg17[%c0_73, %c0_74, %c0_75], %187 {strides = array<i32>} : memref<2x16x32xf32, #tpu.memory_space<vmem>>, vector<2x16x32xf32>,
    return
  }
}

module attributes {stable_mosaic.version = 11 : i64} {
  func.func @_decoder_kernel(%arg0: memref<2x16x32xf32, #tpu.memory_space<vmem>>, %arg1: memref<2x16x32xf32, #tpu.memory_space<vmem>>, %arg2: memref<2x16xf32, #tpu.memory_space<vmem>>, %arg3: memref<8x32xf32, #tpu.memory_space<vmem>>, %arg4: memref<32x64xf32, #tpu.memory_space<vmem>>, %arg5: memref<1x64xf32, #tpu.memory_space<vmem>>, %arg6: memref<32x32xf32, #tpu.memory_space<vmem>>, %arg7: memref<1x32xf32, #tpu.memory_space<vmem>>, %arg8: memref<32x32xf32, #tpu.memory_space<vmem>>, %arg9: memref<1x32xf32, #tpu.memory_space<vmem>>, %arg10: memref<1x32xf32, #tpu.memory_space<vmem>>, %arg11: memref<1x32xf32, #tpu.memory_space<vmem>>, %arg12: memref<32x32xf32, #tpu.memory_space<vmem>>, %arg13: memref<1x32xf32, #tpu.memory_space<vmem>>, %arg14: memref<32x32xf32, #tpu.memory_space<vmem>>, %arg15: memref<1x32xf32, #tpu.memory_space<vmem>>, %arg16: memref<32x32xf32, #tpu.memory_space<vmem>>, %arg17: memref<1x32xf32, #tpu.memory_space<vmem>>, %arg18: memref<32x32xf32, #tpu.memory_space<vmem>>, %arg19: memref<1x32xf32, #tpu.memory_space<vmem>>, %arg20: memref<1x32xf32, #tpu.memory_space<vmem>>, %arg21: memref<1x32xf32, #tpu.memory_space<vmem>>, %arg22: memref<32x64xf32, #tpu.memory_space<vmem>>, %arg23: memref<1x64xf32, #tpu.memory_space<vmem>>, %arg24: memref<64x32xf32, #tpu.memory_space<vmem>>, %arg25: memref<1x32xf32, #tpu.memory_space<vmem>>, %arg26: memref<1x32xf32, #tpu.memory_space<vmem>>, %arg27: memref<1x32xf32, #tpu.memory_space<vmem>>, %arg28: memref<1x32xf32, #tpu.memory_space<vmem>>, %arg29: memref<1x32xf32, #tpu.memory_space<vmem>>, %arg30: memref<32x5xf32, #tpu.memory_space<vmem>>, %arg31: memref<1x5xf32, #tpu.memory_space<vmem>>, %arg32: memref<32x32xf32, #tpu.memory_space<vmem>>, %arg33: memref<1x32xf32, #tpu.memory_space<vmem>>, %arg34: memref<32x32xf32, #tpu.memory_space<vmem>>, %arg35: memref<1x32xf32, #tpu.memory_space<vmem>>, %arg36: memref<32x4xf32, #tpu.memory_space<vmem>>, %arg37: memref<1x4xf32, #tpu.memory_space<vmem>>, %arg38: memref<2x8x5xf32, #tpu.memory_space<vmem>>, %arg39: memref<2x8x4xf32, #tpu.memory_space<vmem>>) attributes {dimension_semantics = [], scalar_prefetch = 0 : i64, scratch_operands = 0 : i64, tpu.core_type = #tpu.core_type<tc>} {
    %c0 = arith.constant 0 : index
    %c0_0 = arith.constant 0 : index
    %c0_1 = arith.constant 0 : index
    %0 = vector.load %arg0[%c0, %c0_0, %c0_1] : memref<2x16x32xf32, #tpu.memory_space<vmem>>, vector<2x16x32xf32>
    %c0_2 = arith.constant 0 : index
    %c0_3 = arith.constant 0 : index
    %c0_4 = arith.constant 0 : index
    %1 = vector.load %arg1[%c0_2, %c0_3, %c0_4] : memref<2x16x32xf32, #tpu.memory_space<vmem>>, vector<2x16x32xf32>
    %c0_5 = arith.constant 0 : index
    %c0_6 = arith.constant 0 : index
    %2 = vector.load %arg3[%c0_5, %c0_6] : memref<8x32xf32, #tpu.memory_space<vmem>>, vector<8x32xf32>
    %3 = vector.shape_cast %2 : vector<8x32xf32> to vector<1x8x32xf32>
    %4 = vector.shape_cast %3 : vector<1x8x32xf32> to vector<1x8x32xf32>
    %5 = vector.broadcast %4 : vector<1x8x32xf32> to vector<2x8x32xf32>
    %6 = vector.shape_cast %5 : vector<2x8x32xf32> to vector<16x32xf32>
    %cst = arith.constant 0.000000e+00 : f32
    %7 = vector.broadcast %cst : f32 to vector<16x32xf32>
    %8 = arith.addf %7, %6 : vector<16x32xf32>
    %c0_7 = arith.constant 0 : index
    %c0_8 = arith.constant 0 : index
    %9 = vector.load %arg4[%c0_7, %c0_8] : memref<32x64xf32, #tpu.memory_space<vmem>>, vector<32x64xf32>
    %10 = arith.truncf %8 : vector<16x32xf32> to vector<16x32xbf16>
    %11 = arith.truncf %9 : vector<32x64xf32> to vector<32x64xbf16>
    %cst_9 = arith.constant dense<0.000000e+00> : vector<16x64xf32>
    %12 = tpu.matmul %10, %11, %cst_9 {dimension_numbers = #tpu.dot_dimension_numbers<[1], [0], [0], [1], [0, 0, 1, 1], [], []>} : vector<16x32xbf16>, vector<32x64xbf16>, vector<16x64xf32> -> vector<16x64xf32>
    %c0_10 = arith.constant 0 : index
    %c0_11 = arith.constant 0 : index
    %13 = vector.load %arg5[%c0_10, %c0_11] : memref<1x64xf32, #tpu.memory_space<vmem>>, vector<1x64xf32>
    %14 = vector.broadcast %13 : vector<1x64xf32> to vector<16x64xf32>
    %15 = arith.addf %12, %14 : vector<16x64xf32>
    %c0_12 = arith.constant 0 : index
    %c0_13 = arith.constant 0 : index
    %16 = vector.load %arg6[%c0_12, %c0_13] : memref<32x32xf32, #tpu.memory_space<vmem>>, vector<32x32xf32>
    %17 = arith.truncf %7 : vector<16x32xf32> to vector<16x32xbf16>
    %18 = arith.truncf %16 : vector<32x32xf32> to vector<32x32xbf16>
    %cst_14 = arith.constant dense<0.000000e+00> : vector<16x32xf32>
    %19 = tpu.matmul %17, %18, %cst_14 {dimension_numbers = #tpu.dot_dimension_numbers<[1], [0], [0], [1], [0, 0, 1, 1], [], []>} : vector<16x32xbf16>, vector<32x32xbf16>, vector<16x32xf32> -> vector<16x32xf32>
    %c0_15 = arith.constant 0 : index
    %c0_16 = arith.constant 0 : index
    %20 = vector.load %arg7[%c0_15, %c0_16] : memref<1x32xf32, #tpu.memory_space<vmem>>, vector<1x32xf32>
    %21 = vector.broadcast %20 : vector<1x32xf32> to vector<16x32xf32>
    %22 = arith.addf %19, %21 : vector<16x32xf32>
    %23 = vector.extract_strided_slice %15 {offsets = [0, 0], sizes = [16, 32], strides = [1, 1]} : vector<16x64xf32> to vector<16x32xf32>
    %24 = vector.extract_strided_slice %15 {offsets = [0, 32], sizes = [16, 32], strides = [1, 1]} : vector<16x64xf32> to vector<16x32xf32>
    %25 = vector.extract_strided_slice %23 {offsets = [0, 0], sizes = [16, 8], strides = [1, 1]} : vector<16x32xf32> to vector<16x8xf32>
    %26 = vector.shape_cast %25 : vector<16x8xf32> to vector<2x8x8xf32>
    %27 = vector.extract_strided_slice %24 {offsets = [0, 0], sizes = [16, 8], strides = [1, 1]} : vector<16x32xf32> to vector<16x8xf32>
    %28 = vector.shape_cast %27 : vector<16x8xf32> to vector<2x8x8xf32>
    %29 = vector.extract_strided_slice %22 {offsets = [0, 0], sizes = [16, 8], strides = [1, 1]} : vector<16x32xf32> to vector<16x8xf32>
    %30 = vector.shape_cast %29 : vector<16x8xf32> to vector<2x8x8xf32>
    "tpu.trace_start"() <{level = 10 : i32, message = "bqd,bkd->bqk"}> : () -> ()
    %cst_17 = arith.constant dense<0.000000e+00> : vector<2x8x8xf32>
    %31 = tpu.matmul %26, %28, %cst_17 {dimension_numbers = #tpu.dot_dimension_numbers<[2], [2], [1], [1], [0, 0, 0, 1, 1, 1], [0], [0]>} : vector<2x8x8xf32>, vector<2x8x8xf32>, vector<2x8x8xf32> -> vector<2x8x8xf32>
    "tpu.trace_stop"() : () -> ()
    %cst_18 = arith.constant 0.353553385 : f32
    %32 = vector.broadcast %cst_18 : f32 to vector<2x8x8xf32>
    %33 = arith.mulf %31, %32 : vector<2x8x8xf32>
    %cst_19 = arith.constant dense<0xFF800000> : vector<2x8xf32>
    %34 = vector.multi_reduction <maximumf>, %33, %cst_19 [2] : vector<2x8x8xf32> to vector<2x8xf32>
    %35 = vector.shape_cast %34 : vector<2x8xf32> to vector<2x8x1xf32>
    %36 = vector.broadcast %35 : vector<2x8x1xf32> to vector<2x8x8xf32>
    %37 = arith.subf %33, %36 : vector<2x8x8xf32>
    %38 = math.exp %37 : vector<2x8x8xf32>
    %cst_20 = arith.constant dense<0.000000e+00> : vector<2x8xf32>
    %39 = vector.multi_reduction <add>, %38, %cst_20 [2] : vector<2x8x8xf32> to vector<2x8xf32>
    %40 = vector.shape_cast %39 : vector<2x8xf32> to vector<2x8x1xf32>
    %41 = tpu.reciprocal %40 {approx = true} : vector<2x8x1xf32> -> vector<2x8x1xf32>
    %42 = vector.broadcast %41 : vector<2x8x1xf32> to vector<2x8x8xf32>
    %43 = arith.mulf %38, %42 : vector<2x8x8xf32>
    "tpu.trace_start"() <{level = 10 : i32, message = "bqk,bkd->bqd"}> : () -> ()
    %cst_21 = arith.constant dense<0.000000e+00> : vector<2x8x8xf32>
    %44 = tpu.matmul %43, %30, %cst_21 {dimension_numbers = #tpu.dot_dimension_numbers<[2], [1], [1], [2], [0, 0, 0, 1, 1, 2], [0], [0]>} : vector<2x8x8xf32>, vector<2x8x8xf32>, vector<2x8x8xf32> -> vector<2x8x8xf32>
    "tpu.trace_stop"() : () -> ()
    %45 = vector.extract_strided_slice %23 {offsets = [0, 8], sizes = [16, 8], strides = [1, 1]} : vector<16x32xf32> to vector<16x8xf32>
    %46 = vector.shape_cast %45 : vector<16x8xf32> to vector<2x8x8xf32>
    %47 = vector.extract_strided_slice %24 {offsets = [0, 8], sizes = [16, 8], strides = [1, 1]} : vector<16x32xf32> to vector<16x8xf32>
    %48 = vector.shape_cast %47 : vector<16x8xf32> to vector<2x8x8xf32>
    %49 = vector.extract_strided_slice %22 {offsets = [0, 8], sizes = [16, 8], strides = [1, 1]} : vector<16x32xf32> to vector<16x8xf32>
    %50 = vector.shape_cast %49 : vector<16x8xf32> to vector<2x8x8xf32>
    "tpu.trace_start"() <{level = 10 : i32, message = "bqd,bkd->bqk"}> : () -> ()
    %cst_22 = arith.constant dense<0.000000e+00> : vector<2x8x8xf32>
    %51 = tpu.matmul %46, %48, %cst_22 {dimension_numbers = #tpu.dot_dimension_numbers<[2], [2], [1], [1], [0, 0, 0, 1, 1, 1], [0], [0]>} : vector<2x8x8xf32>, vector<2x8x8xf32>, vector<2x8x8xf32> -> vector<2x8x8xf32>
    "tpu.trace_stop"() : () -> ()
    %cst_23 = arith.constant 0.353553385 : f32
    %52 = vector.broadcast %cst_23 : f32 to vector<2x8x8xf32>
    %53 = arith.mulf %51, %52 : vector<2x8x8xf32>
    %cst_24 = arith.constant dense<0xFF800000> : vector<2x8xf32>
    %54 = vector.multi_reduction <maximumf>, %53, %cst_24 [2] : vector<2x8x8xf32> to vector<2x8xf32>
    %55 = vector.shape_cast %54 : vector<2x8xf32> to vector<2x8x1xf32>
    %56 = vector.broadcast %55 : vector<2x8x1xf32> to vector<2x8x8xf32>
    %57 = arith.subf %53, %56 : vector<2x8x8xf32>
    %58 = math.exp %57 : vector<2x8x8xf32>
    %cst_25 = arith.constant dense<0.000000e+00> : vector<2x8xf32>
    %59 = vector.multi_reduction <add>, %58, %cst_25 [2] : vector<2x8x8xf32> to vector<2x8xf32>
    %60 = vector.shape_cast %59 : vector<2x8xf32> to vector<2x8x1xf32>
    %61 = tpu.reciprocal %60 {approx = true} : vector<2x8x1xf32> -> vector<2x8x1xf32>
    %62 = vector.broadcast %61 : vector<2x8x1xf32> to vector<2x8x8xf32>
    %63 = arith.mulf %58, %62 : vector<2x8x8xf32>
    "tpu.trace_start"() <{level = 10 : i32, message = "bqk,bkd->bqd"}> : () -> ()
    %cst_26 = arith.constant dense<0.000000e+00> : vector<2x8x8xf32>
    %64 = tpu.matmul %63, %50, %cst_26 {dimension_numbers = #tpu.dot_dimension_numbers<[2], [1], [1], [2], [0, 0, 0, 1, 1, 2], [0], [0]>} : vector<2x8x8xf32>, vector<2x8x8xf32>, vector<2x8x8xf32> -> vector<2x8x8xf32>
    "tpu.trace_stop"() : () -> ()
    %65 = vector.extract_strided_slice %23 {offsets = [0, 16], sizes = [16, 8], strides = [1, 1]} : vector<16x32xf32> to vector<16x8xf32>
    %66 = vector.shape_cast %65 : vector<16x8xf32> to vector<2x8x8xf32>
    %67 = vector.extract_strided_slice %24 {offsets = [0, 16], sizes = [16, 8], strides = [1, 1]} : vector<16x32xf32> to vector<16x8xf32>
    %68 = vector.shape_cast %67 : vector<16x8xf32> to vector<2x8x8xf32>
    %69 = vector.extract_strided_slice %22 {offsets = [0, 16], sizes = [16, 8], strides = [1, 1]} : vector<16x32xf32> to vector<16x8xf32>
    %70 = vector.shape_cast %69 : vector<16x8xf32> to vector<2x8x8xf32>
    "tpu.trace_start"() <{level = 10 : i32, message = "bqd,bkd->bqk"}> : () -> ()
    %cst_27 = arith.constant dense<0.000000e+00> : vector<2x8x8xf32>
    %71 = tpu.matmul %66, %68, %cst_27 {dimension_numbers = #tpu.dot_dimension_numbers<[2], [2], [1], [1], [0, 0, 0, 1, 1, 1], [0], [0]>} : vector<2x8x8xf32>, vector<2x8x8xf32>, vector<2x8x8xf32> -> vector<2x8x8xf32>
    "tpu.trace_stop"() : () -> ()
    %cst_28 = arith.constant 0.353553385 : f32
    %72 = vector.broadcast %cst_28 : f32 to vector<2x8x8xf32>
    %73 = arith.mulf %71, %72 : vector<2x8x8xf32>
    %cst_29 = arith.constant dense<0xFF800000> : vector<2x8xf32>
    %74 = vector.multi_reduction <maximumf>, %73, %cst_29 [2] : vector<2x8x8xf32> to vector<2x8xf32>
    %75 = vector.shape_cast %74 : vector<2x8xf32> to vector<2x8x1xf32>
    %76 = vector.broadcast %75 : vector<2x8x1xf32> to vector<2x8x8xf32>
    %77 = arith.subf %73, %76 : vector<2x8x8xf32>
    %78 = math.exp %77 : vector<2x8x8xf32>
    %cst_30 = arith.constant dense<0.000000e+00> : vector<2x8xf32>
    %79 = vector.multi_reduction <add>, %78, %cst_30 [2] : vector<2x8x8xf32> to vector<2x8xf32>
    %80 = vector.shape_cast %79 : vector<2x8xf32> to vector<2x8x1xf32>
    %81 = tpu.reciprocal %80 {approx = true} : vector<2x8x1xf32> -> vector<2x8x1xf32>
    %82 = vector.broadcast %81 : vector<2x8x1xf32> to vector<2x8x8xf32>
    %83 = arith.mulf %78, %82 : vector<2x8x8xf32>
    "tpu.trace_start"() <{level = 10 : i32, message = "bqk,bkd->bqd"}> : () -> ()
    %cst_31 = arith.constant dense<0.000000e+00> : vector<2x8x8xf32>
    %84 = tpu.matmul %83, %70, %cst_31 {dimension_numbers = #tpu.dot_dimension_numbers<[2], [1], [1], [2], [0, 0, 0, 1, 1, 2], [0], [0]>} : vector<2x8x8xf32>, vector<2x8x8xf32>, vector<2x8x8xf32> -> vector<2x8x8xf32>
    "tpu.trace_stop"() : () -> ()
    %85 = vector.extract_strided_slice %23 {offsets = [0, 24], sizes = [16, 8], strides = [1, 1]} : vector<16x32xf32> to vector<16x8xf32>
    %86 = vector.shape_cast %85 : vector<16x8xf32> to vector<2x8x8xf32>
    %87 = vector.extract_strided_slice %24 {offsets = [0, 24], sizes = [16, 8], strides = [1, 1]} : vector<16x32xf32> to vector<16x8xf32>
    %88 = vector.shape_cast %87 : vector<16x8xf32> to vector<2x8x8xf32>
    %89 = vector.extract_strided_slice %22 {offsets = [0, 24], sizes = [16, 8], strides = [1, 1]} : vector<16x32xf32> to vector<16x8xf32>
    %90 = vector.shape_cast %89 : vector<16x8xf32> to vector<2x8x8xf32>
    "tpu.trace_start"() <{level = 10 : i32, message = "bqd,bkd->bqk"}> : () -> ()
    %cst_32 = arith.constant dense<0.000000e+00> : vector<2x8x8xf32>
    %91 = tpu.matmul %86, %88, %cst_32 {dimension_numbers = #tpu.dot_dimension_numbers<[2], [2], [1], [1], [0, 0, 0, 1, 1, 1], [0], [0]>} : vector<2x8x8xf32>, vector<2x8x8xf32>, vector<2x8x8xf32> -> vector<2x8x8xf32>
    "tpu.trace_stop"() : () -> ()
    %cst_33 = arith.constant 0.353553385 : f32
    %92 = vector.broadcast %cst_33 : f32 to vector<2x8x8xf32>
    %93 = arith.mulf %91, %92 : vector<2x8x8xf32>
    %cst_34 = arith.constant dense<0xFF800000> : vector<2x8xf32>
    %94 = vector.multi_reduction <maximumf>, %93, %cst_34 [2] : vector<2x8x8xf32> to vector<2x8xf32>
    %95 = vector.shape_cast %94 : vector<2x8xf32> to vector<2x8x1xf32>
    %96 = vector.broadcast %95 : vector<2x8x1xf32> to vector<2x8x8xf32>
    %97 = arith.subf %93, %96 : vector<2x8x8xf32>
    %98 = math.exp %97 : vector<2x8x8xf32>
    %cst_35 = arith.constant dense<0.000000e+00> : vector<2x8xf32>
    %99 = vector.multi_reduction <add>, %98, %cst_35 [2] : vector<2x8x8xf32> to vector<2x8xf32>
    %100 = vector.shape_cast %99 : vector<2x8xf32> to vector<2x8x1xf32>
    %101 = tpu.reciprocal %100 {approx = true} : vector<2x8x1xf32> -> vector<2x8x1xf32>
    %102 = vector.broadcast %101 : vector<2x8x1xf32> to vector<2x8x8xf32>
    %103 = arith.mulf %98, %102 : vector<2x8x8xf32>
    "tpu.trace_start"() <{level = 10 : i32, message = "bqk,bkd->bqd"}> : () -> ()
    %cst_36 = arith.constant dense<0.000000e+00> : vector<2x8x8xf32>
    %104 = tpu.matmul %103, %90, %cst_36 {dimension_numbers = #tpu.dot_dimension_numbers<[2], [1], [1], [2], [0, 0, 0, 1, 1, 2], [0], [0]>} : vector<2x8x8xf32>, vector<2x8x8xf32>, vector<2x8x8xf32> -> vector<2x8x8xf32>
    "tpu.trace_stop"() : () -> ()
    %105 = tpu.concatenate %44, %64, %84, %104 in 2 : vector<2x8x8xf32>, vector<2x8x8xf32>, vector<2x8x8xf32>, vector<2x8x8xf32> -> vector<2x8x32xf32>
    %106 = vector.shape_cast %105 : vector<2x8x32xf32> to vector<16x32xf32>
    %c0_37 = arith.constant 0 : index
    %c0_38 = arith.constant 0 : index
    %107 = vector.load %arg8[%c0_37, %c0_38] : memref<32x32xf32, #tpu.memory_space<vmem>>, vector<32x32xf32>
    %108 = arith.truncf %106 : vector<16x32xf32> to vector<16x32xbf16>
    %109 = arith.truncf %107 : vector<32x32xf32> to vector<32x32xbf16>
    %cst_39 = arith.constant dense<0.000000e+00> : vector<16x32xf32>
    %110 = tpu.matmul %108, %109, %cst_39 {dimension_numbers = #tpu.dot_dimension_numbers<[1], [0], [0], [1], [0, 0, 1, 1], [], []>} : vector<16x32xbf16>, vector<32x32xbf16>, vector<16x32xf32> -> vector<16x32xf32>
    %c0_40 = arith.constant 0 : index
    %c0_41 = arith.constant 0 : index
    %111 = vector.load %arg9[%c0_40, %c0_41] : memref<1x32xf32, #tpu.memory_space<vmem>>, vector<1x32xf32>
    %112 = vector.broadcast %111 : vector<1x32xf32> to vector<16x32xf32>
    %113 = arith.addf %110, %112 : vector<16x32xf32>
    %114 = arith.addf %7, %113 : vector<16x32xf32>
    %cst_42 = arith.constant dense<0.000000e+00> : vector<16xf32>
    %115 = vector.multi_reduction <add>, %114, %cst_42 [1] : vector<16x32xf32> to vector<16xf32>
    %116 = vector.shape_cast %115 : vector<16xf32> to vector<16x1xf32>
    %cst_43 = arith.constant 3.200000e+01 : f32
    %117 = vector.broadcast %cst_43 : f32 to vector<16x1xf32>
    %118 = arith.divf %116, %117 : vector<16x1xf32>
    %119 = vector.broadcast %118 : vector<16x1xf32> to vector<16x32xf32>
    %120 = arith.subf %114, %119 : vector<16x32xf32>
    %121 = arith.mulf %120, %120 : vector<16x32xf32>
    %cst_44 = arith.constant dense<0.000000e+00> : vector<16xf32>
    %122 = vector.multi_reduction <add>, %121, %cst_44 [1] : vector<16x32xf32> to vector<16xf32>
    %123 = vector.shape_cast %122 : vector<16xf32> to vector<16x1xf32>
    %cst_45 = arith.constant 3.200000e+01 : f32
    %124 = vector.broadcast %cst_45 : f32 to vector<16x1xf32>
    %125 = arith.divf %123, %124 : vector<16x1xf32>
    %cst_46 = arith.constant 9.99999974E-6 : f32
    %126 = vector.broadcast %cst_46 : f32 to vector<16x1xf32>
    %127 = arith.addf %125, %126 : vector<16x1xf32>
    %128 = math.rsqrt %127 : vector<16x1xf32>
    %129 = vector.broadcast %128 : vector<16x1xf32> to vector<16x32xf32>
    %130 = arith.mulf %120, %129 : vector<16x32xf32>
    %c0_47 = arith.constant 0 : index
    %c0_48 = arith.constant 0 : index
    %131 = vector.load %arg10[%c0_47, %c0_48] : memref<1x32xf32, #tpu.memory_space<vmem>>, vector<1x32xf32>
    %132 = vector.broadcast %131 : vector<1x32xf32> to vector<16x32xf32>
    %133 = arith.mulf %130, %132 : vector<16x32xf32>
    %c0_49 = arith.constant 0 : index
    %c0_50 = arith.constant 0 : index
    %134 = vector.load %arg11[%c0_49, %c0_50] : memref<1x32xf32, #tpu.memory_space<vmem>>, vector<1x32xf32>
    %135 = vector.broadcast %134 : vector<1x32xf32> to vector<16x32xf32>
    %136 = arith.addf %133, %135 : vector<16x32xf32>
    %137 = vector.shape_cast %0 : vector<2x16x32xf32> to vector<32x32xf32>
    %138 = arith.addf %0, %1 : vector<2x16x32xf32>
    %139 = vector.shape_cast %138 : vector<2x16x32xf32> to vector<32x32xf32>
    %140 = arith.addf %136, %6 : vector<16x32xf32>
    %c0_51 = arith.constant 0 : index
    %c0_52 = arith.constant 0 : index
    %141 = vector.load %arg12[%c0_51, %c0_52] : memref<32x32xf32, #tpu.memory_space<vmem>>, vector<32x32xf32>
    %142 = arith.truncf %140 : vector<16x32xf32> to vector<16x32xbf16>
    %143 = arith.truncf %141 : vector<32x32xf32> to vector<32x32xbf16>
    %cst_53 = arith.constant dense<0.000000e+00> : vector<16x32xf32>
    %144 = tpu.matmul %142, %143, %cst_53 {dimension_numbers = #tpu.dot_dimension_numbers<[1], [0], [0], [1], [0, 0, 1, 1], [], []>} : vector<16x32xbf16>, vector<32x32xbf16>, vector<16x32xf32> -> vector<16x32xf32>
    %c0_54 = arith.constant 0 : index
    %c0_55 = arith.constant 0 : index
    %145 = vector.load %arg13[%c0_54, %c0_55] : memref<1x32xf32, #tpu.memory_space<vmem>>, vector<1x32xf32>
    %146 = vector.broadcast %145 : vector<1x32xf32> to vector<16x32xf32>
    %147 = arith.addf %144, %146 : vector<16x32xf32>
    %c0_56 = arith.constant 0 : index
    %c0_57 = arith.constant 0 : index
    %148 = vector.load %arg14[%c0_56, %c0_57] : memref<32x32xf32, #tpu.memory_space<vmem>>, vector<32x32xf32>
    %149 = arith.truncf %139 : vector<32x32xf32> to vector<32x32xbf16>
    %150 = arith.truncf %148 : vector<32x32xf32> to vector<32x32xbf16>
    %cst_58 = arith.constant dense<0.000000e+00> : vector<32x32xf32>
    %151 = tpu.matmul %149, %150, %cst_58 {dimension_numbers = #tpu.dot_dimension_numbers<[1], [0], [0], [1], [0, 0, 1, 1], [], []>} : vector<32x32xbf16>, vector<32x32xbf16>, vector<32x32xf32> -> vector<32x32xf32>
    %c0_59 = arith.constant 0 : index
    %c0_60 = arith.constant 0 : index
    %152 = vector.load %arg15[%c0_59, %c0_60] : memref<1x32xf32, #tpu.memory_space<vmem>>, vector<1x32xf32>
    %153 = vector.broadcast %152 : vector<1x32xf32> to vector<32x32xf32>
    %154 = arith.addf %151, %153 : vector<32x32xf32>
    %c0_61 = arith.constant 0 : index
    %c0_62 = arith.constant 0 : index
    %155 = vector.load %arg16[%c0_61, %c0_62] : memref<32x32xf32, #tpu.memory_space<vmem>>, vector<32x32xf32>
    %156 = arith.truncf %137 : vector<32x32xf32> to vector<32x32xbf16>
    %157 = arith.truncf %155 : vector<32x32xf32> to vector<32x32xbf16>
    %cst_63 = arith.constant dense<0.000000e+00> : vector<32x32xf32>
    %158 = tpu.matmul %156, %157, %cst_63 {dimension_numbers = #tpu.dot_dimension_numbers<[1], [0], [0], [1], [0, 0, 1, 1], [], []>} : vector<32x32xbf16>, vector<32x32xbf16>, vector<32x32xf32> -> vector<32x32xf32>
    %c0_64 = arith.constant 0 : index
    %c0_65 = arith.constant 0 : index
    %159 = vector.load %arg17[%c0_64, %c0_65] : memref<1x32xf32, #tpu.memory_space<vmem>>, vector<1x32xf32>
    %160 = vector.broadcast %159 : vector<1x32xf32> to vector<32x32xf32>
    %161 = arith.addf %158, %160 : vector<32x32xf32>
    %c0_66 = arith.constant 0 : index
    %c0_67 = arith.constant 0 : index
    %162 = vector.load %arg2[%c0_66, %c0_67] : memref<2x16xf32, #tpu.memory_space<vmem>>, vector<2x16xf32>
    %cst_68 = arith.constant 0.000000e+00 : f32
    %163 = vector.broadcast %cst_68 : f32 to vector<2x16xf32>
    %164 = arith.cmpf ogt, %162, %163 : vector<2x16xf32>
    %cst_69 = arith.constant 0.000000e+00 : f32
    %cst_70 = arith.constant -1.000000e+09 : f32
    %165 = vector.broadcast %cst_69 : f32 to vector<2x16xf32>
    %166 = vector.broadcast %cst_70 : f32 to vector<2x16xf32>
    %167 = arith.select %164, %165, %166 : vector<2x16xi1>, vector<2x16xf32>
    %168 = vector.shape_cast %167 : vector<2x16xf32> to vector<2x1x16xf32>
    %169 = vector.extract_strided_slice %147 {offsets = [0, 0], sizes = [16, 8], strides = [1, 1]} : vector<16x32xf32> to vector<16x8xf32>
    %170 = vector.shape_cast %169 : vector<16x8xf32> to vector<2x8x8xf32>
    %171 = vector.extract_strided_slice %154 {offsets = [0, 0], sizes = [32, 8], strides = [1, 1]} : vector<32x32xf32> to vector<32x8xf32>
    %172 = vector.shape_cast %171 : vector<32x8xf32> to vector<2x16x8xf32>
    %173 = vector.extract_strided_slice %161 {offsets = [0, 0], sizes = [32, 8], strides = [1, 1]} : vector<32x32xf32> to vector<32x8xf32>
    %174 = vector.shape_cast %173 : vector<32x8xf32> to vector<2x16x8xf32>
    "tpu.trace_start"() <{level = 10 : i32, message = "bqd,bkd->bqk"}> : () -> ()
    %cst_71 = arith.constant dense<0.000000e+00> : vector<2x8x16xf32>
    %175 = tpu.matmul %170, %172, %cst_71 {dimension_numbers = #tpu.dot_dimension_numbers<[2], [2], [1], [1], [0, 0, 0, 1, 1, 1], [0], [0]>} : vector<2x8x8xf32>, vector<2x16x8xf32>, vector<2x8x16xf32> -> vector<2x8x16xf32>
    "tpu.trace_stop"() : () -> ()
    %cst_72 = arith.constant 0.353553385 : f32
    %176 = vector.broadcast %cst_72 : f32 to vector<2x8x16xf32>
    %177 = arith.mulf %175, %176 : vector<2x8x16xf32>
    %178 = vector.broadcast %168 : vector<2x1x16xf32> to vector<2x8x16xf32>
    %179 = arith.addf %177, %178 : vector<2x8x16xf32>
    %cst_73 = arith.constant dense<0xFF800000> : vector<2x8xf32>
    %180 = vector.multi_reduction <maximumf>, %179, %cst_73 [2] : vector<2x8x16xf32> to vector<2x8xf32>
    %181 = vector.shape_cast %180 : vector<2x8xf32> to vector<2x8x1xf32>
    %182 = vector.broadcast %181 : vector<2x8x1xf32> to vector<2x8x16xf32>
    %183 = arith.subf %179, %182 : vector<2x8x16xf32>
    %184 = math.exp %183 : vector<2x8x16xf32>
    %cst_74 = arith.constant dense<0.000000e+00> : vector<2x8xf32>
    %185 = vector.multi_reduction <add>, %184, %cst_74 [2] : vector<2x8x16xf32> to vector<2x8xf32>
    %186 = vector.shape_cast %185 : vector<2x8xf32> to vector<2x8x1xf32>
    %187 = tpu.reciprocal %186 {approx = true} : vector<2x8x1xf32> -> vector<2x8x1xf32>
    %188 = vector.broadcast %187 : vector<2x8x1xf32> to vector<2x8x16xf32>
    %189 = arith.mulf %184, %188 : vector<2x8x16xf32>
    "tpu.trace_start"() <{level = 10 : i32, message = "bqk,bkd->bqd"}> : () -> ()
    %cst_75 = arith.constant dense<0.000000e+00> : vector<2x8x8xf32>
    %190 = tpu.matmul %189, %174, %cst_75 {dimension_numbers = #tpu.dot_dimension_numbers<[2], [1], [1], [2], [0, 0, 0, 1, 1, 2], [0], [0]>} : vector<2x8x16xf32>, vector<2x16x8xf32>, vector<2x8x8xf32> -> vector<2x8x8xf32>
    "tpu.trace_stop"() : () -> ()
    %191 = vector.extract_strided_slice %147 {offsets = [0, 8], sizes = [16, 8], strides = [1, 1]} : vector<16x32xf32> to vector<16x8xf32>
    %192 = vector.shape_cast %191 : vector<16x8xf32> to vector<2x8x8xf32>
    %193 = vector.extract_strided_slice %154 {offsets = [0, 8], sizes = [32, 8], strides = [1, 1]} : vector<32x32xf32> to vector<32x8xf32>
    %194 = vector.shape_cast %193 : vector<32x8xf32> to vector<2x16x8xf32>
    %195 = vector.extract_strided_slice %161 {offsets = [0, 8], sizes = [32, 8], strides = [1, 1]} : vector<32x32xf32> to vector<32x8xf32>
    %196 = vector.shape_cast %195 : vector<32x8xf32> to vector<2x16x8xf32>
    "tpu.trace_start"() <{level = 10 : i32, message = "bqd,bkd->bqk"}> : () -> ()
    %cst_76 = arith.constant dense<0.000000e+00> : vector<2x8x16xf32>
    %197 = tpu.matmul %192, %194, %cst_76 {dimension_numbers = #tpu.dot_dimension_numbers<[2], [2], [1], [1], [0, 0, 0, 1, 1, 1], [0], [0]>} : vector<2x8x8xf32>, vector<2x16x8xf32>, vector<2x8x16xf32> -> vector<2x8x16xf32>
    "tpu.trace_stop"() : () -> ()
    %cst_77 = arith.constant 0.353553385 : f32
    %198 = vector.broadcast %cst_77 : f32 to vector<2x8x16xf32>
    %199 = arith.mulf %197, %198 : vector<2x8x16xf32>
    %200 = vector.broadcast %168 : vector<2x1x16xf32> to vector<2x8x16xf32>
    %201 = arith.addf %199, %200 : vector<2x8x16xf32>
    %cst_78 = arith.constant dense<0xFF800000> : vector<2x8xf32>
    %202 = vector.multi_reduction <maximumf>, %201, %cst_78 [2] : vector<2x8x16xf32> to vector<2x8xf32>
    %203 = vector.shape_cast %202 : vector<2x8xf32> to vector<2x8x1xf32>
    %204 = vector.broadcast %203 : vector<2x8x1xf32> to vector<2x8x16xf32>
    %205 = arith.subf %201, %204 : vector<2x8x16xf32>
    %206 = math.exp %205 : vector<2x8x16xf32>
    %cst_79 = arith.constant dense<0.000000e+00> : vector<2x8xf32>
    %207 = vector.multi_reduction <add>, %206, %cst_79 [2] : vector<2x8x16xf32> to vector<2x8xf32>
    %208 = vector.shape_cast %207 : vector<2x8xf32> to vector<2x8x1xf32>
    %209 = tpu.reciprocal %208 {approx = true} : vector<2x8x1xf32> -> vector<2x8x1xf32>
    %210 = vector.broadcast %209 : vector<2x8x1xf32> to vector<2x8x16xf32>
    %211 = arith.mulf %206, %210 : vector<2x8x16xf32>
    "tpu.trace_start"() <{level = 10 : i32, message = "bqk,bkd->bqd"}> : () -> ()
    %cst_80 = arith.constant dense<0.000000e+00> : vector<2x8x8xf32>
    %212 = tpu.matmul %211, %196, %cst_80 {dimension_numbers = #tpu.dot_dimension_numbers<[2], [1], [1], [2], [0, 0, 0, 1, 1, 2], [0], [0]>} : vector<2x8x16xf32>, vector<2x16x8xf32>, vector<2x8x8xf32> -> vector<2x8x8xf32>
    "tpu.trace_stop"() : () -> ()
    %213 = vector.extract_strided_slice %147 {offsets = [0, 16], sizes = [16, 8], strides = [1, 1]} : vector<16x32xf32> to vector<16x8xf32>
    %214 = vector.shape_cast %213 : vector<16x8xf32> to vector<2x8x8xf32>
    %215 = vector.extract_strided_slice %154 {offsets = [0, 16], sizes = [32, 8], strides = [1, 1]} : vector<32x32xf32> to vector<32x8xf32>
    %216 = vector.shape_cast %215 : vector<32x8xf32> to vector<2x16x8xf32>
    %217 = vector.extract_strided_slice %161 {offsets = [0, 16], sizes = [32, 8], strides = [1, 1]} : vector<32x32xf32> to vector<32x8xf32>
    %218 = vector.shape_cast %217 : vector<32x8xf32> to vector<2x16x8xf32>
    "tpu.trace_start"() <{level = 10 : i32, message = "bqd,bkd->bqk"}> : () -> ()
    %cst_81 = arith.constant dense<0.000000e+00> : vector<2x8x16xf32>
    %219 = tpu.matmul %214, %216, %cst_81 {dimension_numbers = #tpu.dot_dimension_numbers<[2], [2], [1], [1], [0, 0, 0, 1, 1, 1], [0], [0]>} : vector<2x8x8xf32>, vector<2x16x8xf32>, vector<2x8x16xf32> -> vector<2x8x16xf32>
    "tpu.trace_stop"() : () -> ()
    %cst_82 = arith.constant 0.353553385 : f32
    %220 = vector.broadcast %cst_82 : f32 to vector<2x8x16xf32>
    %221 = arith.mulf %219, %220 : vector<2x8x16xf32>
    %222 = vector.broadcast %168 : vector<2x1x16xf32> to vector<2x8x16xf32>
    %223 = arith.addf %221, %222 : vector<2x8x16xf32>
    %cst_83 = arith.constant dense<0xFF800000> : vector<2x8xf32>
    %224 = vector.multi_reduction <maximumf>, %223, %cst_83 [2] : vector<2x8x16xf32> to vector<2x8xf32>
    %225 = vector.shape_cast %224 : vector<2x8xf32> to vector<2x8x1xf32>
    %226 = vector.broadcast %225 : vector<2x8x1xf32> to vector<2x8x16xf32>
    %227 = arith.subf %223, %226 : vector<2x8x16xf32>
    %228 = math.exp %227 : vector<2x8x16xf32>
    %cst_84 = arith.constant dense<0.000000e+00> : vector<2x8xf32>
    %229 = vector.multi_reduction <add>, %228, %cst_84 [2] : vector<2x8x16xf32> to vector<2x8xf32>
    %230 = vector.shape_cast %229 : vector<2x8xf32> to vector<2x8x1xf32>
    %231 = tpu.reciprocal %230 {approx = true} : vector<2x8x1xf32> -> vector<2x8x1xf32>
    %232 = vector.broadcast %231 : vector<2x8x1xf32> to vector<2x8x16xf32>
    %233 = arith.mulf %228, %232 : vector<2x8x16xf32>
    "tpu.trace_start"() <{level = 10 : i32, message = "bqk,bkd->bqd"}> : () -> ()
    %cst_85 = arith.constant dense<0.000000e+00> : vector<2x8x8xf32>
    %234 = tpu.matmul %233, %218, %cst_85 {dimension_numbers = #tpu.dot_dimension_numbers<[2], [1], [1], [2], [0, 0, 0, 1, 1, 2], [0], [0]>} : vector<2x8x16xf32>, vector<2x16x8xf32>, vector<2x8x8xf32> -> vector<2x8x8xf32>
    "tpu.trace_stop"() : () -> ()
    %235 = vector.extract_strided_slice %147 {offsets = [0, 24], sizes = [16, 8], strides = [1, 1]} : vector<16x32xf32> to vector<16x8xf32>
    %236 = vector.shape_cast %235 : vector<16x8xf32> to vector<2x8x8xf32>
    %237 = vector.extract_strided_slice %154 {offsets = [0, 24], sizes = [32, 8], strides = [1, 1]} : vector<32x32xf32> to vector<32x8xf32>
    %238 = vector.shape_cast %237 : vector<32x8xf32> to vector<2x16x8xf32>
    %239 = vector.extract_strided_slice %161 {offsets = [0, 24], sizes = [32, 8], strides = [1, 1]} : vector<32x32xf32> to vector<32x8xf32>
    %240 = vector.shape_cast %239 : vector<32x8xf32> to vector<2x16x8xf32>
    "tpu.trace_start"() <{level = 10 : i32, message = "bqd,bkd->bqk"}> : () -> ()
    %cst_86 = arith.constant dense<0.000000e+00> : vector<2x8x16xf32>
    %241 = tpu.matmul %236, %238, %cst_86 {dimension_numbers = #tpu.dot_dimension_numbers<[2], [2], [1], [1], [0, 0, 0, 1, 1, 1], [0], [0]>} : vector<2x8x8xf32>, vector<2x16x8xf32>, vector<2x8x16xf32> -> vector<2x8x16xf32>
    "tpu.trace_stop"() : () -> ()
    %cst_87 = arith.constant 0.353553385 : f32
    %242 = vector.broadcast %cst_87 : f32 to vector<2x8x16xf32>
    %243 = arith.mulf %241, %242 : vector<2x8x16xf32>
    %244 = vector.broadcast %168 : vector<2x1x16xf32> to vector<2x8x16xf32>
    %245 = arith.addf %243, %244 : vector<2x8x16xf32>
    %cst_88 = arith.constant dense<0xFF800000> : vector<2x8xf32>
    %246 = vector.multi_reduction <maximumf>, %245, %cst_88 [2] : vector<2x8x16xf32> to vector<2x8xf32>
    %247 = vector.shape_cast %246 : vector<2x8xf32> to vector<2x8x1xf32>
    %248 = vector.broadcast %247 : vector<2x8x1xf32> to vector<2x8x16xf32>
    %249 = arith.subf %245, %248 : vector<2x8x16xf32>
    %250 = math.exp %249 : vector<2x8x16xf32>
    %cst_89 = arith.constant dense<0.000000e+00> : vector<2x8xf32>
    %251 = vector.multi_reduction <add>, %250, %cst_89 [2] : vector<2x8x16xf32> to vector<2x8xf32>
    %252 = vector.shape_cast %251 : vector<2x8xf32> to vector<2x8x1xf32>
    %253 = tpu.reciprocal %252 {approx = true} : vector<2x8x1xf32> -> vector<2x8x1xf32>
    %254 = vector.broadcast %253 : vector<2x8x1xf32> to vector<2x8x16xf32>
    %255 = arith.mulf %250, %254 : vector<2x8x16xf32>
    "tpu.trace_start"() <{level = 10 : i32, message = "bqk,bkd->bqd"}> : () -> ()
    %cst_90 = arith.constant dense<0.000000e+00> : vector<2x8x8xf32>
    %256 = tpu.matmul %255, %240, %cst_90 {dimension_numbers = #tpu.dot_dimension_numbers<[2], [1], [1], [2], [0, 0, 0, 1, 1, 2], [0], [0]>} : vector<2x8x16xf32>, vector<2x16x8xf32>, vector<2x8x8xf32> -> vector<2x8x8xf32>
    "tpu.trace_stop"() : () -> ()
    %257 = tpu.concatenate %190, %212, %234, %256 in 2 : vector<2x8x8xf32>, vector<2x8x8xf32>, vector<2x8x8xf32>, vector<2x8x8xf32> -> vector<2x8x32xf32>
    %258 = vector.shape_cast %257 : vector<2x8x32xf32> to vector<16x32xf32>
    %c0_91 = arith.constant 0 : index
    %c0_92 = arith.constant 0 : index
    %259 = vector.load %arg18[%c0_91, %c0_92] : memref<32x32xf32, #tpu.memory_space<vmem>>, vector<32x32xf32>
    %260 = arith.truncf %258 : vector<16x32xf32> to vector<16x32xbf16>
    %261 = arith.truncf %259 : vector<32x32xf32> to vector<32x32xbf16>
    %cst_93 = arith.constant dense<0.000000e+00> : vector<16x32xf32>
    %262 = tpu.matmul %260, %261, %cst_93 {dimension_numbers = #tpu.dot_dimension_numbers<[1], [0], [0], [1], [0, 0, 1, 1], [], []>} : vector<16x32xbf16>, vector<32x32xbf16>, vector<16x32xf32> -> vector<16x32xf32>
    %c0_94 = arith.constant 0 : index
    %c0_95 = arith.constant 0 : index
    %263 = vector.load %arg19[%c0_94, %c0_95] : memref<1x32xf32, #tpu.memory_space<vmem>>, vector<1x32xf32>
    %264 = vector.broadcast %263 : vector<1x32xf32> to vector<16x32xf32>
    %265 = arith.addf %262, %264 : vector<16x32xf32>
    %266 = arith.addf %136, %265 : vector<16x32xf32>
    %cst_96 = arith.constant dense<0.000000e+00> : vector<16xf32>
    %267 = vector.multi_reduction <add>, %266, %cst_96 [1] : vector<16x32xf32> to vector<16xf32>
    %268 = vector.shape_cast %267 : vector<16xf32> to vector<16x1xf32>
    %cst_97 = arith.constant 3.200000e+01 : f32
    %269 = vector.broadcast %cst_97 : f32 to vector<16x1xf32>
    %270 = arith.divf %268, %269 : vector<16x1xf32>
    %271 = vector.broadcast %270 : vector<16x1xf32> to vector<16x32xf32>
    %272 = arith.subf %266, %271 : vector<16x32xf32>
    %273 = arith.mulf %272, %272 : vector<16x32xf32>
    %cst_98 = arith.constant dense<0.000000e+00> : vector<16xf32>
    %274 = vector.multi_reduction <add>, %273, %cst_98 [1] : vector<16x32xf32> to vector<16xf32>
    %275 = vector.shape_cast %274 : vector<16xf32> to vector<16x1xf32>
    %cst_99 = arith.constant 3.200000e+01 : f32
    %276 = vector.broadcast %cst_99 : f32 to vector<16x1xf32>
    %277 = arith.divf %275, %276 : vector<16x1xf32>
    %cst_100 = arith.constant 9.99999974E-6 : f32
    %278 = vector.broadcast %cst_100 : f32 to vector<16x1xf32>
    %279 = arith.addf %277, %278 : vector<16x1xf32>
    %280 = math.rsqrt %279 : vector<16x1xf32>
    %281 = vector.broadcast %280 : vector<16x1xf32> to vector<16x32xf32>
    %282 = arith.mulf %272, %281 : vector<16x32xf32>
    %c0_101 = arith.constant 0 : index
    %c0_102 = arith.constant 0 : index
    %283 = vector.load %arg20[%c0_101, %c0_102] : memref<1x32xf32, #tpu.memory_space<vmem>>, vector<1x32xf32>
    %284 = vector.broadcast %283 : vector<1x32xf32> to vector<16x32xf32>
    %285 = arith.mulf %282, %284 : vector<16x32xf32>
    %c0_103 = arith.constant 0 : index
    %c0_104 = arith.constant 0 : index
    %286 = vector.load %arg21[%c0_103, %c0_104] : memref<1x32xf32, #tpu.memory_space<vmem>>, vector<1x32xf32>
    %287 = vector.broadcast %286 : vector<1x32xf32> to vector<16x32xf32>
    %288 = arith.addf %285, %287 : vector<16x32xf32>
    %c0_105 = arith.constant 0 : index
    %c0_106 = arith.constant 0 : index
    %289 = vector.load %arg22[%c0_105, %c0_106] : memref<32x64xf32, #tpu.memory_space<vmem>>, vector<32x64xf32>
    %290 = arith.truncf %288 : vector<16x32xf32> to vector<16x32xbf16>
    %291 = arith.truncf %289 : vector<32x64xf32> to vector<32x64xbf16>
    %cst_107 = arith.constant dense<0.000000e+00> : vector<16x64xf32>
    %292 = tpu.matmul %290, %291, %cst_107 {dimension_numbers = #tpu.dot_dimension_numbers<[1], [0], [0], [1], [0, 0, 1, 1], [], []>} : vector<16x32xbf16>, vector<32x64xbf16>, vector<16x64xf32> -> vector<16x64xf32>
    %c0_108 = arith.constant 0 : index
    %c0_109 = arith.constant 0 : index
    %293 = vector.load %arg23[%c0_108, %c0_109] : memref<1x64xf32, #tpu.memory_space<vmem>>, vector<1x64xf32>
    %294 = vector.broadcast %293 : vector<1x64xf32> to vector<16x64xf32>
    %295 = arith.addf %292, %294 : vector<16x64xf32>
    %cst_110 = arith.constant 0.000000e+00 : f32
    %296 = vector.broadcast %cst_110 : f32 to vector<16x64xf32>
    %297 = arith.maximumf %295, %296 : vector<16x64xf32>
    %c0_111 = arith.constant 0 : index
    %c0_112 = arith.constant 0 : index
    %298 = vector.load %arg24[%c0_111, %c0_112] : memref<64x32xf32, #tpu.memory_space<vmem>>, vector<64x32xf32>
    %299 = arith.truncf %297 : vector<16x64xf32> to vector<16x64xbf16>
    %300 = arith.truncf %298 : vector<64x32xf32> to vector<64x32xbf16>
    %cst_113 = arith.constant dense<0.000000e+00> : vector<16x32xf32>
    %301 = tpu.matmul %299, %300, %cst_113 {dimension_numbers = #tpu.dot_dimension_numbers<[1], [0], [0], [1], [0, 0, 1, 1], [], []>} : vector<16x64xbf16>, vector<64x32xbf16>, vector<16x32xf32> -> vector<16x32xf32>
    %c0_114 = arith.constant 0 : index
    %c0_115 = arith.constant 0 : index
    %302 = vector.load %arg25[%c0_114, %c0_115] : memref<1x32xf32, #tpu.memory_space<vmem>>, vector<1x32xf32>
    %303 = vector.broadcast %302 : vector<1x32xf32> to vector<16x32xf32>
    %304 = arith.addf %301, %303 : vector<16x32xf32>
    %305 = arith.addf %288, %304 : vector<16x32xf32>
    %cst_116 = arith.constant dense<0.000000e+00> : vector<16xf32>
    %306 = vector.multi_reduction <add>, %305, %cst_116 [1] : vector<16x32xf32> to vector<16xf32>
    %307 = vector.shape_cast %306 : vector<16xf32> to vector<16x1xf32>
    %cst_117 = arith.constant 3.200000e+01 : f32
    %308 = vector.broadcast %cst_117 : f32 to vector<16x1xf32>
    %309 = arith.divf %307, %308 : vector<16x1xf32>
    %310 = vector.broadcast %309 : vector<16x1xf32> to vector<16x32xf32>
    %311 = arith.subf %305, %310 : vector<16x32xf32>
    %312 = arith.mulf %311, %311 : vector<16x32xf32>
    %cst_118 = arith.constant dense<0.000000e+00> : vector<16xf32>
    %313 = vector.multi_reduction <add>, %312, %cst_118 [1] : vector<16x32xf32> to vector<16xf32>
    %314 = vector.shape_cast %313 : vector<16xf32> to vector<16x1xf32>
    %cst_119 = arith.constant 3.200000e+01 : f32
    %315 = vector.broadcast %cst_119 : f32 to vector<16x1xf32>
    %316 = arith.divf %314, %315 : vector<16x1xf32>
    %cst_120 = arith.constant 9.99999974E-6 : f32
    %317 = vector.broadcast %cst_120 : f32 to vector<16x1xf32>
    %318 = arith.addf %316, %317 : vector<16x1xf32>
    %319 = math.rsqrt %318 : vector<16x1xf32>
    %320 = vector.broadcast %319 : vector<16x1xf32> to vector<16x32xf32>
    %321 = arith.mulf %311, %320 : vector<16x32xf32>
    %c0_121 = arith.constant 0 : index
    %c0_122 = arith.constant 0 : index
    %322 = vector.load %arg26[%c0_121, %c0_122] : memref<1x32xf32, #tpu.memory_space<vmem>>, vector<1x32xf32>
    %323 = vector.broadcast %322 : vector<1x32xf32> to vector<16x32xf32>
    %324 = arith.mulf %321, %323 : vector<16x32xf32>
    %c0_123 = arith.constant 0 : index
    %c0_124 = arith.constant 0 : index
    %325 = vector.load %arg27[%c0_123, %c0_124] : memref<1x32xf32, #tpu.memory_space<vmem>>, vector<1x32xf32>
    %326 = vector.broadcast %325 : vector<1x32xf32> to vector<16x32xf32>
    %327 = arith.addf %324, %326 : vector<16x32xf32>
    %cst_125 = arith.constant dense<0.000000e+00> : vector<16xf32>
    %328 = vector.multi_reduction <add>, %327, %cst_125 [1] : vector<16x32xf32> to vector<16xf32>
    %329 = vector.shape_cast %328 : vector<16xf32> to vector<16x1xf32>
    %cst_126 = arith.constant 3.200000e+01 : f32
    %330 = vector.broadcast %cst_126 : f32 to vector<16x1xf32>
    %331 = arith.divf %329, %330 : vector<16x1xf32>
    %332 = vector.broadcast %331 : vector<16x1xf32> to vector<16x32xf32>
    %333 = arith.subf %327, %332 : vector<16x32xf32>
    %334 = arith.mulf %333, %333 : vector<16x32xf32>
    %cst_127 = arith.constant dense<0.000000e+00> : vector<16xf32>
    %335 = vector.multi_reduction <add>, %334, %cst_127 [1] : vector<16x32xf32> to vector<16xf32>
    %336 = vector.shape_cast %335 : vector<16xf32> to vector<16x1xf32>
    %cst_128 = arith.constant 3.200000e+01 : f32
    %337 = vector.broadcast %cst_128 : f32 to vector<16x1xf32>
    %338 = arith.divf %336, %337 : vector<16x1xf32>
    %cst_129 = arith.constant 9.99999974E-6 : f32
    %339 = vector.broadcast %cst_129 : f32 to vector<16x1xf32>
    %340 = arith.addf %338, %339 : vector<16x1xf32>
    %341 = math.rsqrt %340 : vector<16x1xf32>
    %342 = vector.broadcast %341 : vector<16x1xf32> to vector<16x32xf32>
    %343 = arith.mulf %333, %342 : vector<16x32xf32>
    %c0_130 = arith.constant 0 : index
    %c0_131 = arith.constant 0 : index
    %344 = vector.load %arg28[%c0_130, %c0_131] : memref<1x32xf32, #tpu.memory_space<vmem>>, vector<1x32xf32>
    %345 = vector.broadcast %344 : vector<1x32xf32> to vector<16x32xf32>
    %346 = arith.mulf %343, %345 : vector<16x32xf32>
    %c0_132 = arith.constant 0 : index
    %c0_133 = arith.constant 0 : index
    %347 = vector.load %arg29[%c0_132, %c0_133] : memref<1x32xf32, #tpu.memory_space<vmem>>, vector<1x32xf32>
    %348 = vector.broadcast %347 : vector<1x32xf32> to vector<16x32xf32>
    %349 = arith.addf %346, %348 : vector<16x32xf32>
    %c0_134 = arith.constant 0 : index
    %c0_135 = arith.constant 0 : index
    %350 = vector.load %arg30[%c0_134, %c0_135] : memref<32x5xf32, #tpu.memory_space<vmem>>, vector<32x5xf32>
    %351 = arith.truncf %349 : vector<16x32xf32> to vector<16x32xbf16>
    %352 = arith.truncf %350 : vector<32x5xf32> to vector<32x5xbf16>
    %cst_136 = arith.constant dense<0.000000e+00> : vector<16x5xf32>
    %353 = tpu.matmul %351, %352, %cst_136 {dimension_numbers = #tpu.dot_dimension_numbers<[1], [0], [0], [1], [0, 0, 1, 1], [], []>} : vector<16x32xbf16>, vector<32x5xbf16>, vector<16x5xf32> -> vector<16x5xf32>
    %c0_137 = arith.constant 0 : index
    %c0_138 = arith.constant 0 : index
    %354 = vector.load %arg31[%c0_137, %c0_138] : memref<1x5xf32, #tpu.memory_space<vmem>>, vector<1x5xf32>
    %355 = vector.broadcast %354 : vector<1x5xf32> to vector<16x5xf32>
    %356 = arith.addf %353, %355 : vector<16x5xf32>
    %c0_139 = arith.constant 0 : index
    %c0_140 = arith.constant 0 : index
    %357 = vector.load %arg32[%c0_139, %c0_140] : memref<32x32xf32, #tpu.memory_space<vmem>>, vector<32x32xf32>
    %358 = arith.truncf %349 : vector<16x32xf32> to vector<16x32xbf16>
    %359 = arith.truncf %357 : vector<32x32xf32> to vector<32x32xbf16>
    %cst_141 = arith.constant dense<0.000000e+00> : vector<16x32xf32>
    %360 = tpu.matmul %358, %359, %cst_141 {dimension_numbers = #tpu.dot_dimension_numbers<[1], [0], [0], [1], [0, 0, 1, 1], [], []>} : vector<16x32xbf16>, vector<32x32xbf16>, vector<16x32xf32> -> vector<16x32xf32>
    %c0_142 = arith.constant 0 : index
    %c0_143 = arith.constant 0 : index
    %361 = vector.load %arg33[%c0_142, %c0_143] : memref<1x32xf32, #tpu.memory_space<vmem>>, vector<1x32xf32>
    %362 = vector.broadcast %361 : vector<1x32xf32> to vector<16x32xf32>
    %363 = arith.addf %360, %362 : vector<16x32xf32>
    %cst_144 = arith.constant 0.000000e+00 : f32
    %364 = vector.broadcast %cst_144 : f32 to vector<16x32xf32>
    %365 = arith.maximumf %363, %364 : vector<16x32xf32>
    %c0_145 = arith.constant 0 : index
    %c0_146 = arith.constant 0 : index
    %366 = vector.load %arg34[%c0_145, %c0_146] : memref<32x32xf32, #tpu.memory_space<vmem>>, vector<32x32xf32>
    %367 = arith.truncf %365 : vector<16x32xf32> to vector<16x32xbf16>
    %368 = arith.truncf %366 : vector<32x32xf32> to vector<32x32xbf16>
    %cst_147 = arith.constant dense<0.000000e+00> : vector<16x32xf32>
    %369 = tpu.matmul %367, %368, %cst_147 {dimension_numbers = #tpu.dot_dimension_numbers<[1], [0], [0], [1], [0, 0, 1, 1], [], []>} : vector<16x32xbf16>, vector<32x32xbf16>, vector<16x32xf32> -> vector<16x32xf32>
    %c0_148 = arith.constant 0 : index
    %c0_149 = arith.constant 0 : index
    %370 = vector.load %arg35[%c0_148, %c0_149] : memref<1x32xf32, #tpu.memory_space<vmem>>, vector<1x32xf32>
    %371 = vector.broadcast %370 : vector<1x32xf32> to vector<16x32xf32>
    %372 = arith.addf %369, %371 : vector<16x32xf32>
    %cst_150 = arith.constant 0.000000e+00 : f32
    %373 = vector.broadcast %cst_150 : f32 to vector<16x32xf32>
    %374 = arith.maximumf %372, %373 : vector<16x32xf32>
    %c0_151 = arith.constant 0 : index
    %c0_152 = arith.constant 0 : index
    %375 = vector.load %arg36[%c0_151, %c0_152] : memref<32x4xf32, #tpu.memory_space<vmem>>, vector<32x4xf32>
    %376 = arith.truncf %374 : vector<16x32xf32> to vector<16x32xbf16>
    %377 = arith.truncf %375 : vector<32x4xf32> to vector<32x4xbf16>
    %cst_153 = arith.constant dense<0.000000e+00> : vector<16x4xf32>
    %378 = tpu.matmul %376, %377, %cst_153 {dimension_numbers = #tpu.dot_dimension_numbers<[1], [0], [0], [1], [0, 0, 1, 1], [], []>} : vector<16x32xbf16>, vector<32x4xbf16>, vector<16x4xf32> -> vector<16x4xf32>
    %c0_154 = arith.constant 0 : index
    %c0_155 = arith.constant 0 : index
    %379 = vector.load %arg37[%c0_154, %c0_155] : memref<1x4xf32, #tpu.memory_space<vmem>>, vector<1x4xf32>
    %380 = vector.broadcast %379 : vector<1x4xf32> to vector<16x4xf32>
    %381 = arith.addf %378, %380 : vector<16x4xf32>
    %cst_156 = arith.constant 0.000000e+00 : f32
    %382 = vector.broadcast %cst_156 : f32 to vector<16x4xf32>
    %383 = arith.subf %382, %381 : vector<16x4xf32>
    %384 = math.exp %383 : vector<16x4xf32>
    %cst_157 = arith.constant 1.000000e+00 : f32
    %385 = vector.broadcast %cst_157 : f32 to vector<16x4xf32>
    %386 = arith.addf %385, %384 : vector<16x4xf32>
    %cst_158 = arith.constant 1.000000e+00 : f32
    %387 = vector.broadcast %cst_158 : f32 to vector<16x4xf32>
    %388 = arith.divf %387, %386 : vector<16x4xf32>
    %389 = vector.shape_cast %356 : vector<16x5xf32> to vector<2x8x5xf32>
    %c0_159 = arith.constant 0 : index
    %c0_160 = arith.constant 0 : index
    %c0_161 = arith.constant 0 : index
    %390 = vector.load %arg38[%c0_159, %c0_160, %c0_161] : memref<2x8x5xf32, #tpu.memory_space<vmem>>, vector<2x8x5xf32>
    tpu.vector_store %arg38[%c0_159, %c0_160, %c0_161], %389 {strides = array<i32>} : memref<2x8x5xf32, #tpu.memory_space<vmem>>, vector<2x8x5xf32>,
    %391 = vector.shape_cast %388 : vector<16x4xf32> to vector<2x8x4xf32>
    %c0_162 = arith.constant 0 : index
    %c0_163 = arith.constant 0 : index
    %c0_164 = arith.constant 0 : index
    %392 = vector.load %arg39[%c0_162, %c0_163, %c0_164] : memref<2x8x4xf32, #tpu.memory_space<vmem>>, vector<2x8x4xf32>
    tpu.vector_store %arg39[%c0_162, %c0_163, %c0_164], %391 {strides = array<i32>} : memref<2x8x4xf32, #tpu.memory_space<vmem>>, vector<2x8x4xf32>,
    return
  }
}

</mosaic_0001>

<llo_original>
// kernel: detr_forward.3
$region0: #{detr_forward.3}
  #allocation0 [shape = 'u32[]', space=smem, size = 0x4, offset = 0x4, fixed_abs, tag = 'smem constant byte address 0x4 - core index']
  #allocation1 [shape = 'u32[144,128]{1,0:T(1,128)}', space=vmem, size = 0x12000, scoped, tag = 'internal scratch']
  %s0 = inlined_call_operand.vmem [shape: f32[32,768], index: 0, kind: input, shape index: {}]
  %s1 = inlined_call_operand.vmem [shape: f32[768,64], index: 1, kind: input, shape index: {}]
  %s2 = inlined_call_operand.hbm [shape: f32[1,64], index: 2, kind: input, shape index: {}]
  %s3 = inlined_call_operand.vmem [shape: f32[64,32], index: 3, kind: input, shape index: {}]
  %s4 = inlined_call_operand.hbm [shape: f32[1,32], index: 4, kind: input, shape index: {}]
  %s5 = inlined_call_operand.vmem [shape: f32[32,32], index: 5, kind: output, shape index: {}]
  %s6 = sld [smem:[#allocation0]]
  $region38: #{detr_forward.3} parent=0
    _
  %s8 = ssub.s32 1, %s6
  %s9 = scalar_select 0, %s8, %s6
  $region1: #{detr_forward.3} parent=0
    #allocation2 [shape = 'u8[512]{0}', space=vmem, size = 0x400, scoped, tag = 'input window, operand 2, single buffered']
    #allocation3 [shape = 's32[1]{0}', space=sflag, size = 0x4, scoped, tag = 'scoped memory for detr_forward.3']
    #allocation4 [shape = 'u8[512]{0}', space=vmem, size = 0x400, scoped, tag = 'input window, operand 4, single buffered']
    #allocation5 [shape = 's32[1]{0}', space=sflag, size = 0x4, scoped, tag = 'scoped memory for detr_forward.3']
    %10 = vsyncpa [#allocation3], 0
    %11 = vsyncpa [#allocation5], 0
    // Predicated region
    $region2: #{detr_forward.3} parent=1 // pred_check
      _
    $region3: #{detr_forward.3} parent=1 // pred_check_branch
      %13 = sbr.rel (0) target = $region5
    $region4: #{detr_forward.3} parent=1 // pred_region
      _
    $region5: #{detr_forward.3} parent=1 // pred_fallthru
      _
    // Predicated region
    $region6: #{detr_forward.3} parent=1 // pred_check
      _
    $region7: #{detr_forward.3} parent=1 // pred_check_branch
      %15 = sbr.rel (0) target = $region9
    $region8: #{detr_forward.3} parent=1 // pred_region
      _
    $region9: #{detr_forward.3} parent=1 // pred_fallthru
      _
    // Predicated region
    $region10: #{detr_forward.3} parent=1 // pred_check
      _
    $region11: #{detr_forward.3} parent=1 // pred_check_branch
      %17 = sbr.rel (0) target = $region13
    $region12: #{detr_forward.3} parent=1 // pred_region
      %s19 = ssub.s32 16, 16
      %20 = vsyncadd [#allocation3], %s19
      %s22 = sshll.u32 [#allocation2], 4
      %s23 = int_to_ptr.vmem [resolvable:$true] %s22
      %25 = dma.hbm_to_vmem [thread:$0]  %s2, 16, %s23, [#allocation3]
    $region13: #{detr_forward.3} parent=1 // pred_fallthru
      _
    // Predicated region
    $region14: #{detr_forward.3} parent=1 // pred_check
      _
    $region15: #{detr_forward.3} parent=1 // pred_check_branch
      %27 = sbr.rel (0) target = $region17
    $region16: #{detr_forward.3} parent=1 // pred_region
      _
    $region17: #{detr_forward.3} parent=1 // pred_fallthru
      _
    // Predicated region
    $region18: #{detr_forward.3} parent=1 // pred_check
      _
    $region19: #{detr_forward.3} parent=1 // pred_check_branch
      %29 = sbr.rel (0) target = $region21
    $region20: #{detr_forward.3} parent=1 // pred_region
      %s31 = ssub.s32 16, 16
      %32 = vsyncadd [#allocation5], %s31
      %s34 = sshll.u32 [#allocation4], 4
      %s35 = int_to_ptr.vmem [resolvable:$true] %s34
      %37 = dma.hbm_to_vmem [thread:$0]  %s4, 16, %s35, [#allocation5]
    $region21: #{detr_forward.3} parent=1 // pred_fallthru
      _
    // Predicated region
    $region22: #{detr_forward.3} parent=1 // pred_check
      _
    $region23: #{detr_forward.3} parent=1 // pred_check_branch
      %39 = sbr.rel (0) target = $region25
    $region24: #{detr_forward.3} parent=1 // pred_region
      %40 = dma.done [#allocation3], 16
    $region25: #{detr_forward.3} parent=1 // pred_fallthru
      _
    // Predicated region
    $region26: #{detr_forward.3} parent=1 // pred_check
      _
    $region27: #{detr_forward.3} parent=1 // pred_check_branch
      %42 = sbr.rel (0) target = $region29
    $region28: #{detr_forward.3} parent=1 // pred_region
      %43 = dma.done [#allocation5], 16
    $region29: #{detr_forward.3} parent=1 // pred_fallthru
      _
    %v45 = vld [vmem:[%s0] sm:$0xff]
    %v46 = vld [vmem:[%s0 + $0x8] sm:$0xff]
    %v47 = vld [vmem:[%s0 + $0x10] sm:$0xff]
    %v48 = vld [vmem:[%s0 + $0x18] sm:$0xff]
    %v49 = vld [vmem:[%s0 + $0x20] sm:$0xff]
    %v50 = vld [vmem:[%s0 + $0x28] sm:$0xff]
    %v51 = vld [vmem:[%s0 + $0x30] sm:$0xff]
    %v52 = vld [vmem:[%s0 + $0x38] sm:$0xff]
    %v53 = vld [vmem:[%s0 + $0x40] sm:$0xff]
    %v54 = vld [vmem:[%s0 + $0x48] sm:$0xff]
    %v55 = vld [vmem:[%s0 + $0x50] sm:$0xff]
    %v56 = vld [vmem:[%s0 + $0x58] sm:$0xff]
    %v57 = vld [vmem:[%s0 + $0x60] sm:$0xff]
    %v58 = vld [vmem:[%s0 + $0x68] sm:$0xff]
    %v59 = vld [vmem:[%s0 + $0x70] sm:$0xff]
    %v60 = vld [vmem:[%s0 + $0x78] sm:$0xff]
    %v61 = vld [vmem:[%s0 + $0x80] sm:$0xff]
    %v62 = vld [vmem:[%s0 + $0x88] sm:$0xff]
    %v63 = vld [vmem:[%s0 + $0x90] sm:$0xff]
    %v64 = vld [vmem:[%s0 + $0x98] sm:$0xff]
    %v65 = vld [vmem:[%s0 + $0xa0] sm:$0xff]
    %v66 = vld [vmem:[%s0 + $0xa8] sm:$0xff]
    %v67 = vld [vmem:[%s0 + $0xb0] sm:$0xff]
    %v68 = vld [vmem:[%s0 + $0xb8] sm:$0xff]
    %v69 = vld [vmem:[%s1] sm:$0xff]
    %v70 = vld [vmem:[%s1 + $0x8] sm:$0xff]
    %v71 = vld [vmem:[%s1 + $0x10] sm:$0xff]
    %v72 = vld [vmem:[%s1 + $0x18] sm:$0xff]
    %v73 = vld [vmem:[%s1 + $0x20] sm:$0xff]
    %v74 = vld [vmem:[%s1 + $0x28] sm:$0xff]
    %v75 = vld [vmem:[%s1 + $0x30] sm:$0xff]
    %v76 = vld [vmem:[%s1 + $0x38] sm:$0xff]
    %v77 = vld [vmem:[%s1 + $0x40] sm:$0xff]
    %v78 = vld [vmem:[%s1 + $0x48] sm:$0xff]
    %v79 = vld [vmem:[%s1 + $0x50] sm:$0xff]
    %v80 = vld [vmem:[%s1 + $0x58] sm:$0xff]
    %v81 = vld [vmem:[%s1 + $0x60] sm:$0xff]
    %v82 = vld [vmem:[%s1 + $0x68] sm:$0xff]
    %v83 = vld [vmem:[%s1 + $0x70] sm:$0xff]
    %v84 = vld [vmem:[%s1 + $0x78] sm:$0xff]
    %v85 = vld [vmem:[%s1 + $0x80] sm:$0xff]
    %v86 = vld [vmem:[%s1 + $0x88] sm:$0xff]
    %v87 = vld [vmem:[%s1 + $0x90] sm:$0xff]
    %v88 = vld [vmem:[%s1 + $0x98] sm:$0xff]
    %v89 = vld [vmem:[%s1 + $0xa0] sm:$0xff]
    %v90 = vld [vmem:[%s1 + $0xa8] sm:$0xff]
    %v91 = vld [vmem:[%s1 + $0xb0] sm:$0xff]
    %v92 = vld [vmem:[%s1 + $0xb8] sm:$0xff]
    %v93 = vld [vmem:[%s1 + $0xc0] sm:$0xff]
    %v94 = vld [vmem:[%s1 + $0xc8] sm:$0xff]
    %v95 = vld [vmem:[%s1 + $0xd0] sm:$0xff]
    %v96 = vld [vmem:[%s1 + $0xd8] sm:$0xff]
    %v97 = vld [vmem:[%s1 + $0xe0] sm:$0xff]
    %v98 = vld [vmem:[%s1 + $0xe8] sm:$0xff]
    %v99 = vld [vmem:[%s1 + $0xf0] sm:$0xff]
    %v100 = vld [vmem:[%s1 + $0xf8] sm:$0xff]
    %v101 = vld [vmem:[%s1 + $0x100] sm:$0xff]
    %v102 = vld [vmem:[%s1 + $0x108] sm:$0xff]
    %v103 = vld [vmem:[%s1 + $0x110] sm:$0xff]
    %v104 = vld [vmem:[%s1 + $0x118] sm:$0xff]
    %v105 = vld [vmem:[%s1 + $0x120] sm:$0xff]
    %v106 = vld [vmem:[%s1 + $0x128] sm:$0xff]
    %v107 = vld [vmem:[%s1 + $0x130] sm:$0xff]
    %v108 = vld [vmem:[%s1 + $0x138] sm:$0xff]
    %v109 = vld [vmem:[%s1 + $0x140] sm:$0xff]
    %v110 = vld [vmem:[%s1 + $0x148] sm:$0xff]
    %v111 = vld [vmem:[%s1 + $0x150] sm:$0xff]
    %v112 = vld [vmem:[%s1 + $0x158] sm:$0xff]
    %v113 = vld [vmem:[%s1 + $0x160] sm:$0xff]
    %v114 = vld [vmem:[%s1 + $0x168] sm:$0xff]
    %v115 = vld [vmem:[%s1 + $0x170] sm:$0xff]
    %v116 = vld [vmem:[%s1 + $0x178] sm:$0xff]
    %v117 = vld [vmem:[%s1 + $0x180] sm:$0xff]
    %v118 = vld [vmem:[%s1 + $0x188] sm:$0xff]
    %v119 = vld [vmem:[%s1 + $0x190] sm:$0xff]
    %v120 = vld [vmem:[%s1 + $0x198] sm:$0xff]
    %v121 = vld [vmem:[%s1 + $0x1a0] sm:$0xff]
    %v122 = vld [vmem:[%s1 + $0x1a8] sm:$0xff]
    %v123 = vld [vmem:[%s1 + $0x1b0] sm:$0xff]
    %v124 = vld [vmem:[%s1 + $0x1b8] sm:$0xff]
    %v125 = vld [vmem:[%s1 + $0x1c0] sm:$0xff]
    %v126 = vld [vmem:[%s1 + $0x1c8] sm:$0xff]
    %v127 = vld [vmem:[%s1 + $0x1d0] sm:$0xff]
    %v128 = vld [vmem:[%s1 + $0x1d8] sm:$0xff]
    %v129 = vld [vmem:[%s1 + $0x1e0] sm:$0xff]
    %v130 = vld [vmem:[%s1 + $0x1e8] sm:$0xff]
    %v131 = vld [vmem:[%s1 + $0x1f0] sm:$0xff]
    %v132 = vld [vmem:[%s1 + $0x1f8] sm:$0xff]
    %v133 = vld [vmem:[%s1 + $0x200] sm:$0xff]
    %v134 = vld [vmem:[%s1 + $0x208] sm:$0xff]
    %v135 = vld [vmem:[%s1 + $0x210] sm:$0xff]
    %v136 = vld [vmem:[%s1 + $0x218] sm:$0xff]
    %v137 = vld [vmem:[%s1 + $0x220] sm:$0xff]
    %v138 = vld [vmem:[%s1 + $0x228] sm:$0xff]
    %v139 = vld [vmem:[%s1 + $0x230] sm:$0xff]
    %v140 = vld [vmem:[%s1 + $0x238] sm:$0xff]
    %v141 = vld [vmem:[%s1 + $0x240] sm:$0xff]
    %v142 = vld [vmem:[%s1 + $0x248] sm:$0xff]
    %v143 = vld [vmem:[%s1 + $0x250] sm:$0xff]
    %v144 = vld [vmem:[%s1 + $0x258] sm:$0xff]
    %v145 = vld [vmem:[%s1 + $0x260] sm:$0xff]
    %v146 = vld [vmem:[%s1 + $0x268] sm:$0xff]
    %v147 = vld [vmem:[%s1 + $0x270] sm:$0xff]
    %v148 = vld [vmem:[%s1 + $0x278] sm:$0xff]
    %v149 = vld [vmem:[%s1 + $0x280] sm:$0xff]
    %v150 = vld [vmem:[%s1 + $0x288] sm:$0xff]
    %v151 = vld [vmem:[%s1 + $0x290] sm:$0xff]
    %v152 = vld [vmem:[%s1 + $0x298] sm:$0xff]
    %v153 = vld [vmem:[%s1 + $0x2a0] sm:$0xff]
    %v154 = vld [vmem:[%s1 + $0x2a8] sm:$0xff]
    %v155 = vld [vmem:[%s1 + $0x2b0] sm:$0xff]
    %v156 = vld [vmem:[%s1 + $0x2b8] sm:$0xff]
    %v157 = vld [vmem:[%s1 + $0x2c0] sm:$0xff]
    %v158 = vld [vmem:[%s1 + $0x2c8] sm:$0xff]
    %v159 = vld [vmem:[%s1 + $0x2d0] sm:$0xff]
    %v160 = vld [vmem:[%s1 + $0x2d8] sm:$0xff]
    %v161 = vld [vmem:[%s1 + $0x2e0] sm:$0xff]
    %v162 = vld [vmem:[%s1 + $0x2e8] sm:$0xff]
    %v163 = vld [vmem:[%s1 + $0x2f0] sm:$0xff]
    %v164 = vld [vmem:[%s1 + $0x2f8] sm:$0xff]
    %v165 = vpack.c.bf16 %v51, %v45
    %v166 = vpack.c.bf16 %v52, %v46
    %v167 = vpack.c.bf16 %v53, %v47
    %v168 = vpack.c.bf16 %v54, %v48
    %v169 = vpack.c.bf16 %v55, %v49
    %v170 = vpack.c.bf16 %v56, %v50
    %v171 = vpack.c.bf16 %v63, %v57
    %v172 = vpack.c.bf16 %v64, %v58
    %v173 = vpack.c.bf16 %v65, %v59
    %v174 = vpack.c.bf16 %v66, %v60
    %v175 = vpack.c.bf16 %v67, %v61
    %v176 = vpack.c.bf16 %v68, %v62
    %v177 = vpack.c.bf16 %v70, %v69
    %v178 = vpack.c.bf16 %v72, %v71
    %v179 = vpack.c.bf16 %v74, %v73
    %v180 = vpack.c.bf16 %v76, %v75
    %v181 = vpack.c.bf16 %v78, %v77
    %v182 = vpack.c.bf16 %v80, %v79
    %v183 = vpack.c.bf16 %v82, %v81
    %v184 = vpack.c.bf16 %v84, %v83
    %v185 = vpack.c.bf16 %v86, %v85
    %v186 = vpack.c.bf16 %v88, %v87
    %v187 = vpack.c.bf16 %v90, %v89
    %v188 = vpack.c.bf16 %v92, %v91
    %v189 = vpack.c.bf16 %v94, %v93
    %v190 = vpack.c.bf16 %v96, %v95
    %v191 = vpack.c.bf16 %v98, %v97
    %v192 = vpack.c.bf16 %v100, %v99
    %v193 = vpack.c.bf16 %v102, %v101
    %v194 = vpack.c.bf16 %v104, %v103
    %v195 = vpack.c.bf16 %v106, %v105
    %v196 = vpack.c.bf16 %v108, %v107
    %v197 = vpack.c.bf16 %v110, %v109
    %v198 = vpack.c.bf16 %v112, %v111
    %v199 = vpack.c.bf16 %v114, %v113
    %v200 = vpack.c.bf16 %v116, %v115
    %v201 = vpack.c.bf16 %v118, %v117
    %v202 = vpack.c.bf16 %v120, %v119
    %v203 = vpack.c.bf16 %v122, %v121
    %v204 = vpack.c.bf16 %v124, %v123
    %v205 = vpack.c.bf16 %v126, %v125
    %v206 = vpack.c.bf16 %v128, %v127
    %v207 = vpack.c.bf16 %v130, %v129
    %v208 = vpack.c.bf16 %v132, %v131
    %v209 = vpack.c.bf16 %v134, %v133
    %v210 = vpack.c.bf16 %v136, %v135
    %v211 = vpack.c.bf16 %v138, %v137
    %v212 = vpack.c.bf16 %v140, %v139
    %v213 = vpack.c.bf16 %v142, %v141
    %v214 = vpack.c.bf16 %v144, %v143
    %v215 = vpack.c.bf16 %v146, %v145
    %v216 = vpack.c.bf16 %v148, %v147
    %v217 = vpack.c.bf16 %v150, %v149
    %v218 = vpack.c.bf16 %v152, %v151
    %v219 = vpack.c.bf16 %v154, %v153
    %v220 = vpack.c.bf16 %v156, %v155
    %v221 = vpack.c.bf16 %v158, %v157
    %v222 = vpack.c.bf16 %v160, %v159
    %v223 = vpack.c.bf16 %v162, %v161
    %v224 = vpack.c.bf16 %v164, %v163
    %v225 = vld [vmem:[#allocation2] sm:$0x1]
    %v227 = vlaneseq
    %v228 = vshrl.u32 %v227, 7
    %v229 = vsub.s32 0, %v228
    %v230 = vrot.slane %v225, %v229
    %232 = vmatprep.subr.bf16.mxu0 0
    %233 = vmatpush1.bf16.msra.mxu0 %v177
    %234 = vmatprep.subr.bf16.mxu0 0
    %235 = vmatpush1.bf16.msra.mxu0 %v178
    %236 = vmatprep.subr.bf16.mxu0 0
    %237 = vmatpush1.bf16.msra.mxu0 %v179
    %238 = vmatprep.subr.bf16.mxu0 0
    %239 = vmatpush1.bf16.msra.mxu0 %v180
    %240 = vmatprep.subr.bf16.mxu0 0
    %241 = vmatpush1.bf16.msra.mxu0 %v181
    %242 = vmatprep.subr.bf16.mxu0 0
    %243 = vmatpush1.bf16.msra.mxu0 %v182
    %244 = vmatprep.subr.bf16.mxu0 0
    %245 = vmatpush1.bf16.msra.mxu0 %v183
    %246 = vmatprep.subr.bf16.mxu0 0
    %247 = vmatpush1.bf16.msra.mxu0 %v184
    %248 = vmatprep.subr.bf16.mxu0 0
    %249 = vmatpush1.bf16.msra.mxu0 %v185
    %250 = vmatprep.subr.bf16.mxu0 0
    %251 = vmatpush1.bf16.msra.mxu0 %v186
    %252 = vmatprep.subr.bf16.mxu0 0
    %253 = vmatpush1.bf16.msra.mxu0 %v187
    %254 = vmatprep.subr.bf16.mxu0 0
    %255 = vmatpush1.bf16.msra.mxu0 %v188
    %256 = vmatprep.subr.bf16.mxu0 0
    %257 = vmatpush1.bf16.msra.mxu0 %v189
    %258 = vmatprep.subr.bf16.mxu0 0
    %259 = vmatpush1.bf16.msra.mxu0 %v190
    %260 = vmatprep.subr.bf16.mxu0 0
    %261 = vmatpush1.bf16.msra.mxu0 %v191
    %262 = vmatprep.subr.bf16.mxu0 0
    %263 = vmatpush1.bf16.msra.mxu0 %v192
    %264 = vmatprep.mubr.bf16.mxu0 %v166
    %265 = vmatmul.mubr.bf16.gmra.mrb[0].mxu0 %v165
    %v266 = vpop.f32.mrb[0].mxu0
    %v267 = vadd.f32 %v230, %v266
    %v268 = vpop.f32.mrb[0].mxu0
    %v269 = vpop.f32.mrb[0].mxu0
    %v270 = vadd.f32 %v230, %v269
    %v271 = vpop.f32.mrb[0].mxu0
    %272 = vmatprep.mubr.bf16.mxu0 %v172
    %273 = vmatmul.mubr.bf16.gmra.mrb[0].mxu0 %v171
    %v274 = vpop.f32.mrb[0].mxu0
    %v275 = vadd.f32 %v230, %v274
    %v276 = vpop.f32.mrb[0].mxu0
    %v277 = vpop.f32.mrb[0].mxu0
    %v278 = vadd.f32 %v230, %v277
    %v279 = vpop.f32.mrb[0].mxu0
    %280 = vdwg.mxu0
    %281 = vmatprep.subr.bf16.mxu0 0
    %282 = vmatpush1.bf16.msra.mxu0 %v193
    %283 = vmatprep.subr.bf16.mxu0 0
    %284 = vmatpush1.bf16.msra.mxu0 %v194
    %285 = vmatprep.subr.bf16.mxu0 0
    %286 = vmatpush1.bf16.msra.mxu0 %v195
    %287 = vmatprep.subr.bf16.mxu0 0
    %288 = vmatpush1.bf16.msra.mxu0 %v196
    %289 = vmatprep.subr.bf16.mxu0 0
    %290 = vmatpush1.bf16.msra.mxu0 %v197
    %291 = vmatprep.subr.bf16.mxu0 0
    %292 = vmatpush1.bf16.msra.mxu0 %v198
    %293 = vmatprep.subr.bf16.mxu0 0
    %294 = vmatpush1.bf16.msra.mxu0 %v199
    %295 = vmatprep.subr.bf16.mxu0 0
    %296 = vmatpush1.bf16.msra.mxu0 %v200
    %297 = vmatprep.subr.bf16.mxu0 0
    %298 = vmatpush1.bf16.msra.mxu0 %v201
    %299 = vmatprep.subr.bf16.mxu0 0
    %300 = vmatpush1.bf16.msra.mxu0 %v202
    %301 = vmatprep.subr.bf16.mxu0 0
    %302 = vmatpush1.bf16.msra.mxu0 %v203
    %303 = vmatprep.subr.bf16.mxu0 0
    %304 = vmatpush1.bf16.msra.mxu0 %v204
    %305 = vmatprep.subr.bf16.mxu0 0
    %306 = vmatpush1.bf16.msra.mxu0 %v205
    %307 = vmatprep.subr.bf16.mxu0 0
    %308 = vmatpush1.bf16.msra.mxu0 %v206
    %309 = vmatprep.subr.bf16.mxu0 0
    %310 = vmatpush1.bf16.msra.mxu0 %v207
    %311 = vmatprep.subr.bf16.mxu0 0
    %312 = vmatpush1.bf16.msra.mxu0 %v208
    %313 = vmatprep.mubr.bf16.mxu0 %v168
    %314 = vmatmul.mubr.bf16.gmra.mrb[0].mxu0 %v167
    %v315 = vpop.f32.mrb[0].mxu0
    %v316 = vadd.f32 %v267, %v315
    %v317 = vpop.f32.mrb[0].mxu0
    %v318 = vpop.f32.mrb[0].mxu0
    %v319 = vadd.f32 %v270, %v318
    %v320 = vpop.f32.mrb[0].mxu0
    %321 = vmatprep.mubr.bf16.mxu0 %v174
    %322 = vmatmul.mubr.bf16.gmra.mrb[0].mxu0 %v173
    %v323 = vpop.f32.mrb[0].mxu0
    %v324 = vadd.f32 %v275, %v323
    %v325 = vpop.f32.mrb[0].mxu0
    %v326 = vpop.f32.mrb[0].mxu0
    %v327 = vadd.f32 %v278, %v326
    %v328 = vpop.f32.mrb[0].mxu0
    %329 = vdwg.mxu0
    %330 = vmatprep.subr.bf16.mxu0 0
    %331 = vmatpush1.bf16.msra.mxu0 %v209
    %332 = vmatprep.subr.bf16.mxu0 0
    %333 = vmatpush1.bf16.msra.mxu0 %v210
    %334 = vmatprep.subr.bf16.mxu0 0
    %335 = vmatpush1.bf16.msra.mxu0 %v211
    %336 = vmatprep.subr.bf16.mxu0 0
    %337 = vmatpush1.bf16.msra.mxu0 %v212
    %338 = vmatprep.subr.bf16.mxu0 0
    %339 = vmatpush1.bf16.msra.mxu0 %v213
    %340 = vmatprep.subr.bf16.mxu0 0
    %341 = vmatpush1.bf16.msra.mxu0 %v214
    %342 = vmatprep.subr.bf16.mxu0 0
    %343 = vmatpush1.bf16.msra.mxu0 %v215
    %344 = vmatprep.subr.bf16.mxu0 0
    %345 = vmatpush1.bf16.msra.mxu0 %v216
    %346 = vmatprep.subr.bf16.mxu0 0
    %347 = vmatpush1.bf16.msra.mxu0 %v217
    %348 = vmatprep.subr.bf16.mxu0 0
    %349 = vmatpush1.bf16.msra.mxu0 %v218
    %350 = vmatprep.subr.bf16.mxu0 0
    %351 = vmatpush1.bf16.msra.mxu0 %v219
    %352 = vmatprep.subr.bf16.mxu0 0
    %353 = vmatpush1.bf16.msra.mxu0 %v220
    %354 = vmatprep.subr.bf16.mxu0 0
    %355 = vmatpush1.bf16.msra.mxu0 %v221
    %356 = vmatprep.subr.bf16.mxu0 0
    %357 = vmatpush1.bf16.msra.mxu0 %v222
    %358 = vmatprep.subr.bf16.mxu0 0
    %359 = vmatpush1.bf16.msra.mxu0 %v223
    %360 = vmatprep.subr.bf16.mxu0 0
    %361 = vmatpush1.bf16.msra.mxu0 %v224
    %362 = vmatprep.mubr.bf16.mxu0 %v170
    %363 = vmatmul.mubr.bf16.gmra.mrb[0].mxu0 %v169
    %v364 = vpop.f32.mrb[0].mxu0
    %v365 = vadd.f32 %v316, %v364
    %v366 = vpop.f32.mrb[0].mxu0
    %v367 = vpop.f32.mrb[0].mxu0
    %v368 = vadd.f32 %v319, %v367
    %v369 = vpop.f32.mrb[0].mxu0
    %370 = vmatprep.mubr.bf16.mxu0 %v176
    %371 = vmatmul.mubr.bf16.gmra.mrb[0].mxu0 %v175
    %v372 = vpop.f32.mrb[0].mxu0
    %v373 = vadd.f32 %v324, %v372
    %v374 = vpop.f32.mrb[0].mxu0
    %v375 = vpop.f32.mrb[0].mxu0
    %v376 = vadd.f32 %v327, %v375
    %v377 = vpop.f32.mrb[0].mxu0
    %378 = vdwg.mxu0
    %v379 = vmax.f32 %v365, 0.0
    %v380 = vmax.f32 %v368, 0.0
    %v381 = vmax.f32 %v373, 0.0
    %v382 = vmax.f32 %v376, 0.0
    %v383 = vld [vmem:[%s3] sm:$0xff]
    %v384 = vld [vmem:[%s3 + $0x8] sm:$0xff]
    %v385 = vld [vmem:[%s3 + $0x10] sm:$0xff]
    %v386 = vld [vmem:[%s3 + $0x18] sm:$0xff]
    %v387 = vld [vmem:[%s3 + $0x20] sm:$0xff]
    %v388 = vld [vmem:[%s3 + $0x28] sm:$0xff]
    %v389 = vld [vmem:[%s3 + $0x30] sm:$0xff]
    %v390 = vld [vmem:[%s3 + $0x38] sm:$0xff]
    %v391 = vpack.c.bf16 %v380, %v379
    %v392 = vpack.c.bf16 %v382, %v381
    %v393 = vpack.c.bf16 %v384, %v383
    %v394 = vpack.c.bf16 %v386, %v385
    %v395 = vpack.c.bf16 %v388, %v387
    %v396 = vpack.c.bf16 %v390, %v389
    %v397 = vld [vmem:[#allocation4] sm:$0x1]
    %v399 = vlaneseq
    %v400 = vshrl.u32 %v399, 7
    %v401 = vsub.s32 0, %v400
    %v402 = vrot.slane %v397, %v401
    %vm404 = vcmask 523264
    %v406 = vsel %vm404, %v391, 0
    %v409 = vsel %vm404, %v392, 0
    %411 = vmatprep.subr.bf16.mxu0 0
    %412 = vmatpush1.bf16.msra.mxu0 %v393
    %413 = vmatprep.subr.bf16.mxu0 0
    %414 = vmatpush1.bf16.msra.mxu0 %v394
    %415 = vmatprep.subr.bf16.mxu0 0
    %416 = vmatpush1.bf16.msra.mxu0 %v395
    %417 = vmatprep.subr.bf16.mxu0 0
    %418 = vmatpush1.bf16.msra.mxu0 %v396
    %419 = vmatprep.subr.bf16.mxu0 0
    %420 = vmatpush1.bf16.msra.mxu0 0
    %421 = vmatprep.subr.bf16.mxu0 0
    %422 = vmatpush1.bf16.msra.mxu0 0
    %423 = vmatprep.subr.bf16.mxu0 0
    %424 = vmatpush1.bf16.msra.mxu0 0
    %425 = vmatprep.subr.bf16.mxu0 0
    %426 = vmatpush1.bf16.msra.mxu0 0
    %427 = vmatprep.subr.bf16.mxu0 0
    %428 = vmatpush1.bf16.msra.mxu0 0
    %429 = vmatprep.subr.bf16.mxu0 0
    %430 = vmatpush1.bf16.msra.mxu0 0
    %431 = vmatprep.subr.bf16.mxu0 0
    %432 = vmatpush1.bf16.msra.mxu0 0
    %433 = vmatprep.subr.bf16.mxu0 0
    %434 = vmatpush1.bf16.msra.mxu0 0
    %435 = vmatprep.subr.bf16.mxu0 0
    %436 = vmatpush1.bf16.msra.mxu0 0
    %437 = vmatprep.subr.bf16.mxu0 0
    %438 = vmatpush1.bf16.msra.mxu0 0
    %439 = vmatprep.subr.bf16.mxu0 0
    %440 = vmatpush1.bf16.msra.mxu0 0
    %441 = vmatprep.subr.bf16.mxu0 0
    %442 = vmatpush1.bf16.msra.mxu0 0
    %443 = vmatprep.mubr.bf16.mxu0 0
    %444 = vmatmul.mubr.bf16.gmra.mrb[0].mxu0 %v406
    %v445 = vpop.f32.mrb[0].mxu0
    %v446 = vadd.f32 %v402, %v445
    %v447 = vpop.f32.mrb[0].mxu0
    %v448 = vpop.f32.mrb[0].mxu0
    %v449 = vadd.f32 %v402, %v448
    %v450 = vpop.f32.mrb[0].mxu0
    %451 = vmatprep.mubr.bf16.mxu0 0
    %452 = vmatmul.mubr.bf16.gmra.mrb[0].mxu0 %v409
    %v453 = vpop.f32.mrb[0].mxu0
    %v454 = vadd.f32 %v402, %v453
    %v455 = vpop.f32.mrb[0].mxu0
    %v456 = vpop.f32.mrb[0].mxu0
    %v457 = vadd.f32 %v402, %v456
    %v458 = vpop.f32.mrb[0].mxu0
    %459 = vdwg.mxu0
    %vm460 = vcmask 261120
    %461 = vst.msk [vmem:[%s5] sm:$0xff] %vm460, %v446
    %462 = vst.msk [vmem:[%s5 + $0x8] sm:$0xff] %vm460, %v449
    %463 = vst.msk [vmem:[%s5 + $0x10] sm:$0xff] %vm460, %v454
    %464 = vst.msk [vmem:[%s5 + $0x18] sm:$0xff] %vm460, %v457
    // Predicated region
    $region30: #{detr_forward.3} parent=1 // pred_check
      _
    $region31: #{detr_forward.3} parent=1 // pred_check_branch
      %466 = sbr.rel (0) target = $region33
    $region32: #{detr_forward.3} parent=1 // pred_region
      _
    $region33: #{detr_forward.3} parent=1 // pred_fallthru
      _
    // Predicated region
    $region34: #{detr_forward.3} parent=1 // pred_check
      _
    $region35: #{detr_forward.3} parent=1 // pred_check_branch
      %468 = sbr.rel (0) target = $region37
    $region36: #{detr_forward.3} parent=1 // pred_region
      _
    $region37: #{detr_forward.3} parent=1 // pred_fallthru
      _
    %469 = vsyncpa [#allocation3], 1
    %470 = vsyncpa [#allocation5], 1

// kernel: detr_forward.4
$region0: #{detr_forward.4}
  #allocation0 [shape = 'u32[]', space=smem, size = 0x4, offset = 0x4, fixed_abs, tag = 'smem constant byte address 0x4 - core index']
  #allocation1 [shape = 'u32[144,128]{1,0:T(1,128)}', space=vmem, size = 0x12000, scoped, tag = 'internal scratch']
  %s0 = inlined_call_operand.vmem [shape: f32[2,16,32], index: 0, kind: input, shape index: {}]
  %s1 = inlined_call_operand.vmem [shape: f32[2,16,32], index: 1, kind: input, shape index: {}]
  %s2 = inlined_call_operand.vmem [shape: f32[2,16], index: 2, kind: input, shape index: {}]
  %s3 = inlined_call_operand.vmem [shape: f32[32,64], index: 3, kind: input, shape index: {}]
  %s4 = inlined_call_operand.vmem [shape: f32[1,64], index: 4, kind: input, shape index: {}]
  %s5 = inlined_call_operand.vmem [shape: f32[32,32], index: 5, kind: input, shape index: {}]
  %s6 = inlined_call_operand.vmem [shape: f32[1,32], index: 6, kind: input, shape index: {}]
  %s7 = inlined_call_operand.vmem [shape: f32[32,32], index: 7, kind: input, shape index: {}]
  %s8 = inlined_call_operand.vmem [shape: f32[1,32], index: 8, kind: input, shape index: {}]
  %s9 = inlined_call_operand.vmem [shape: f32[1,32], index: 9, kind: input, shape index: {}]
  %s10 = inlined_call_operand.vmem [shape: f32[1,32], index: 10, kind: input, shape index: {}]
  %s11 = inlined_call_operand.vmem [shape: f32[32,64], index: 11, kind: input, shape index: {}]
  %s12 = inlined_call_operand.vmem [shape: f32[1,64], index: 12, kind: input, shape index: {}]
  %s13 = inlined_call_operand.vmem [shape: f32[64,32], index: 13, kind: input, shape index: {}]
  %s14 = inlined_call_operand.vmem [shape: f32[1,32], index: 14, kind: input, shape index: {}]
  %s15 = inlined_call_operand.vmem [shape: f32[1,32], index: 15, kind: input, shape index: {}]
  %s16 = inlined_call_operand.vmem [shape: f32[1,32], index: 16, kind: input, shape index: {}]
  %s17 = inlined_call_operand.vmem [shape: f32[2,16,32], index: 17, kind: output, shape index: {}]
  %s18 = sld [smem:[#allocation0]]
  $region78: #{detr_forward.4} parent=0
    _
  %s20 = ssub.s32 1, %s18
  %s21 = scalar_select 0, %s20, %s18
  // Predicated region
  $region2: #{detr_forward.4} parent=0 // pred_check
    _
  $region3: #{detr_forward.4} parent=0 // pred_check_branch
    %23 = sbr.rel (0) target = $region5
  $region4: #{detr_forward.4} parent=0 // pred_region
    _
  $region5: #{detr_forward.4} parent=0 // pred_fallthru
    _
  // Predicated region
  $region6: #{detr_forward.4} parent=0 // pred_check
    _
  $region7: #{detr_forward.4} parent=0 // pred_check_branch
    %25 = sbr.rel (0) target = $region9
  $region8: #{detr_forward.4} parent=0 // pred_region
    _
  $region9: #{detr_forward.4} parent=0 // pred_fallthru
    _
  // Predicated region
  $region10: #{detr_forward.4} parent=0 // pred_check
    _
  $region11: #{detr_forward.4} parent=0 // pred_check_branch
    %27 = sbr.rel (0) target = $region13
  $region12: #{detr_forward.4} parent=0 // pred_region
    _
  $region13: #{detr_forward.4} parent=0 // pred_fallthru
    _
  // Predicated region
  $region14: #{detr_forward.4} parent=0 // pred_check
    _
  $region15: #{detr_forward.4} parent=0 // pred_check_branch
    %29 = sbr.rel (0) target = $region17
  $region16: #{detr_forward.4} parent=0 // pred_region
    _
  $region17: #{detr_forward.4} parent=0 // pred_fallthru
    _
  // Predicated region
  $region18: #{detr_forward.4} parent=0 // pred_check
    _
  $region19: #{detr_forward.4} parent=0 // pred_check_branch
    %31 = sbr.rel (0) target = $region21
  $region20: #{detr_forward.4} parent=0 // pred_region
    _
  $region21: #{detr_forward.4} parent=0 // pred_fallthru
    _
  // Predicated region
  $region22: #{detr_forward.4} parent=0 // pred_check
    _
  $region23: #{detr_forward.4} parent=0 // pred_check_branch
    %33 = sbr.rel (0) target = $region25
  $region24: #{detr_forward.4} parent=0 // pred_region
    _
  $region25: #{detr_forward.4} parent=0 // pred_fallthru
    _
  // Predicated region
  $region26: #{detr_forward.4} parent=0 // pred_check
    _
  $region27: #{detr_forward.4} parent=0 // pred_check_branch
    %35 = sbr.rel (0) target = $region29
  $region28: #{detr_forward.4} parent=0 // pred_region
    _
  $region29: #{detr_forward.4} parent=0 // pred_fallthru
    _
  // Predicated region
  $region30: #{detr_forward.4} parent=0 // pred_check
    _
  $region31: #{detr_forward.4} parent=0 // pred_check_branch
    %37 = sbr.rel (0) target = $region33
  $region32: #{detr_forward.4} parent=0 // pred_region
    _
  $region33: #{detr_forward.4} parent=0 // pred_fallthru
    _
  // Predicated region
  $region34: #{detr_forward.4} parent=0 // pred_check
    _
  $region35: #{detr_forward.4} parent=0 // pred_check_branch
    %39 = sbr.rel (0) target = $region37
  $region36: #{detr_forward.4} parent=0 // pred_region
    _
  $region37: #{detr_forward.4} parent=0 // pred_fallthru
    _
  // Predicated region
  $region38: #{detr_forward.4} parent=0 // pred_check
    _
  $region39: #{detr_forward.4} parent=0 // pred_check_branch
    %41 = sbr.rel (0) target = $region41
  $region40: #{detr_forward.4} parent=0 // pred_region
    _
  $region41: #{detr_forward.4} parent=0 // pred_fallthru
    _
  // Predicated region
  $region42: #{detr_forward.4} parent=0 // pred_check
    _
  $region43: #{detr_forward.4} parent=0 // pred_check_branch
    %43 = sbr.rel (0) target = $region45
  $region44: #{detr_forward.4} parent=0 // pred_region
    _
  $region45: #{detr_forward.4} parent=0 // pred_fallthru
    _
  // Predicated region
  $region46: #{detr_forward.4} parent=0 // pred_check
    _
  $region47: #{detr_forward.4} parent=0 // pred_check_branch
    %45 = sbr.rel (0) target = $region49
  $region48: #{detr_forward.4} parent=0 // pred_region
    _
  $region49: #{detr_forward.4} parent=0 // pred_fallthru
    _
  // Predicated region
  $region50: #{detr_forward.4} parent=0 // pred_check
    _
  $region51: #{detr_forward.4} parent=0 // pred_check_branch
    %47 = sbr.rel (0) target = $region53
  $region52: #{detr_forward.4} parent=0 // pred_region
    _
  $region53: #{detr_forward.4} parent=0 // pred_fallthru
    _
  // Predicated region
  $region54: #{detr_forward.4} parent=0 // pred_check
    _
  $region55: #{detr_forward.4} parent=0 // pred_check_branch
    %49 = sbr.rel (0) target = $region57
  $region56: #{detr_forward.4} parent=0 // pred_region
    _
  $region57: #{detr_forward.4} parent=0 // pred_fallthru
    _
  // Predicated region
  $region58: #{detr_forward.4} parent=0 // pred_check
    _
  $region59: #{detr_forward.4} parent=0 // pred_check_branch
    %51 = sbr.rel (0) target = $region61
  $region60: #{detr_forward.4} parent=0 // pred_region
    _
  $region61: #{detr_forward.4} parent=0 // pred_fallthru
    _
  // Predicated region
  $region62: #{detr_forward.4} parent=0 // pred_check
    _
  $region63: #{detr_forward.4} parent=0 // pred_check_branch
    %53 = sbr.rel (0) target = $region65
  $region64: #{detr_forward.4} parent=0 // pred_region
    _
  $region65: #{detr_forward.4} parent=0 // pred_fallthru
    _
  // Predicated region
  $region66: #{detr_forward.4} parent=0 // pred_check
    _
  $region67: #{detr_forward.4} parent=0 // pred_check_branch
    %55 = sbr.rel (0) target = $region69
  $region68: #{detr_forward.4} parent=0 // pred_region
    _
  $region69: #{detr_forward.4} parent=0 // pred_fallthru
    _
  %v57 = vld [vmem:[%s0] sm:$0xff]
  %v58 = vld [vmem:[%s0 + $0x8] sm:$0xff]
  %v59 = vld [vmem:[%s0 + $0x10] sm:$0xff]
  %v60 = vld [vmem:[%s0 + $0x18] sm:$0xff]
  %v61 = vld [vmem:[%s1] sm:$0xff]
  %v62 = vld [vmem:[%s1 + $0x8] sm:$0xff]
  %v63 = vld [vmem:[%s1 + $0x10] sm:$0xff]
  %v64 = vld [vmem:[%s1 + $0x18] sm:$0xff]
  %v65 = vadd.f32 %v57, %v61
  %v66 = vadd.f32 %v58, %v62
  %v67 = vadd.f32 %v59, %v63
  %v68 = vadd.f32 %v60, %v64
  %v69 = vld [vmem:[%s3] sm:$0xff]
  %v70 = vld [vmem:[%s3 + $0x8] sm:$0xff]
  %v71 = vld [vmem:[%s3 + $0x10] sm:$0xff]
  %v72 = vld [vmem:[%s3 + $0x18] sm:$0xff]
  %v73 = vpack.c.bf16 %v66, %v65
  %v74 = vpack.c.bf16 %v68, %v67
  %v75 = vpack.c.bf16 %v70, %v69
  %v76 = vpack.c.bf16 %v72, %v71
  %v77 = vld [vmem:[%s4] sm:$0x1]
  %v79 = vlaneseq
  %v80 = vshrl.u32 %v79, 7
  %v81 = vsub.s32 0, %v80
  %v82 = vrot.slane %v77, %v81
  %vm84 = vcmask 261120
  %v86 = vsel %vm84, %v73, 0
  %v89 = vsel %vm84, %v74, 0
  %91 = vmatprep.subr.bf16.mxu0 0
  %92 = vmatpush1.bf16.msra.mxu0 %v75
  %93 = vmatprep.subr.bf16.mxu0 0
  %94 = vmatpush1.bf16.msra.mxu0 %v76
  %95 = vmatprep.subr.bf16.mxu0 0
  %96 = vmatpush1.bf16.msra.mxu0 0
  %97 = vmatprep.subr.bf16.mxu0 0
  %98 = vmatpush1.bf16.msra.mxu0 0
  %99 = vmatprep.subr.bf16.mxu0 0
  %100 = vmatpush1.bf16.msra.mxu0 0
  %101 = vmatprep.subr.bf16.mxu0 0
  %102 = vmatpush1.bf16.msra.mxu0 0
  %103 = vmatprep.subr.bf16.mxu0 0
  %104 = vmatpush1.bf16.msra.mxu0 0
  %105 = vmatprep.subr.bf16.mxu0 0
  %106 = vmatpush1.bf16.msra.mxu0 0
  %107 = vmatprep.subr.bf16.mxu0 0
  %108 = vmatpush1.bf16.msra.mxu0 0
  %109 = vmatprep.subr.bf16.mxu0 0
  %110 = vmatpush1.bf16.msra.mxu0 0
  %111 = vmatprep.subr.bf16.mxu0 0
  %112 = vmatpush1.bf16.msra.mxu0 0
  %113 = vmatprep.subr.bf16.mxu0 0
  %114 = vmatpush1.bf16.msra.mxu0 0
  %115 = vmatprep.subr.bf16.mxu0 0
  %116 = vmatpush1.bf16.msra.mxu0 0
  %117 = vmatprep.subr.bf16.mxu0 0
  %118 = vmatpush1.bf16.msra.mxu0 0
  %119 = vmatprep.subr.bf16.mxu0 0
  %120 = vmatpush1.bf16.msra.mxu0 0
  %121 = vmatprep.subr.bf16.mxu0 0
  %122 = vmatpush1.bf16.msra.mxu0 0
  %123 = vmatprep.mubr.bf16.mxu0 0
  %124 = vmatmul.mubr.bf16.gmra.mrb[0].mxu0 %v86
  %v125 = vpop.f32.mrb[0].mxu0
  %v126 = vadd.f32 %v82, %v125
  %v127 = vpop.f32.mrb[0].mxu0
  %v128 = vpop.f32.mrb[0].mxu0
  %v129 = vadd.f32 %v82, %v128
  %v130 = vpop.f32.mrb[0].mxu0
  %131 = vmatprep.mubr.bf16.mxu0 0
  %132 = vmatmul.mubr.bf16.gmra.mrb[0].mxu0 %v89
  %v133 = vpop.f32.mrb[0].mxu0
  %v134 = vadd.f32 %v82, %v133
  %v135 = vpop.f32.mrb[0].mxu0
  %v136 = vpop.f32.mrb[0].mxu0
  %v137 = vadd.f32 %v82, %v136
  %v138 = vpop.f32.mrb[0].mxu0
  %139 = vdwg.mxu0
  %v140 = vld [vmem:[%s5] sm:$0xff]
  %v141 = vld [vmem:[%s5 + $0x8] sm:$0xff]
  %v142 = vld [vmem:[%s5 + $0x10] sm:$0xff]
  %v143 = vld [vmem:[%s5 + $0x18] sm:$0xff]
  %v144 = vpack.c.bf16 %v58, %v57
  %v145 = vpack.c.bf16 %v60, %v59
  %v146 = vpack.c.bf16 %v141, %v140
  %v147 = vpack.c.bf16 %v143, %v142
  %v148 = vld [vmem:[%s6] sm:$0x1]
  %v150 = vlaneseq
  %v151 = vshrl.u32 %v150, 7
  %v152 = vsub.s32 0, %v151
  %v153 = vrot.slane %v148, %v152
  %v156 = vsel %vm84, %v144, 0
  %v159 = vsel %vm84, %v145, 0
  %161 = vmatprep.subr.bf16.mxu0 0
  %162 = vmatpush1.bf16.msra.mxu0 %v146
  %163 = vmatprep.subr.bf16.mxu0 0
  %164 = vmatpush1.bf16.msra.mxu0 %v147
  %165 = vmatprep.subr.bf16.mxu0 0
  %166 = vmatpush1.bf16.msra.mxu0 0
  %167 = vmatprep.subr.bf16.mxu0 0
  %168 = vmatpush1.bf16.msra.mxu0 0
  %169 = vmatprep.subr.bf16.mxu0 0
  %170 = vmatpush1.bf16.msra.mxu0 0
  %171 = vmatprep.subr.bf16.mxu0 0
  %172 = vmatpush1.bf16.msra.mxu0 0
  %173 = vmatprep.subr.bf16.mxu0 0
  %174 = vmatpush1.bf16.msra.mxu0 0
  %175 = vmatprep.subr.bf16.mxu0 0
  %176 = vmatpush1.bf16.msra.mxu0 0
  %177 = vmatprep.subr.bf16.mxu0 0
  %178 = vmatpush1.bf16.msra.mxu0 0
  %179 = vmatprep.subr.bf16.mxu0 0
  %180 = vmatpush1.bf16.msra.mxu0 0
  %181 = vmatprep.subr.bf16.mxu0 0
  %182 = vmatpush1.bf16.msra.mxu0 0
  %183 = vmatprep.subr.bf16.mxu0 0
  %184 = vmatpush1.bf16.msra.mxu0 0
  %185 = vmatprep.subr.bf16.mxu0 0
  %186 = vmatpush1.bf16.msra.mxu0 0
  %187 = vmatprep.subr.bf16.mxu0 0
  %188 = vmatpush1.bf16.msra.mxu0 0
  %189 = vmatprep.subr.bf16.mxu0 0
  %190 = vmatpush1.bf16.msra.mxu0 0
  %191 = vmatprep.subr.bf16.mxu0 0
  %192 = vmatpush1.bf16.msra.mxu0 0
  %193 = vmatprep.mubr.bf16.mxu0 0
  %194 = vmatmul.mubr.bf16.gmra.mrb[0].mxu0 %v156
  %v195 = vpop.f32.mrb[0].mxu0
  %v196 = vadd.f32 %v153, %v195
  %v197 = vpop.f32.mrb[0].mxu0
  %v198 = vpop.f32.mrb[0].mxu0
  %v199 = vadd.f32 %v153, %v198
  %v200 = vpop.f32.mrb[0].mxu0
  %201 = vmatprep.mubr.bf16.mxu0 0
  %202 = vmatmul.mubr.bf16.gmra.mrb[0].mxu0 %v159
  %v203 = vpop.f32.mrb[0].mxu0
  %v204 = vadd.f32 %v153, %v203
  %v205 = vpop.f32.mrb[0].mxu0
  %v206 = vpop.f32.mrb[0].mxu0
  %v207 = vadd.f32 %v153, %v206
  %v208 = vpop.f32.mrb[0].mxu0
  %209 = vdwg.mxu0
  %v210 = vld [vmem:[%s2] sm:$0x3]
  %vm211 = vcmp.gt.f32.partialorder %v210, 0.0
  %v212 = vsel %vm211, 0.0, -1e+09
  %v215 = vunpack.c.l.s4 1966171168
  %v216 = vunpack.c.0.s8 %v215
  %v217 = vlaneseq
  %v218 = vshrl.u32 %v217, 7
  %v219 = vsub.s32 %v216, %v218
  %v220 = vrot.slane %v212, %v219
  %v221 = vcombine.high %v220, %v220
  %v223 = vunpack.c.l.s4 1966171168
  %v224 = vunpack.c.0.s8 %v223
  %v225 = vlaneseq
  %v226 = vshrl.u32 %v225, 7
  %v227 = vsub.s32 %v224, %v226
  %v228 = vrot.slane %v220, %v227
  %v230 = vunpack.c.l.s4 1966171168
  %v231 = vunpack.c.0.s8 %v230
  %v232 = vlaneseq
  %v233 = vshrl.u32 %v232, 7
  %v234 = vsub.s32 %v231, %v233
  %v235 = vrot.slane %v221, %v234
  %238 = vrot.lane.b32.xlu0 %v126, 96
  %v239 = vpop.permute.xlu0 %238
  %240 = vrot.lane.b32.xlu0 %v129, 96
  %v241 = vpop.permute.xlu0 %240
  %vm242 = vcmask 64512
  %v243 = vsel %vm242, %v126, 0
  %v245 = vsel %vm242, %v129, 0
  %v247 = vsel %vm242, %v239, 0
  %v249 = vsel %vm242, %v241, 0
  %251 = vmatprep.subr.mxu0 0.0
  %252 = vmatpush1.xpose.msra.mxu0 %v247
  %253 = vmatprep.subr.mxu0 0.0
  %254 = vmatpush1.xpose.msra.mxu0 %v249
  %255 = vmatprep.subr.mxu0 0.0
  %256 = vmatpush1.xpose.msra.mxu0 0.0
  %257 = vmatprep.subr.mxu0 0.0
  %258 = vmatpush1.xpose.msra.mxu0 0.0
  %259 = vmatprep.subr.mxu0 0.0
  %260 = vmatpush1.xpose.msra.mxu0 0.0
  %261 = vmatprep.subr.mxu0 0.0
  %262 = vmatpush1.xpose.msra.mxu0 0.0
  %263 = vmatprep.subr.mxu0 0.0
  %264 = vmatpush1.xpose.msra.mxu0 0.0
  %265 = vmatprep.subr.mxu0 0.0
  %266 = vmatpush1.xpose.msra.mxu0 0.0
  %267 = vmatprep.subr.mxu0 0.0
  %268 = vmatpush1.xpose.msra.mxu0 0.0
  %269 = vmatprep.subr.mxu0 0.0
  %270 = vmatpush1.xpose.msra.mxu0 0.0
  %271 = vmatprep.subr.mxu0 0.0
  %272 = vmatpush1.xpose.msra.mxu0 0.0
  %273 = vmatprep.subr.mxu0 0.0
  %274 = vmatpush1.xpose.msra.mxu0 0.0
  %275 = vmatprep.subr.mxu0 0.0
  %276 = vmatpush1.xpose.msra.mxu0 0.0
  %277 = vmatprep.subr.mxu0 0.0
  %278 = vmatpush1.xpose.msra.mxu0 0.0
  %279 = vmatprep.subr.mxu0 0.0
  %280 = vmatpush1.xpose.msra.mxu0 0.0
  %281 = vmatprep.subr.mxu0 0.0
  %282 = vmatpush1.xpose.msra.mxu0 0.0
  %283 = vmatprep.subr.mxu0 0.0
  %284 = vmatpush1.xpose.msra.mxu0 0.0
  %285 = vmatprep.subr.mxu0 0.0
  %286 = vmatpush1.xpose.msra.mxu0 0.0
  %287 = vmatprep.subr.mxu0 0.0
  %288 = vmatpush1.xpose.msra.mxu0 0.0
  %289 = vmatprep.subr.mxu0 0.0
  %290 = vmatpush1.xpose.msra.mxu0 0.0
  %291 = vmatprep.subr.mxu0 0.0
  %292 = vmatpush1.xpose.msra.mxu0 0.0
  %293 = vmatprep.subr.mxu0 0.0
  %294 = vmatpush1.xpose.msra.mxu0 0.0
  %295 = vmatprep.subr.mxu0 0.0
  %296 = vmatpush1.xpose.msra.mxu0 0.0
  %297 = vmatprep.subr.mxu0 0.0
  %298 = vmatpush1.xpose.msra.mxu0 0.0
  %299 = vmatprep.subr.mxu0 0.0
  %300 = vmatpush1.xpose.msra.mxu0 0.0
  %301 = vmatprep.subr.mxu0 0.0
  %302 = vmatpush1.xpose.msra.mxu0 0.0
  %303 = vmatprep.subr.mxu0 0.0
  %304 = vmatpush1.xpose.msra.mxu0 0.0
  %305 = vmatprep.subr.mxu0 0.0
  %306 = vmatpush1.xpose.msra.mxu0 0.0
  %307 = vmatprep.subr.mxu0 0.0
  %308 = vmatpush1.xpose.msra.mxu0 0.0
  %309 = vmatprep.subr.mxu0 0.0
  %310 = vmatpush1.xpose.msra.mxu0 0.0
  %311 = vmatprep.subr.mxu0 0.0
  %312 = vmatpush1.xpose.msra.mxu0 0.0
  %313 = vmatprep.subr.mxu0 0.0
  %314 = vmatpush1.xpose.msra.mxu0 0.0
  %315 = vmatprep.mubr.f32.mxu0 0.0
  %316 = vmatmul.mubr.f32.gmra.mrb[0].mxu0 %v243
  %v317 = vpop.f32.mrb[0].mxu0
  %v318 = vadd.f32 0.0, %v317
  %v319 = vpop.f32.mrb[0].mxu0
  %320 = vmatprep.mubr.f32.mxu0 0.0
  %321 = vmatmul.mubr.f32.gmra.mrb[0].mxu0 %v245
  %v322 = vpop.f32.mrb[0].mxu0
  %v323 = vadd.f32 0.0, %v322
  %v324 = vpop.f32.mrb[0].mxu0
  %325 = vdwg.mxu0
  %328 = vrot.lane.b32.xlu0 %v134, 96
  %v329 = vpop.permute.xlu0 %328
  %330 = vrot.lane.b32.xlu0 %v137, 96
  %v331 = vpop.permute.xlu0 %330
  %v332 = vsel %vm242, %v134, 0
  %v334 = vsel %vm242, %v137, 0
  %v336 = vsel %vm242, %v329, 0
  %v338 = vsel %vm242, %v331, 0
  %340 = vmatprep.subr.mxu0 0.0
  %341 = vmatpush1.xpose.msra.mxu0 %v336
  %342 = vmatprep.subr.mxu0 0.0
  %343 = vmatpush1.xpose.msra.mxu0 %v338
  %344 = vmatprep.subr.mxu0 0.0
  %345 = vmatpush1.xpose.msra.mxu0 0.0
  %346 = vmatprep.subr.mxu0 0.0
  %347 = vmatpush1.xpose.msra.mxu0 0.0
  %348 = vmatprep.subr.mxu0 0.0
  %349 = vmatpush1.xpose.msra.mxu0 0.0
  %350 = vmatprep.subr.mxu0 0.0
  %351 = vmatpush1.xpose.msra.mxu0 0.0
  %352 = vmatprep.subr.mxu0 0.0
  %353 = vmatpush1.xpose.msra.mxu0 0.0
  %354 = vmatprep.subr.mxu0 0.0
  %355 = vmatpush1.xpose.msra.mxu0 0.0
  %356 = vmatprep.subr.mxu0 0.0
  %357 = vmatpush1.xpose.msra.mxu0 0.0
  %358 = vmatprep.subr.mxu0 0.0
  %359 = vmatpush1.xpose.msra.mxu0 0.0
  %360 = vmatprep.subr.mxu0 0.0
  %361 = vmatpush1.xpose.msra.mxu0 0.0
  %362 = vmatprep.subr.mxu0 0.0
  %363 = vmatpush1.xpose.msra.mxu0 0.0
  %364 = vmatprep.subr.mxu0 0.0
  %365 = vmatpush1.xpose.msra.mxu0 0.0
  %366 = vmatprep.subr.mxu0 0.0
  %367 = vmatpush1.xpose.msra.mxu0 0.0
  %368 = vmatprep.subr.mxu0 0.0
  %369 = vmatpush1.xpose.msra.mxu0 0.0
  %370 = vmatprep.subr.mxu0 0.0
  %371 = vmatpush1.xpose.msra.mxu0 0.0
  %372 = vmatprep.subr.mxu0 0.0
  %373 = vmatpush1.xpose.msra.mxu0 0.0
  %374 = vmatprep.subr.mxu0 0.0
  %375 = vmatpush1.xpose.msra.mxu0 0.0
  %376 = vmatprep.subr.mxu0 0.0
  %377 = vmatpush1.xpose.msra.mxu0 0.0
  %378 = vmatprep.subr.mxu0 0.0
  %379 = vmatpush1.xpose.msra.mxu0 0.0
  %380 = vmatprep.subr.mxu0 0.0
  %381 = vmatpush1.xpose.msra.mxu0 0.0
  %382 = vmatprep.subr.mxu0 0.0
  %383 = vmatpush1.xpose.msra.mxu0 0.0
  %384 = vmatprep.subr.mxu0 0.0
  %385 = vmatpush1.xpose.msra.mxu0 0.0
  %386 = vmatprep.subr.mxu0 0.0
  %387 = vmatpush1.xpose.msra.mxu0 0.0
  %388 = vmatprep.subr.mxu0 0.0
  %389 = vmatpush1.xpose.msra.mxu0 0.0
  %390 = vmatprep.subr.mxu0 0.0
  %391 = vmatpush1.xpose.msra.mxu0 0.0
  %392 = vmatprep.subr.mxu0 0.0
  %393 = vmatpush1.xpose.msra.mxu0 0.0
  %394 = vmatprep.subr.mxu0 0.0
  %395 = vmatpush1.xpose.msra.mxu0 0.0
  %396 = vmatprep.subr.mxu0 0.0
  %397 = vmatpush1.xpose.msra.mxu0 0.0
  %398 = vmatprep.subr.mxu0 0.0
  %399 = vmatpush1.xpose.msra.mxu0 0.0
  %400 = vmatprep.subr.mxu0 0.0
  %401 = vmatpush1.xpose.msra.mxu0 0.0
  %402 = vmatprep.subr.mxu0 0.0
  %403 = vmatpush1.xpose.msra.mxu0 0.0
  %404 = vmatprep.mubr.f32.mxu0 0.0
  %405 = vmatmul.mubr.f32.gmra.mrb[0].mxu0 %v332
  %v406 = vpop.f32.mrb[0].mxu0
  %v407 = vadd.f32 0.0, %v406
  %v408 = vpop.f32.mrb[0].mxu0
  %409 = vmatprep.mubr.f32.mxu0 0.0
  %410 = vmatmul.mubr.f32.gmra.mrb[0].mxu0 %v334
  %v411 = vpop.f32.mrb[0].mxu0
  %v412 = vadd.f32 0.0, %v411
  %v413 = vpop.f32.mrb[0].mxu0
  %414 = vdwg.mxu0
  %v415 = vmul.f32 %v318, 0.35355338
  %v416 = vmul.f32 %v323, 0.35355338
  %v417 = vmul.f32 %v407, 0.35355338
  %v418 = vmul.f32 %v412, 0.35355338
  %v419 = vlaneseq
  %v420 = vshrl.u32 %v419, 7
  %v421 = vsub.s32 0, %v420
  %v422 = vrot.slane %v228, %v421
  %v423 = vlaneseq
  %v424 = vshrl.u32 %v423, 7
  %v425 = vsub.s32 0, %v424
  %v426 = vrot.slane %v235, %v425
  %v429 = vadd.f32 %v415, %v422
  %v430 = vadd.f32 %v416, %v422
  %v431 = vadd.f32 %v417, %v426
  %v432 = vadd.f32 %v418, %v426
  %vm433 = vcmask 130048
  %v434 = vsel %vm433, %v429, -inf
  %435 = vmax.xlane.f32.xlu0 %v434
  %v436 = vpop.xlane.xlu0 %435
  %v437 = vsel %vm433, %v430, -inf
  %438 = vmax.xlane.f32.xlu0 %v437
  %v439 = vpop.xlane.xlu0 %438
  %v440 = vsel %vm433, %v431, -inf
  %441 = vmax.xlane.f32.xlu0 %v440
  %v442 = vpop.xlane.xlu0 %441
  %v443 = vsel %vm433, %v432, -inf
  %444 = vmax.xlane.f32.xlu0 %v443
  %v445 = vpop.xlane.xlu0 %444
  %v446 = vsub.f32 %v429, %v436
  %v447 = vsub.f32 %v430, %v439
  %v448 = vsub.f32 %v431, %v442
  %v449 = vsub.f32 %v432, %v445
  %v450 = vmul.f32 %v446, 1.442695
  %v451 = vpow.pop %v450
  %v452 = vmul.f32 %v447, 1.442695
  %v453 = vpow.pop %v452
  %v454 = vmul.f32 %v448, 1.442695
  %v455 = vpow.pop %v454
  %v456 = vmul.f32 %v449, 1.442695
  %v457 = vpow.pop %v456
  %v458 = vsel %vm433, %v451, 0.0
  %459 = vadd.xlane.f32.xlu0 %v458
  %v460 = vpop.xlane.xlu0 %459
  %v461 = vsel %vm433, %v453, 0.0
  %462 = vadd.xlane.f32.xlu0 %v461
  %v463 = vpop.xlane.xlu0 %462
  %v464 = vsel %vm433, %v455, 0.0
  %465 = vadd.xlane.f32.xlu0 %v464
  %v466 = vpop.xlane.xlu0 %465
  %v467 = vsel %vm433, %v457, 0.0
  %468 = vadd.xlane.f32.xlu0 %v467
  %v469 = vpop.xlane.xlu0 %468
  %v470 = vrcp.pop %v460
  %v471 = vrcp.pop %v463
  %v472 = vrcp.pop %v466
  %v473 = vrcp.pop %v469
  %v474 = vmul.f32 %v451, %v470
  %v475 = vmul.f32 %v453, %v471
  %v476 = vmul.f32 %v455, %v472
  %v477 = vmul.f32 %v457, %v473
  %v479 = vsel %vm433, %v474, 0
  %v482 = vsel %vm433, %v475, 0
  %484 = vmatprep.subr.mxu0 0.0
  %485 = vmatpush1.msra.mxu0 %v196
  %486 = vmatprep.subr.mxu0 0.0
  %487 = vmatpush1.msra.mxu0 %v199
  %488 = vmatprep.subr.mxu0 0.0
  %489 = vmatpush1.msra.mxu0 0.0
  %490 = vmatprep.subr.mxu0 0.0
  %491 = vmatpush1.msra.mxu0 0.0
  %492 = vmatprep.subr.mxu0 0.0
  %493 = vmatpush1.msra.mxu0 0.0
  %494 = vmatprep.subr.mxu0 0.0
  %495 = vmatpush1.msra.mxu0 0.0
  %496 = vmatprep.subr.mxu0 0.0
  %497 = vmatpush1.msra.mxu0 0.0
  %498 = vmatprep.subr.mxu0 0.0
  %499 = vmatpush1.msra.mxu0 0.0
  %500 = vmatprep.subr.mxu0 0.0
  %501 = vmatpush1.msra.mxu0 0.0
  %502 = vmatprep.subr.mxu0 0.0
  %503 = vmatpush1.msra.mxu0 0.0
  %504 = vmatprep.subr.mxu0 0.0
  %505 = vmatpush1.msra.mxu0 0.0
  %506 = vmatprep.subr.mxu0 0.0
  %507 = vmatpush1.msra.mxu0 0.0
  %508 = vmatprep.subr.mxu0 0.0
  %509 = vmatpush1.msra.mxu0 0.0
  %510 = vmatprep.subr.mxu0 0.0
  %511 = vmatpush1.msra.mxu0 0.0
  %512 = vmatprep.subr.mxu0 0.0
  %513 = vmatpush1.msra.mxu0 0.0
  %514 = vmatprep.subr.mxu0 0.0
  %515 = vmatpush1.msra.mxu0 0.0
  %516 = vmatprep.subr.mxu0 0.0
  %517 = vmatpush1.msra.mxu0 0.0
  %518 = vmatprep.subr.mxu0 0.0
  %519 = vmatpush1.msra.mxu0 0.0
  %520 = vmatprep.subr.mxu0 0.0
  %521 = vmatpush1.msra.mxu0 0.0
  %522 = vmatprep.subr.mxu0 0.0
  %523 = vmatpush1.msra.mxu0 0.0
  %524 = vmatprep.subr.mxu0 0.0
  %525 = vmatpush1.msra.mxu0 0.0
  %526 = vmatprep.subr.mxu0 0.0
  %527 = vmatpush1.msra.mxu0 0.0
  %528 = vmatprep.subr.mxu0 0.0
  %529 = vmatpush1.msra.mxu0 0.0
  %530 = vmatprep.subr.mxu0 0.0
  %531 = vmatpush1.msra.mxu0 0.0
  %532 = vmatprep.subr.mxu0 0.0
  %533 = vmatpush1.msra.mxu0 0.0
  %534 = vmatprep.subr.mxu0 0.0
  %535 = vmatpush1.msra.mxu0 0.0
  %536 = vmatprep.subr.mxu0 0.0
  %537 = vmatpush1.msra.mxu0 0.0
  %538 = vmatprep.subr.mxu0 0.0
  %539 = vmatpush1.msra.mxu0 0.0
  %540 = vmatprep.subr.mxu0 0.0
  %541 = vmatpush1.msra.mxu0 0.0
  %542 = vmatprep.subr.mxu0 0.0
  %543 = vmatpush1.msra.mxu0 0.0
  %544 = vmatprep.subr.mxu0 0.0
  %545 = vmatpush1.msra.mxu0 0.0
  %546 = vmatprep.subr.mxu0 0.0
  %547 = vmatpush1.msra.mxu0 0.0
  %548 = vmatprep.mubr.f32.mxu0 0.0
  %549 = vmatmul.mubr.f32.gmra.mrb[0].mxu0 %v479
  %v550 = vpop.f32.mrb[0].mxu0
  %v551 = vadd.f32 0.0, %v550
  %v552 = vpop.f32.mrb[0].mxu0
  %553 = vmatprep.mubr.f32.mxu0 0.0
  %554 = vmatmul.mubr.f32.gmra.mrb[0].mxu0 %v482
  %v555 = vpop.f32.mrb[0].mxu0
  %v556 = vadd.f32 0.0, %v555
  %v557 = vpop.f32.mrb[0].mxu0
  %558 = vdwg.mxu0
  %v560 = vsel %vm433, %v476, 0
  %v563 = vsel %vm433, %v477, 0
  %565 = vmatprep.subr.mxu0 0.0
  %566 = vmatpush1.msra.mxu0 %v204
  %567 = vmatprep.subr.mxu0 0.0
  %568 = vmatpush1.msra.mxu0 %v207
  %569 = vmatprep.subr.mxu0 0.0
  %570 = vmatpush1.msra.mxu0 0.0
  %571 = vmatprep.subr.mxu0 0.0
  %572 = vmatpush1.msra.mxu0 0.0
  %573 = vmatprep.subr.mxu0 0.0
  %574 = vmatpush1.msra.mxu0 0.0
  %575 = vmatprep.subr.mxu0 0.0
  %576 = vmatpush1.msra.mxu0 0.0
  %577 = vmatprep.subr.mxu0 0.0
  %578 = vmatpush1.msra.mxu0 0.0
  %579 = vmatprep.subr.mxu0 0.0
  %580 = vmatpush1.msra.mxu0 0.0
  %581 = vmatprep.subr.mxu0 0.0
  %582 = vmatpush1.msra.mxu0 0.0
  %583 = vmatprep.subr.mxu0 0.0
  %584 = vmatpush1.msra.mxu0 0.0
  %585 = vmatprep.subr.mxu0 0.0
  %586 = vmatpush1.msra.mxu0 0.0
  %587 = vmatprep.subr.mxu0 0.0
  %588 = vmatpush1.msra.mxu0 0.0
  %589 = vmatprep.subr.mxu0 0.0
  %590 = vmatpush1.msra.mxu0 0.0
  %591 = vmatprep.subr.mxu0 0.0
  %592 = vmatpush1.msra.mxu0 0.0
  %593 = vmatprep.subr.mxu0 0.0
  %594 = vmatpush1.msra.mxu0 0.0
  %595 = vmatprep.subr.mxu0 0.0
  %596 = vmatpush1.msra.mxu0 0.0
  %597 = vmatprep.subr.mxu0 0.0
  %598 = vmatpush1.msra.mxu0 0.0
  %599 = vmatprep.subr.mxu0 0.0
  %600 = vmatpush1.msra.mxu0 0.0
  %601 = vmatprep.subr.mxu0 0.0
  %602 = vmatpush1.msra.mxu0 0.0
  %603 = vmatprep.subr.mxu0 0.0
  %604 = vmatpush1.msra.mxu0 0.0
  %605 = vmatprep.subr.mxu0 0.0
  %606 = vmatpush1.msra.mxu0 0.0
  %607 = vmatprep.subr.mxu0 0.0
  %608 = vmatpush1.msra.mxu0 0.0
  %609 = vmatprep.subr.mxu0 0.0
  %610 = vmatpush1.msra.mxu0 0.0
  %611 = vmatprep.subr.mxu0 0.0
  %612 = vmatpush1.msra.mxu0 0.0
  %613 = vmatprep.subr.mxu0 0.0
  %614 = vmatpush1.msra.mxu0 0.0
  %615 = vmatprep.subr.mxu0 0.0
  %616 = vmatpush1.msra.mxu0 0.0
  %617 = vmatprep.subr.mxu0 0.0
  %618 = vmatpush1.msra.mxu0 0.0
  %619 = vmatprep.subr.mxu0 0.0
  %620 = vmatpush1.msra.mxu0 0.0
  %621 = vmatprep.subr.mxu0 0.0
  %622 = vmatpush1.msra.mxu0 0.0
  %623 = vmatprep.subr.mxu0 0.0
  %624 = vmatpush1.msra.mxu0 0.0
  %625 = vmatprep.subr.mxu0 0.0
  %626 = vmatpush1.msra.mxu0 0.0
  %627 = vmatprep.subr.mxu0 0.0
  %628 = vmatpush1.msra.mxu0 0.0
  %629 = vmatprep.mubr.f32.mxu0 0.0
  %630 = vmatmul.mubr.f32.gmra.mrb[0].mxu0 %v560
  %v631 = vpop.f32.mrb[0].mxu0
  %v632 = vadd.f32 0.0, %v631
  %v633 = vpop.f32.mrb[0].mxu0
  %634 = vmatprep.mubr.f32.mxu0 0.0
  %635 = vmatmul.mubr.f32.gmra.mrb[0].mxu0 %v563
  %v636 = vpop.f32.mrb[0].mxu0
  %v637 = vadd.f32 0.0, %v636
  %v638 = vpop.f32.mrb[0].mxu0
  %639 = vdwg.mxu0
  %640 = vrot.lane.b32.xlu0 %v126, 120
  %v641 = vpop.permute.xlu0 %640
  %642 = vrot.lane.b32.xlu0 %v129, 120
  %v643 = vpop.permute.xlu0 %642
  %644 = vrot.lane.b32.xlu0 %v126, 88
  %v645 = vpop.permute.xlu0 %644
  %646 = vrot.lane.b32.xlu0 %v129, 88
  %v647 = vpop.permute.xlu0 %646
  %v648 = vsel %vm242, %v641, 0
  %v650 = vsel %vm242, %v643, 0
  %v652 = vsel %vm242, %v645, 0
  %v654 = vsel %vm242, %v647, 0
  %656 = vmatprep.subr.mxu0 0.0
  %657 = vmatpush1.xpose.msra.mxu0 %v652
  %658 = vmatprep.subr.mxu0 0.0
  %659 = vmatpush1.xpose.msra.mxu0 %v654
  %660 = vmatprep.subr.mxu0 0.0
  %661 = vmatpush1.xpose.msra.mxu0 0.0
  %662 = vmatprep.subr.mxu0 0.0
  %663 = vmatpush1.xpose.msra.mxu0 0.0
  %664 = vmatprep.subr.mxu0 0.0
  %665 = vmatpush1.xpose.msra.mxu0 0.0
  %666 = vmatprep.subr.mxu0 0.0
  %667 = vmatpush1.xpose.msra.mxu0 0.0
  %668 = vmatprep.subr.mxu0 0.0
  %669 = vmatpush1.xpose.msra.mxu0 0.0
  %670 = vmatprep.subr.mxu0 0.0
  %671 = vmatpush1.xpose.msra.mxu0 0.0
  %672 = vmatprep.subr.mxu0 0.0
  %673 = vmatpush1.xpose.msra.mxu0 0.0
  %674 = vmatprep.subr.mxu0 0.0
  %675 = vmatpush1.xpose.msra.mxu0 0.0
  %676 = vmatprep.subr.mxu0 0.0
  %677 = vmatpush1.xpose.msra.mxu0 0.0
  %678 = vmatprep.subr.mxu0 0.0
  %679 = vmatpush1.xpose.msra.mxu0 0.0
  %680 = vmatprep.subr.mxu0 0.0
  %681 = vmatpush1.xpose.msra.mxu0 0.0
  %682 = vmatprep.subr.mxu0 0.0
  %683 = vmatpush1.xpose.msra.mxu0 0.0
  %684 = vmatprep.subr.mxu0 0.0
  %685 = vmatpush1.xpose.msra.mxu0 0.0
  %686 = vmatprep.subr.mxu0 0.0
  %687 = vmatpush1.xpose.msra.mxu0 0.0
  %688 = vmatprep.subr.mxu0 0.0
  %689 = vmatpush1.xpose.msra.mxu0 0.0
  %690 = vmatprep.subr.mxu0 0.0
  %691 = vmatpush1.xpose.msra.mxu0 0.0
  %692 = vmatprep.subr.mxu0 0.0
  %693 = vmatpush1.xpose.msra.mxu0 0.0
  %694 = vmatprep.subr.mxu0 0.0
  %695 = vmatpush1.xpose.msra.mxu0 0.0
  %696 = vmatprep.subr.mxu0 0.0
  %697 = vmatpush1.xpose.msra.mxu0 0.0
  %698 = vmatprep.subr.mxu0 0.0
  %699 = vmatpush1.xpose.msra.mxu0 0.0
  %700 = vmatprep.subr.mxu0 0.0
  %701 = vmatpush1.xpose.msra.mxu0 0.0
  %702 = vmatprep.subr.mxu0 0.0
  %703 = vmatpush1.xpose.msra.mxu0 0.0
  %704 = vmatprep.subr.mxu0 0.0
  %705 = vmatpush1.xpose.msra.mxu0 0.0
  %706 = vmatprep.subr.mxu0 0.0
  %707 = vmatpush1.xpose.msra.mxu0 0.0
  %708 = vmatprep.subr.mxu0 0.0
  %709 = vmatpush1.xpose.msra.mxu0 0.0
  %710 = vmatprep.subr.mxu0 0.0
  %711 = vmatpush1.xpose.msra.mxu0 0.0
  %712 = vmatprep.subr.mxu0 0.0
  %713 = vmatpush1.xpose.msra.mxu0 0.0
  %714 = vmatprep.subr.mxu0 0.0
  %715 = vmatpush1.xpose.msra.mxu0 0.0
  %716 = vmatprep.subr.mxu0 0.0
  %717 = vmatpush1.xpose.msra.mxu0 0.0
  %718 = vmatprep.subr.mxu0 0.0
  %719 = vmatpush1.xpose.msra.mxu0 0.0
  %720 = vmatprep.mubr.f32.mxu0 0.0
  %721 = vmatmul.mubr.f32.gmra.mrb[0].mxu0 %v648
  %v722 = vpop.f32.mrb[0].mxu0
  %v723 = vadd.f32 0.0, %v722
  %v724 = vpop.f32.mrb[0].mxu0
  %725 = vmatprep.mubr.f32.mxu0 0.0
  %726 = vmatmul.mubr.f32.gmra.mrb[0].mxu0 %v650
  %v727 = vpop.f32.mrb[0].mxu0
  %v728 = vadd.f32 0.0, %v727
  %v729 = vpop.f32.mrb[0].mxu0
  %730 = vdwg.mxu0
  %731 = vrot.lane.b32.xlu0 %v134, 120
  %v732 = vpop.permute.xlu0 %731
  %733 = vrot.lane.b32.xlu0 %v137, 120
  %v734 = vpop.permute.xlu0 %733
  %735 = vrot.lane.b32.xlu0 %v134, 88
  %v736 = vpop.permute.xlu0 %735
  %737 = vrot.lane.b32.xlu0 %v137, 88
  %v738 = vpop.permute.xlu0 %737
  %v739 = vsel %vm242, %v732, 0
  %v741 = vsel %vm242, %v734, 0
  %v743 = vsel %vm242, %v736, 0
  %v745 = vsel %vm242, %v738, 0
  %747 = vmatprep.subr.mxu0 0.0
  %748 = vmatpush1.xpose.msra.mxu0 %v743
  %749 = vmatprep.subr.mxu0 0.0
  %750 = vmatpush1.xpose.msra.mxu0 %v745
  %751 = vmatprep.subr.mxu0 0.0
  %752 = vmatpush1.xpose.msra.mxu0 0.0
  %753 = vmatprep.subr.mxu0 0.0
  %754 = vmatpush1.xpose.msra.mxu0 0.0
  %755 = vmatprep.subr.mxu0 0.0
  %756 = vmatpush1.xpose.msra.mxu0 0.0
  %757 = vmatprep.subr.mxu0 0.0
  %758 = vmatpush1.xpose.msra.mxu0 0.0
  %759 = vmatprep.subr.mxu0 0.0
  %760 = vmatpush1.xpose.msra.mxu0 0.0
  %761 = vmatprep.subr.mxu0 0.0
  %762 = vmatpush1.xpose.msra.mxu0 0.0
  %763 = vmatprep.subr.mxu0 0.0
  %764 = vmatpush1.xpose.msra.mxu0 0.0
  %765 = vmatprep.subr.mxu0 0.0
  %766 = vmatpush1.xpose.msra.mxu0 0.0
  %767 = vmatprep.subr.mxu0 0.0
  %768 = vmatpush1.xpose.msra.mxu0 0.0
  %769 = vmatprep.subr.mxu0 0.0
  %770 = vmatpush1.xpose.msra.mxu0 0.0
  %771 = vmatprep.subr.mxu0 0.0
  %772 = vmatpush1.xpose.msra.mxu0 0.0
  %773 = vmatprep.subr.mxu0 0.0
  %774 = vmatpush1.xpose.msra.mxu0 0.0
  %775 = vmatprep.subr.mxu0 0.0
  %776 = vmatpush1.xpose.msra.mxu0 0.0
  %777 = vmatprep.subr.mxu0 0.0
  %778 = vmatpush1.xpose.msra.mxu0 0.0
  %779 = vmatprep.subr.mxu0 0.0
  %780 = vmatpush1.xpose.msra.mxu0 0.0
  %781 = vmatprep.subr.mxu0 0.0
  %782 = vmatpush1.xpose.msra.mxu0 0.0
  %783 = vmatprep.subr.mxu0 0.0
  %784 = vmatpush1.xpose.msra.mxu0 0.0
  %785 = vmatprep.subr.mxu0 0.0
  %786 = vmatpush1.xpose.msra.mxu0 0.0
  %787 = vmatprep.subr.mxu0 0.0
  %788 = vmatpush1.xpose.msra.mxu0 0.0
  %789 = vmatprep.subr.mxu0 0.0
  %790 = vmatpush1.xpose.msra.mxu0 0.0
  %791 = vmatprep.subr.mxu0 0.0
  %792 = vmatpush1.xpose.msra.mxu0 0.0
  %793 = vmatprep.subr.mxu0 0.0
  %794 = vmatpush1.xpose.msra.mxu0 0.0
  %795 = vmatprep.subr.mxu0 0.0
  %796 = vmatpush1.xpose.msra.mxu0 0.0
  %797 = vmatprep.subr.mxu0 0.0
  %798 = vmatpush1.xpose.msra.mxu0 0.0
  %799 = vmatprep.subr.mxu0 0.0
  %800 = vmatpush1.xpose.msra.mxu0 0.0
  %801 = vmatprep.subr.mxu0 0.0
  %802 = vmatpush1.xpose.msra.mxu0 0.0
  %803 = vmatprep.subr.mxu0 0.0
  %804 = vmatpush1.xpose.msra.mxu0 0.0
  %805 = vmatprep.subr.mxu0 0.0
  %806 = vmatpush1.xpose.msra.mxu0 0.0
  %807 = vmatprep.subr.mxu0 0.0
  %808 = vmatpush1.xpose.msra.mxu0 0.0
  %809 = vmatprep.subr.mxu0 0.0
  %810 = vmatpush1.xpose.msra.mxu0 0.0
  %811 = vmatprep.mubr.f32.mxu0 0.0
  %812 = vmatmul.mubr.f32.gmra.mrb[0].mxu0 %v739
  %v813 = vpop.f32.mrb[0].mxu0
  %v814 = vadd.f32 0.0, %v813
  %v815 = vpop.f32.mrb[0].mxu0
  %816 = vmatprep.mubr.f32.mxu0 0.0
  %817 = vmatmul.mubr.f32.gmra.mrb[0].mxu0 %v741
  %v818 = vpop.f32.mrb[0].mxu0
  %v819 = vadd.f32 0.0, %v818
  %v820 = vpop.f32.mrb[0].mxu0
  %821 = vdwg.mxu0
  %v822 = vmul.f32 %v723, 0.35355338
  %v823 = vmul.f32 %v728, 0.35355338
  %v824 = vmul.f32 %v814, 0.35355338
  %v825 = vmul.f32 %v819, 0.35355338
  %v826 = vadd.f32 %v822, %v422
  %v827 = vadd.f32 %v823, %v422
  %v828 = vadd.f32 %v824, %v426
  %v829 = vadd.f32 %v825, %v426
  %v830 = vsel %vm433, %v826, -inf
  %831 = vmax.xlane.f32.xlu0 %v830
  %v832 = vpop.xlane.xlu0 %831
  %v833 = vsel %vm433, %v827, -inf
  %834 = vmax.xlane.f32.xlu0 %v833
  %v835 = vpop.xlane.xlu0 %834
  %v836 = vsel %vm433, %v828, -inf
  %837 = vmax.xlane.f32.xlu0 %v836
  %v838 = vpop.xlane.xlu0 %837
  %v839 = vsel %vm433, %v829, -inf
  %840 = vmax.xlane.f32.xlu0 %v839
  %v841 = vpop.xlane.xlu0 %840
  %v842 = vsub.f32 %v826, %v832
  %v843 = vsub.f32 %v827, %v835
  %v844 = vsub.f32 %v828, %v838
  %v845 = vsub.f32 %v829, %v841
  %v846 = vmul.f32 %v842, 1.442695
  %v847 = vpow.pop %v846
  %v848 = vmul.f32 %v843, 1.442695
  %v849 = vpow.pop %v848
  %v850 = vmul.f32 %v844, 1.442695
  %v851 = vpow.pop %v850
  %v852 = vmul.f32 %v845, 1.442695
  %v853 = vpow.pop %v852
  %v854 = vsel %vm433, %v847, 0.0
  %855 = vadd.xlane.f32.xlu0 %v854
  %v856 = vpop.xlane.xlu0 %855
  %v857 = vsel %vm433, %v849, 0.0
  %858 = vadd.xlane.f32.xlu0 %v857
  %v859 = vpop.xlane.xlu0 %858
  %v860 = vsel %vm433, %v851, 0.0
  %861 = vadd.xlane.f32.xlu0 %v860
  %v862 = vpop.xlane.xlu0 %861
  %v863 = vsel %vm433, %v853, 0.0
  %864 = vadd.xlane.f32.xlu0 %v863
  %v865 = vpop.xlane.xlu0 %864
  %v866 = vrcp.pop %v856
  %v867 = vrcp.pop %v859
  %v868 = vrcp.pop %v862
  %v869 = vrcp.pop %v865
  %v870 = vmul.f32 %v847, %v866
  %v871 = vmul.f32 %v849, %v867
  %v872 = vmul.f32 %v851, %v868
  %v873 = vmul.f32 %v853, %v869
  %876 = vrot.lane.b32.xlu0 %v196, 120
  %v877 = vpop.permute.xlu0 %876
  %878 = vrot.lane.b32.xlu0 %v199, 120
  %v879 = vpop.permute.xlu0 %878
  %v883 = vsel %vm433, %v870, 0
  %v886 = vsel %vm433, %v871, 0
  %888 = vmatprep.subr.mxu0 0.0
  %889 = vmatpush1.msra.mxu0 %v877
  %890 = vmatprep.subr.mxu0 0.0
  %891 = vmatpush1.msra.mxu0 %v879
  %892 = vmatprep.subr.mxu0 0.0
  %893 = vmatpush1.msra.mxu0 0.0
  %894 = vmatprep.subr.mxu0 0.0
  %895 = vmatpush1.msra.mxu0 0.0
  %896 = vmatprep.subr.mxu0 0.0
  %897 = vmatpush1.msra.mxu0 0.0
  %898 = vmatprep.subr.mxu0 0.0
  %899 = vmatpush1.msra.mxu0 0.0
  %900 = vmatprep.subr.mxu0 0.0
  %901 = vmatpush1.msra.mxu0 0.0
  %902 = vmatprep.subr.mxu0 0.0
  %903 = vmatpush1.msra.mxu0 0.0
  %904 = vmatprep.subr.mxu0 0.0
  %905 = vmatpush1.msra.mxu0 0.0
  %906 = vmatprep.subr.mxu0 0.0
  %907 = vmatpush1.msra.mxu0 0.0
  %908 = vmatprep.subr.mxu0 0.0
  %909 = vmatpush1.msra.mxu0 0.0
  %910 = vmatprep.subr.mxu0 0.0
  %911 = vmatpush1.msra.mxu0 0.0
  %912 = vmatprep.subr.mxu0 0.0
  %913 = vmatpush1.msra.mxu0 0.0
  %914 = vmatprep.subr.mxu0 0.0
  %915 = vmatpush1.msra.mxu0 0.0
  %916 = vmatprep.subr.mxu0 0.0
  %917 = vmatpush1.msra.mxu0 0.0
  %918 = vmatprep.subr.mxu0 0.0
  %919 = vmatpush1.msra.mxu0 0.0
  %920 = vmatprep.subr.mxu0 0.0
  %921 = vmatpush1.msra.mxu0 0.0
  %922 = vmatprep.subr.mxu0 0.0
  %923 = vmatpush1.msra.mxu0 0.0
  %924 = vmatprep.subr.mxu0 0.0
  %925 = vmatpush1.msra.mxu0 0.0
  %926 = vmatprep.subr.mxu0 0.0
  %927 = vmatpush1.msra.mxu0 0.0
  %928 = vmatprep.subr.mxu0 0.0
  %929 = vmatpush1.msra.mxu0 0.0
  %930 = vmatprep.subr.mxu0 0.0
  %931 = vmatpush1.msra.mxu0 0.0
  %932 = vmatprep.subr.mxu0 0.0
  %933 = vmatpush1.msra.mxu0 0.0
  %934 = vmatprep.subr.mxu0 0.0
  %935 = vmatpush1.msra.mxu0 0.0
  %936 = vmatprep.subr.mxu0 0.0
  %937 = vmatpush1.msra.mxu0 0.0
  %938 = vmatprep.subr.mxu0 0.0
  %939 = vmatpush1.msra.mxu0 0.0
  %940 = vmatprep.subr.mxu0 0.0
  %941 = vmatpush1.msra.mxu0 0.0
  %942 = vmatprep.subr.mxu0 0.0
  %943 = vmatpush1.msra.mxu0 0.0
  %944 = vmatprep.subr.mxu0 0.0
  %945 = vmatpush1.msra.mxu0 0.0
  %946 = vmatprep.subr.mxu0 0.0
  %947 = vmatpush1.msra.mxu0 0.0
  %948 = vmatprep.subr.mxu0 0.0
  %949 = vmatpush1.msra.mxu0 0.0
  %950 = vmatprep.subr.mxu0 0.0
  %951 = vmatpush1.msra.mxu0 0.0
  %952 = vmatprep.mubr.f32.mxu0 0.0
  %953 = vmatmul.mubr.f32.gmra.mrb[0].mxu0 %v883
  %v954 = vpop.f32.mrb[0].mxu0
  %v955 = vadd.f32 0.0, %v954
  %v956 = vpop.f32.mrb[0].mxu0
  %957 = vmatprep.mubr.f32.mxu0 0.0
  %958 = vmatmul.mubr.f32.gmra.mrb[0].mxu0 %v886
  %v959 = vpop.f32.mrb[0].mxu0
  %v960 = vadd.f32 0.0, %v959
  %v961 = vpop.f32.mrb[0].mxu0
  %962 = vdwg.mxu0
  %965 = vrot.lane.b32.xlu0 %v204, 120
  %v966 = vpop.permute.xlu0 %965
  %967 = vrot.lane.b32.xlu0 %v207, 120
  %v968 = vpop.permute.xlu0 %967
  %v972 = vsel %vm433, %v872, 0
  %v975 = vsel %vm433, %v873, 0
  %977 = vmatprep.subr.mxu0 0.0
  %978 = vmatpush1.msra.mxu0 %v966
  %979 = vmatprep.subr.mxu0 0.0
  %980 = vmatpush1.msra.mxu0 %v968
  %981 = vmatprep.subr.mxu0 0.0
  %982 = vmatpush1.msra.mxu0 0.0
  %983 = vmatprep.subr.mxu0 0.0
  %984 = vmatpush1.msra.mxu0 0.0
  %985 = vmatprep.subr.mxu0 0.0
  %986 = vmatpush1.msra.mxu0 0.0
  %987 = vmatprep.subr.mxu0 0.0
  %988 = vmatpush1.msra.mxu0 0.0
  %989 = vmatprep.subr.mxu0 0.0
  %990 = vmatpush1.msra.mxu0 0.0
  %991 = vmatprep.subr.mxu0 0.0
  %992 = vmatpush1.msra.mxu0 0.0
  %993 = vmatprep.subr.mxu0 0.0
  %994 = vmatpush1.msra.mxu0 0.0
  %995 = vmatprep.subr.mxu0 0.0
  %996 = vmatpush1.msra.mxu0 0.0
  %997 = vmatprep.subr.mxu0 0.0
  %998 = vmatpush1.msra.mxu0 0.0
  %999 = vmatprep.subr.mxu0 0.0
  %1000 = vmatpush1.msra.mxu0 0.0
  %1001 = vmatprep.subr.mxu0 0.0
  %1002 = vmatpush1.msra.mxu0 0.0
  %1003 = vmatprep.subr.mxu0 0.0
  %1004 = vmatpush1.msra.mxu0 0.0
  %1005 = vmatprep.subr.mxu0 0.0
  %1006 = vmatpush1.msra.mxu0 0.0
  %1007 = vmatprep.subr.mxu0 0.0
  %1008 = vmatpush1.msra.mxu0 0.0
  %1009 = vmatprep.subr.mxu0 0.0
  %1010 = vmatpush1.msra.mxu0 0.0
  %1011 = vmatprep.subr.mxu0 0.0
  %1012 = vmatpush1.msra.mxu0 0.0
  %1013 = vmatprep.subr.mxu0 0.0
  %1014 = vmatpush1.msra.mxu0 0.0
  %1015 = vmatprep.subr.mxu0 0.0
  %1016 = vmatpush1.msra.mxu0 0.0
  %1017 = vmatprep.subr.mxu0 0.0
  %1018 = vmatpush1.msra.mxu0 0.0
  %1019 = vmatprep.subr.mxu0 0.0
  %1020 = vmatpush1.msra.mxu0 0.0
  %1021 = vmatprep.subr.mxu0 0.0
  %1022 = vmatpush1.msra.mxu0 0.0
  %1023 = vmatprep.subr.mxu0 0.0
  %1024 = vmatpush1.msra.mxu0 0.0
  %1025 = vmatprep.subr.mxu0 0.0
  %1026 = vmatpush1.msra.mxu0 0.0
  %1027 = vmatprep.subr.mxu0 0.0
  %1028 = vmatpush1.msra.mxu0 0.0
  %1029 = vmatprep.subr.mxu0 0.0
  %1030 = vmatpush1.msra.mxu0 0.0
  %1031 = vmatprep.subr.mxu0 0.0
  %1032 = vmatpush1.msra.mxu0 0.0
  %1033 = vmatprep.subr.mxu0 0.0
  %1034 = vmatpush1.msra.mxu0 0.0
  %1035 = vmatprep.subr.mxu0 0.0
  %1036 = vmatpush1.msra.mxu0 0.0
  %1037 = vmatprep.subr.mxu0 0.0
  %1038 = vmatpush1.msra.mxu0 0.0
  %1039 = vmatprep.subr.mxu0 0.0
  %1040 = vmatpush1.msra.mxu0 0.0
  %1041 = vmatprep.mubr.f32.mxu0 0.0
  %1042 = vmatmul.mubr.f32.gmra.mrb[0].mxu0 %v972
  %v1043 = vpop.f32.mrb[0].mxu0
  %v1044 = vadd.f32 0.0, %v1043
  %v1045 = vpop.f32.mrb[0].mxu0
  %1046 = vmatprep.mubr.f32.mxu0 0.0
  %1047 = vmatmul.mubr.f32.gmra.mrb[0].mxu0 %v975
  %v1048 = vpop.f32.mrb[0].mxu0
  %v1049 = vadd.f32 0.0, %v1048
  %v1050 = vpop.f32.mrb[0].mxu0
  %1051 = vdwg.mxu0
  %1052 = vrot.lane.b32.xlu0 %v126, 112
  %v1053 = vpop.permute.xlu0 %1052
  %1054 = vrot.lane.b32.xlu0 %v129, 112
  %v1055 = vpop.permute.xlu0 %1054
  %1056 = vrot.lane.b32.xlu0 %v126, 80
  %v1057 = vpop.permute.xlu0 %1056
  %1058 = vrot.lane.b32.xlu0 %v129, 80
  %v1059 = vpop.permute.xlu0 %1058
  %v1060 = vsel %vm242, %v1053, 0
  %v1062 = vsel %vm242, %v1055, 0
  %v1064 = vsel %vm242, %v1057, 0
  %v1066 = vsel %vm242, %v1059, 0
  %1068 = vmatprep.subr.mxu0 0.0
  %1069 = vmatpush1.xpose.msra.mxu0 %v1064
  %1070 = vmatprep.subr.mxu0 0.0
  %1071 = vmatpush1.xpose.msra.mxu0 %v1066
  %1072 = vmatprep.subr.mxu0 0.0
  %1073 = vmatpush1.xpose.msra.mxu0 0.0
  %1074 = vmatprep.subr.mxu0 0.0
  %1075 = vmatpush1.xpose.msra.mxu0 0.0
  %1076 = vmatprep.subr.mxu0 0.0
  %1077 = vmatpush1.xpose.msra.mxu0 0.0
  %1078 = vmatprep.subr.mxu0 0.0
  %1079 = vmatpush1.xpose.msra.mxu0 0.0
  %1080 = vmatprep.subr.mxu0 0.0
  %1081 = vmatpush1.xpose.msra.mxu0 0.0
  %1082 = vmatprep.subr.mxu0 0.0
  %1083 = vmatpush1.xpose.msra.mxu0 0.0
  %1084 = vmatprep.subr.mxu0 0.0
  %1085 = vmatpush1.xpose.msra.mxu0 0.0
  %1086 = vmatprep.subr.mxu0 0.0
  %1087 = vmatpush1.xpose.msra.mxu0 0.0
  %1088 = vmatprep.subr.mxu0 0.0
  %1089 = vmatpush1.xpose.msra.mxu0 0.0
  %1090 = vmatprep.subr.mxu0 0.0
  %1091 = vmatpush1.xpose.msra.mxu0 0.0
  %1092 = vmatprep.subr.mxu0 0.0
  %1093 = vmatpush1.xpose.msra.mxu0 0.0
  %1094 = vmatprep.subr.mxu0 0.0
  %1095 = vmatpush1.xpose.msra.mxu0 0.0
  %1096 = vmatprep.subr.mxu0 0.0
  %1097 = vmatpush1.xpose.msra.mxu0 0.0
  %1098 = vmatprep.subr.mxu0 0.0
  %1099 = vmatpush1.xpose.msra.mxu0 0.0
  %1100 = vmatprep.subr.mxu0 0.0
  %1101 = vmatpush1.xpose.msra.mxu0 0.0
  %1102 = vmatprep.subr.mxu0 0.0
  %1103 = vmatpush1.xpose.msra.mxu0 0.0
  %1104 = vmatprep.subr.mxu0 0.0
  %1105 = vmatpush1.xpose.msra.mxu0 0.0
  %1106 = vmatprep.subr.mxu0 0.0
  %1107 = vmatpush1.xpose.msra.mxu0 0.0
  %1108 = vmatprep.subr.mxu0 0.0
  %1109 = vmatpush1.xpose.msra.mxu0 0.0
  %1110 = vmatprep.subr.mxu0 0.0
  %1111 = vmatpush1.xpose.msra.mxu0 0.0
  %1112 = vmatprep.subr.mxu0 0.0
  %1113 = vmatpush1.xpose.msra.mxu0 0.0
  %1114 = vmatprep.subr.mxu0 0.0
  %1115 = vmatpush1.xpose.msra.mxu0 0.0
  %1116 = vmatprep.subr.mxu0 0.0
  %1117 = vmatpush1.xpose.msra.mxu0 0.0
  %1118 = vmatprep.subr.mxu0 0.0
  %1119 = vmatpush1.xpose.msra.mxu0 0.0
  %1120 = vmatprep.subr.mxu0 0.0
  %1121 = vmatpush1.xpose.msra.mxu0 0.0
  %1122 = vmatprep.subr.mxu0 0.0
  %1123 = vmatpush1.xpose.msra.mxu0 0.0
  %1124 = vmatprep.subr.mxu0 0.0
  %1125 = vmatpush1.xpose.msra.mxu0 0.0
  %1126 = vmatprep.subr.mxu0 0.0
  %1127 = vmatpush1.xpose.msra.mxu0 0.0
  %1128 = vmatprep.subr.mxu0 0.0
  %1129 = vmatpush1.xpose.msra.mxu0 0.0
  %1130 = vmatprep.subr.mxu0 0.0
  %1131 = vmatpush1.xpose.msra.mxu0 0.0
  %1132 = vmatprep.mubr.f32.mxu0 0.0
  %1133 = vmatmul.mubr.f32.gmra.mrb[0].mxu0 %v1060
  %v1134 = vpop.f32.mrb[0].mxu0
  %v1135 = vadd.f32 0.0, %v1134
  %v1136 = vpop.f32.mrb[0].mxu0
  %1137 = vmatprep.mubr.f32.mxu0 0.0
  %1138 = vmatmul.mubr.f32.gmra.mrb[0].mxu0 %v1062
  %v1139 = vpop.f32.mrb[0].mxu0
  %v1140 = vadd.f32 0.0, %v1139
  %v1141 = vpop.f32.mrb[0].mxu0
  %1142 = vdwg.mxu0
  %1143 = vrot.lane.b32.xlu0 %v134, 112
  %v1144 = vpop.permute.xlu0 %1143
  %1145 = vrot.lane.b32.xlu0 %v137, 112
  %v1146 = vpop.permute.xlu0 %1145
  %1147 = vrot.lane.b32.xlu0 %v134, 80
  %v1148 = vpop.permute.xlu0 %1147
  %1149 = vrot.lane.b32.xlu0 %v137, 80
  %v1150 = vpop.permute.xlu0 %1149
  %v1151 = vsel %vm242, %v1144, 0
  %v1153 = vsel %vm242, %v1146, 0
  %v1155 = vsel %vm242, %v1148, 0
  %v1157 = vsel %vm242, %v1150, 0
  %1159 = vmatprep.subr.mxu0 0.0
  %1160 = vmatpush1.xpose.msra.mxu0 %v1155
  %1161 = vmatprep.subr.mxu0 0.0
  %1162 = vmatpush1.xpose.msra.mxu0 %v1157
  %1163 = vmatprep.subr.mxu0 0.0
  %1164 = vmatpush1.xpose.msra.mxu0 0.0
  %1165 = vmatprep.subr.mxu0 0.0
  %1166 = vmatpush1.xpose.msra.mxu0 0.0
  %1167 = vmatprep.subr.mxu0 0.0
  %1168 = vmatpush1.xpose.msra.mxu0 0.0
  %1169 = vmatprep.subr.mxu0 0.0
  %1170 = vmatpush1.xpose.msra.mxu0 0.0
  %1171 = vmatprep.subr.mxu0 0.0
  %1172 = vmatpush1.xpose.msra.mxu0 0.0
  %1173 = vmatprep.subr.mxu0 0.0
  %1174 = vmatpush1.xpose.msra.mxu0 0.0
  %1175 = vmatprep.subr.mxu0 0.0
  %1176 = vmatpush1.xpose.msra.mxu0 0.0
  %1177 = vmatprep.subr.mxu0 0.0
  %1178 = vmatpush1.xpose.msra.mxu0 0.0
  %1179 = vmatprep.subr.mxu0 0.0
  %1180 = vmatpush1.xpose.msra.mxu0 0.0
  %1181 = vmatprep.subr.mxu0 0.0
  %1182 = vmatpush1.xpose.msra.mxu0 0.0
  %1183 = vmatprep.subr.mxu0 0.0
  %1184 = vmatpush1.xpose.msra.mxu0 0.0
  %1185 = vmatprep.subr.mxu0 0.0
  %1186 = vmatpush1.xpose.msra.mxu0 0.0
  %1187 = vmatprep.subr.mxu0 0.0
  %1188 = vmatpush1.xpose.msra.mxu0 0.0
  %1189 = vmatprep.subr.mxu0 0.0
  %1190 = vmatpush1.xpose.msra.mxu0 0.0
  %1191 = vmatprep.subr.mxu0 0.0
  %1192 = vmatpush1.xpose.msra.mxu0 0.0
  %1193 = vmatprep.subr.mxu0 0.0
  %1194 = vmatpush1.xpose.msra.mxu0 0.0
  %1195 = vmatprep.subr.mxu0 0.0
  %1196 = vmatpush1.xpose.msra.mxu0 0.0
  %1197 = vmatprep.subr.mxu0 0.0
  %1198 = vmatpush1.xpose.msra.mxu0 0.0
  %1199 = vmatprep.subr.mxu0 0.0
  %1200 = vmatpush1.xpose.msra.mxu0 0.0
  %1201 = vmatprep.subr.mxu0 0.0
  %1202 = vmatpush1.xpose.msra.mxu0 0.0
  %1203 = vmatprep.subr.mxu0 0.0
  %1204 = vmatpush1.xpose.msra.mxu0 0.0
  %1205 = vmatprep.subr.mxu0 0.0
  %1206 = vmatpush1.xpose.msra.mxu0 0.0
  %1207 = vmatprep.subr.mxu0 0.0
  %1208 = vmatpush1.xpose.msra.mxu0 0.0
  %1209 = vmatprep.subr.mxu0 0.0
  %1210 = vmatpush1.xpose.msra.mxu0 0.0
  %1211 = vmatprep.subr.mxu0 0.0
  %1212 = vmatpush1.xpose.msra.mxu0 0.0
  %1213 = vmatprep.subr.mxu0 0.0
  %1214 = vmatpush1.xpose.msra.mxu0 0.0
  %1215 = vmatprep.subr.mxu0 0.0
  %1216 = vmatpush1.xpose.msra.mxu0 0.0
  %1217 = vmatprep.subr.mxu0 0.0
  %1218 = vmatpush1.xpose.msra.mxu0 0.0
  %1219 = vmatprep.subr.mxu0 0.0
  %1220 = vmatpush1.xpose.msra.mxu0 0.0
  %1221 = vmatprep.subr.mxu0 0.0
  %1222 = vmatpush1.xpose.msra.mxu0 0.0
  %1223 = vmatprep.mubr.f32.mxu0 0.0
  %1224 = vmatmul.mubr.f32.gmra.mrb[0].mxu0 %v1151
  %v1225 = vpop.f32.mrb[0].mxu0
  %v1226 = vadd.f32 0.0, %v1225
  %v1227 = vpop.f32.mrb[0].mxu0
  %1228 = vmatprep.mubr.f32.mxu0 0.0
  %1229 = vmatmul.mubr.f32.gmra.mrb[0].mxu0 %v1153
  %v1230 = vpop.f32.mrb[0].mxu0
  %v1231 = vadd.f32 0.0, %v1230
  %v1232 = vpop.f32.mrb[0].mxu0
  %1233 = vdwg.mxu0
  %v1234 = vmul.f32 %v1135, 0.35355338
  %v1235 = vmul.f32 %v1140, 0.35355338
  %v1236 = vmul.f32 %v1226, 0.35355338
  %v1237 = vmul.f32 %v1231, 0.35355338
  %v1238 = vadd.f32 %v1234, %v422
  %v1239 = vadd.f32 %v1235, %v422
  %v1240 = vadd.f32 %v1236, %v426
  %v1241 = vadd.f32 %v1237, %v426
  %v1242 = vsel %vm433, %v1238, -inf
  %1243 = vmax.xlane.f32.xlu0 %v1242
  %v1244 = vpop.xlane.xlu0 %1243
  %v1245 = vsel %vm433, %v1239, -inf
  %1246 = vmax.xlane.f32.xlu0 %v1245
  %v1247 = vpop.xlane.xlu0 %1246
  %v1248 = vsel %vm433, %v1240, -inf
  %1249 = vmax.xlane.f32.xlu0 %v1248
  %v1250 = vpop.xlane.xlu0 %1249
  %v1251 = vsel %vm433, %v1241, -inf
  %1252 = vmax.xlane.f32.xlu0 %v1251
  %v1253 = vpop.xlane.xlu0 %1252
  %v1254 = vsub.f32 %v1238, %v1244
  %v1255 = vsub.f32 %v1239, %v1247
  %v1256 = vsub.f32 %v1240, %v1250
  %v1257 = vsub.f32 %v1241, %v1253
  %v1258 = vmul.f32 %v1254, 1.442695
  %v1259 = vpow.pop %v1258
  %v1260 = vmul.f32 %v1255, 1.442695
  %v1261 = vpow.pop %v1260
  %v1262 = vmul.f32 %v1256, 1.442695
  %v1263 = vpow.pop %v1262
  %v1264 = vmul.f32 %v1257, 1.442695
  %v1265 = vpow.pop %v1264
  %v1266 = vsel %vm433, %v1259, 0.0
  %1267 = vadd.xlane.f32.xlu0 %v1266
  %v1268 = vpop.xlane.xlu0 %1267
  %v1269 = vsel %vm433, %v1261, 0.0
  %1270 = vadd.xlane.f32.xlu0 %v1269
  %v1271 = vpop.xlane.xlu0 %1270
  %v1272 = vsel %vm433, %v1263, 0.0
  %1273 = vadd.xlane.f32.xlu0 %v1272
  %v1274 = vpop.xlane.xlu0 %1273
  %v1275 = vsel %vm433, %v1265, 0.0
  %1276 = vadd.xlane.f32.xlu0 %v1275
  %v1277 = vpop.xlane.xlu0 %1276
  %v1278 = vrcp.pop %v1268
  %v1279 = vrcp.pop %v1271
  %v1280 = vrcp.pop %v1274
  %v1281 = vrcp.pop %v1277
  %v1282 = vmul.f32 %v1259, %v1278
  %v1283 = vmul.f32 %v1261, %v1279
  %v1284 = vmul.f32 %v1263, %v1280
  %v1285 = vmul.f32 %v1265, %v1281
  %1286 = vrot.lane.b32.xlu0 %v196, 112
  %v1287 = vpop.permute.xlu0 %1286
  %1288 = vrot.lane.b32.xlu0 %v199, 112
  %v1289 = vpop.permute.xlu0 %1288
  %v1293 = vsel %vm433, %v1282, 0
  %v1296 = vsel %vm433, %v1283, 0
  %1298 = vmatprep.subr.mxu0 0.0
  %1299 = vmatpush1.msra.mxu0 %v1287
  %1300 = vmatprep.subr.mxu0 0.0
  %1301 = vmatpush1.msra.mxu0 %v1289
  %1302 = vmatprep.subr.mxu0 0.0
  %1303 = vmatpush1.msra.mxu0 0.0
  %1304 = vmatprep.subr.mxu0 0.0
  %1305 = vmatpush1.msra.mxu0 0.0
  %1306 = vmatprep.subr.mxu0 0.0
  %1307 = vmatpush1.msra.mxu0 0.0
  %1308 = vmatprep.subr.mxu0 0.0
  %1309 = vmatpush1.msra.mxu0 0.0
  %1310 = vmatprep.subr.mxu0 0.0
  %1311 = vmatpush1.msra.mxu0 0.0
  %1312 = vmatprep.subr.mxu0 0.0
  %1313 = vmatpush1.msra.mxu0 0.0
  %1314 = vmatprep.subr.mxu0 0.0
  %1315 = vmatpush1.msra.mxu0 0.0
  %1316 = vmatprep.subr.mxu0 0.0
  %1317 = vmatpush1.msra.mxu0 0.0
  %1318 = vmatprep.subr.mxu0 0.0
  %1319 = vmatpush1.msra.mxu0 0.0
  %1320 = vmatprep.subr.mxu0 0.0
  %1321 = vmatpush1.msra.mxu0 0.0
  %1322 = vmatprep.subr.mxu0 0.0
  %1323 = vmatpush1.msra.mxu0 0.0
  %1324 = vmatprep.subr.mxu0 0.0
  %1325 = vmatpush1.msra.mxu0 0.0
  %1326 = vmatprep.subr.mxu0 0.0
  %1327 = vmatpush1.msra.mxu0 0.0
  %1328 = vmatprep.subr.mxu0 0.0
  %1329 = vmatpush1.msra.mxu0 0.0
  %1330 = vmatprep.subr.mxu0 0.0
  %1331 = vmatpush1.msra.mxu0 0.0
  %1332 = vmatprep.subr.mxu0 0.0
  %1333 = vmatpush1.msra.mxu0 0.0
  %1334 = vmatprep.subr.mxu0 0.0
  %1335 = vmatpush1.msra.mxu0 0.0
  %1336 = vmatprep.subr.mxu0 0.0
  %1337 = vmatpush1.msra.mxu0 0.0
  %1338 = vmatprep.subr.mxu0 0.0
  %1339 = vmatpush1.msra.mxu0 0.0
  %1340 = vmatprep.subr.mxu0 0.0
  %1341 = vmatpush1.msra.mxu0 0.0
  %1342 = vmatprep.subr.mxu0 0.0
  %1343 = vmatpush1.msra.mxu0 0.0
  %1344 = vmatprep.subr.mxu0 0.0
  %1345 = vmatpush1.msra.mxu0 0.0
  %1346 = vmatprep.subr.mxu0 0.0
  %1347 = vmatpush1.msra.mxu0 0.0
  %1348 = vmatprep.subr.mxu0 0.0
  %1349 = vmatpush1.msra.mxu0 0.0
  %1350 = vmatprep.subr.mxu0 0.0
  %1351 = vmatpush1.msra.mxu0 0.0
  %1352 = vmatprep.subr.mxu0 0.0
  %1353 = vmatpush1.msra.mxu0 0.0
  %1354 = vmatprep.subr.mxu0 0.0
  %1355 = vmatpush1.msra.mxu0 0.0
  %1356 = vmatprep.subr.mxu0 0.0
  %1357 = vmatpush1.msra.mxu0 0.0
  %1358 = vmatprep.subr.mxu0 0.0
  %1359 = vmatpush1.msra.mxu0 0.0
  %1360 = vmatprep.subr.mxu0 0.0
  %1361 = vmatpush1.msra.mxu0 0.0
  %1362 = vmatprep.mubr.f32.mxu0 0.0
  %1363 = vmatmul.mubr.f32.gmra.mrb[0].mxu0 %v1293
  %v1364 = vpop.f32.mrb[0].mxu0
  %v1365 = vadd.f32 0.0, %v1364
  %v1366 = vpop.f32.mrb[0].mxu0
  %1367 = vmatprep.mubr.f32.mxu0 0.0
  %1368 = vmatmul.mubr.f32.gmra.mrb[0].mxu0 %v1296
  %v1369 = vpop.f32.mrb[0].mxu0
  %v1370 = vadd.f32 0.0, %v1369
  %v1371 = vpop.f32.mrb[0].mxu0
  %1372 = vdwg.mxu0
  %1373 = vrot.lane.b32.xlu0 %v204, 112
  %v1374 = vpop.permute.xlu0 %1373
  %1375 = vrot.lane.b32.xlu0 %v207, 112
  %v1376 = vpop.permute.xlu0 %1375
  %v1380 = vsel %vm433, %v1284, 0
  %v1383 = vsel %vm433, %v1285, 0
  %1385 = vmatprep.subr.mxu0 0.0
  %1386 = vmatpush1.msra.mxu0 %v1374
  %1387 = vmatprep.subr.mxu0 0.0
  %1388 = vmatpush1.msra.mxu0 %v1376
  %1389 = vmatprep.subr.mxu0 0.0
  %1390 = vmatpush1.msra.mxu0 0.0
  %1391 = vmatprep.subr.mxu0 0.0
  %1392 = vmatpush1.msra.mxu0 0.0
  %1393 = vmatprep.subr.mxu0 0.0
  %1394 = vmatpush1.msra.mxu0 0.0
  %1395 = vmatprep.subr.mxu0 0.0
  %1396 = vmatpush1.msra.mxu0 0.0
  %1397 = vmatprep.subr.mxu0 0.0
  %1398 = vmatpush1.msra.mxu0 0.0
  %1399 = vmatprep.subr.mxu0 0.0
  %1400 = vmatpush1.msra.mxu0 0.0
  %1401 = vmatprep.subr.mxu0 0.0
  %1402 = vmatpush1.msra.mxu0 0.0
  %1403 = vmatprep.subr.mxu0 0.0
  %1404 = vmatpush1.msra.mxu0 0.0
  %1405 = vmatprep.subr.mxu0 0.0
  %1406 = vmatpush1.msra.mxu0 0.0
  %1407 = vmatprep.subr.mxu0 0.0
  %1408 = vmatpush1.msra.mxu0 0.0
  %1409 = vmatprep.subr.mxu0 0.0
  %1410 = vmatpush1.msra.mxu0 0.0
  %1411 = vmatprep.subr.mxu0 0.0
  %1412 = vmatpush1.msra.mxu0 0.0
  %1413 = vmatprep.subr.mxu0 0.0
  %1414 = vmatpush1.msra.mxu0 0.0
  %1415 = vmatprep.subr.mxu0 0.0
  %1416 = vmatpush1.msra.mxu0 0.0
  %1417 = vmatprep.subr.mxu0 0.0
  %1418 = vmatpush1.msra.mxu0 0.0
  %1419 = vmatprep.subr.mxu0 0.0
  %1420 = vmatpush1.msra.mxu0 0.0
  %1421 = vmatprep.subr.mxu0 0.0
  %1422 = vmatpush1.msra.mxu0 0.0
  %1423 = vmatprep.subr.mxu0 0.0
  %1424 = vmatpush1.msra.mxu0 0.0
  %1425 = vmatprep.subr.mxu0 0.0
  %1426 = vmatpush1.msra.mxu0 0.0
  %1427 = vmatprep.subr.mxu0 0.0
  %1428 = vmatpush1.msra.mxu0 0.0
  %1429 = vmatprep.subr.mxu0 0.0
  %1430 = vmatpush1.msra.mxu0 0.0
  %1431 = vmatprep.subr.mxu0 0.0
  %1432 = vmatpush1.msra.mxu0 0.0
  %1433 = vmatprep.subr.mxu0 0.0
  %1434 = vmatpush1.msra.mxu0 0.0
  %1435 = vmatprep.subr.mxu0 0.0
  %1436 = vmatpush1.msra.mxu0 0.0
  %1437 = vmatprep.subr.mxu0 0.0
  %1438 = vmatpush1.msra.mxu0 0.0
  %1439 = vmatprep.subr.mxu0 0.0
  %1440 = vmatpush1.msra.mxu0 0.0
  %1441 = vmatprep.subr.mxu0 0.0
  %1442 = vmatpush1.msra.mxu0 0.0
  %1443 = vmatprep.subr.mxu0 0.0
  %1444 = vmatpush1.msra.mxu0 0.0
  %1445 = vmatprep.subr.mxu0 0.0
  %1446 = vmatpush1.msra.mxu0 0.0
  %1447 = vmatprep.subr.mxu0 0.0
  %1448 = vmatpush1.msra.mxu0 0.0
  %1449 = vmatprep.mubr.f32.mxu0 0.0
  %1450 = vmatmul.mubr.f32.gmra.mrb[0].mxu0 %v1380
  %v1451 = vpop.f32.mrb[0].mxu0
  %v1452 = vadd.f32 0.0, %v1451
  %v1453 = vpop.f32.mrb[0].mxu0
  %1454 = vmatprep.mubr.f32.mxu0 0.0
  %1455 = vmatmul.mubr.f32.gmra.mrb[0].mxu0 %v1383
  %v1456 = vpop.f32.mrb[0].mxu0
  %v1457 = vadd.f32 0.0, %v1456
  %v1458 = vpop.f32.mrb[0].mxu0
  %1459 = vdwg.mxu0
  %1460 = vrot.lane.b32.xlu0 %v126, 104
  %v1461 = vpop.permute.xlu0 %1460
  %1462 = vrot.lane.b32.xlu0 %v129, 104
  %v1463 = vpop.permute.xlu0 %1462
  %1464 = vrot.lane.b32.xlu0 %v126, 72
  %v1465 = vpop.permute.xlu0 %1464
  %1466 = vrot.lane.b32.xlu0 %v129, 72
  %v1467 = vpop.permute.xlu0 %1466
  %v1468 = vsel %vm242, %v1461, 0
  %v1470 = vsel %vm242, %v1463, 0
  %v1472 = vsel %vm242, %v1465, 0
  %v1474 = vsel %vm242, %v1467, 0
  %1476 = vmatprep.subr.mxu0 0.0
  %1477 = vmatpush1.xpose.msra.mxu0 %v1472
  %1478 = vmatprep.subr.mxu0 0.0
  %1479 = vmatpush1.xpose.msra.mxu0 %v1474
  %1480 = vmatprep.subr.mxu0 0.0
  %1481 = vmatpush1.xpose.msra.mxu0 0.0
  %1482 = vmatprep.subr.mxu0 0.0
  %1483 = vmatpush1.xpose.msra.mxu0 0.0
  %1484 = vmatprep.subr.mxu0 0.0
  %1485 = vmatpush1.xpose.msra.mxu0 0.0
  %1486 = vmatprep.subr.mxu0 0.0
  %1487 = vmatpush1.xpose.msra.mxu0 0.0
  %1488 = vmatprep.subr.mxu0 0.0
  %1489 = vmatpush1.xpose.msra.mxu0 0.0
  %1490 = vmatprep.subr.mxu0 0.0
  %1491 = vmatpush1.xpose.msra.mxu0 0.0
  %1492 = vmatprep.subr.mxu0 0.0
  %1493 = vmatpush1.xpose.msra.mxu0 0.0
  %1494 = vmatprep.subr.mxu0 0.0
  %1495 = vmatpush1.xpose.msra.mxu0 0.0
  %1496 = vmatprep.subr.mxu0 0.0
  %1497 = vmatpush1.xpose.msra.mxu0 0.0
  %1498 = vmatprep.subr.mxu0 0.0
  %1499 = vmatpush1.xpose.msra.mxu0 0.0
  %1500 = vmatprep.subr.mxu0 0.0
  %1501 = vmatpush1.xpose.msra.mxu0 0.0
  %1502 = vmatprep.subr.mxu0 0.0
  %1503 = vmatpush1.xpose.msra.mxu0 0.0
  %1504 = vmatprep.subr.mxu0 0.0
  %1505 = vmatpush1.xpose.msra.mxu0 0.0
  %1506 = vmatprep.subr.mxu0 0.0
  %1507 = vmatpush1.xpose.msra.mxu0 0.0
  %1508 = vmatprep.subr.mxu0 0.0
  %1509 = vmatpush1.xpose.msra.mxu0 0.0
  %1510 = vmatprep.subr.mxu0 0.0
  %1511 = vmatpush1.xpose.msra.mxu0 0.0
  %1512 = vmatprep.subr.mxu0 0.0
  %1513 = vmatpush1.xpose.msra.mxu0 0.0
  %1514 = vmatprep.subr.mxu0 0.0
  %1515 = vmatpush1.xpose.msra.mxu0 0.0
  %1516 = vmatprep.subr.mxu0 0.0
  %1517 = vmatpush1.xpose.msra.mxu0 0.0
  %1518 = vmatprep.subr.mxu0 0.0
  %1519 = vmatpush1.xpose.msra.mxu0 0.0
  %1520 = vmatprep.subr.mxu0 0.0
  %1521 = vmatpush1.xpose.msra.mxu0 0.0
  %1522 = vmatprep.subr.mxu0 0.0
  %1523 = vmatpush1.xpose.msra.mxu0 0.0
  %1524 = vmatprep.subr.mxu0 0.0
  %1525 = vmatpush1.xpose.msra.mxu0 0.0
  %1526 = vmatprep.subr.mxu0 0.0
  %1527 = vmatpush1.xpose.msra.mxu0 0.0
  %1528 = vmatprep.subr.mxu0 0.0
  %1529 = vmatpush1.xpose.msra.mxu0 0.0
  %1530 = vmatprep.subr.mxu0 0.0
  %1531 = vmatpush1.xpose.msra.mxu0 0.0
  %1532 = vmatprep.subr.mxu0 0.0
  %1533 = vmatpush1.xpose.msra.mxu0 0.0
  %1534 = vmatprep.subr.mxu0 0.0
  %1535 = vmatpush1.xpose.msra.mxu0 0.0
  %1536 = vmatprep.subr.mxu0 0.0
  %1537 = vmatpush1.xpose.msra.mxu0 0.0
  %1538 = vmatprep.subr.mxu0 0.0
  %1539 = vmatpush1.xpose.msra.mxu0 0.0
  %1540 = vmatprep.mubr.f32.mxu0 0.0
  %1541 = vmatmul.mubr.f32.gmra.mrb[0].mxu0 %v1468
  %v1542 = vpop.f32.mrb[0].mxu0
  %v1543 = vadd.f32 0.0, %v1542
  %v1544 = vpop.f32.mrb[0].mxu0
  %1545 = vmatprep.mubr.f32.mxu0 0.0
  %1546 = vmatmul.mubr.f32.gmra.mrb[0].mxu0 %v1470
  %v1547 = vpop.f32.mrb[0].mxu0
  %v1548 = vadd.f32 0.0, %v1547
  %v1549 = vpop.f32.mrb[0].mxu0
  %1550 = vdwg.mxu0
  %1551 = vrot.lane.b32.xlu0 %v134, 104
  %v1552 = vpop.permute.xlu0 %1551
  %1553 = vrot.lane.b32.xlu0 %v137, 104
  %v1554 = vpop.permute.xlu0 %1553
  %1555 = vrot.lane.b32.xlu0 %v134, 72
  %v1556 = vpop.permute.xlu0 %1555
  %1557 = vrot.lane.b32.xlu0 %v137, 72
  %v1558 = vpop.permute.xlu0 %1557
  %v1559 = vsel %vm242, %v1552, 0
  %v1561 = vsel %vm242, %v1554, 0
  %v1563 = vsel %vm242, %v1556, 0
  %v1565 = vsel %vm242, %v1558, 0
  %1567 = vmatprep.subr.mxu0 0.0
  %1568 = vmatpush1.xpose.msra.mxu0 %v1563
  %1569 = vmatprep.subr.mxu0 0.0
  %1570 = vmatpush1.xpose.msra.mxu0 %v1565
  %1571 = vmatprep.subr.mxu0 0.0
  %1572 = vmatpush1.xpose.msra.mxu0 0.0
  %1573 = vmatprep.subr.mxu0 0.0
  %1574 = vmatpush1.xpose.msra.mxu0 0.0
  %1575 = vmatprep.subr.mxu0 0.0
  %1576 = vmatpush1.xpose.msra.mxu0 0.0
  %1577 = vmatprep.subr.mxu0 0.0
  %1578 = vmatpush1.xpose.msra.mxu0 0.0
  %1579 = vmatprep.subr.mxu0 0.0
  %1580 = vmatpush1.xpose.msra.mxu0 0.0
  %1581 = vmatprep.subr.mxu0 0.0
  %1582 = vmatpush1.xpose.msra.mxu0 0.0
  %1583 = vmatprep.subr.mxu0 0.0
  %1584 = vmatpush1.xpose.msra.mxu0 0.0
  %1585 = vmatprep.subr.mxu0 0.0
  %1586 = vmatpush1.xpose.msra.mxu0 0.0
  %1587 = vmatprep.subr.mxu0 0.0
  %1588 = vmatpush1.xpose.msra.mxu0 0.0
  %1589 = vmatprep.subr.mxu0 0.0
  %1590 = vmatpush1.xpose.msra.mxu0 0.0
  %1591 = vmatprep.subr.mxu0 0.0
  %1592 = vmatpush1.xpose.msra.mxu0 0.0
  %1593 = vmatprep.subr.mxu0 0.0
  %1594 = vmatpush1.xpose.msra.mxu0 0.0
  %1595 = vmatprep.subr.mxu0 0.0
  %1596 = vmatpush1.xpose.msra.mxu0 0.0
  %1597 = vmatprep.subr.mxu0 0.0
  %1598 = vmatpush1.xpose.msra.mxu0 0.0
  %1599 = vmatprep.subr.mxu0 0.0
  %1600 = vmatpush1.xpose.msra.mxu0 0.0
  %1601 = vmatprep.subr.mxu0 0.0
  %1602 = vmatpush1.xpose.msra.mxu0 0.0
  %1603 = vmatprep.subr.mxu0 0.0
  %1604 = vmatpush1.xpose.msra.mxu0 0.0
  %1605 = vmatprep.subr.mxu0 0.0
  %1606 = vmatpush1.xpose.msra.mxu0 0.0
  %1607 = vmatprep.subr.mxu0 0.0
  %1608 = vmatpush1.xpose.msra.mxu0 0.0
  %1609 = vmatprep.subr.mxu0 0.0
  %1610 = vmatpush1.xpose.msra.mxu0 0.0
  %1611 = vmatprep.subr.mxu0 0.0
  %1612 = vmatpush1.xpose.msra.mxu0 0.0
  %1613 = vmatprep.subr.mxu0 0.0
  %1614 = vmatpush1.xpose.msra.mxu0 0.0
  %1615 = vmatprep.subr.mxu0 0.0
  %1616 = vmatpush1.xpose.msra.mxu0 0.0
  %1617 = vmatprep.subr.mxu0 0.0
  %1618 = vmatpush1.xpose.msra.mxu0 0.0
  %1619 = vmatprep.subr.mxu0 0.0
  %1620 = vmatpush1.xpose.msra.mxu0 0.0
  %1621 = vmatprep.subr.mxu0 0.0
  %1622 = vmatpush1.xpose.msra.mxu0 0.0
  %1623 = vmatprep.subr.mxu0 0.0
  %1624 = vmatpush1.xpose.msra.mxu0 0.0
  %1625 = vmatprep.subr.mxu0 0.0
  %1626 = vmatpush1.xpose.msra.mxu0 0.0
  %1627 = vmatprep.subr.mxu0 0.0
  %1628 = vmatpush1.xpose.msra.mxu0 0.0
  %1629 = vmatprep.subr.mxu0 0.0
  %1630 = vmatpush1.xpose.msra.mxu0 0.0
  %1631 = vmatprep.mubr.f32.mxu0 0.0
  %1632 = vmatmul.mubr.f32.gmra.mrb[0].mxu0 %v1559
  %v1633 = vpop.f32.mrb[0].mxu0
  %v1634 = vadd.f32 0.0, %v1633
  %v1635 = vpop.f32.mrb[0].mxu0
  %1636 = vmatprep.mubr.f32.mxu0 0.0
  %1637 = vmatmul.mubr.f32.gmra.mrb[0].mxu0 %v1561
  %v1638 = vpop.f32.mrb[0].mxu0
  %v1639 = vadd.f32 0.0, %v1638
  %v1640 = vpop.f32.mrb[0].mxu0
  %1641 = vdwg.mxu0
  %v1642 = vmul.f32 %v1543, 0.35355338
  %v1643 = vmul.f32 %v1548, 0.35355338
  %v1644 = vmul.f32 %v1634, 0.35355338
  %v1645 = vmul.f32 %v1639, 0.35355338
  %v1646 = vadd.f32 %v1642, %v422
  %v1647 = vadd.f32 %v1643, %v422
  %v1648 = vadd.f32 %v1644, %v426
  %v1649 = vadd.f32 %v1645, %v426
  %v1650 = vsel %vm433, %v1646, -inf
  %1651 = vmax.xlane.f32.xlu0 %v1650
  %v1652 = vpop.xlane.xlu0 %1651
  %v1653 = vsel %vm433, %v1647, -inf
  %1654 = vmax.xlane.f32.xlu0 %v1653
  %v1655 = vpop.xlane.xlu0 %1654
  %v1656 = vsel %vm433, %v1648, -inf
  %1657 = vmax.xlane.f32.xlu0 %v1656
  %v1658 = vpop.xlane.xlu0 %1657
  %v1659 = vsel %vm433, %v1649, -inf
  %1660 = vmax.xlane.f32.xlu0 %v1659
  %v1661 = vpop.xlane.xlu0 %1660
  %v1662 = vsub.f32 %v1646, %v1652
  %v1663 = vsub.f32 %v1647, %v1655
  %v1664 = vsub.f32 %v1648, %v1658
  %v1665 = vsub.f32 %v1649, %v1661
  %v1666 = vmul.f32 %v1662, 1.442695
  %v1667 = vpow.pop %v1666
  %v1668 = vmul.f32 %v1663, 1.442695
  %v1669 = vpow.pop %v1668
  %v1670 = vmul.f32 %v1664, 1.442695
  %v1671 = vpow.pop %v1670
  %v1672 = vmul.f32 %v1665, 1.442695
  %v1673 = vpow.pop %v1672
  %v1674 = vsel %vm433, %v1667, 0.0
  %1675 = vadd.xlane.f32.xlu0 %v1674
  %v1676 = vpop.xlane.xlu0 %1675
  %v1677 = vsel %vm433, %v1669, 0.0
  %1678 = vadd.xlane.f32.xlu0 %v1677
  %v1679 = vpop.xlane.xlu0 %1678
  %v1680 = vsel %vm433, %v1671, 0.0
  %1681 = vadd.xlane.f32.xlu0 %v1680
  %v1682 = vpop.xlane.xlu0 %1681
  %v1683 = vsel %vm433, %v1673, 0.0
  %1684 = vadd.xlane.f32.xlu0 %v1683
  %v1685 = vpop.xlane.xlu0 %1684
  %v1686 = vrcp.pop %v1676
  %v1687 = vrcp.pop %v1679
  %v1688 = vrcp.pop %v1682
  %v1689 = vrcp.pop %v1685
  %v1690 = vmul.f32 %v1667, %v1686
  %v1691 = vmul.f32 %v1669, %v1687
  %v1692 = vmul.f32 %v1671, %v1688
  %v1693 = vmul.f32 %v1673, %v1689
  %1694 = vrot.lane.b32.xlu0 %v196, 104
  %v1695 = vpop.permute.xlu0 %1694
  %1696 = vrot.lane.b32.xlu0 %v199, 104
  %v1697 = vpop.permute.xlu0 %1696
  %v1701 = vsel %vm433, %v1690, 0
  %v1704 = vsel %vm433, %v1691, 0
  %1706 = vmatprep.subr.mxu0 0.0
  %1707 = vmatpush1.msra.mxu0 %v1695
  %1708 = vmatprep.subr.mxu0 0.0
  %1709 = vmatpush1.msra.mxu0 %v1697
  %1710 = vmatprep.subr.mxu0 0.0
  %1711 = vmatpush1.msra.mxu0 0.0
  %1712 = vmatprep.subr.mxu0 0.0
  %1713 = vmatpush1.msra.mxu0 0.0
  %1714 = vmatprep.subr.mxu0 0.0
  %1715 = vmatpush1.msra.mxu0 0.0
  %1716 = vmatprep.subr.mxu0 0.0
  %1717 = vmatpush1.msra.mxu0 0.0
  %1718 = vmatprep.subr.mxu0 0.0
  %1719 = vmatpush1.msra.mxu0 0.0
  %1720 = vmatprep.subr.mxu0 0.0
  %1721 = vmatpush1.msra.mxu0 0.0
  %1722 = vmatprep.subr.mxu0 0.0
  %1723 = vmatpush1.msra.mxu0 0.0
  %1724 = vmatprep.subr.mxu0 0.0
  %1725 = vmatpush1.msra.mxu0 0.0
  %1726 = vmatprep.subr.mxu0 0.0
  %1727 = vmatpush1.msra.mxu0 0.0
  %1728 = vmatprep.subr.mxu0 0.0
  %1729 = vmatpush1.msra.mxu0 0.0
  %1730 = vmatprep.subr.mxu0 0.0
  %1731 = vmatpush1.msra.mxu0 0.0
  %1732 = vmatprep.subr.mxu0 0.0
  %1733 = vmatpush1.msra.mxu0 0.0
  %1734 = vmatprep.subr.mxu0 0.0
  %1735 = vmatpush1.msra.mxu0 0.0
  %1736 = vmatprep.subr.mxu0 0.0
  %1737 = vmatpush1.msra.mxu0 0.0
  %1738 = vmatprep.subr.mxu0 0.0
  %1739 = vmatpush1.msra.mxu0 0.0
  %1740 = vmatprep.subr.mxu0 0.0
  %1741 = vmatpush1.msra.mxu0 0.0
  %1742 = vmatprep.subr.mxu0 0.0
  %1743 = vmatpush1.msra.mxu0 0.0
  %1744 = vmatprep.subr.mxu0 0.0
  %1745 = vmatpush1.msra.mxu0 0.0
  %1746 = vmatprep.subr.mxu0 0.0
  %1747 = vmatpush1.msra.mxu0 0.0
  %1748 = vmatprep.subr.mxu0 0.0
  %1749 = vmatpush1.msra.mxu0 0.0
  %1750 = vmatprep.subr.mxu0 0.0
  %1751 = vmatpush1.msra.mxu0 0.0
  %1752 = vmatprep.subr.mxu0 0.0
  %1753 = vmatpush1.msra.mxu0 0.0
  %1754 = vmatprep.subr.mxu0 0.0
  %1755 = vmatpush1.msra.mxu0 0.0
  %1756 = vmatprep.subr.mxu0 0.0
  %1757 = vmatpush1.msra.mxu0 0.0
  %1758 = vmatprep.subr.mxu0 0.0
  %1759 = vmatpush1.msra.mxu0 0.0
  %1760 = vmatprep.subr.mxu0 0.0
  %1761 = vmatpush1.msra.mxu0 0.0
  %1762 = vmatprep.subr.mxu0 0.0
  %1763 = vmatpush1.msra.mxu0 0.0
  %1764 = vmatprep.subr.mxu0 0.0
  %1765 = vmatpush1.msra.mxu0 0.0
  %1766 = vmatprep.subr.mxu0 0.0
  %1767 = vmatpush1.msra.mxu0 0.0
  %1768 = vmatprep.subr.mxu0 0.0
  %1769 = vmatpush1.msra.mxu0 0.0
  %1770 = vmatprep.mubr.f32.mxu0 0.0
  %1771 = vmatmul.mubr.f32.gmra.mrb[0].mxu0 %v1701
  %v1772 = vpop.f32.mrb[0].mxu0
  %v1773 = vadd.f32 0.0, %v1772
  %v1774 = vpop.f32.mrb[0].mxu0
  %1775 = vmatprep.mubr.f32.mxu0 0.0
  %1776 = vmatmul.mubr.f32.gmra.mrb[0].mxu0 %v1704
  %v1777 = vpop.f32.mrb[0].mxu0
  %v1778 = vadd.f32 0.0, %v1777
  %v1779 = vpop.f32.mrb[0].mxu0
  %1780 = vdwg.mxu0
  %1781 = vrot.lane.b32.xlu0 %v204, 104
  %v1782 = vpop.permute.xlu0 %1781
  %1783 = vrot.lane.b32.xlu0 %v207, 104
  %v1784 = vpop.permute.xlu0 %1783
  %v1788 = vsel %vm433, %v1692, 0
  %v1791 = vsel %vm433, %v1693, 0
  %1793 = vmatprep.subr.mxu0 0.0
  %1794 = vmatpush1.msra.mxu0 %v1782
  %1795 = vmatprep.subr.mxu0 0.0
  %1796 = vmatpush1.msra.mxu0 %v1784
  %1797 = vmatprep.subr.mxu0 0.0
  %1798 = vmatpush1.msra.mxu0 0.0
  %1799 = vmatprep.subr.mxu0 0.0
  %1800 = vmatpush1.msra.mxu0 0.0
  %1801 = vmatprep.subr.mxu0 0.0
  %1802 = vmatpush1.msra.mxu0 0.0
  %1803 = vmatprep.subr.mxu0 0.0
  %1804 = vmatpush1.msra.mxu0 0.0
  %1805 = vmatprep.subr.mxu0 0.0
  %1806 = vmatpush1.msra.mxu0 0.0
  %1807 = vmatprep.subr.mxu0 0.0
  %1808 = vmatpush1.msra.mxu0 0.0
  %1809 = vmatprep.subr.mxu0 0.0
  %1810 = vmatpush1.msra.mxu0 0.0
  %1811 = vmatprep.subr.mxu0 0.0
  %1812 = vmatpush1.msra.mxu0 0.0
  %1813 = vmatprep.subr.mxu0 0.0
  %1814 = vmatpush1.msra.mxu0 0.0
  %1815 = vmatprep.subr.mxu0 0.0
  %1816 = vmatpush1.msra.mxu0 0.0
  %1817 = vmatprep.subr.mxu0 0.0
  %1818 = vmatpush1.msra.mxu0 0.0
  %1819 = vmatprep.subr.mxu0 0.0
  %1820 = vmatpush1.msra.mxu0 0.0
  %1821 = vmatprep.subr.mxu0 0.0
  %1822 = vmatpush1.msra.mxu0 0.0
  %1823 = vmatprep.subr.mxu0 0.0
  %1824 = vmatpush1.msra.mxu0 0.0
  %1825 = vmatprep.subr.mxu0 0.0
  %1826 = vmatpush1.msra.mxu0 0.0
  %1827 = vmatprep.subr.mxu0 0.0
  %1828 = vmatpush1.msra.mxu0 0.0
  %1829 = vmatprep.subr.mxu0 0.0
  %1830 = vmatpush1.msra.mxu0 0.0
  %1831 = vmatprep.subr.mxu0 0.0
  %1832 = vmatpush1.msra.mxu0 0.0
  %1833 = vmatprep.subr.mxu0 0.0
  %1834 = vmatpush1.msra.mxu0 0.0
  %1835 = vmatprep.subr.mxu0 0.0
  %1836 = vmatpush1.msra.mxu0 0.0
  %1837 = vmatprep.subr.mxu0 0.0
  %1838 = vmatpush1.msra.mxu0 0.0
  %1839 = vmatprep.subr.mxu0 0.0
  %1840 = vmatpush1.msra.mxu0 0.0
  %1841 = vmatprep.subr.mxu0 0.0
  %1842 = vmatpush1.msra.mxu0 0.0
  %1843 = vmatprep.subr.mxu0 0.0
  %1844 = vmatpush1.msra.mxu0 0.0
  %1845 = vmatprep.subr.mxu0 0.0
  %1846 = vmatpush1.msra.mxu0 0.0
  %1847 = vmatprep.subr.mxu0 0.0
  %1848 = vmatpush1.msra.mxu0 0.0
  %1849 = vmatprep.subr.mxu0 0.0
  %1850 = vmatpush1.msra.mxu0 0.0
  %1851 = vmatprep.subr.mxu0 0.0
  %1852 = vmatpush1.msra.mxu0 0.0
  %1853 = vmatprep.subr.mxu0 0.0
  %1854 = vmatpush1.msra.mxu0 0.0
  %1855 = vmatprep.subr.mxu0 0.0
  %1856 = vmatpush1.msra.mxu0 0.0
  %1857 = vmatprep.mubr.f32.mxu0 0.0
  %1858 = vmatmul.mubr.f32.gmra.mrb[0].mxu0 %v1788
  %v1859 = vpop.f32.mrb[0].mxu0
  %v1860 = vadd.f32 0.0, %v1859
  %v1861 = vpop.f32.mrb[0].mxu0
  %1862 = vmatprep.mubr.f32.mxu0 0.0
  %1863 = vmatmul.mubr.f32.gmra.mrb[0].mxu0 %v1791
  %v1864 = vpop.f32.mrb[0].mxu0
  %v1865 = vadd.f32 0.0, %v1864
  %v1866 = vpop.f32.mrb[0].mxu0
  %1867 = vdwg.mxu0
  %1872 = vrot.lane.b32.xlu0 %v955, 8
  %v1873 = vpop.permute.xlu0 %1872
  %1874 = vrot.lane.b32.xlu0 %v960, 8
  %v1875 = vpop.permute.xlu0 %1874
  %1876 = vrot.lane.b32.xlu0 %v1044, 8
  %v1877 = vpop.permute.xlu0 %1876
  %1878 = vrot.lane.b32.xlu0 %v1049, 8
  %v1879 = vpop.permute.xlu0 %1878
  %1888 = vrot.lane.b32.xlu0 %v1365, 16
  %v1889 = vpop.permute.xlu0 %1888
  %1890 = vrot.lane.b32.xlu0 %v1370, 16
  %v1891 = vpop.permute.xlu0 %1890
  %1892 = vrot.lane.b32.xlu0 %v1452, 16
  %v1893 = vpop.permute.xlu0 %1892
  %1894 = vrot.lane.b32.xlu0 %v1457, 16
  %v1895 = vpop.permute.xlu0 %1894
  %1904 = vrot.lane.b32.xlu0 %v1773, 24
  %v1905 = vpop.permute.xlu0 %1904
  %1906 = vrot.lane.b32.xlu0 %v1778, 24
  %v1907 = vpop.permute.xlu0 %1906
  %1908 = vrot.lane.b32.xlu0 %v1860, 24
  %v1909 = vpop.permute.xlu0 %1908
  %1910 = vrot.lane.b32.xlu0 %v1865, 24
  %v1911 = vpop.permute.xlu0 %1910
  %v1916 = vsel %vm242, %v551, %v1873
  %v1917 = vsel %vm242, %v556, %v1875
  %v1918 = vsel %vm242, %v632, %v1877
  %v1919 = vsel %vm242, %v637, %v1879
  %v1920 = vsel %vm433, %v1916, %v1889
  %v1921 = vsel %vm433, %v1917, %v1891
  %v1922 = vsel %vm433, %v1918, %v1893
  %v1923 = vsel %vm433, %v1919, %v1895
  %vm1924 = vcmask 195584
  %v1925 = vsel %vm1924, %v1920, %v1905
  %v1926 = vsel %vm1924, %v1921, %v1907
  %v1927 = vsel %vm1924, %v1922, %v1909
  %v1928 = vsel %vm1924, %v1923, %v1911
  %v1929 = vld [vmem:[%s7] sm:$0xff]
  %v1930 = vld [vmem:[%s7 + $0x8] sm:$0xff]
  %v1931 = vld [vmem:[%s7 + $0x10] sm:$0xff]
  %v1932 = vld [vmem:[%s7 + $0x18] sm:$0xff]
  %v1933 = vpack.c.bf16 %v1926, %v1925
  %v1934 = vpack.c.bf16 %v1928, %v1927
  %v1935 = vpack.c.bf16 %v1930, %v1929
  %v1936 = vpack.c.bf16 %v1932, %v1931
  %v1937 = vld [vmem:[%s8] sm:$0x1]
  %v1939 = vlaneseq
  %v1940 = vshrl.u32 %v1939, 7
  %v1941 = vsub.s32 0, %v1940
  %v1942 = vrot.slane %v1937, %v1941
  %v1945 = vsel %vm84, %v1933, 0
  %v1948 = vsel %vm84, %v1934, 0
  %1950 = vmatprep.subr.bf16.mxu0 0
  %1951 = vmatpush1.bf16.msra.mxu0 %v1935
  %1952 = vmatprep.subr.bf16.mxu0 0
  %1953 = vmatpush1.bf16.msra.mxu0 %v1936
  %1954 = vmatprep.subr.bf16.mxu0 0
  %1955 = vmatpush1.bf16.msra.mxu0 0
  %1956 = vmatprep.subr.bf16.mxu0 0
  %1957 = vmatpush1.bf16.msra.mxu0 0
  %1958 = vmatprep.subr.bf16.mxu0 0
  %1959 = vmatpush1.bf16.msra.mxu0 0
  %1960 = vmatprep.subr.bf16.mxu0 0
  %1961 = vmatpush1.bf16.msra.mxu0 0
  %1962 = vmatprep.subr.bf16.mxu0 0
  %1963 = vmatpush1.bf16.msra.mxu0 0
  %1964 = vmatprep.subr.bf16.mxu0 0
  %1965 = vmatpush1.bf16.msra.mxu0 0
  %1966 = vmatprep.subr.bf16.mxu0 0
  %1967 = vmatpush1.bf16.msra.mxu0 0
  %1968 = vmatprep.subr.bf16.mxu0 0
  %1969 = vmatpush1.bf16.msra.mxu0 0
  %1970 = vmatprep.subr.bf16.mxu0 0
  %1971 = vmatpush1.bf16.msra.mxu0 0
  %1972 = vmatprep.subr.bf16.mxu0 0
  %1973 = vmatpush1.bf16.msra.mxu0 0
  %1974 = vmatprep.subr.bf16.mxu0 0
  %1975 = vmatpush1.bf16.msra.mxu0 0
  %1976 = vmatprep.subr.bf16.mxu0 0
  %1977 = vmatpush1.bf16.msra.mxu0 0
  %1978 = vmatprep.subr.bf16.mxu0 0
  %1979 = vmatpush1.bf16.msra.mxu0 0
  %1980 = vmatprep.subr.bf16.mxu0 0
  %1981 = vmatpush1.bf16.msra.mxu0 0
  %1982 = vmatprep.mubr.bf16.mxu0 0
  %1983 = vmatmul.mubr.bf16.gmra.mrb[0].mxu0 %v1945
  %v1984 = vpop.f32.mrb[0].mxu0
  %v1985 = vadd.f32 %v1942, %v1984
  %v1986 = vpop.f32.mrb[0].mxu0
  %v1987 = vpop.f32.mrb[0].mxu0
  %v1988 = vadd.f32 %v1942, %v1987
  %v1989 = vpop.f32.mrb[0].mxu0
  %1990 = vmatprep.mubr.bf16.mxu0 0
  %1991 = vmatmul.mubr.bf16.gmra.mrb[0].mxu0 %v1948
  %v1992 = vpop.f32.mrb[0].mxu0
  %v1993 = vadd.f32 %v1942, %v1992
  %v1994 = vpop.f32.mrb[0].mxu0
  %v1995 = vpop.f32.mrb[0].mxu0
  %v1996 = vadd.f32 %v1942, %v1995
  %v1997 = vpop.f32.mrb[0].mxu0
  %1998 = vdwg.mxu0
  %v1999 = vadd.f32 %v57, %v1985
  %v2000 = vadd.f32 %v58, %v1988
  %v2001 = vadd.f32 %v59, %v1993
  %v2002 = vadd.f32 %v60, %v1996
  %v2003 = vsel %vm84, %v1999, 0.0
  %2004 = vadd.xlane.f32.xlu0 %v2003
  %v2005 = vpop.xlane.xlu0 %2004
  %v2006 = vsel %vm84, %v2000, 0.0
  %2007 = vadd.xlane.f32.xlu0 %v2006
  %v2008 = vpop.xlane.xlu0 %2007
  %v2009 = vsel %vm84, %v2001, 0.0
  %2010 = vadd.xlane.f32.xlu0 %v2009
  %v2011 = vpop.xlane.xlu0 %2010
  %v2012 = vsel %vm84, %v2002, 0.0
  %2013 = vadd.xlane.f32.xlu0 %v2012
  %v2014 = vpop.xlane.xlu0 %2013
  %v2015 = vrcp.pop 32.0
  %v2016 = vmul.f32 %v2005, %v2015
  %v2017 = vmul.f32 %v2008, %v2015
  %v2018 = vmul.f32 %v2011, %v2015
  %v2019 = vmul.f32 %v2014, %v2015
  %v2020 = vsub.f32 %v1999, %v2016
  %v2021 = vsub.f32 %v2000, %v2017
  %v2022 = vsub.f32 %v2001, %v2018
  %v2023 = vsub.f32 %v2002, %v2019
  %v2024 = vmul.f32 %v2020, %v2020
  %v2025 = vmul.f32 %v2021, %v2021
  %v2026 = vmul.f32 %v2022, %v2022
  %v2027 = vmul.f32 %v2023, %v2023
  %v2028 = vsel %vm84, %v2024, 0.0
  %2029 = vadd.xlane.f32.xlu0 %v2028
  %v2030 = vpop.xlane.xlu0 %2029
  %v2031 = vsel %vm84, %v2025, 0.0
  %2032 = vadd.xlane.f32.xlu0 %v2031
  %v2033 = vpop.xlane.xlu0 %2032
  %v2034 = vsel %vm84, %v2026, 0.0
  %2035 = vadd.xlane.f32.xlu0 %v2034
  %v2036 = vpop.xlane.xlu0 %2035
  %v2037 = vsel %vm84, %v2027, 0.0
  %2038 = vadd.xlane.f32.xlu0 %v2037
  %v2039 = vpop.xlane.xlu0 %2038
  %v2040 = vmul.f32 %v2030, %v2015
  %v2041 = vmul.f32 %v2033, %v2015
  %v2042 = vmul.f32 %v2036, %v2015
  %v2043 = vmul.f32 %v2039, %v2015
  %v2044 = vadd.f32 %v2040, 1e-05
  %v2045 = vadd.f32 %v2041, 1e-05
  %v2046 = vadd.f32 %v2042, 1e-05
  %v2047 = vadd.f32 %v2043, 1e-05
  %v2048 = vrsqrt.pop %v2044
  %v2049 = vrsqrt.pop %v2045
  %v2050 = vrsqrt.pop %v2046
  %v2051 = vrsqrt.pop %v2047
  %v2052 = vmul.f32 %v2020, %v2048
  %v2053 = vmul.f32 %v2021, %v2049
  %v2054 = vmul.f32 %v2022, %v2050
  %v2055 = vmul.f32 %v2023, %v2051
  %v2056 = vld [vmem:[%s9] sm:$0x1]
  %v2058 = vlaneseq
  %v2059 = vshrl.u32 %v2058, 7
  %v2060 = vsub.s32 0, %v2059
  %v2061 = vrot.slane %v2056, %v2060
  %v2063 = vmul.f32 %v2052, %v2061
  %v2064 = vmul.f32 %v2053, %v2061
  %v2065 = vmul.f32 %v2054, %v2061
  %v2066 = vmul.f32 %v2055, %v2061
  %v2067 = vld [vmem:[%s10] sm:$0x1]
  %v2069 = vlaneseq
  %v2070 = vshrl.u32 %v2069, 7
  %v2071 = vsub.s32 0, %v2070
  %v2072 = vrot.slane %v2067, %v2071
  %v2074 = vadd.f32 %v2063, %v2072
  %v2075 = vadd.f32 %v2064, %v2072
  %v2076 = vadd.f32 %v2065, %v2072
  %v2077 = vadd.f32 %v2066, %v2072
  %v2078 = vld [vmem:[%s11] sm:$0xff]
  %v2079 = vld [vmem:[%s11 + $0x8] sm:$0xff]
  %v2080 = vld [vmem:[%s11 + $0x10] sm:$0xff]
  %v2081 = vld [vmem:[%s11 + $0x18] sm:$0xff]
  %v2082 = vpack.c.bf16 %v2075, %v2074
  %v2083 = vpack.c.bf16 %v2077, %v2076
  %v2084 = vpack.c.bf16 %v2079, %v2078
  %v2085 = vpack.c.bf16 %v2081, %v2080
  %v2086 = vld [vmem:[%s12] sm:$0x1]
  %v2088 = vlaneseq
  %v2089 = vshrl.u32 %v2088, 7
  %v2090 = vsub.s32 0, %v2089
  %v2091 = vrot.slane %v2086, %v2090
  %v2094 = vsel %vm84, %v2082, 0
  %v2097 = vsel %vm84, %v2083, 0
  %2099 = vmatprep.subr.bf16.mxu0 0
  %2100 = vmatpush1.bf16.msra.mxu0 %v2084
  %2101 = vmatprep.subr.bf16.mxu0 0
  %2102 = vmatpush1.bf16.msra.mxu0 %v2085
  %2103 = vmatprep.subr.bf16.mxu0 0
  %2104 = vmatpush1.bf16.msra.mxu0 0
  %2105 = vmatprep.subr.bf16.mxu0 0
  %2106 = vmatpush1.bf16.msra.mxu0 0
  %2107 = vmatprep.subr.bf16.mxu0 0
  %2108 = vmatpush1.bf16.msra.mxu0 0
  %2109 = vmatprep.subr.bf16.mxu0 0
  %2110 = vmatpush1.bf16.msra.mxu0 0
  %2111 = vmatprep.subr.bf16.mxu0 0
  %2112 = vmatpush1.bf16.msra.mxu0 0
  %2113 = vmatprep.subr.bf16.mxu0 0
  %2114 = vmatpush1.bf16.msra.mxu0 0
  %2115 = vmatprep.subr.bf16.mxu0 0
  %2116 = vmatpush1.bf16.msra.mxu0 0
  %2117 = vmatprep.subr.bf16.mxu0 0
  %2118 = vmatpush1.bf16.msra.mxu0 0
  %2119 = vmatprep.subr.bf16.mxu0 0
  %2120 = vmatpush1.bf16.msra.mxu0 0
  %2121 = vmatprep.subr.bf16.mxu0 0
  %2122 = vmatpush1.bf16.msra.mxu0 0
  %2123 = vmatprep.subr.bf16.mxu0 0
  %2124 = vmatpush1.bf16.msra.mxu0 0
  %2125 = vmatprep.subr.bf16.mxu0 0
  %2126 = vmatpush1.bf16.msra.mxu0 0
  %2127 = vmatprep.subr.bf16.mxu0 0
  %2128 = vmatpush1.bf16.msra.mxu0 0
  %2129 = vmatprep.subr.bf16.mxu0 0
  %2130 = vmatpush1.bf16.msra.mxu0 0
  %2131 = vmatprep.mubr.bf16.mxu0 0
  %2132 = vmatmul.mubr.bf16.gmra.mrb[0].mxu0 %v2094
  %v2133 = vpop.f32.mrb[0].mxu0
  %v2134 = vadd.f32 %v2091, %v2133
  %v2135 = vpop.f32.mrb[0].mxu0
  %v2136 = vpop.f32.mrb[0].mxu0
  %v2137 = vadd.f32 %v2091, %v2136
  %v2138 = vpop.f32.mrb[0].mxu0
  %2139 = vmatprep.mubr.bf16.mxu0 0
  %2140 = vmatmul.mubr.bf16.gmra.mrb[0].mxu0 %v2097
  %v2141 = vpop.f32.mrb[0].mxu0
  %v2142 = vadd.f32 %v2091, %v2141
  %v2143 = vpop.f32.mrb[0].mxu0
  %v2144 = vpop.f32.mrb[0].mxu0
  %v2145 = vadd.f32 %v2091, %v2144
  %v2146 = vpop.f32.mrb[0].mxu0
  %2147 = vdwg.mxu0
  %v2148 = vmax.f32 %v2134, 0.0
  %v2149 = vmax.f32 %v2137, 0.0
  %v2150 = vmax.f32 %v2142, 0.0
  %v2151 = vmax.f32 %v2145, 0.0
  %v2152 = vld [vmem:[%s13] sm:$0xff]
  %v2153 = vld [vmem:[%s13 + $0x8] sm:$0xff]
  %v2154 = vld [vmem:[%s13 + $0x10] sm:$0xff]
  %v2155 = vld [vmem:[%s13 + $0x18] sm:$0xff]
  %v2156 = vld [vmem:[%s13 + $0x20] sm:$0xff]
  %v2157 = vld [vmem:[%s13 + $0x28] sm:$0xff]
  %v2158 = vld [vmem:[%s13 + $0x30] sm:$0xff]
  %v2159 = vld [vmem:[%s13 + $0x38] sm:$0xff]
  %v2160 = vpack.c.bf16 %v2149, %v2148
  %v2161 = vpack.c.bf16 %v2151, %v2150
  %v2162 = vpack.c.bf16 %v2153, %v2152
  %v2163 = vpack.c.bf16 %v2155, %v2154
  %v2164 = vpack.c.bf16 %v2157, %v2156
  %v2165 = vpack.c.bf16 %v2159, %v2158
  %v2166 = vld [vmem:[%s14] sm:$0x1]
  %v2168 = vlaneseq
  %v2169 = vshrl.u32 %v2168, 7
  %v2170 = vsub.s32 0, %v2169
  %v2171 = vrot.slane %v2166, %v2170
  %vm2173 = vcmask 523264
  %v2175 = vsel %vm2173, %v2160, 0
  %v2178 = vsel %vm2173, %v2161, 0
  %2180 = vmatprep.subr.bf16.mxu0 0
  %2181 = vmatpush1.bf16.msra.mxu0 %v2162
  %2182 = vmatprep.subr.bf16.mxu0 0
  %2183 = vmatpush1.bf16.msra.mxu0 %v2163
  %2184 = vmatprep.subr.bf16.mxu0 0
  %2185 = vmatpush1.bf16.msra.mxu0 %v2164
  %2186 = vmatprep.subr.bf16.mxu0 0
  %2187 = vmatpush1.bf16.msra.mxu0 %v2165
  %2188 = vmatprep.subr.bf16.mxu0 0
  %2189 = vmatpush1.bf16.msra.mxu0 0
  %2190 = vmatprep.subr.bf16.mxu0 0
  %2191 = vmatpush1.bf16.msra.mxu0 0
  %2192 = vmatprep.subr.bf16.mxu0 0
  %2193 = vmatpush1.bf16.msra.mxu0 0
  %2194 = vmatprep.subr.bf16.mxu0 0
  %2195 = vmatpush1.bf16.msra.mxu0 0
  %2196 = vmatprep.subr.bf16.mxu0 0
  %2197 = vmatpush1.bf16.msra.mxu0 0
  %2198 = vmatprep.subr.bf16.mxu0 0
  %2199 = vmatpush1.bf16.msra.mxu0 0
  %2200 = vmatprep.subr.bf16.mxu0 0
  %2201 = vmatpush1.bf16.msra.mxu0 0
  %2202 = vmatprep.subr.bf16.mxu0 0
  %2203 = vmatpush1.bf16.msra.mxu0 0
  %2204 = vmatprep.subr.bf16.mxu0 0
  %2205 = vmatpush1.bf16.msra.mxu0 0
  %2206 = vmatprep.subr.bf16.mxu0 0
  %2207 = vmatpush1.bf16.msra.mxu0 0
  %2208 = vmatprep.subr.bf16.mxu0 0
  %2209 = vmatpush1.bf16.msra.mxu0 0
  %2210 = vmatprep.subr.bf16.mxu0 0
  %2211 = vmatpush1.bf16.msra.mxu0 0
  %2212 = vmatprep.mubr.bf16.mxu0 0
  %2213 = vmatmul.mubr.bf16.gmra.mrb[0].mxu0 %v2175
  %v2214 = vpop.f32.mrb[0].mxu0
  %v2215 = vadd.f32 %v2171, %v2214
  %v2216 = vpop.f32.mrb[0].mxu0
  %v2217 = vpop.f32.mrb[0].mxu0
  %v2218 = vadd.f32 %v2171, %v2217
  %v2219 = vpop.f32.mrb[0].mxu0
  %2220 = vmatprep.mubr.bf16.mxu0 0
  %2221 = vmatmul.mubr.bf16.gmra.mrb[0].mxu0 %v2178
  %v2222 = vpop.f32.mrb[0].mxu0
  %v2223 = vadd.f32 %v2171, %v2222
  %v2224 = vpop.f32.mrb[0].mxu0
  %v2225 = vpop.f32.mrb[0].mxu0
  %v2226 = vadd.f32 %v2171, %v2225
  %v2227 = vpop.f32.mrb[0].mxu0
  %2228 = vdwg.mxu0
  %v2229 = vadd.f32 %v2074, %v2215
  %v2230 = vadd.f32 %v2075, %v2218
  %v2231 = vadd.f32 %v2076, %v2223
  %v2232 = vadd.f32 %v2077, %v2226
  %v2233 = vsel %vm84, %v2229, 0.0
  %2234 = vadd.xlane.f32.xlu0 %v2233
  %v2235 = vpop.xlane.xlu0 %2234
  %v2236 = vsel %vm84, %v2230, 0.0
  %2237 = vadd.xlane.f32.xlu0 %v2236
  %v2238 = vpop.xlane.xlu0 %2237
  %v2239 = vsel %vm84, %v2231, 0.0
  %2240 = vadd.xlane.f32.xlu0 %v2239
  %v2241 = vpop.xlane.xlu0 %2240
  %v2242 = vsel %vm84, %v2232, 0.0
  %2243 = vadd.xlane.f32.xlu0 %v2242
  %v2244 = vpop.xlane.xlu0 %2243
  %v2245 = vmul.f32 %v2235, %v2015
  %v2246 = vmul.f32 %v2238, %v2015
  %v2247 = vmul.f32 %v2241, %v2015
  %v2248 = vmul.f32 %v2244, %v2015
  %v2249 = vsub.f32 %v2229, %v2245
  %v2250 = vsub.f32 %v2230, %v2246
  %v2251 = vsub.f32 %v2231, %v2247
  %v2252 = vsub.f32 %v2232, %v2248
  %v2253 = vmul.f32 %v2249, %v2249
  %v2254 = vmul.f32 %v2250, %v2250
  %v2255 = vmul.f32 %v2251, %v2251
  %v2256 = vmul.f32 %v2252, %v2252
  %v2257 = vsel %vm84, %v2253, 0.0
  %2258 = vadd.xlane.f32.xlu0 %v2257
  %v2259 = vpop.xlane.xlu0 %2258
  %v2260 = vsel %vm84, %v2254, 0.0
  %2261 = vadd.xlane.f32.xlu0 %v2260
  %v2262 = vpop.xlane.xlu0 %2261
  %v2263 = vsel %vm84, %v2255, 0.0
  %2264 = vadd.xlane.f32.xlu0 %v2263
  %v2265 = vpop.xlane.xlu0 %2264
  %v2266 = vsel %vm84, %v2256, 0.0
  %2267 = vadd.xlane.f32.xlu0 %v2266
  %v2268 = vpop.xlane.xlu0 %2267
  %v2269 = vmul.f32 %v2259, %v2015
  %v2270 = vmul.f32 %v2262, %v2015
  %v2271 = vmul.f32 %v2265, %v2015
  %v2272 = vmul.f32 %v2268, %v2015
  %v2273 = vadd.f32 %v2269, 1e-05
  %v2274 = vadd.f32 %v2270, 1e-05
  %v2275 = vadd.f32 %v2271, 1e-05
  %v2276 = vadd.f32 %v2272, 1e-05
  %v2277 = vrsqrt.pop %v2273
  %v2278 = vrsqrt.pop %v2274
  %v2279 = vrsqrt.pop %v2275
  %v2280 = vrsqrt.pop %v2276
  %v2281 = vmul.f32 %v2249, %v2277
  %v2282 = vmul.f32 %v2250, %v2278
  %v2283 = vmul.f32 %v2251, %v2279
  %v2284 = vmul.f32 %v2252, %v2280
  %v2285 = vld [vmem:[%s15] sm:$0x1]
  %v2287 = vlaneseq
  %v2288 = vshrl.u32 %v2287, 7
  %v2289 = vsub.s32 0, %v2288
  %v2290 = vrot.slane %v2285, %v2289
  %v2292 = vmul.f32 %v2281, %v2290
  %v2293 = vmul.f32 %v2282, %v2290
  %v2294 = vmul.f32 %v2283, %v2290
  %v2295 = vmul.f32 %v2284, %v2290
  %v2296 = vld [vmem:[%s16] sm:$0x1]
  %v2298 = vlaneseq
  %v2299 = vshrl.u32 %v2298, 7
  %v2300 = vsub.s32 0, %v2299
  %v2301 = vrot.slane %v2296, %v2300
  %v2303 = vadd.f32 %v2292, %v2301
  %v2304 = vadd.f32 %v2293, %v2301
  %v2305 = vadd.f32 %v2294, %v2301
  %v2306 = vadd.f32 %v2295, %v2301
  %2307 = vst.msk [vmem:[%s17] sm:$0xff] %vm84, %v2303
  %2308 = vst.msk [vmem:[%s17 + $0x8] sm:$0xff] %vm84, %v2304
  %2309 = vst.msk [vmem:[%s17 + $0x10] sm:$0xff] %vm84, %v2305
  %2310 = vst.msk [vmem:[%s17 + $0x18] sm:$0xff] %vm84, %v2306
  // Predicated region
  $region70: #{detr_forward.4} parent=0 // pred_check
    _
  $region71: #{detr_forward.4} parent=0 // pred_check_branch
    %2312 = sbr.rel (0) target = $region73
  $region72: #{detr_forward.4} parent=0 // pred_region
    _
  $region73: #{detr_forward.4} parent=0 // pred_fallthru
    _
  // Predicated region
  $region74: #{detr_forward.4} parent=0 // pred_check
    _
  $region75: #{detr_forward.4} parent=0 // pred_check_branch
    %2314 = sbr.rel (0) target = $region77
  $region76: #{detr_forward.4} parent=0 // pred_region
    _
  $region77: #{detr_forward.4} parent=0 // pred_fallthru
    _

// kernel: detr_forward.5
$region0: #{detr_forward.5}
  #allocation0 [shape = 'u32[]', space=smem, size = 0x4, offset = 0x4, fixed_abs, tag = 'smem constant byte address 0x4 - core index']
  #allocation1 [shape = 'u32[144,128]{1,0:T(1,128)}', space=vmem, size = 0x12000, scoped, tag = 'internal scratch']
  %s0 = inlined_call_operand.smem [shape: u32[40], index: -1, kind: input, shape index: {}]
  %s1 = sld [smem:[%s0]]
  %s2 = scalar_lea.smem %s0, 1
  %s3 = sld [smem:[%s2]]
  %s4 = scalar_lea.smem %s0, 2
  %s5 = sld [smem:[%s4]]
  %s6 = scalar_lea.smem %s0, 3
  %s7 = sld [smem:[%s6]]
  %s8 = scalar_lea.smem %s0, 4
  %s9 = sld [smem:[%s8]]
  %s10 = scalar_lea.smem %s0, 5
  %s11 = sld [smem:[%s10]]
  %s12 = scalar_lea.smem %s0, 6
  %s13 = sld [smem:[%s12]]
  %s14 = scalar_lea.smem %s0, 7
  %s15 = sld [smem:[%s14]]
  %s16 = scalar_lea.smem %s0, 8
  %s17 = sld [smem:[%s16]]
  %s18 = scalar_lea.smem %s0, 9
  %s19 = sld [smem:[%s18]]
  %s20 = scalar_lea.smem %s0, 10
  %s21 = sld [smem:[%s20]]
  %s22 = scalar_lea.smem %s0, 11
  %s23 = sld [smem:[%s22]]
  %s24 = scalar_lea.smem %s0, 12
  %s25 = sld [smem:[%s24]]
  %s26 = scalar_lea.smem %s0, 13
  %s27 = sld [smem:[%s26]]
  %s28 = scalar_lea.smem %s0, 14
  %s29 = sld [smem:[%s28]]
  %s30 = scalar_lea.smem %s0, 15
  %s31 = sld [smem:[%s30]]
  %s32 = scalar_lea.smem %s0, 16
  %s33 = sld [smem:[%s32]]
  %s34 = scalar_lea.smem %s0, 17
  %s35 = sld [smem:[%s34]]
  %s36 = scalar_lea.smem %s0, 18
  %s37 = sld [smem:[%s36]]
  %s38 = scalar_lea.smem %s0, 19
  %s39 = sld [smem:[%s38]]
  %s40 = scalar_lea.smem %s0, 20
  %s41 = sld [smem:[%s40]]
  %s42 = scalar_lea.smem %s0, 21
  %s43 = sld [smem:[%s42]]
  %s44 = scalar_lea.smem %s0, 22
  %s45 = sld [smem:[%s44]]
  %s46 = scalar_lea.smem %s0, 23
  %s47 = sld [smem:[%s46]]
  %s48 = scalar_lea.smem %s0, 24
  %s49 = sld [smem:[%s48]]
  %s50 = scalar_lea.smem %s0, 25
  %s51 = sld [smem:[%s50]]
  %s52 = scalar_lea.smem %s0, 26
  %s53 = sld [smem:[%s52]]
  %s54 = scalar_lea.smem %s0, 27
  %s55 = sld [smem:[%s54]]
  %s56 = scalar_lea.smem %s0, 28
  %s57 = sld [smem:[%s56]]
  %s58 = scalar_lea.smem %s0, 29
  %s59 = sld [smem:[%s58]]
  %s60 = scalar_lea.smem %s0, 30
  %s61 = sld [smem:[%s60]]
  %s62 = scalar_lea.smem %s0, 31
  %s63 = sld [smem:[%s62]]
  %s64 = scalar_lea.smem %s0, 32
  %s65 = sld [smem:[%s64]]
  %s66 = scalar_lea.smem %s0, 33
  %s67 = sld [smem:[%s66]]
  %s68 = scalar_lea.smem %s0, 34
  %s69 = sld [smem:[%s68]]
  %s70 = scalar_lea.smem %s0, 35
  %s71 = sld [smem:[%s70]]
  %s72 = scalar_lea.smem %s0, 36
  %s73 = sld [smem:[%s72]]
  %s74 = scalar_lea.smem %s0, 37
  %s75 = sld [smem:[%s74]]
  %s76 = scalar_lea.smem %s0, 38
  %s77 = sld [smem:[%s76]]
  %s78 = scalar_lea.smem %s0, 39
  %s79 = sld [smem:[%s78]]
  %80 = xla_tuple %s77, %s79
  %s81 = sld [smem:[#allocation0]]
  $region214: #{detr_forward.5} parent=0
    _
  %s83 = ssub.s32 1, %s81
  %s84 = scalar_select 0, %s83, %s81
  $region1: #{detr_forward.5} parent=0
    #allocation2 [shape = 'u8[512]{0}', space=vmem, size = 0x400, scoped, tag = 'input window, operand 21, single buffered']
    #allocation3 [shape = 's32[1]{0}', space=sflag, size = 0x4, scoped, tag = 'scoped memory for detr_forward.5']
    #allocation4 [shape = 'u8[512]{0}', space=vmem, size = 0x400, scoped, tag = 'input window, operand 23, single buffered']
    #allocation5 [shape = 's32[1]{0}', space=sflag, size = 0x4, scoped, tag = 'scoped memory for detr_forward.5']
    #allocation6 [shape = 'u8[512]{0}', space=vmem, size = 0x400, scoped, tag = 'input window, operand 25, single buffered']
    #allocation7 [shape = 'u8[512]{0}', space=vmem, size = 0x400, scoped, tag = 'input window, operand 26, single buffered']
    #allocation8 [shape = 's32[1]{0}', space=sflag, size = 0x4, scoped, tag = 'scoped memory for detr_forward.5']
    #allocation9 [shape = 'u8[512]{0}', space=vmem, size = 0x400, scoped, tag = 'input window, operand 27, single buffered']
    #allocation10 [shape = 'u8[512]{0}', space=vmem, size = 0x400, scoped, tag = 'input window, operand 28, single buffered']
    #allocation11 [shape = 's32[1]{0}', space=sflag, size = 0x4, scoped, tag = 'scoped memory for detr_forward.5']
    #allocation12 [shape = 'u8[512]{0}', space=vmem, size = 0x400, scoped, tag = 'input window, operand 29, single buffered']
    #allocation13 [shape = 'u8[512]{0}', space=vmem, size = 0x400, scoped, tag = 'input window, operand 31, single buffered']
    #allocation14 [shape = 's32[1]{0}', space=sflag, size = 0x4, scoped, tag = 'scoped memory for detr_forward.5']
    #allocation15 [shape = 'u8[512]{0}', space=vmem, size = 0x400, scoped, tag = 'input window, operand 33, single buffered']
    #allocation16 [shape = 'u8[512]{0}', space=vmem, size = 0x400, scoped, tag = 'input window, operand 35, single buffered']
    #allocation17 [shape = 's32[1]{0}', space=sflag, size = 0x4, scoped, tag = 'scoped memory for detr_forward.5']
    #allocation18 [shape = 'u8[512]{0}', space=vmem, size = 0x400, scoped, tag = 'input window, operand 37, single buffered']
    %85 = vsyncpa [#allocation3], 0
    %86 = vsyncpa [#allocation5], 0
    %87 = vsyncpa [#allocation8], 0
    %88 = vsyncpa [#allocation11], 0
    %89 = vsyncpa [#allocation14], 0
    %90 = vsyncpa [#allocation17], 0
    // Predicated region
    $region2: #{detr_forward.5} parent=1 // pred_check
      _
    $region3: #{detr_forward.5} parent=1 // pred_check_branch
      %92 = sbr.rel (0) target = $region5
    $region4: #{detr_forward.5} parent=1 // pred_region
      _
    $region5: #{detr_forward.5} parent=1 // pred_fallthru
      _
    // Predicated region
    $region6: #{detr_forward.5} parent=1 // pred_check
      _
    $region7: #{detr_forward.5} parent=1 // pred_check_branch
      %94 = sbr.rel (0) target = $region9
    $region8: #{detr_forward.5} parent=1 // pred_region
      _
    $region9: #{detr_forward.5} parent=1 // pred_fallthru
      _
    // Predicated region
    $region10: #{detr_forward.5} parent=1 // pred_check
      _
    $region11: #{detr_forward.5} parent=1 // pred_check_branch
      %96 = sbr.rel (0) target = $region13
    $region12: #{detr_forward.5} parent=1 // pred_region
      _
    $region13: #{detr_forward.5} parent=1 // pred_fallthru
      _
    // Predicated region
    $region14: #{detr_forward.5} parent=1 // pred_check
      _
    $region15: #{detr_forward.5} parent=1 // pred_check_branch
      %98 = sbr.rel (0) target = $region17
    $region16: #{detr_forward.5} parent=1 // pred_region
      _
    $region17: #{detr_forward.5} parent=1 // pred_fallthru
      _
    // Predicated region
    $region18: #{detr_forward.5} parent=1 // pred_check
      _
    $region19: #{detr_forward.5} parent=1 // pred_check_branch
      %100 = sbr.rel (0) target = $region21
    $region20: #{detr_forward.5} parent=1 // pred_region
      _
    $region21: #{detr_forward.5} parent=1 // pred_fallthru
      _
    // Predicated region
    $region22: #{detr_forward.5} parent=1 // pred_check
      _
    $region23: #{detr_forward.5} parent=1 // pred_check_branch
      %102 = sbr.rel (0) target = $region25
    $region24: #{detr_forward.5} parent=1 // pred_region
      _
    $region25: #{detr_forward.5} parent=1 // pred_fallthru
      _
    // Predicated region
    $region26: #{detr_forward.5} parent=1 // pred_check
      _
    $region27: #{detr_forward.5} parent=1 // pred_check_branch
      %104 = sbr.rel (0) target = $region29
    $region28: #{detr_forward.5} parent=1 // pred_region
      _
    $region29: #{detr_forward.5} parent=1 // pred_fallthru
      _
    // Predicated region
    $region30: #{detr_forward.5} parent=1 // pred_check
      _
    $region31: #{detr_forward.5} parent=1 // pred_check_branch
      %106 = sbr.rel (0) target = $region33
    $region32: #{detr_forward.5} parent=1 // pred_region
      _
    $region33: #{detr_forward.5} parent=1 // pred_fallthru
      _
    // Predicated region
    $region34: #{detr_forward.5} parent=1 // pred_check
      _
    $region35: #{detr_forward.5} parent=1 // pred_check_branch
      %108 = sbr.rel (0) target = $region37
    $region36: #{detr_forward.5} parent=1 // pred_region
      _
    $region37: #{detr_forward.5} parent=1 // pred_fallthru
      _
    // Predicated region
    $region38: #{detr_forward.5} parent=1 // pred_check
      _
    $region39: #{detr_forward.5} parent=1 // pred_check_branch
      %110 = sbr.rel (0) target = $region41
    $region40: #{detr_forward.5} parent=1 // pred_region
      _
    $region41: #{detr_forward.5} parent=1 // pred_fallthru
      _
    // Predicated region
    $region42: #{detr_forward.5} parent=1 // pred_check
      _
    $region43: #{detr_forward.5} parent=1 // pred_check_branch
      %112 = sbr.rel (0) target = $region45
    $region44: #{detr_forward.5} parent=1 // pred_region
      _
    $region45: #{detr_forward.5} parent=1 // pred_fallthru
      _
    // Predicated region
    $region46: #{detr_forward.5} parent=1 // pred_check
      _
    $region47: #{detr_forward.5} parent=1 // pred_check_branch
      %114 = sbr.rel (0) target = $region49
    $region48: #{detr_forward.5} parent=1 // pred_region
      _
    $region49: #{detr_forward.5} parent=1 // pred_fallthru
      _
    // Predicated region
    $region50: #{detr_forward.5} parent=1 // pred_check
      _
    $region51: #{detr_forward.5} parent=1 // pred_check_branch
      %116 = sbr.rel (0) target = $region53
    $region52: #{detr_forward.5} parent=1 // pred_region
      _
    $region53: #{detr_forward.5} parent=1 // pred_fallthru
      _
    // Predicated region
    $region54: #{detr_forward.5} parent=1 // pred_check
      _
    $region55: #{detr_forward.5} parent=1 // pred_check_branch
      %118 = sbr.rel (0) target = $region57
    $region56: #{detr_forward.5} parent=1 // pred_region
      _
    $region57: #{detr_forward.5} parent=1 // pred_fallthru
      _
    // Predicated region
    $region58: #{detr_forward.5} parent=1 // pred_check
      _
    $region59: #{detr_forward.5} parent=1 // pred_check_branch
      %120 = sbr.rel (0) target = $region61
    $region60: #{detr_forward.5} parent=1 // pred_region
      _
    $region61: #{detr_forward.5} parent=1 // pred_fallthru
      _
    // Predicated region
    $region62: #{detr_forward.5} parent=1 // pred_check
      _
    $region63: #{detr_forward.5} parent=1 // pred_check_branch
      %122 = sbr.rel (0) target = $region65
    $region64: #{detr_forward.5} parent=1 // pred_region
      _
    $region65: #{detr_forward.5} parent=1 // pred_fallthru
      _
    // Predicated region
    $region66: #{detr_forward.5} parent=1 // pred_check
      _
    $region67: #{detr_forward.5} parent=1 // pred_check_branch
      %124 = sbr.rel (0) target = $region69
    $region68: #{detr_forward.5} parent=1 // pred_region
      _
    $region69: #{detr_forward.5} parent=1 // pred_fallthru
      _
    // Predicated region
    $region70: #{detr_forward.5} parent=1 // pred_check
      _
    $region71: #{detr_forward.5} parent=1 // pred_check_branch
      %126 = sbr.rel (0) target = $region73
    $region72: #{detr_forward.5} parent=1 // pred_region
      _
    $region73: #{detr_forward.5} parent=1 // pred_fallthru
      _
    // Predicated region
    $region74: #{detr_forward.5} parent=1 // pred_check
      _
    $region75: #{detr_forward.5} parent=1 // pred_check_branch
      %128 = sbr.rel (0) target = $region77
    $region76: #{detr_forward.5} parent=1 // pred_region
      _
    $region77: #{detr_forward.5} parent=1 // pred_fallthru
      _
    // Predicated region
    $region78: #{detr_forward.5} parent=1 // pred_check
      _
    $region79: #{detr_forward.5} parent=1 // pred_check_branch
      %130 = sbr.rel (0) target = $region81
    $region80: #{detr_forward.5} parent=1 // pred_region
      _
    $region81: #{detr_forward.5} parent=1 // pred_fallthru
      _
    // Predicated region
    $region82: #{detr_forward.5} parent=1 // pred_check
      _
    $region83: #{detr_forward.5} parent=1 // pred_check_branch
      %132 = sbr.rel (0) target = $region85
    $region84: #{detr_forward.5} parent=1 // pred_region
      _
    $region85: #{detr_forward.5} parent=1 // pred_fallthru
      _
    // Predicated region
    $region86: #{detr_forward.5} parent=1 // pred_check
      _
    $region87: #{detr_forward.5} parent=1 // pred_check_branch
      %134 = sbr.rel (0) target = $region89
    $region88: #{detr_forward.5} parent=1 // pred_region
      %s136 = ssub.s32 16, 16
      %137 = vsyncadd [#allocation3], %s136
      %s139 = sshll.u32 [#allocation2], 4
      %s140 = int_to_ptr.vmem [resolvable:$true] %s139
      %142 = dma.hbm_to_vmem [thread:$0]  %s43, 16, %s140, [#allocation3]
    $region89: #{detr_forward.5} parent=1 // pred_fallthru
      _
    // Predicated region
    $region90: #{detr_forward.5} parent=1 // pred_check
      _
    $region91: #{detr_forward.5} parent=1 // pred_check_branch
      %144 = sbr.rel (0) target = $region93
    $region92: #{detr_forward.5} parent=1 // pred_region
      _
    $region93: #{detr_forward.5} parent=1 // pred_fallthru
      _
    // Predicated region
    $region94: #{detr_forward.5} parent=1 // pred_check
      _
    $region95: #{detr_forward.5} parent=1 // pred_check_branch
      %146 = sbr.rel (0) target = $region97
    $region96: #{detr_forward.5} parent=1 // pred_region
      %s148 = ssub.s32 16, 16
      %149 = vsyncadd [#allocation5], %s148
      %s151 = sshll.u32 [#allocation4], 4
      %s152 = int_to_ptr.vmem [resolvable:$true] %s151
      %154 = dma.hbm_to_vmem [thread:$0]  %s47, 16, %s152, [#allocation5]
    $region97: #{detr_forward.5} parent=1 // pred_fallthru
      _
    // Predicated region
    $region98: #{detr_forward.5} parent=1 // pred_check
      _
    $region99: #{detr_forward.5} parent=1 // pred_check_branch
      %156 = sbr.rel (0) target = $region101
    $region100: #{detr_forward.5} parent=1 // pred_region
      _
    $region101: #{detr_forward.5} parent=1 // pred_fallthru
      _
    // Predicated region
    $region102: #{detr_forward.5} parent=1 // pred_check
      _
    $region103: #{detr_forward.5} parent=1 // pred_check_branch
      %158 = sbr.rel (0) target = $region105
    $region104: #{detr_forward.5} parent=1 // pred_region
      %s160 = ssub.s32 16, 16
      %161 = vsyncadd [#allocation5], %s160
      %s163 = sshll.u32 [#allocation6], 4
      %s164 = int_to_ptr.vmem [resolvable:$true] %s163
      %166 = dma.hbm_to_vmem [thread:$0]  %s51, 16, %s164, [#allocation5]
    $region105: #{detr_forward.5} parent=1 // pred_fallthru
      _
    // Predicated region
    $region106: #{detr_forward.5} parent=1 // pred_check
      _
    $region107: #{detr_forward.5} parent=1 // pred_check_branch
      %168 = sbr.rel (0) target = $region109
    $region108: #{detr_forward.5} parent=1 // pred_region
      %s170 = ssub.s32 16, 16
      %171 = vsyncadd [#allocation8], %s170
      %s173 = sshll.u32 [#allocation7], 4
      %s174 = int_to_ptr.vmem [resolvable:$true] %s173
      %176 = dma.hbm_to_vmem [thread:$0]  %s53, 16, %s174, [#allocation8]
    $region109: #{detr_forward.5} parent=1 // pred_fallthru
      _
    // Predicated region
    $region110: #{detr_forward.5} parent=1 // pred_check
      _
    $region111: #{detr_forward.5} parent=1 // pred_check_branch
      %178 = sbr.rel (0) target = $region113
    $region112: #{detr_forward.5} parent=1 // pred_region
      %s180 = ssub.s32 16, 16
      %181 = vsyncadd [#allocation8], %s180
      %s183 = sshll.u32 [#allocation9], 4
      %s184 = int_to_ptr.vmem [resolvable:$true] %s183
      %186 = dma.hbm_to_vmem [thread:$0]  %s55, 16, %s184, [#allocation8]
    $region113: #{detr_forward.5} parent=1 // pred_fallthru
      _
    // Predicated region
    $region114: #{detr_forward.5} parent=1 // pred_check
      _
    $region115: #{detr_forward.5} parent=1 // pred_check_branch
      %188 = sbr.rel (0) target = $region117
    $region116: #{detr_forward.5} parent=1 // pred_region
      %s190 = ssub.s32 16, 16
      %191 = vsyncadd [#allocation11], %s190
      %s193 = sshll.u32 [#allocation10], 4
      %s194 = int_to_ptr.vmem [resolvable:$true] %s193
      %196 = dma.hbm_to_vmem [thread:$0]  %s57, 16, %s194, [#allocation11]
    $region117: #{detr_forward.5} parent=1 // pred_fallthru
      _
    // Predicated region
    $region118: #{detr_forward.5} parent=1 // pred_check
      _
    $region119: #{detr_forward.5} parent=1 // pred_check_branch
      %198 = sbr.rel (0) target = $region121
    $region120: #{detr_forward.5} parent=1 // pred_region
      %s200 = ssub.s32 16, 16
      %201 = vsyncadd [#allocation11], %s200
      %s203 = sshll.u32 [#allocation12], 4
      %s204 = int_to_ptr.vmem [resolvable:$true] %s203
      %206 = dma.hbm_to_vmem [thread:$0]  %s59, 16, %s204, [#allocation11]
    $region121: #{detr_forward.5} parent=1 // pred_fallthru
      _
    // Predicated region
    $region122: #{detr_forward.5} parent=1 // pred_check
      _
    $region123: #{detr_forward.5} parent=1 // pred_check_branch
      %208 = sbr.rel (0) target = $region125
    $region124: #{detr_forward.5} parent=1 // pred_region
      _
    $region125: #{detr_forward.5} parent=1 // pred_fallthru
      _
    // Predicated region
    $region126: #{detr_forward.5} parent=1 // pred_check
      _
    $region127: #{detr_forward.5} parent=1 // pred_check_branch
      %210 = sbr.rel (0) target = $region129
    $region128: #{detr_forward.5} parent=1 // pred_region
      %s212 = ssub.s32 16, 16
      %213 = vsyncadd [#allocation14], %s212
      %s215 = sshll.u32 [#allocation13], 4
      %s216 = int_to_ptr.vmem [resolvable:$true] %s215
      %218 = dma.hbm_to_vmem [thread:$0]  %s63, 16, %s216, [#allocation14]
    $region129: #{detr_forward.5} parent=1 // pred_fallthru
      _
    // Predicated region
    $region130: #{detr_forward.5} parent=1 // pred_check
      _
    $region131: #{detr_forward.5} parent=1 // pred_check_branch
      %220 = sbr.rel (0) target = $region133
    $region132: #{detr_forward.5} parent=1 // pred_region
      _
    $region133: #{detr_forward.5} parent=1 // pred_fallthru
      _
    // Predicated region
    $region134: #{detr_forward.5} parent=1 // pred_check
      _
    $region135: #{detr_forward.5} parent=1 // pred_check_branch
      %222 = sbr.rel (0) target = $region137
    $region136: #{detr_forward.5} parent=1 // pred_region
      %s224 = ssub.s32 16, 16
      %225 = vsyncadd [#allocation14], %s224
      %s227 = sshll.u32 [#allocation15], 4
      %s228 = int_to_ptr.vmem [resolvable:$true] %s227
      %230 = dma.hbm_to_vmem [thread:$0]  %s67, 16, %s228, [#allocation14]
    $region137: #{detr_forward.5} parent=1 // pred_fallthru
      _
    // Predicated region
    $region138: #{detr_forward.5} parent=1 // pred_check
      _
    $region139: #{detr_forward.5} parent=1 // pred_check_branch
      %232 = sbr.rel (0) target = $region141
    $region140: #{detr_forward.5} parent=1 // pred_region
      _
    $region141: #{detr_forward.5} parent=1 // pred_fallthru
      _
    // Predicated region
    $region142: #{detr_forward.5} parent=1 // pred_check
      _
    $region143: #{detr_forward.5} parent=1 // pred_check_branch
      %234 = sbr.rel (0) target = $region145
    $region144: #{detr_forward.5} parent=1 // pred_region
      %s236 = ssub.s32 16, 16
      %237 = vsyncadd [#allocation17], %s236
      %s239 = sshll.u32 [#allocation16], 4
      %s240 = int_to_ptr.vmem [resolvable:$true] %s239
      %242 = dma.hbm_to_vmem [thread:$0]  %s71, 16, %s240, [#allocation17]
    $region145: #{detr_forward.5} parent=1 // pred_fallthru
      _
    // Predicated region
    $region146: #{detr_forward.5} parent=1 // pred_check
      _
    $region147: #{detr_forward.5} parent=1 // pred_check_branch
      %244 = sbr.rel (0) target = $region149
    $region148: #{detr_forward.5} parent=1 // pred_region
      _
    $region149: #{detr_forward.5} parent=1 // pred_fallthru
      _
    // Predicated region
    $region150: #{detr_forward.5} parent=1 // pred_check
      _
    $region151: #{detr_forward.5} parent=1 // pred_check_branch
      %246 = sbr.rel (0) target = $region153
    $region152: #{detr_forward.5} parent=1 // pred_region
      %s248 = ssub.s32 16, 16
      %249 = vsyncadd [#allocation17], %s248
      %s251 = sshll.u32 [#allocation18], 4
      %s252 = int_to_ptr.vmem [resolvable:$true] %s251
      %254 = dma.hbm_to_vmem [thread:$0]  %s75, 16, %s252, [#allocation17]
    $region153: #{detr_forward.5} parent=1 // pred_fallthru
      _
    // Predicated region
    $region154: #{detr_forward.5} parent=1 // pred_check
      _
    $region155: #{detr_forward.5} parent=1 // pred_check_branch
      %256 = sbr.rel (0) target = $region157
    $region156: #{detr_forward.5} parent=1 // pred_region
      %257 = dma.done [#allocation3], 16
    $region157: #{detr_forward.5} parent=1 // pred_fallthru
      _
    // Predicated region
    $region158: #{detr_forward.5} parent=1 // pred_check
      _
    $region159: #{detr_forward.5} parent=1 // pred_check_branch
      %259 = sbr.rel (0) target = $region161
    $region160: #{detr_forward.5} parent=1 // pred_region
      %260 = dma.done [#allocation5], 16
    $region161: #{detr_forward.5} parent=1 // pred_fallthru
      _
    // Predicated region
    $region162: #{detr_forward.5} parent=1 // pred_check
      _
    $region163: #{detr_forward.5} parent=1 // pred_check_branch
      %262 = sbr.rel (0) target = $region165
    $region164: #{detr_forward.5} parent=1 // pred_region
      %263 = dma.done [#allocation5], 16
    $region165: #{detr_forward.5} parent=1 // pred_fallthru
      _
    // Predicated region
    $region166: #{detr_forward.5} parent=1 // pred_check
      _
    $region167: #{detr_forward.5} parent=1 // pred_check_branch
      %265 = sbr.rel (0) target = $region169
    $region168: #{detr_forward.5} parent=1 // pred_region
      %266 = dma.done [#allocation8], 16
    $region169: #{detr_forward.5} parent=1 // pred_fallthru
      _
    // Predicated region
    $region170: #{detr_forward.5} parent=1 // pred_check
      _
    $region171: #{detr_forward.5} parent=1 // pred_check_branch
      %268 = sbr.rel (0) target = $region173
    $region172: #{detr_forward.5} parent=1 // pred_region
      %269 = dma.done [#allocation8], 16
    $region173: #{detr_forward.5} parent=1 // pred_fallthru
      _
    // Predicated region
    $region174: #{detr_forward.5} parent=1 // pred_check
      _
    $region175: #{detr_forward.5} parent=1 // pred_check_branch
      %271 = sbr.rel (0) target = $region177
    $region176: #{detr_forward.5} parent=1 // pred_region
      %272 = dma.done [#allocation11], 16
    $region177: #{detr_forward.5} parent=1 // pred_fallthru
      _
    // Predicated region
    $region178: #{detr_forward.5} parent=1 // pred_check
      _
    $region179: #{detr_forward.5} parent=1 // pred_check_branch
      %274 = sbr.rel (0) target = $region181
    $region180: #{detr_forward.5} parent=1 // pred_region
      %275 = dma.done [#allocation11], 16
    $region181: #{detr_forward.5} parent=1 // pred_fallthru
      _
    // Predicated region
    $region182: #{detr_forward.5} parent=1 // pred_check
      _
    $region183: #{detr_forward.5} parent=1 // pred_check_branch
      %277 = sbr.rel (0) target = $region185
    $region184: #{detr_forward.5} parent=1 // pred_region
      %278 = dma.done [#allocation14], 16
    $region185: #{detr_forward.5} parent=1 // pred_fallthru
      _
    // Predicated region
    $region186: #{detr_forward.5} parent=1 // pred_check
      _
    $region187: #{detr_forward.5} parent=1 // pred_check_branch
      %280 = sbr.rel (0) target = $region189
    $region188: #{detr_forward.5} parent=1 // pred_region
      %281 = dma.done [#allocation14], 16
    $region189: #{detr_forward.5} parent=1 // pred_fallthru
      _
    // Predicated region
    $region190: #{detr_forward.5} parent=1 // pred_check
      _
    $region191: #{detr_forward.5} parent=1 // pred_check_branch
      %283 = sbr.rel (0) target = $region193
    $region192: #{detr_forward.5} parent=1 // pred_region
      %284 = dma.done [#allocation17], 16
    $region193: #{detr_forward.5} parent=1 // pred_fallthru
      _
    // Predicated region
    $region194: #{detr_forward.5} parent=1 // pred_check
      _
    $region195: #{detr_forward.5} parent=1 // pred_check_branch
      %286 = sbr.rel (0) target = $region197
    $region196: #{detr_forward.5} parent=1 // pred_region
      %287 = dma.done [#allocation17], 16
    $region197: #{detr_forward.5} parent=1 // pred_fallthru
      _
    %v289 = vld [vmem:[%s1] sm:$0xff]
    %v290 = vld [vmem:[%s1 + $0x8] sm:$0xff]
    %v291 = vld [vmem:[%s1 + $0x10] sm:$0xff]
    %v292 = vld [vmem:[%s1 + $0x18] sm:$0xff]
    %v293 = vld [vmem:[%s3] sm:$0xff]
    %v294 = vld [vmem:[%s3 + $0x8] sm:$0xff]
    %v295 = vld [vmem:[%s3 + $0x10] sm:$0xff]
    %v296 = vld [vmem:[%s3 + $0x18] sm:$0xff]
    %v297 = vld [vmem:[%s7] sm:$0xff]
    %v298 = vadd.f32 %v297, 0.0
    %v299 = vld [vmem:[%s9] sm:$0xff]
    %v300 = vld [vmem:[%s9 + $0x8] sm:$0xff]
    %v301 = vld [vmem:[%s9 + $0x10] sm:$0xff]
    %v302 = vld [vmem:[%s9 + $0x18] sm:$0xff]
    %v303 = vpack.c.bf16 %v298, %v298
    %v304 = vpack.c.bf16 %v300, %v299
    %v305 = vpack.c.bf16 %v302, %v301
    %v306 = vld [vmem:[%s11] sm:$0x1]
    %v308 = vlaneseq
    %v309 = vshrl.u32 %v308, 7
    %v310 = vsub.s32 0, %v309
    %v311 = vrot.slane %v306, %v310
    %vm313 = vcmask 261120
    %v315 = vsel %vm313, %v303, 0
    %317 = vmatprep.subr.bf16.mxu0 0
    %318 = vmatpush1.bf16.msra.mxu0 %v304
    %319 = vmatprep.subr.bf16.mxu0 0
    %320 = vmatpush1.bf16.msra.mxu0 %v305
    %321 = vmatprep.subr.bf16.mxu0 0
    %322 = vmatpush1.bf16.msra.mxu0 0
    %323 = vmatprep.subr.bf16.mxu0 0
    %324 = vmatpush1.bf16.msra.mxu0 0
    %325 = vmatprep.subr.bf16.mxu0 0
    %326 = vmatpush1.bf16.msra.mxu0 0
    %327 = vmatprep.subr.bf16.mxu0 0
    %328 = vmatpush1.bf16.msra.mxu0 0
    %329 = vmatprep.subr.bf16.mxu0 0
    %330 = vmatpush1.bf16.msra.mxu0 0
    %331 = vmatprep.subr.bf16.mxu0 0
    %332 = vmatpush1.bf16.msra.mxu0 0
    %333 = vmatprep.subr.bf16.mxu0 0
    %334 = vmatpush1.bf16.msra.mxu0 0
    %335 = vmatprep.subr.bf16.mxu0 0
    %336 = vmatpush1.bf16.msra.mxu0 0
    %337 = vmatprep.subr.bf16.mxu0 0
    %338 = vmatpush1.bf16.msra.mxu0 0
    %339 = vmatprep.subr.bf16.mxu0 0
    %340 = vmatpush1.bf16.msra.mxu0 0
    %341 = vmatprep.subr.bf16.mxu0 0
    %342 = vmatpush1.bf16.msra.mxu0 0
    %343 = vmatprep.subr.bf16.mxu0 0
    %344 = vmatpush1.bf16.msra.mxu0 0
    %345 = vmatprep.subr.bf16.mxu0 0
    %346 = vmatpush1.bf16.msra.mxu0 0
    %347 = vmatprep.subr.bf16.mxu0 0
    %348 = vmatpush1.bf16.msra.mxu0 0
    %349 = vmatprep.mubr.bf16.mxu0 0
    %350 = vmatmul.mubr.bf16.gmra.mrb[0].mxu0 %v315
    %v351 = vpop.f32.mrb[0].mxu0
    %v352 = vadd.f32 %v311, %v351
    %v353 = vpop.f32.mrb[0].mxu0
    %v354 = vpop.f32.mrb[0].mxu0
    %v355 = vadd.f32 %v311, %v354
    %v356 = vpop.f32.mrb[0].mxu0
    %357 = vdwg.mxu0
    %v358 = vld [vmem:[%s13] sm:$0xff]
    %v359 = vld [vmem:[%s13 + $0x8] sm:$0xff]
    %v360 = vld [vmem:[%s13 + $0x10] sm:$0xff]
    %v361 = vld [vmem:[%s13 + $0x18] sm:$0xff]
    %v362 = vpack.c.bf16 %v359, %v358
    %v363 = vpack.c.bf16 %v361, %v360
    %v364 = vld [vmem:[%s15] sm:$0x1]
    %v366 = vlaneseq
    %v367 = vshrl.u32 %v366, 7
    %v368 = vsub.s32 0, %v367
    %v369 = vrot.slane %v364, %v368
    %v372 = vsel %vm313, 0, 0
    %374 = vmatprep.subr.bf16.mxu0 0
    %375 = vmatpush1.bf16.msra.mxu0 %v362
    %376 = vmatprep.subr.bf16.mxu0 0
    %377 = vmatpush1.bf16.msra.mxu0 %v363
    %378 = vmatprep.subr.bf16.mxu0 0
    %379 = vmatpush1.bf16.msra.mxu0 0
    %380 = vmatprep.subr.bf16.mxu0 0
    %381 = vmatpush1.bf16.msra.mxu0 0
    %382 = vmatprep.subr.bf16.mxu0 0
    %383 = vmatpush1.bf16.msra.mxu0 0
    %384 = vmatprep.subr.bf16.mxu0 0
    %385 = vmatpush1.bf16.msra.mxu0 0
    %386 = vmatprep.subr.bf16.mxu0 0
    %387 = vmatpush1.bf16.msra.mxu0 0
    %388 = vmatprep.subr.bf16.mxu0 0
    %389 = vmatpush1.bf16.msra.mxu0 0
    %390 = vmatprep.subr.bf16.mxu0 0
    %391 = vmatpush1.bf16.msra.mxu0 0
    %392 = vmatprep.subr.bf16.mxu0 0
    %393 = vmatpush1.bf16.msra.mxu0 0
    %394 = vmatprep.subr.bf16.mxu0 0
    %395 = vmatpush1.bf16.msra.mxu0 0
    %396 = vmatprep.subr.bf16.mxu0 0
    %397 = vmatpush1.bf16.msra.mxu0 0
    %398 = vmatprep.subr.bf16.mxu0 0
    %399 = vmatpush1.bf16.msra.mxu0 0
    %400 = vmatprep.subr.bf16.mxu0 0
    %401 = vmatpush1.bf16.msra.mxu0 0
    %402 = vmatprep.subr.bf16.mxu0 0
    %403 = vmatpush1.bf16.msra.mxu0 0
    %404 = vmatprep.subr.bf16.mxu0 0
    %405 = vmatpush1.bf16.msra.mxu0 0
    %406 = vmatprep.mubr.bf16.mxu0 0
    %407 = vmatmul.mubr.bf16.gmra.mrb[0].mxu0 %v372
    %v408 = vpop.f32.mrb[0].mxu0
    %v409 = vadd.f32 %v369, %v408
    %v410 = vpop.f32.mrb[0].mxu0
    %v411 = vpop.f32.mrb[0].mxu0
    %v412 = vadd.f32 %v369, %v411
    %v413 = vpop.f32.mrb[0].mxu0
    %414 = vdwg.mxu0
    %416 = vrot.lane.b32.xlu0 %v352, 96
    %v417 = vpop.permute.xlu0 %416
    %vm418 = vcmask 64512
    %v419 = vsel %vm418, %v352, 0
    %v421 = vsel %vm418, %v417, 0
    %423 = vmatprep.subr.mxu0 0.0
    %424 = vmatpush1.xpose.msra.mxu0 %v421
    %425 = vmatprep.subr.mxu0 0.0
    %426 = vmatpush1.xpose.msra.mxu0 0.0
    %427 = vmatprep.subr.mxu0 0.0
    %428 = vmatpush1.xpose.msra.mxu0 0.0
    %429 = vmatprep.subr.mxu0 0.0
    %430 = vmatpush1.xpose.msra.mxu0 0.0
    %431 = vmatprep.subr.mxu0 0.0
    %432 = vmatpush1.xpose.msra.mxu0 0.0
    %433 = vmatprep.subr.mxu0 0.0
    %434 = vmatpush1.xpose.msra.mxu0 0.0
    %435 = vmatprep.subr.mxu0 0.0
    %436 = vmatpush1.xpose.msra.mxu0 0.0
    %437 = vmatprep.subr.mxu0 0.0
    %438 = vmatpush1.xpose.msra.mxu0 0.0
    %439 = vmatprep.subr.mxu0 0.0
    %440 = vmatpush1.xpose.msra.mxu0 0.0
    %441 = vmatprep.subr.mxu0 0.0
    %442 = vmatpush1.xpose.msra.mxu0 0.0
    %443 = vmatprep.subr.mxu0 0.0
    %444 = vmatpush1.xpose.msra.mxu0 0.0
    %445 = vmatprep.subr.mxu0 0.0
    %446 = vmatpush1.xpose.msra.mxu0 0.0
    %447 = vmatprep.subr.mxu0 0.0
    %448 = vmatpush1.xpose.msra.mxu0 0.0
    %449 = vmatprep.subr.mxu0 0.0
    %450 = vmatpush1.xpose.msra.mxu0 0.0
    %451 = vmatprep.subr.mxu0 0.0
    %452 = vmatpush1.xpose.msra.mxu0 0.0
    %453 = vmatprep.subr.mxu0 0.0
    %454 = vmatpush1.xpose.msra.mxu0 0.0
    %455 = vmatprep.subr.mxu0 0.0
    %456 = vmatpush1.xpose.msra.mxu0 0.0
    %457 = vmatprep.subr.mxu0 0.0
    %458 = vmatpush1.xpose.msra.mxu0 0.0
    %459 = vmatprep.subr.mxu0 0.0
    %460 = vmatpush1.xpose.msra.mxu0 0.0
    %461 = vmatprep.subr.mxu0 0.0
    %462 = vmatpush1.xpose.msra.mxu0 0.0
    %463 = vmatprep.subr.mxu0 0.0
    %464 = vmatpush1.xpose.msra.mxu0 0.0
    %465 = vmatprep.subr.mxu0 0.0
    %466 = vmatpush1.xpose.msra.mxu0 0.0
    %467 = vmatprep.subr.mxu0 0.0
    %468 = vmatpush1.xpose.msra.mxu0 0.0
    %469 = vmatprep.subr.mxu0 0.0
    %470 = vmatpush1.xpose.msra.mxu0 0.0
    %471 = vmatprep.subr.mxu0 0.0
    %472 = vmatpush1.xpose.msra.mxu0 0.0
    %473 = vmatprep.subr.mxu0 0.0
    %474 = vmatpush1.xpose.msra.mxu0 0.0
    %475 = vmatprep.subr.mxu0 0.0
    %476 = vmatpush1.xpose.msra.mxu0 0.0
    %477 = vmatprep.subr.mxu0 0.0
    %478 = vmatpush1.xpose.msra.mxu0 0.0
    %479 = vmatprep.subr.mxu0 0.0
    %480 = vmatpush1.xpose.msra.mxu0 0.0
    %481 = vmatprep.subr.mxu0 0.0
    %482 = vmatpush1.xpose.msra.mxu0 0.0
    %483 = vmatprep.subr.mxu0 0.0
    %484 = vmatpush1.xpose.msra.mxu0 0.0
    %485 = vmatprep.subr.mxu0 0.0
    %486 = vmatpush1.xpose.msra.mxu0 0.0
    %487 = vmatprep.mubr.f32.mxu0 0.0
    %488 = vmatmul.mubr.f32.gmra.mrb[0].mxu0 %v419
    %v489 = vpop.f32.mrb[0].mxu0
    %v490 = vadd.f32 0.0, %v489
    %v491 = vpop.f32.mrb[0].mxu0
    %492 = vdwg.mxu0
    %494 = vrot.lane.b32.xlu0 %v355, 96
    %v495 = vpop.permute.xlu0 %494
    %v496 = vsel %vm418, %v355, 0
    %v498 = vsel %vm418, %v495, 0
    %500 = vmatprep.subr.mxu0 0.0
    %501 = vmatpush1.xpose.msra.mxu0 %v498
    %502 = vmatprep.subr.mxu0 0.0
    %503 = vmatpush1.xpose.msra.mxu0 0.0
    %504 = vmatprep.subr.mxu0 0.0
    %505 = vmatpush1.xpose.msra.mxu0 0.0
    %506 = vmatprep.subr.mxu0 0.0
    %507 = vmatpush1.xpose.msra.mxu0 0.0
    %508 = vmatprep.subr.mxu0 0.0
    %509 = vmatpush1.xpose.msra.mxu0 0.0
    %510 = vmatprep.subr.mxu0 0.0
    %511 = vmatpush1.xpose.msra.mxu0 0.0
    %512 = vmatprep.subr.mxu0 0.0
    %513 = vmatpush1.xpose.msra.mxu0 0.0
    %514 = vmatprep.subr.mxu0 0.0
    %515 = vmatpush1.xpose.msra.mxu0 0.0
    %516 = vmatprep.subr.mxu0 0.0
    %517 = vmatpush1.xpose.msra.mxu0 0.0
    %518 = vmatprep.subr.mxu0 0.0
    %519 = vmatpush1.xpose.msra.mxu0 0.0
    %520 = vmatprep.subr.mxu0 0.0
    %521 = vmatpush1.xpose.msra.mxu0 0.0
    %522 = vmatprep.subr.mxu0 0.0
    %523 = vmatpush1.xpose.msra.mxu0 0.0
    %524 = vmatprep.subr.mxu0 0.0
    %525 = vmatpush1.xpose.msra.mxu0 0.0
    %526 = vmatprep.subr.mxu0 0.0
    %527 = vmatpush1.xpose.msra.mxu0 0.0
    %528 = vmatprep.subr.mxu0 0.0
    %529 = vmatpush1.xpose.msra.mxu0 0.0
    %530 = vmatprep.subr.mxu0 0.0
    %531 = vmatpush1.xpose.msra.mxu0 0.0
    %532 = vmatprep.subr.mxu0 0.0
    %533 = vmatpush1.xpose.msra.mxu0 0.0
    %534 = vmatprep.subr.mxu0 0.0
    %535 = vmatpush1.xpose.msra.mxu0 0.0
    %536 = vmatprep.subr.mxu0 0.0
    %537 = vmatpush1.xpose.msra.mxu0 0.0
    %538 = vmatprep.subr.mxu0 0.0
    %539 = vmatpush1.xpose.msra.mxu0 0.0
    %540 = vmatprep.subr.mxu0 0.0
    %541 = vmatpush1.xpose.msra.mxu0 0.0
    %542 = vmatprep.subr.mxu0 0.0
    %543 = vmatpush1.xpose.msra.mxu0 0.0
    %544 = vmatprep.subr.mxu0 0.0
    %545 = vmatpush1.xpose.msra.mxu0 0.0
    %546 = vmatprep.subr.mxu0 0.0
    %547 = vmatpush1.xpose.msra.mxu0 0.0
    %548 = vmatprep.subr.mxu0 0.0
    %549 = vmatpush1.xpose.msra.mxu0 0.0
    %550 = vmatprep.subr.mxu0 0.0
    %551 = vmatpush1.xpose.msra.mxu0 0.0
    %552 = vmatprep.subr.mxu0 0.0
    %553 = vmatpush1.xpose.msra.mxu0 0.0
    %554 = vmatprep.subr.mxu0 0.0
    %555 = vmatpush1.xpose.msra.mxu0 0.0
    %556 = vmatprep.subr.mxu0 0.0
    %557 = vmatpush1.xpose.msra.mxu0 0.0
    %558 = vmatprep.subr.mxu0 0.0
    %559 = vmatpush1.xpose.msra.mxu0 0.0
    %560 = vmatprep.subr.mxu0 0.0
    %561 = vmatpush1.xpose.msra.mxu0 0.0
    %562 = vmatprep.subr.mxu0 0.0
    %563 = vmatpush1.xpose.msra.mxu0 0.0
    %564 = vmatprep.mubr.f32.mxu0 0.0
    %565 = vmatmul.mubr.f32.gmra.mrb[0].mxu0 %v496
    %v566 = vpop.f32.mrb[0].mxu0
    %v567 = vadd.f32 0.0, %v566
    %v568 = vpop.f32.mrb[0].mxu0
    %569 = vdwg.mxu0
    %v570 = vmul.f32 %v490, 0.35355338
    %v571 = vmul.f32 %v567, 0.35355338
    %v572 = vsel %vm418, %v570, -inf
    %573 = vmax.xlane.f32.xlu0 %v572
    %v574 = vpop.xlane.xlu0 %573
    %v575 = vsel %vm418, %v571, -inf
    %576 = vmax.xlane.f32.xlu0 %v575
    %v577 = vpop.xlane.xlu0 %576
    %v578 = vsub.f32 %v570, %v574
    %v579 = vsub.f32 %v571, %v577
    %v580 = vmul.f32 %v578, 1.442695
    %v581 = vpow.pop %v580
    %v582 = vmul.f32 %v579, 1.442695
    %v583 = vpow.pop %v582
    %v584 = vsel %vm418, %v581, 0.0
    %585 = vadd.xlane.f32.xlu0 %v584
    %v586 = vpop.xlane.xlu0 %585
    %v587 = vsel %vm418, %v583, 0.0
    %588 = vadd.xlane.f32.xlu0 %v587
    %v589 = vpop.xlane.xlu0 %588
    %v590 = vrcp.pop %v586
    %v591 = vrcp.pop %v589
    %v592 = vmul.f32 %v581, %v590
    %v593 = vmul.f32 %v583, %v591
    %v595 = vsel %vm418, %v592, 0
    %597 = vmatprep.subr.mxu0 0.0
    %598 = vmatpush1.msra.mxu0 %v409
    %599 = vmatprep.subr.mxu0 0.0
    %600 = vmatpush1.msra.mxu0 0.0
    %601 = vmatprep.subr.mxu0 0.0
    %602 = vmatpush1.msra.mxu0 0.0
    %603 = vmatprep.subr.mxu0 0.0
    %604 = vmatpush1.msra.mxu0 0.0
    %605 = vmatprep.subr.mxu0 0.0
    %606 = vmatpush1.msra.mxu0 0.0
    %607 = vmatprep.subr.mxu0 0.0
    %608 = vmatpush1.msra.mxu0 0.0
    %609 = vmatprep.subr.mxu0 0.0
    %610 = vmatpush1.msra.mxu0 0.0
    %611 = vmatprep.subr.mxu0 0.0
    %612 = vmatpush1.msra.mxu0 0.0
    %613 = vmatprep.subr.mxu0 0.0
    %614 = vmatpush1.msra.mxu0 0.0
    %615 = vmatprep.subr.mxu0 0.0
    %616 = vmatpush1.msra.mxu0 0.0
    %617 = vmatprep.subr.mxu0 0.0
    %618 = vmatpush1.msra.mxu0 0.0
    %619 = vmatprep.subr.mxu0 0.0
    %620 = vmatpush1.msra.mxu0 0.0
    %621 = vmatprep.subr.mxu0 0.0
    %622 = vmatpush1.msra.mxu0 0.0
    %623 = vmatprep.subr.mxu0 0.0
    %624 = vmatpush1.msra.mxu0 0.0
    %625 = vmatprep.subr.mxu0 0.0
    %626 = vmatpush1.msra.mxu0 0.0
    %627 = vmatprep.subr.mxu0 0.0
    %628 = vmatpush1.msra.mxu0 0.0
    %629 = vmatprep.subr.mxu0 0.0
    %630 = vmatpush1.msra.mxu0 0.0
    %631 = vmatprep.subr.mxu0 0.0
    %632 = vmatpush1.msra.mxu0 0.0
    %633 = vmatprep.subr.mxu0 0.0
    %634 = vmatpush1.msra.mxu0 0.0
    %635 = vmatprep.subr.mxu0 0.0
    %636 = vmatpush1.msra.mxu0 0.0
    %637 = vmatprep.subr.mxu0 0.0
    %638 = vmatpush1.msra.mxu0 0.0
    %639 = vmatprep.subr.mxu0 0.0
    %640 = vmatpush1.msra.mxu0 0.0
    %641 = vmatprep.subr.mxu0 0.0
    %642 = vmatpush1.msra.mxu0 0.0
    %643 = vmatprep.subr.mxu0 0.0
    %644 = vmatpush1.msra.mxu0 0.0
    %645 = vmatprep.subr.mxu0 0.0
    %646 = vmatpush1.msra.mxu0 0.0
    %647 = vmatprep.subr.mxu0 0.0
    %648 = vmatpush1.msra.mxu0 0.0
    %649 = vmatprep.subr.mxu0 0.0
    %650 = vmatpush1.msra.mxu0 0.0
    %651 = vmatprep.subr.mxu0 0.0
    %652 = vmatpush1.msra.mxu0 0.0
    %653 = vmatprep.subr.mxu0 0.0
    %654 = vmatpush1.msra.mxu0 0.0
    %655 = vmatprep.subr.mxu0 0.0
    %656 = vmatpush1.msra.mxu0 0.0
    %657 = vmatprep.subr.mxu0 0.0
    %658 = vmatpush1.msra.mxu0 0.0
    %659 = vmatprep.subr.mxu0 0.0
    %660 = vmatpush1.msra.mxu0 0.0
    %661 = vmatprep.mubr.f32.mxu0 0.0
    %662 = vmatmul.mubr.f32.gmra.mrb[0].mxu0 %v595
    %v663 = vpop.f32.mrb[0].mxu0
    %v664 = vadd.f32 0.0, %v663
    %v665 = vpop.f32.mrb[0].mxu0
    %666 = vdwg.mxu0
    %v668 = vsel %vm418, %v593, 0
    %670 = vmatprep.subr.mxu0 0.0
    %671 = vmatpush1.msra.mxu0 %v412
    %672 = vmatprep.subr.mxu0 0.0
    %673 = vmatpush1.msra.mxu0 0.0
    %674 = vmatprep.subr.mxu0 0.0
    %675 = vmatpush1.msra.mxu0 0.0
    %676 = vmatprep.subr.mxu0 0.0
    %677 = vmatpush1.msra.mxu0 0.0
    %678 = vmatprep.subr.mxu0 0.0
    %679 = vmatpush1.msra.mxu0 0.0
    %680 = vmatprep.subr.mxu0 0.0
    %681 = vmatpush1.msra.mxu0 0.0
    %682 = vmatprep.subr.mxu0 0.0
    %683 = vmatpush1.msra.mxu0 0.0
    %684 = vmatprep.subr.mxu0 0.0
    %685 = vmatpush1.msra.mxu0 0.0
    %686 = vmatprep.subr.mxu0 0.0
    %687 = vmatpush1.msra.mxu0 0.0
    %688 = vmatprep.subr.mxu0 0.0
    %689 = vmatpush1.msra.mxu0 0.0
    %690 = vmatprep.subr.mxu0 0.0
    %691 = vmatpush1.msra.mxu0 0.0
    %692 = vmatprep.subr.mxu0 0.0
    %693 = vmatpush1.msra.mxu0 0.0
    %694 = vmatprep.subr.mxu0 0.0
    %695 = vmatpush1.msra.mxu0 0.0
    %696 = vmatprep.subr.mxu0 0.0
    %697 = vmatpush1.msra.mxu0 0.0
    %698 = vmatprep.subr.mxu0 0.0
    %699 = vmatpush1.msra.mxu0 0.0
    %700 = vmatprep.subr.mxu0 0.0
    %701 = vmatpush1.msra.mxu0 0.0
    %702 = vmatprep.subr.mxu0 0.0
    %703 = vmatpush1.msra.mxu0 0.0
    %704 = vmatprep.subr.mxu0 0.0
    %705 = vmatpush1.msra.mxu0 0.0
    %706 = vmatprep.subr.mxu0 0.0
    %707 = vmatpush1.msra.mxu0 0.0
    %708 = vmatprep.subr.mxu0 0.0
    %709 = vmatpush1.msra.mxu0 0.0
    %710 = vmatprep.subr.mxu0 0.0
    %711 = vmatpush1.msra.mxu0 0.0
    %712 = vmatprep.subr.mxu0 0.0
    %713 = vmatpush1.msra.mxu0 0.0
    %714 = vmatprep.subr.mxu0 0.0
    %715 = vmatpush1.msra.mxu0 0.0
    %716 = vmatprep.subr.mxu0 0.0
    %717 = vmatpush1.msra.mxu0 0.0
    %718 = vmatprep.subr.mxu0 0.0
    %719 = vmatpush1.msra.mxu0 0.0
    %720 = vmatprep.subr.mxu0 0.0
    %721 = vmatpush1.msra.mxu0 0.0
    %722 = vmatprep.subr.mxu0 0.0
    %723 = vmatpush1.msra.mxu0 0.0
    %724 = vmatprep.subr.mxu0 0.0
    %725 = vmatpush1.msra.mxu0 0.0
    %726 = vmatprep.subr.mxu0 0.0
    %727 = vmatpush1.msra.mxu0 0.0
    %728 = vmatprep.subr.mxu0 0.0
    %729 = vmatpush1.msra.mxu0 0.0
    %730 = vmatprep.subr.mxu0 0.0
    %731 = vmatpush1.msra.mxu0 0.0
    %732 = vmatprep.subr.mxu0 0.0
    %733 = vmatpush1.msra.mxu0 0.0
    %734 = vmatprep.mubr.f32.mxu0 0.0
    %735 = vmatmul.mubr.f32.gmra.mrb[0].mxu0 %v668
    %v736 = vpop.f32.mrb[0].mxu0
    %v737 = vadd.f32 0.0, %v736
    %v738 = vpop.f32.mrb[0].mxu0
    %739 = vdwg.mxu0
    %740 = vrot.lane.b32.xlu0 %v352, 120
    %v741 = vpop.permute.xlu0 %740
    %742 = vrot.lane.b32.xlu0 %v352, 88
    %v743 = vpop.permute.xlu0 %742
    %v744 = vsel %vm418, %v741, 0
    %v746 = vsel %vm418, %v743, 0
    %748 = vmatprep.subr.mxu0 0.0
    %749 = vmatpush1.xpose.msra.mxu0 %v746
    %750 = vmatprep.subr.mxu0 0.0
    %751 = vmatpush1.xpose.msra.mxu0 0.0
    %752 = vmatprep.subr.mxu0 0.0
    %753 = vmatpush1.xpose.msra.mxu0 0.0
    %754 = vmatprep.subr.mxu0 0.0
    %755 = vmatpush1.xpose.msra.mxu0 0.0
    %756 = vmatprep.subr.mxu0 0.0
    %757 = vmatpush1.xpose.msra.mxu0 0.0
    %758 = vmatprep.subr.mxu0 0.0
    %759 = vmatpush1.xpose.msra.mxu0 0.0
    %760 = vmatprep.subr.mxu0 0.0
    %761 = vmatpush1.xpose.msra.mxu0 0.0
    %762 = vmatprep.subr.mxu0 0.0
    %763 = vmatpush1.xpose.msra.mxu0 0.0
    %764 = vmatprep.subr.mxu0 0.0
    %765 = vmatpush1.xpose.msra.mxu0 0.0
    %766 = vmatprep.subr.mxu0 0.0
    %767 = vmatpush1.xpose.msra.mxu0 0.0
    %768 = vmatprep.subr.mxu0 0.0
    %769 = vmatpush1.xpose.msra.mxu0 0.0
    %770 = vmatprep.subr.mxu0 0.0
    %771 = vmatpush1.xpose.msra.mxu0 0.0
    %772 = vmatprep.subr.mxu0 0.0
    %773 = vmatpush1.xpose.msra.mxu0 0.0
    %774 = vmatprep.subr.mxu0 0.0
    %775 = vmatpush1.xpose.msra.mxu0 0.0
    %776 = vmatprep.subr.mxu0 0.0
    %777 = vmatpush1.xpose.msra.mxu0 0.0
    %778 = vmatprep.subr.mxu0 0.0
    %779 = vmatpush1.xpose.msra.mxu0 0.0
    %780 = vmatprep.subr.mxu0 0.0
    %781 = vmatpush1.xpose.msra.mxu0 0.0
    %782 = vmatprep.subr.mxu0 0.0
    %783 = vmatpush1.xpose.msra.mxu0 0.0
    %784 = vmatprep.subr.mxu0 0.0
    %785 = vmatpush1.xpose.msra.mxu0 0.0
    %786 = vmatprep.subr.mxu0 0.0
    %787 = vmatpush1.xpose.msra.mxu0 0.0
    %788 = vmatprep.subr.mxu0 0.0
    %789 = vmatpush1.xpose.msra.mxu0 0.0
    %790 = vmatprep.subr.mxu0 0.0
    %791 = vmatpush1.xpose.msra.mxu0 0.0
    %792 = vmatprep.subr.mxu0 0.0
    %793 = vmatpush1.xpose.msra.mxu0 0.0
    %794 = vmatprep.subr.mxu0 0.0
    %795 = vmatpush1.xpose.msra.mxu0 0.0
    %796 = vmatprep.subr.mxu0 0.0
    %797 = vmatpush1.xpose.msra.mxu0 0.0
    %798 = vmatprep.subr.mxu0 0.0
    %799 = vmatpush1.xpose.msra.mxu0 0.0
    %800 = vmatprep.subr.mxu0 0.0
    %801 = vmatpush1.xpose.msra.mxu0 0.0
    %802 = vmatprep.subr.mxu0 0.0
    %803 = vmatpush1.xpose.msra.mxu0 0.0
    %804 = vmatprep.subr.mxu0 0.0
    %805 = vmatpush1.xpose.msra.mxu0 0.0
    %806 = vmatprep.subr.mxu0 0.0
    %807 = vmatpush1.xpose.msra.mxu0 0.0
    %808 = vmatprep.subr.mxu0 0.0
    %809 = vmatpush1.xpose.msra.mxu0 0.0
    %810 = vmatprep.subr.mxu0 0.0
    %811 = vmatpush1.xpose.msra.mxu0 0.0
    %812 = vmatprep.mubr.f32.mxu0 0.0
    %813 = vmatmul.mubr.f32.gmra.mrb[0].mxu0 %v744
    %v814 = vpop.f32.mrb[0].mxu0
    %v815 = vadd.f32 0.0, %v814
    %v816 = vpop.f32.mrb[0].mxu0
    %817 = vdwg.mxu0
    %818 = vrot.lane.b32.xlu0 %v355, 120
    %v819 = vpop.permute.xlu0 %818
    %820 = vrot.lane.b32.xlu0 %v355, 88
    %v821 = vpop.permute.xlu0 %820
    %v822 = vsel %vm418, %v819, 0
    %v824 = vsel %vm418, %v821, 0
    %826 = vmatprep.subr.mxu0 0.0
    %827 = vmatpush1.xpose.msra.mxu0 %v824
    %828 = vmatprep.subr.mxu0 0.0
    %829 = vmatpush1.xpose.msra.mxu0 0.0
    %830 = vmatprep.subr.mxu0 0.0
    %831 = vmatpush1.xpose.msra.mxu0 0.0
    %832 = vmatprep.subr.mxu0 0.0
    %833 = vmatpush1.xpose.msra.mxu0 0.0
    %834 = vmatprep.subr.mxu0 0.0
    %835 = vmatpush1.xpose.msra.mxu0 0.0
    %836 = vmatprep.subr.mxu0 0.0
    %837 = vmatpush1.xpose.msra.mxu0 0.0
    %838 = vmatprep.subr.mxu0 0.0
    %839 = vmatpush1.xpose.msra.mxu0 0.0
    %840 = vmatprep.subr.mxu0 0.0
    %841 = vmatpush1.xpose.msra.mxu0 0.0
    %842 = vmatprep.subr.mxu0 0.0
    %843 = vmatpush1.xpose.msra.mxu0 0.0
    %844 = vmatprep.subr.mxu0 0.0
    %845 = vmatpush1.xpose.msra.mxu0 0.0
    %846 = vmatprep.subr.mxu0 0.0
    %847 = vmatpush1.xpose.msra.mxu0 0.0
    %848 = vmatprep.subr.mxu0 0.0
    %849 = vmatpush1.xpose.msra.mxu0 0.0
    %850 = vmatprep.subr.mxu0 0.0
    %851 = vmatpush1.xpose.msra.mxu0 0.0
    %852 = vmatprep.subr.mxu0 0.0
    %853 = vmatpush1.xpose.msra.mxu0 0.0
    %854 = vmatprep.subr.mxu0 0.0
    %855 = vmatpush1.xpose.msra.mxu0 0.0
    %856 = vmatprep.subr.mxu0 0.0
    %857 = vmatpush1.xpose.msra.mxu0 0.0
    %858 = vmatprep.subr.mxu0 0.0
    %859 = vmatpush1.xpose.msra.mxu0 0.0
    %860 = vmatprep.subr.mxu0 0.0
    %861 = vmatpush1.xpose.msra.mxu0 0.0
    %862 = vmatprep.subr.mxu0 0.0
    %863 = vmatpush1.xpose.msra.mxu0 0.0
    %864 = vmatprep.subr.mxu0 0.0
    %865 = vmatpush1.xpose.msra.mxu0 0.0
    %866 = vmatprep.subr.mxu0 0.0
    %867 = vmatpush1.xpose.msra.mxu0 0.0
    %868 = vmatprep.subr.mxu0 0.0
    %869 = vmatpush1.xpose.msra.mxu0 0.0
    %870 = vmatprep.subr.mxu0 0.0
    %871 = vmatpush1.xpose.msra.mxu0 0.0
    %872 = vmatprep.subr.mxu0 0.0
    %873 = vmatpush1.xpose.msra.mxu0 0.0
    %874 = vmatprep.subr.mxu0 0.0
    %875 = vmatpush1.xpose.msra.mxu0 0.0
    %876 = vmatprep.subr.mxu0 0.0
    %877 = vmatpush1.xpose.msra.mxu0 0.0
    %878 = vmatprep.subr.mxu0 0.0
    %879 = vmatpush1.xpose.msra.mxu0 0.0
    %880 = vmatprep.subr.mxu0 0.0
    %881 = vmatpush1.xpose.msra.mxu0 0.0
    %882 = vmatprep.subr.mxu0 0.0
    %883 = vmatpush1.xpose.msra.mxu0 0.0
    %884 = vmatprep.subr.mxu0 0.0
    %885 = vmatpush1.xpose.msra.mxu0 0.0
    %886 = vmatprep.subr.mxu0 0.0
    %887 = vmatpush1.xpose.msra.mxu0 0.0
    %888 = vmatprep.subr.mxu0 0.0
    %889 = vmatpush1.xpose.msra.mxu0 0.0
    %890 = vmatprep.mubr.f32.mxu0 0.0
    %891 = vmatmul.mubr.f32.gmra.mrb[0].mxu0 %v822
    %v892 = vpop.f32.mrb[0].mxu0
    %v893 = vadd.f32 0.0, %v892
    %v894 = vpop.f32.mrb[0].mxu0
    %895 = vdwg.mxu0
    %v896 = vmul.f32 %v815, 0.35355338
    %v897 = vmul.f32 %v893, 0.35355338
    %v898 = vsel %vm418, %v896, -inf
    %899 = vmax.xlane.f32.xlu0 %v898
    %v900 = vpop.xlane.xlu0 %899
    %v901 = vsel %vm418, %v897, -inf
    %902 = vmax.xlane.f32.xlu0 %v901
    %v903 = vpop.xlane.xlu0 %902
    %v904 = vsub.f32 %v896, %v900
    %v905 = vsub.f32 %v897, %v903
    %v906 = vmul.f32 %v904, 1.442695
    %v907 = vpow.pop %v906
    %v908 = vmul.f32 %v905, 1.442695
    %v909 = vpow.pop %v908
    %v910 = vsel %vm418, %v907, 0.0
    %911 = vadd.xlane.f32.xlu0 %v910
    %v912 = vpop.xlane.xlu0 %911
    %v913 = vsel %vm418, %v909, 0.0
    %914 = vadd.xlane.f32.xlu0 %v913
    %v915 = vpop.xlane.xlu0 %914
    %v916 = vrcp.pop %v912
    %v917 = vrcp.pop %v915
    %v918 = vmul.f32 %v907, %v916
    %v919 = vmul.f32 %v909, %v917
    %921 = vrot.lane.b32.xlu0 %v409, 120
    %v922 = vpop.permute.xlu0 %921
    %v925 = vsel %vm418, %v918, 0
    %927 = vmatprep.subr.mxu0 0.0
    %928 = vmatpush1.msra.mxu0 %v922
    %929 = vmatprep.subr.mxu0 0.0
    %930 = vmatpush1.msra.mxu0 0.0
    %931 = vmatprep.subr.mxu0 0.0
    %932 = vmatpush1.msra.mxu0 0.0
    %933 = vmatprep.subr.mxu0 0.0
    %934 = vmatpush1.msra.mxu0 0.0
    %935 = vmatprep.subr.mxu0 0.0
    %936 = vmatpush1.msra.mxu0 0.0
    %937 = vmatprep.subr.mxu0 0.0
    %938 = vmatpush1.msra.mxu0 0.0
    %939 = vmatprep.subr.mxu0 0.0
    %940 = vmatpush1.msra.mxu0 0.0
    %941 = vmatprep.subr.mxu0 0.0
    %942 = vmatpush1.msra.mxu0 0.0
    %943 = vmatprep.subr.mxu0 0.0
    %944 = vmatpush1.msra.mxu0 0.0
    %945 = vmatprep.subr.mxu0 0.0
    %946 = vmatpush1.msra.mxu0 0.0
    %947 = vmatprep.subr.mxu0 0.0
    %948 = vmatpush1.msra.mxu0 0.0
    %949 = vmatprep.subr.mxu0 0.0
    %950 = vmatpush1.msra.mxu0 0.0
    %951 = vmatprep.subr.mxu0 0.0
    %952 = vmatpush1.msra.mxu0 0.0
    %953 = vmatprep.subr.mxu0 0.0
    %954 = vmatpush1.msra.mxu0 0.0
    %955 = vmatprep.subr.mxu0 0.0
    %956 = vmatpush1.msra.mxu0 0.0
    %957 = vmatprep.subr.mxu0 0.0
    %958 = vmatpush1.msra.mxu0 0.0
    %959 = vmatprep.subr.mxu0 0.0
    %960 = vmatpush1.msra.mxu0 0.0
    %961 = vmatprep.subr.mxu0 0.0
    %962 = vmatpush1.msra.mxu0 0.0
    %963 = vmatprep.subr.mxu0 0.0
    %964 = vmatpush1.msra.mxu0 0.0
    %965 = vmatprep.subr.mxu0 0.0
    %966 = vmatpush1.msra.mxu0 0.0
    %967 = vmatprep.subr.mxu0 0.0
    %968 = vmatpush1.msra.mxu0 0.0
    %969 = vmatprep.subr.mxu0 0.0
    %970 = vmatpush1.msra.mxu0 0.0
    %971 = vmatprep.subr.mxu0 0.0
    %972 = vmatpush1.msra.mxu0 0.0
    %973 = vmatprep.subr.mxu0 0.0
    %974 = vmatpush1.msra.mxu0 0.0
    %975 = vmatprep.subr.mxu0 0.0
    %976 = vmatpush1.msra.mxu0 0.0
    %977 = vmatprep.subr.mxu0 0.0
    %978 = vmatpush1.msra.mxu0 0.0
    %979 = vmatprep.subr.mxu0 0.0
    %980 = vmatpush1.msra.mxu0 0.0
    %981 = vmatprep.subr.mxu0 0.0
    %982 = vmatpush1.msra.mxu0 0.0
    %983 = vmatprep.subr.mxu0 0.0
    %984 = vmatpush1.msra.mxu0 0.0
    %985 = vmatprep.subr.mxu0 0.0
    %986 = vmatpush1.msra.mxu0 0.0
    %987 = vmatprep.subr.mxu0 0.0
    %988 = vmatpush1.msra.mxu0 0.0
    %989 = vmatprep.subr.mxu0 0.0
    %990 = vmatpush1.msra.mxu0 0.0
    %991 = vmatprep.mubr.f32.mxu0 0.0
    %992 = vmatmul.mubr.f32.gmra.mrb[0].mxu0 %v925
    %v993 = vpop.f32.mrb[0].mxu0
    %v994 = vadd.f32 0.0, %v993
    %v995 = vpop.f32.mrb[0].mxu0
    %996 = vdwg.mxu0
    %998 = vrot.lane.b32.xlu0 %v412, 120
    %v999 = vpop.permute.xlu0 %998
    %v1002 = vsel %vm418, %v919, 0
    %1004 = vmatprep.subr.mxu0 0.0
    %1005 = vmatpush1.msra.mxu0 %v999
    %1006 = vmatprep.subr.mxu0 0.0
    %1007 = vmatpush1.msra.mxu0 0.0
    %1008 = vmatprep.subr.mxu0 0.0
    %1009 = vmatpush1.msra.mxu0 0.0
    %1010 = vmatprep.subr.mxu0 0.0
    %1011 = vmatpush1.msra.mxu0 0.0
    %1012 = vmatprep.subr.mxu0 0.0
    %1013 = vmatpush1.msra.mxu0 0.0
    %1014 = vmatprep.subr.mxu0 0.0
    %1015 = vmatpush1.msra.mxu0 0.0
    %1016 = vmatprep.subr.mxu0 0.0
    %1017 = vmatpush1.msra.mxu0 0.0
    %1018 = vmatprep.subr.mxu0 0.0
    %1019 = vmatpush1.msra.mxu0 0.0
    %1020 = vmatprep.subr.mxu0 0.0
    %1021 = vmatpush1.msra.mxu0 0.0
    %1022 = vmatprep.subr.mxu0 0.0
    %1023 = vmatpush1.msra.mxu0 0.0
    %1024 = vmatprep.subr.mxu0 0.0
    %1025 = vmatpush1.msra.mxu0 0.0
    %1026 = vmatprep.subr.mxu0 0.0
    %1027 = vmatpush1.msra.mxu0 0.0
    %1028 = vmatprep.subr.mxu0 0.0
    %1029 = vmatpush1.msra.mxu0 0.0
    %1030 = vmatprep.subr.mxu0 0.0
    %1031 = vmatpush1.msra.mxu0 0.0
    %1032 = vmatprep.subr.mxu0 0.0
    %1033 = vmatpush1.msra.mxu0 0.0
    %1034 = vmatprep.subr.mxu0 0.0
    %1035 = vmatpush1.msra.mxu0 0.0
    %1036 = vmatprep.subr.mxu0 0.0
    %1037 = vmatpush1.msra.mxu0 0.0
    %1038 = vmatprep.subr.mxu0 0.0
    %1039 = vmatpush1.msra.mxu0 0.0
    %1040 = vmatprep.subr.mxu0 0.0
    %1041 = vmatpush1.msra.mxu0 0.0
    %1042 = vmatprep.subr.mxu0 0.0
    %1043 = vmatpush1.msra.mxu0 0.0
    %1044 = vmatprep.subr.mxu0 0.0
    %1045 = vmatpush1.msra.mxu0 0.0
    %1046 = vmatprep.subr.mxu0 0.0
    %1047 = vmatpush1.msra.mxu0 0.0
    %1048 = vmatprep.subr.mxu0 0.0
    %1049 = vmatpush1.msra.mxu0 0.0
    %1050 = vmatprep.subr.mxu0 0.0
    %1051 = vmatpush1.msra.mxu0 0.0
    %1052 = vmatprep.subr.mxu0 0.0
    %1053 = vmatpush1.msra.mxu0 0.0
    %1054 = vmatprep.subr.mxu0 0.0
    %1055 = vmatpush1.msra.mxu0 0.0
    %1056 = vmatprep.subr.mxu0 0.0
    %1057 = vmatpush1.msra.mxu0 0.0
    %1058 = vmatprep.subr.mxu0 0.0
    %1059 = vmatpush1.msra.mxu0 0.0
    %1060 = vmatprep.subr.mxu0 0.0
    %1061 = vmatpush1.msra.mxu0 0.0
    %1062 = vmatprep.subr.mxu0 0.0
    %1063 = vmatpush1.msra.mxu0 0.0
    %1064 = vmatprep.subr.mxu0 0.0
    %1065 = vmatpush1.msra.mxu0 0.0
    %1066 = vmatprep.subr.mxu0 0.0
    %1067 = vmatpush1.msra.mxu0 0.0
    %1068 = vmatprep.mubr.f32.mxu0 0.0
    %1069 = vmatmul.mubr.f32.gmra.mrb[0].mxu0 %v1002
    %v1070 = vpop.f32.mrb[0].mxu0
    %v1071 = vadd.f32 0.0, %v1070
    %v1072 = vpop.f32.mrb[0].mxu0
    %1073 = vdwg.mxu0
    %1074 = vrot.lane.b32.xlu0 %v352, 112
    %v1075 = vpop.permute.xlu0 %1074
    %1076 = vrot.lane.b32.xlu0 %v352, 80
    %v1077 = vpop.permute.xlu0 %1076
    %v1078 = vsel %vm418, %v1075, 0
    %v1080 = vsel %vm418, %v1077, 0
    %1082 = vmatprep.subr.mxu0 0.0
    %1083 = vmatpush1.xpose.msra.mxu0 %v1080
    %1084 = vmatprep.subr.mxu0 0.0
    %1085 = vmatpush1.xpose.msra.mxu0 0.0
    %1086 = vmatprep.subr.mxu0 0.0
    %1087 = vmatpush1.xpose.msra.mxu0 0.0
    %1088 = vmatprep.subr.mxu0 0.0
    %1089 = vmatpush1.xpose.msra.mxu0 0.0
    %1090 = vmatprep.subr.mxu0 0.0
    %1091 = vmatpush1.xpose.msra.mxu0 0.0
    %1092 = vmatprep.subr.mxu0 0.0
    %1093 = vmatpush1.xpose.msra.mxu0 0.0
    %1094 = vmatprep.subr.mxu0 0.0
    %1095 = vmatpush1.xpose.msra.mxu0 0.0
    %1096 = vmatprep.subr.mxu0 0.0
    %1097 = vmatpush1.xpose.msra.mxu0 0.0
    %1098 = vmatprep.subr.mxu0 0.0
    %1099 = vmatpush1.xpose.msra.mxu0 0.0
    %1100 = vmatprep.subr.mxu0 0.0
    %1101 = vmatpush1.xpose.msra.mxu0 0.0
    %1102 = vmatprep.subr.mxu0 0.0
    %1103 = vmatpush1.xpose.msra.mxu0 0.0
    %1104 = vmatprep.subr.mxu0 0.0
    %1105 = vmatpush1.xpose.msra.mxu0 0.0
    %1106 = vmatprep.subr.mxu0 0.0
    %1107 = vmatpush1.xpose.msra.mxu0 0.0
    %1108 = vmatprep.subr.mxu0 0.0
    %1109 = vmatpush1.xpose.msra.mxu0 0.0
    %1110 = vmatprep.subr.mxu0 0.0
    %1111 = vmatpush1.xpose.msra.mxu0 0.0
    %1112 = vmatprep.subr.mxu0 0.0
    %1113 = vmatpush1.xpose.msra.mxu0 0.0
    %1114 = vmatprep.subr.mxu0 0.0
    %1115 = vmatpush1.xpose.msra.mxu0 0.0
    %1116 = vmatprep.subr.mxu0 0.0
    %1117 = vmatpush1.xpose.msra.mxu0 0.0
    %1118 = vmatprep.subr.mxu0 0.0
    %1119 = vmatpush1.xpose.msra.mxu0 0.0
    %1120 = vmatprep.subr.mxu0 0.0
    %1121 = vmatpush1.xpose.msra.mxu0 0.0
    %1122 = vmatprep.subr.mxu0 0.0
    %1123 = vmatpush1.xpose.msra.mxu0 0.0
    %1124 = vmatprep.subr.mxu0 0.0
    %1125 = vmatpush1.xpose.msra.mxu0 0.0
    %1126 = vmatprep.subr.mxu0 0.0
    %1127 = vmatpush1.xpose.msra.mxu0 0.0
    %1128 = vmatprep.subr.mxu0 0.0
    %1129 = vmatpush1.xpose.msra.mxu0 0.0
    %1130 = vmatprep.subr.mxu0 0.0
    %1131 = vmatpush1.xpose.msra.mxu0 0.0
    %1132 = vmatprep.subr.mxu0 0.0
    %1133 = vmatpush1.xpose.msra.mxu0 0.0
    %1134 = vmatprep.subr.mxu0 0.0
    %1135 = vmatpush1.xpose.msra.mxu0 0.0
    %1136 = vmatprep.subr.mxu0 0.0
    %1137 = vmatpush1.xpose.msra.mxu0 0.0
    %1138 = vmatprep.subr.mxu0 0.0
    %1139 = vmatpush1.xpose.msra.mxu0 0.0
    %1140 = vmatprep.subr.mxu0 0.0
    %1141 = vmatpush1.xpose.msra.mxu0 0.0
    %1142 = vmatprep.subr.mxu0 0.0
    %1143 = vmatpush1.xpose.msra.mxu0 0.0
    %1144 = vmatprep.subr.mxu0 0.0
    %1145 = vmatpush1.xpose.msra.mxu0 0.0
    %1146 = vmatprep.mubr.f32.mxu0 0.0
    %1147 = vmatmul.mubr.f32.gmra.mrb[0].mxu0 %v1078
    %v1148 = vpop.f32.mrb[0].mxu0
    %v1149 = vadd.f32 0.0, %v1148
    %v1150 = vpop.f32.mrb[0].mxu0
    %1151 = vdwg.mxu0
    %1152 = vrot.lane.b32.xlu0 %v355, 112
    %v1153 = vpop.permute.xlu0 %1152
    %1154 = vrot.lane.b32.xlu0 %v355, 80
    %v1155 = vpop.permute.xlu0 %1154
    %v1156 = vsel %vm418, %v1153, 0
    %v1158 = vsel %vm418, %v1155, 0
    %1160 = vmatprep.subr.mxu0 0.0
    %1161 = vmatpush1.xpose.msra.mxu0 %v1158
    %1162 = vmatprep.subr.mxu0 0.0
    %1163 = vmatpush1.xpose.msra.mxu0 0.0
    %1164 = vmatprep.subr.mxu0 0.0
    %1165 = vmatpush1.xpose.msra.mxu0 0.0
    %1166 = vmatprep.subr.mxu0 0.0
    %1167 = vmatpush1.xpose.msra.mxu0 0.0
    %1168 = vmatprep.subr.mxu0 0.0
    %1169 = vmatpush1.xpose.msra.mxu0 0.0
    %1170 = vmatprep.subr.mxu0 0.0
    %1171 = vmatpush1.xpose.msra.mxu0 0.0
    %1172 = vmatprep.subr.mxu0 0.0
    %1173 = vmatpush1.xpose.msra.mxu0 0.0
    %1174 = vmatprep.subr.mxu0 0.0
    %1175 = vmatpush1.xpose.msra.mxu0 0.0
    %1176 = vmatprep.subr.mxu0 0.0
    %1177 = vmatpush1.xpose.msra.mxu0 0.0
    %1178 = vmatprep.subr.mxu0 0.0
    %1179 = vmatpush1.xpose.msra.mxu0 0.0
    %1180 = vmatprep.subr.mxu0 0.0
    %1181 = vmatpush1.xpose.msra.mxu0 0.0
    %1182 = vmatprep.subr.mxu0 0.0
    %1183 = vmatpush1.xpose.msra.mxu0 0.0
    %1184 = vmatprep.subr.mxu0 0.0
    %1185 = vmatpush1.xpose.msra.mxu0 0.0
    %1186 = vmatprep.subr.mxu0 0.0
    %1187 = vmatpush1.xpose.msra.mxu0 0.0
    %1188 = vmatprep.subr.mxu0 0.0
    %1189 = vmatpush1.xpose.msra.mxu0 0.0
    %1190 = vmatprep.subr.mxu0 0.0
    %1191 = vmatpush1.xpose.msra.mxu0 0.0
    %1192 = vmatprep.subr.mxu0 0.0
    %1193 = vmatpush1.xpose.msra.mxu0 0.0
    %1194 = vmatprep.subr.mxu0 0.0
    %1195 = vmatpush1.xpose.msra.mxu0 0.0
    %1196 = vmatprep.subr.mxu0 0.0
    %1197 = vmatpush1.xpose.msra.mxu0 0.0
    %1198 = vmatprep.subr.mxu0 0.0
    %1199 = vmatpush1.xpose.msra.mxu0 0.0
    %1200 = vmatprep.subr.mxu0 0.0
    %1201 = vmatpush1.xpose.msra.mxu0 0.0
    %1202 = vmatprep.subr.mxu0 0.0
    %1203 = vmatpush1.xpose.msra.mxu0 0.0
    %1204 = vmatprep.subr.mxu0 0.0
    %1205 = vmatpush1.xpose.msra.mxu0 0.0
    %1206 = vmatprep.subr.mxu0 0.0
    %1207 = vmatpush1.xpose.msra.mxu0 0.0
    %1208 = vmatprep.subr.mxu0 0.0
    %1209 = vmatpush1.xpose.msra.mxu0 0.0
    %1210 = vmatprep.subr.mxu0 0.0
    %1211 = vmatpush1.xpose.msra.mxu0 0.0
    %1212 = vmatprep.subr.mxu0 0.0
    %1213 = vmatpush1.xpose.msra.mxu0 0.0
    %1214 = vmatprep.subr.mxu0 0.0
    %1215 = vmatpush1.xpose.msra.mxu0 0.0
    %1216 = vmatprep.subr.mxu0 0.0
    %1217 = vmatpush1.xpose.msra.mxu0 0.0
    %1218 = vmatprep.subr.mxu0 0.0
    %1219 = vmatpush1.xpose.msra.mxu0 0.0
    %1220 = vmatprep.subr.mxu0 0.0
    %1221 = vmatpush1.xpose.msra.mxu0 0.0
    %1222 = vmatprep.subr.mxu0 0.0
    %1223 = vmatpush1.xpose.msra.mxu0 0.0
    %1224 = vmatprep.mubr.f32.mxu0 0.0
    %1225 = vmatmul.mubr.f32.gmra.mrb[0].mxu0 %v1156
    %v1226 = vpop.f32.mrb[0].mxu0
    %v1227 = vadd.f32 0.0, %v1226
    %v1228 = vpop.f32.mrb[0].mxu0
    %1229 = vdwg.mxu0
    %v1230 = vmul.f32 %v1149, 0.35355338
    %v1231 = vmul.f32 %v1227, 0.35355338
    %v1232 = vsel %vm418, %v1230, -inf
    %1233 = vmax.xlane.f32.xlu0 %v1232
    %v1234 = vpop.xlane.xlu0 %1233
    %v1235 = vsel %vm418, %v1231, -inf
    %1236 = vmax.xlane.f32.xlu0 %v1235
    %v1237 = vpop.xlane.xlu0 %1236
    %v1238 = vsub.f32 %v1230, %v1234
    %v1239 = vsub.f32 %v1231, %v1237
    %v1240 = vmul.f32 %v1238, 1.442695
    %v1241 = vpow.pop %v1240
    %v1242 = vmul.f32 %v1239, 1.442695
    %v1243 = vpow.pop %v1242
    %v1244 = vsel %vm418, %v1241, 0.0
    %1245 = vadd.xlane.f32.xlu0 %v1244
    %v1246 = vpop.xlane.xlu0 %1245
    %v1247 = vsel %vm418, %v1243, 0.0
    %1248 = vadd.xlane.f32.xlu0 %v1247
    %v1249 = vpop.xlane.xlu0 %1248
    %v1250 = vrcp.pop %v1246
    %v1251 = vrcp.pop %v1249
    %v1252 = vmul.f32 %v1241, %v1250
    %v1253 = vmul.f32 %v1243, %v1251
    %1254 = vrot.lane.b32.xlu0 %v409, 112
    %v1255 = vpop.permute.xlu0 %1254
    %v1258 = vsel %vm418, %v1252, 0
    %1260 = vmatprep.subr.mxu0 0.0
    %1261 = vmatpush1.msra.mxu0 %v1255
    %1262 = vmatprep.subr.mxu0 0.0
    %1263 = vmatpush1.msra.mxu0 0.0
    %1264 = vmatprep.subr.mxu0 0.0
    %1265 = vmatpush1.msra.mxu0 0.0
    %1266 = vmatprep.subr.mxu0 0.0
    %1267 = vmatpush1.msra.mxu0 0.0
    %1268 = vmatprep.subr.mxu0 0.0
    %1269 = vmatpush1.msra.mxu0 0.0
    %1270 = vmatprep.subr.mxu0 0.0
    %1271 = vmatpush1.msra.mxu0 0.0
    %1272 = vmatprep.subr.mxu0 0.0
    %1273 = vmatpush1.msra.mxu0 0.0
    %1274 = vmatprep.subr.mxu0 0.0
    %1275 = vmatpush1.msra.mxu0 0.0
    %1276 = vmatprep.subr.mxu0 0.0
    %1277 = vmatpush1.msra.mxu0 0.0
    %1278 = vmatprep.subr.mxu0 0.0
    %1279 = vmatpush1.msra.mxu0 0.0
    %1280 = vmatprep.subr.mxu0 0.0
    %1281 = vmatpush1.msra.mxu0 0.0
    %1282 = vmatprep.subr.mxu0 0.0
    %1283 = vmatpush1.msra.mxu0 0.0
    %1284 = vmatprep.subr.mxu0 0.0
    %1285 = vmatpush1.msra.mxu0 0.0
    %1286 = vmatprep.subr.mxu0 0.0
    %1287 = vmatpush1.msra.mxu0 0.0
    %1288 = vmatprep.subr.mxu0 0.0
    %1289 = vmatpush1.msra.mxu0 0.0
    %1290 = vmatprep.subr.mxu0 0.0
    %1291 = vmatpush1.msra.mxu0 0.0
    %1292 = vmatprep.subr.mxu0 0.0
    %1293 = vmatpush1.msra.mxu0 0.0
    %1294 = vmatprep.subr.mxu0 0.0
    %1295 = vmatpush1.msra.mxu0 0.0
    %1296 = vmatprep.subr.mxu0 0.0
    %1297 = vmatpush1.msra.mxu0 0.0
    %1298 = vmatprep.subr.mxu0 0.0
    %1299 = vmatpush1.msra.mxu0 0.0
    %1300 = vmatprep.subr.mxu0 0.0
    %1301 = vmatpush1.msra.mxu0 0.0
    %1302 = vmatprep.subr.mxu0 0.0
    %1303 = vmatpush1.msra.mxu0 0.0
    %1304 = vmatprep.subr.mxu0 0.0
    %1305 = vmatpush1.msra.mxu0 0.0
    %1306 = vmatprep.subr.mxu0 0.0
    %1307 = vmatpush1.msra.mxu0 0.0
    %1308 = vmatprep.subr.mxu0 0.0
    %1309 = vmatpush1.msra.mxu0 0.0
    %1310 = vmatprep.subr.mxu0 0.0
    %1311 = vmatpush1.msra.mxu0 0.0
    %1312 = vmatprep.subr.mxu0 0.0
    %1313 = vmatpush1.msra.mxu0 0.0
    %1314 = vmatprep.subr.mxu0 0.0
    %1315 = vmatpush1.msra.mxu0 0.0
    %1316 = vmatprep.subr.mxu0 0.0
    %1317 = vmatpush1.msra.mxu0 0.0
    %1318 = vmatprep.subr.mxu0 0.0
    %1319 = vmatpush1.msra.mxu0 0.0
    %1320 = vmatprep.subr.mxu0 0.0
    %1321 = vmatpush1.msra.mxu0 0.0
    %1322 = vmatprep.subr.mxu0 0.0
    %1323 = vmatpush1.msra.mxu0 0.0
    %1324 = vmatprep.mubr.f32.mxu0 0.0
    %1325 = vmatmul.mubr.f32.gmra.mrb[0].mxu0 %v1258
    %v1326 = vpop.f32.mrb[0].mxu0
    %v1327 = vadd.f32 0.0, %v1326
    %v1328 = vpop.f32.mrb[0].mxu0
    %1329 = vdwg.mxu0
    %1330 = vrot.lane.b32.xlu0 %v412, 112
    %v1331 = vpop.permute.xlu0 %1330
    %v1334 = vsel %vm418, %v1253, 0
    %1336 = vmatprep.subr.mxu0 0.0
    %1337 = vmatpush1.msra.mxu0 %v1331
    %1338 = vmatprep.subr.mxu0 0.0
    %1339 = vmatpush1.msra.mxu0 0.0
    %1340 = vmatprep.subr.mxu0 0.0
    %1341 = vmatpush1.msra.mxu0 0.0
    %1342 = vmatprep.subr.mxu0 0.0
    %1343 = vmatpush1.msra.mxu0 0.0
    %1344 = vmatprep.subr.mxu0 0.0
    %1345 = vmatpush1.msra.mxu0 0.0
    %1346 = vmatprep.subr.mxu0 0.0
    %1347 = vmatpush1.msra.mxu0 0.0
    %1348 = vmatprep.subr.mxu0 0.0
    %1349 = vmatpush1.msra.mxu0 0.0
    %1350 = vmatprep.subr.mxu0 0.0
    %1351 = vmatpush1.msra.mxu0 0.0
    %1352 = vmatprep.subr.mxu0 0.0
    %1353 = vmatpush1.msra.mxu0 0.0
    %1354 = vmatprep.subr.mxu0 0.0
    %1355 = vmatpush1.msra.mxu0 0.0
    %1356 = vmatprep.subr.mxu0 0.0
    %1357 = vmatpush1.msra.mxu0 0.0
    %1358 = vmatprep.subr.mxu0 0.0
    %1359 = vmatpush1.msra.mxu0 0.0
    %1360 = vmatprep.subr.mxu0 0.0
    %1361 = vmatpush1.msra.mxu0 0.0
    %1362 = vmatprep.subr.mxu0 0.0
    %1363 = vmatpush1.msra.mxu0 0.0
    %1364 = vmatprep.subr.mxu0 0.0
    %1365 = vmatpush1.msra.mxu0 0.0
    %1366 = vmatprep.subr.mxu0 0.0
    %1367 = vmatpush1.msra.mxu0 0.0
    %1368 = vmatprep.subr.mxu0 0.0
    %1369 = vmatpush1.msra.mxu0 0.0
    %1370 = vmatprep.subr.mxu0 0.0
    %1371 = vmatpush1.msra.mxu0 0.0
    %1372 = vmatprep.subr.mxu0 0.0
    %1373 = vmatpush1.msra.mxu0 0.0
    %1374 = vmatprep.subr.mxu0 0.0
    %1375 = vmatpush1.msra.mxu0 0.0
    %1376 = vmatprep.subr.mxu0 0.0
    %1377 = vmatpush1.msra.mxu0 0.0
    %1378 = vmatprep.subr.mxu0 0.0
    %1379 = vmatpush1.msra.mxu0 0.0
    %1380 = vmatprep.subr.mxu0 0.0
    %1381 = vmatpush1.msra.mxu0 0.0
    %1382 = vmatprep.subr.mxu0 0.0
    %1383 = vmatpush1.msra.mxu0 0.0
    %1384 = vmatprep.subr.mxu0 0.0
    %1385 = vmatpush1.msra.mxu0 0.0
    %1386 = vmatprep.subr.mxu0 0.0
    %1387 = vmatpush1.msra.mxu0 0.0
    %1388 = vmatprep.subr.mxu0 0.0
    %1389 = vmatpush1.msra.mxu0 0.0
    %1390 = vmatprep.subr.mxu0 0.0
    %1391 = vmatpush1.msra.mxu0 0.0
    %1392 = vmatprep.subr.mxu0 0.0
    %1393 = vmatpush1.msra.mxu0 0.0
    %1394 = vmatprep.subr.mxu0 0.0
    %1395 = vmatpush1.msra.mxu0 0.0
    %1396 = vmatprep.subr.mxu0 0.0
    %1397 = vmatpush1.msra.mxu0 0.0
    %1398 = vmatprep.subr.mxu0 0.0
    %1399 = vmatpush1.msra.mxu0 0.0
    %1400 = vmatprep.mubr.f32.mxu0 0.0
    %1401 = vmatmul.mubr.f32.gmra.mrb[0].mxu0 %v1334
    %v1402 = vpop.f32.mrb[0].mxu0
    %v1403 = vadd.f32 0.0, %v1402
    %v1404 = vpop.f32.mrb[0].mxu0
    %1405 = vdwg.mxu0
    %1406 = vrot.lane.b32.xlu0 %v352, 104
    %v1407 = vpop.permute.xlu0 %1406
    %1408 = vrot.lane.b32.xlu0 %v352, 72
    %v1409 = vpop.permute.xlu0 %1408
    %v1410 = vsel %vm418, %v1407, 0
    %v1412 = vsel %vm418, %v1409, 0
    %1414 = vmatprep.subr.mxu0 0.0
    %1415 = vmatpush1.xpose.msra.mxu0 %v1412
    %1416 = vmatprep.subr.mxu0 0.0
    %1417 = vmatpush1.xpose.msra.mxu0 0.0
    %1418 = vmatprep.subr.mxu0 0.0
    %1419 = vmatpush1.xpose.msra.mxu0 0.0
    %1420 = vmatprep.subr.mxu0 0.0
    %1421 = vmatpush1.xpose.msra.mxu0 0.0
    %1422 = vmatprep.subr.mxu0 0.0
    %1423 = vmatpush1.xpose.msra.mxu0 0.0
    %1424 = vmatprep.subr.mxu0 0.0
    %1425 = vmatpush1.xpose.msra.mxu0 0.0
    %1426 = vmatprep.subr.mxu0 0.0
    %1427 = vmatpush1.xpose.msra.mxu0 0.0
    %1428 = vmatprep.subr.mxu0 0.0
    %1429 = vmatpush1.xpose.msra.mxu0 0.0
    %1430 = vmatprep.subr.mxu0 0.0
    %1431 = vmatpush1.xpose.msra.mxu0 0.0
    %1432 = vmatprep.subr.mxu0 0.0
    %1433 = vmatpush1.xpose.msra.mxu0 0.0
    %1434 = vmatprep.subr.mxu0 0.0
    %1435 = vmatpush1.xpose.msra.mxu0 0.0
    %1436 = vmatprep.subr.mxu0 0.0
    %1437 = vmatpush1.xpose.msra.mxu0 0.0
    %1438 = vmatprep.subr.mxu0 0.0
    %1439 = vmatpush1.xpose.msra.mxu0 0.0
    %1440 = vmatprep.subr.mxu0 0.0
    %1441 = vmatpush1.xpose.msra.mxu0 0.0
    %1442 = vmatprep.subr.mxu0 0.0
    %1443 = vmatpush1.xpose.msra.mxu0 0.0
    %1444 = vmatprep.subr.mxu0 0.0
    %1445 = vmatpush1.xpose.msra.mxu0 0.0
    %1446 = vmatprep.subr.mxu0 0.0
    %1447 = vmatpush1.xpose.msra.mxu0 0.0
    %1448 = vmatprep.subr.mxu0 0.0
    %1449 = vmatpush1.xpose.msra.mxu0 0.0
    %1450 = vmatprep.subr.mxu0 0.0
    %1451 = vmatpush1.xpose.msra.mxu0 0.0
    %1452 = vmatprep.subr.mxu0 0.0
    %1453 = vmatpush1.xpose.msra.mxu0 0.0
    %1454 = vmatprep.subr.mxu0 0.0
    %1455 = vmatpush1.xpose.msra.mxu0 0.0
    %1456 = vmatprep.subr.mxu0 0.0
    %1457 = vmatpush1.xpose.msra.mxu0 0.0
    %1458 = vmatprep.subr.mxu0 0.0
    %1459 = vmatpush1.xpose.msra.mxu0 0.0
    %1460 = vmatprep.subr.mxu0 0.0
    %1461 = vmatpush1.xpose.msra.mxu0 0.0
    %1462 = vmatprep.subr.mxu0 0.0
    %1463 = vmatpush1.xpose.msra.mxu0 0.0
    %1464 = vmatprep.subr.mxu0 0.0
    %1465 = vmatpush1.xpose.msra.mxu0 0.0
    %1466 = vmatprep.subr.mxu0 0.0
    %1467 = vmatpush1.xpose.msra.mxu0 0.0
    %1468 = vmatprep.subr.mxu0 0.0
    %1469 = vmatpush1.xpose.msra.mxu0 0.0
    %1470 = vmatprep.subr.mxu0 0.0
    %1471 = vmatpush1.xpose.msra.mxu0 0.0
    %1472 = vmatprep.subr.mxu0 0.0
    %1473 = vmatpush1.xpose.msra.mxu0 0.0
    %1474 = vmatprep.subr.mxu0 0.0
    %1475 = vmatpush1.xpose.msra.mxu0 0.0
    %1476 = vmatprep.subr.mxu0 0.0
    %1477 = vmatpush1.xpose.msra.mxu0 0.0
    %1478 = vmatprep.mubr.f32.mxu0 0.0
    %1479 = vmatmul.mubr.f32.gmra.mrb[0].mxu0 %v1410
    %v1480 = vpop.f32.mrb[0].mxu0
    %v1481 = vadd.f32 0.0, %v1480
    %v1482 = vpop.f32.mrb[0].mxu0
    %1483 = vdwg.mxu0
    %1484 = vrot.lane.b32.xlu0 %v355, 104
    %v1485 = vpop.permute.xlu0 %1484
    %1486 = vrot.lane.b32.xlu0 %v355, 72
    %v1487 = vpop.permute.xlu0 %1486
    %v1488 = vsel %vm418, %v1485, 0
    %v1490 = vsel %vm418, %v1487, 0
    %1492 = vmatprep.subr.mxu0 0.0
    %1493 = vmatpush1.xpose.msra.mxu0 %v1490
    %1494 = vmatprep.subr.mxu0 0.0
    %1495 = vmatpush1.xpose.msra.mxu0 0.0
    %1496 = vmatprep.subr.mxu0 0.0
    %1497 = vmatpush1.xpose.msra.mxu0 0.0
    %1498 = vmatprep.subr.mxu0 0.0
    %1499 = vmatpush1.xpose.msra.mxu0 0.0
    %1500 = vmatprep.subr.mxu0 0.0
    %1501 = vmatpush1.xpose.msra.mxu0 0.0
    %1502 = vmatprep.subr.mxu0 0.0
    %1503 = vmatpush1.xpose.msra.mxu0 0.0
    %1504 = vmatprep.subr.mxu0 0.0
    %1505 = vmatpush1.xpose.msra.mxu0 0.0
    %1506 = vmatprep.subr.mxu0 0.0
    %1507 = vmatpush1.xpose.msra.mxu0 0.0
    %1508 = vmatprep.subr.mxu0 0.0
    %1509 = vmatpush1.xpose.msra.mxu0 0.0
    %1510 = vmatprep.subr.mxu0 0.0
    %1511 = vmatpush1.xpose.msra.mxu0 0.0
    %1512 = vmatprep.subr.mxu0 0.0
    %1513 = vmatpush1.xpose.msra.mxu0 0.0
    %1514 = vmatprep.subr.mxu0 0.0
    %1515 = vmatpush1.xpose.msra.mxu0 0.0
    %1516 = vmatprep.subr.mxu0 0.0
    %1517 = vmatpush1.xpose.msra.mxu0 0.0
    %1518 = vmatprep.subr.mxu0 0.0
    %1519 = vmatpush1.xpose.msra.mxu0 0.0
    %1520 = vmatprep.subr.mxu0 0.0
    %1521 = vmatpush1.xpose.msra.mxu0 0.0
    %1522 = vmatprep.subr.mxu0 0.0
    %1523 = vmatpush1.xpose.msra.mxu0 0.0
    %1524 = vmatprep.subr.mxu0 0.0
    %1525 = vmatpush1.xpose.msra.mxu0 0.0
    %1526 = vmatprep.subr.mxu0 0.0
    %1527 = vmatpush1.xpose.msra.mxu0 0.0
    %1528 = vmatprep.subr.mxu0 0.0
    %1529 = vmatpush1.xpose.msra.mxu0 0.0
    %1530 = vmatprep.subr.mxu0 0.0
    %1531 = vmatpush1.xpose.msra.mxu0 0.0
    %1532 = vmatprep.subr.mxu0 0.0
    %1533 = vmatpush1.xpose.msra.mxu0 0.0
    %1534 = vmatprep.subr.mxu0 0.0
    %1535 = vmatpush1.xpose.msra.mxu0 0.0
    %1536 = vmatprep.subr.mxu0 0.0
    %1537 = vmatpush1.xpose.msra.mxu0 0.0
    %1538 = vmatprep.subr.mxu0 0.0
    %1539 = vmatpush1.xpose.msra.mxu0 0.0
    %1540 = vmatprep.subr.mxu0 0.0
    %1541 = vmatpush1.xpose.msra.mxu0 0.0
    %1542 = vmatprep.subr.mxu0 0.0
    %1543 = vmatpush1.xpose.msra.mxu0 0.0
    %1544 = vmatprep.subr.mxu0 0.0
    %1545 = vmatpush1.xpose.msra.mxu0 0.0
    %1546 = vmatprep.subr.mxu0 0.0
    %1547 = vmatpush1.xpose.msra.mxu0 0.0
    %1548 = vmatprep.subr.mxu0 0.0
    %1549 = vmatpush1.xpose.msra.mxu0 0.0
    %1550 = vmatprep.subr.mxu0 0.0
    %1551 = vmatpush1.xpose.msra.mxu0 0.0
    %1552 = vmatprep.subr.mxu0 0.0
    %1553 = vmatpush1.xpose.msra.mxu0 0.0
    %1554 = vmatprep.subr.mxu0 0.0
    %1555 = vmatpush1.xpose.msra.mxu0 0.0
    %1556 = vmatprep.mubr.f32.mxu0 0.0
    %1557 = vmatmul.mubr.f32.gmra.mrb[0].mxu0 %v1488
    %v1558 = vpop.f32.mrb[0].mxu0
    %v1559 = vadd.f32 0.0, %v1558
    %v1560 = vpop.f32.mrb[0].mxu0
    %1561 = vdwg.mxu0
    %v1562 = vmul.f32 %v1481, 0.35355338
    %v1563 = vmul.f32 %v1559, 0.35355338
    %v1564 = vsel %vm418, %v1562, -inf
    %1565 = vmax.xlane.f32.xlu0 %v1564
    %v1566 = vpop.xlane.xlu0 %1565
    %v1567 = vsel %vm418, %v1563, -inf
    %1568 = vmax.xlane.f32.xlu0 %v1567
    %v1569 = vpop.xlane.xlu0 %1568
    %v1570 = vsub.f32 %v1562, %v1566
    %v1571 = vsub.f32 %v1563, %v1569
    %v1572 = vmul.f32 %v1570, 1.442695
    %v1573 = vpow.pop %v1572
    %v1574 = vmul.f32 %v1571, 1.442695
    %v1575 = vpow.pop %v1574
    %v1576 = vsel %vm418, %v1573, 0.0
    %1577 = vadd.xlane.f32.xlu0 %v1576
    %v1578 = vpop.xlane.xlu0 %1577
    %v1579 = vsel %vm418, %v1575, 0.0
    %1580 = vadd.xlane.f32.xlu0 %v1579
    %v1581 = vpop.xlane.xlu0 %1580
    %v1582 = vrcp.pop %v1578
    %v1583 = vrcp.pop %v1581
    %v1584 = vmul.f32 %v1573, %v1582
    %v1585 = vmul.f32 %v1575, %v1583
    %1586 = vrot.lane.b32.xlu0 %v409, 104
    %v1587 = vpop.permute.xlu0 %1586
    %v1590 = vsel %vm418, %v1584, 0
    %1592 = vmatprep.subr.mxu0 0.0
    %1593 = vmatpush1.msra.mxu0 %v1587
    %1594 = vmatprep.subr.mxu0 0.0
    %1595 = vmatpush1.msra.mxu0 0.0
    %1596 = vmatprep.subr.mxu0 0.0
    %1597 = vmatpush1.msra.mxu0 0.0
    %1598 = vmatprep.subr.mxu0 0.0
    %1599 = vmatpush1.msra.mxu0 0.0
    %1600 = vmatprep.subr.mxu0 0.0
    %1601 = vmatpush1.msra.mxu0 0.0
    %1602 = vmatprep.subr.mxu0 0.0
    %1603 = vmatpush1.msra.mxu0 0.0
    %1604 = vmatprep.subr.mxu0 0.0
    %1605 = vmatpush1.msra.mxu0 0.0
    %1606 = vmatprep.subr.mxu0 0.0
    %1607 = vmatpush1.msra.mxu0 0.0
    %1608 = vmatprep.subr.mxu0 0.0
    %1609 = vmatpush1.msra.mxu0 0.0
    %1610 = vmatprep.subr.mxu0 0.0
    %1611 = vmatpush1.msra.mxu0 0.0
    %1612 = vmatprep.subr.mxu0 0.0
    %1613 = vmatpush1.msra.mxu0 0.0
    %1614 = vmatprep.subr.mxu0 0.0
    %1615 = vmatpush1.msra.mxu0 0.0
    %1616 = vmatprep.subr.mxu0 0.0
    %1617 = vmatpush1.msra.mxu0 0.0
    %1618 = vmatprep.subr.mxu0 0.0
    %1619 = vmatpush1.msra.mxu0 0.0
    %1620 = vmatprep.subr.mxu0 0.0
    %1621 = vmatpush1.msra.mxu0 0.0
    %1622 = vmatprep.subr.mxu0 0.0
    %1623 = vmatpush1.msra.mxu0 0.0
    %1624 = vmatprep.subr.mxu0 0.0
    %1625 = vmatpush1.msra.mxu0 0.0
    %1626 = vmatprep.subr.mxu0 0.0
    %1627 = vmatpush1.msra.mxu0 0.0
    %1628 = vmatprep.subr.mxu0 0.0
    %1629 = vmatpush1.msra.mxu0 0.0
    %1630 = vmatprep.subr.mxu0 0.0
    %1631 = vmatpush1.msra.mxu0 0.0
    %1632 = vmatprep.subr.mxu0 0.0
    %1633 = vmatpush1.msra.mxu0 0.0
    %1634 = vmatprep.subr.mxu0 0.0
    %1635 = vmatpush1.msra.mxu0 0.0
    %1636 = vmatprep.subr.mxu0 0.0
    %1637 = vmatpush1.msra.mxu0 0.0
    %1638 = vmatprep.subr.mxu0 0.0
    %1639 = vmatpush1.msra.mxu0 0.0
    %1640 = vmatprep.subr.mxu0 0.0
    %1641 = vmatpush1.msra.mxu0 0.0
    %1642 = vmatprep.subr.mxu0 0.0
    %1643 = vmatpush1.msra.mxu0 0.0
    %1644 = vmatprep.subr.mxu0 0.0
    %1645 = vmatpush1.msra.mxu0 0.0
    %1646 = vmatprep.subr.mxu0 0.0
    %1647 = vmatpush1.msra.mxu0 0.0
    %1648 = vmatprep.subr.mxu0 0.0
    %1649 = vmatpush1.msra.mxu0 0.0
    %1650 = vmatprep.subr.mxu0 0.0
    %1651 = vmatpush1.msra.mxu0 0.0
    %1652 = vmatprep.subr.mxu0 0.0
    %1653 = vmatpush1.msra.mxu0 0.0
    %1654 = vmatprep.subr.mxu0 0.0
    %1655 = vmatpush1.msra.mxu0 0.0
    %1656 = vmatprep.mubr.f32.mxu0 0.0
    %1657 = vmatmul.mubr.f32.gmra.mrb[0].mxu0 %v1590
    %v1658 = vpop.f32.mrb[0].mxu0
    %v1659 = vadd.f32 0.0, %v1658
    %v1660 = vpop.f32.mrb[0].mxu0
    %1661 = vdwg.mxu0
    %1662 = vrot.lane.b32.xlu0 %v412, 104
    %v1663 = vpop.permute.xlu0 %1662
    %v1666 = vsel %vm418, %v1585, 0
    %1668 = vmatprep.subr.mxu0 0.0
    %1669 = vmatpush1.msra.mxu0 %v1663
    %1670 = vmatprep.subr.mxu0 0.0
    %1671 = vmatpush1.msra.mxu0 0.0
    %1672 = vmatprep.subr.mxu0 0.0
    %1673 = vmatpush1.msra.mxu0 0.0
    %1674 = vmatprep.subr.mxu0 0.0
    %1675 = vmatpush1.msra.mxu0 0.0
    %1676 = vmatprep.subr.mxu0 0.0
    %1677 = vmatpush1.msra.mxu0 0.0
    %1678 = vmatprep.subr.mxu0 0.0
    %1679 = vmatpush1.msra.mxu0 0.0
    %1680 = vmatprep.subr.mxu0 0.0
    %1681 = vmatpush1.msra.mxu0 0.0
    %1682 = vmatprep.subr.mxu0 0.0
    %1683 = vmatpush1.msra.mxu0 0.0
    %1684 = vmatprep.subr.mxu0 0.0
    %1685 = vmatpush1.msra.mxu0 0.0
    %1686 = vmatprep.subr.mxu0 0.0
    %1687 = vmatpush1.msra.mxu0 0.0
    %1688 = vmatprep.subr.mxu0 0.0
    %1689 = vmatpush1.msra.mxu0 0.0
    %1690 = vmatprep.subr.mxu0 0.0
    %1691 = vmatpush1.msra.mxu0 0.0
    %1692 = vmatprep.subr.mxu0 0.0
    %1693 = vmatpush1.msra.mxu0 0.0
    %1694 = vmatprep.subr.mxu0 0.0
    %1695 = vmatpush1.msra.mxu0 0.0
    %1696 = vmatprep.subr.mxu0 0.0
    %1697 = vmatpush1.msra.mxu0 0.0
    %1698 = vmatprep.subr.mxu0 0.0
    %1699 = vmatpush1.msra.mxu0 0.0
    %1700 = vmatprep.subr.mxu0 0.0
    %1701 = vmatpush1.msra.mxu0 0.0
    %1702 = vmatprep.subr.mxu0 0.0
    %1703 = vmatpush1.msra.mxu0 0.0
    %1704 = vmatprep.subr.mxu0 0.0
    %1705 = vmatpush1.msra.mxu0 0.0
    %1706 = vmatprep.subr.mxu0 0.0
    %1707 = vmatpush1.msra.mxu0 0.0
    %1708 = vmatprep.subr.mxu0 0.0
    %1709 = vmatpush1.msra.mxu0 0.0
    %1710 = vmatprep.subr.mxu0 0.0
    %1711 = vmatpush1.msra.mxu0 0.0
    %1712 = vmatprep.subr.mxu0 0.0
    %1713 = vmatpush1.msra.mxu0 0.0
    %1714 = vmatprep.subr.mxu0 0.0
    %1715 = vmatpush1.msra.mxu0 0.0
    %1716 = vmatprep.subr.mxu0 0.0
    %1717 = vmatpush1.msra.mxu0 0.0
    %1718 = vmatprep.subr.mxu0 0.0
    %1719 = vmatpush1.msra.mxu0 0.0
    %1720 = vmatprep.subr.mxu0 0.0
    %1721 = vmatpush1.msra.mxu0 0.0
    %1722 = vmatprep.subr.mxu0 0.0
    %1723 = vmatpush1.msra.mxu0 0.0
    %1724 = vmatprep.subr.mxu0 0.0
    %1725 = vmatpush1.msra.mxu0 0.0
    %1726 = vmatprep.subr.mxu0 0.0
    %1727 = vmatpush1.msra.mxu0 0.0
    %1728 = vmatprep.subr.mxu0 0.0
    %1729 = vmatpush1.msra.mxu0 0.0
    %1730 = vmatprep.subr.mxu0 0.0
    %1731 = vmatpush1.msra.mxu0 0.0
    %1732 = vmatprep.mubr.f32.mxu0 0.0
    %1733 = vmatmul.mubr.f32.gmra.mrb[0].mxu0 %v1666
    %v1734 = vpop.f32.mrb[0].mxu0
    %v1735 = vadd.f32 0.0, %v1734
    %v1736 = vpop.f32.mrb[0].mxu0
    %1737 = vdwg.mxu0
    %1740 = vrot.lane.b32.xlu0 %v994, 8
    %v1741 = vpop.permute.xlu0 %1740
    %1742 = vrot.lane.b32.xlu0 %v1071, 8
    %v1743 = vpop.permute.xlu0 %1742
    %1748 = vrot.lane.b32.xlu0 %v1327, 16
    %v1749 = vpop.permute.xlu0 %1748
    %1750 = vrot.lane.b32.xlu0 %v1403, 16
    %v1751 = vpop.permute.xlu0 %1750
    %1756 = vrot.lane.b32.xlu0 %v1659, 24
    %v1757 = vpop.permute.xlu0 %1756
    %1758 = vrot.lane.b32.xlu0 %v1735, 24
    %v1759 = vpop.permute.xlu0 %1758
    %v1762 = vsel %vm418, %v664, %v1741
    %v1763 = vsel %vm418, %v737, %v1743
    %vm1764 = vcmask 130048
    %v1765 = vsel %vm1764, %v1762, %v1749
    %v1766 = vsel %vm1764, %v1763, %v1751
    %vm1767 = vcmask 195584
    %v1768 = vsel %vm1767, %v1765, %v1757
    %v1769 = vsel %vm1767, %v1766, %v1759
    %v1770 = vld [vmem:[%s17] sm:$0xff]
    %v1771 = vld [vmem:[%s17 + $0x8] sm:$0xff]
    %v1772 = vld [vmem:[%s17 + $0x10] sm:$0xff]
    %v1773 = vld [vmem:[%s17 + $0x18] sm:$0xff]
    %v1774 = vpack.c.bf16 %v1769, %v1768
    %v1775 = vpack.c.bf16 %v1771, %v1770
    %v1776 = vpack.c.bf16 %v1773, %v1772
    %v1777 = vld [vmem:[%s19] sm:$0x1]
    %v1779 = vlaneseq
    %v1780 = vshrl.u32 %v1779, 7
    %v1781 = vsub.s32 0, %v1780
    %v1782 = vrot.slane %v1777, %v1781
    %v1785 = vsel %vm313, %v1774, 0
    %1787 = vmatprep.subr.bf16.mxu0 0
    %1788 = vmatpush1.bf16.msra.mxu0 %v1775
    %1789 = vmatprep.subr.bf16.mxu0 0
    %1790 = vmatpush1.bf16.msra.mxu0 %v1776
    %1791 = vmatprep.subr.bf16.mxu0 0
    %1792 = vmatpush1.bf16.msra.mxu0 0
    %1793 = vmatprep.subr.bf16.mxu0 0
    %1794 = vmatpush1.bf16.msra.mxu0 0
    %1795 = vmatprep.subr.bf16.mxu0 0
    %1796 = vmatpush1.bf16.msra.mxu0 0
    %1797 = vmatprep.subr.bf16.mxu0 0
    %1798 = vmatpush1.bf16.msra.mxu0 0
    %1799 = vmatprep.subr.bf16.mxu0 0
    %1800 = vmatpush1.bf16.msra.mxu0 0
    %1801 = vmatprep.subr.bf16.mxu0 0
    %1802 = vmatpush1.bf16.msra.mxu0 0
    %1803 = vmatprep.subr.bf16.mxu0 0
    %1804 = vmatpush1.bf16.msra.mxu0 0
    %1805 = vmatprep.subr.bf16.mxu0 0
    %1806 = vmatpush1.bf16.msra.mxu0 0
    %1807 = vmatprep.subr.bf16.mxu0 0
    %1808 = vmatpush1.bf16.msra.mxu0 0
    %1809 = vmatprep.subr.bf16.mxu0 0
    %1810 = vmatpush1.bf16.msra.mxu0 0
    %1811 = vmatprep.subr.bf16.mxu0 0
    %1812 = vmatpush1.bf16.msra.mxu0 0
    %1813 = vmatprep.subr.bf16.mxu0 0
    %1814 = vmatpush1.bf16.msra.mxu0 0
    %1815 = vmatprep.subr.bf16.mxu0 0
    %1816 = vmatpush1.bf16.msra.mxu0 0
    %1817 = vmatprep.subr.bf16.mxu0 0
    %1818 = vmatpush1.bf16.msra.mxu0 0
    %1819 = vmatprep.mubr.bf16.mxu0 0
    %1820 = vmatmul.mubr.bf16.gmra.mrb[0].mxu0 %v1785
    %v1821 = vpop.f32.mrb[0].mxu0
    %v1822 = vadd.f32 %v1782, %v1821
    %v1823 = vpop.f32.mrb[0].mxu0
    %v1824 = vpop.f32.mrb[0].mxu0
    %v1825 = vadd.f32 %v1782, %v1824
    %v1826 = vpop.f32.mrb[0].mxu0
    %1827 = vdwg.mxu0
    %v1828 = vadd.f32 %v1822, 0.0
    %v1829 = vadd.f32 %v1825, 0.0
    %v1830 = vsel %vm313, %v1828, 0.0
    %1831 = vadd.xlane.f32.xlu0 %v1830
    %v1832 = vpop.xlane.xlu0 %1831
    %v1833 = vsel %vm313, %v1829, 0.0
    %1834 = vadd.xlane.f32.xlu0 %v1833
    %v1835 = vpop.xlane.xlu0 %1834
    %v1836 = vrcp.pop 32.0
    %v1837 = vmul.f32 %v1832, %v1836
    %v1838 = vmul.f32 %v1835, %v1836
    %v1839 = vsub.f32 %v1828, %v1837
    %v1840 = vsub.f32 %v1829, %v1838
    %v1841 = vmul.f32 %v1839, %v1839
    %v1842 = vmul.f32 %v1840, %v1840
    %v1843 = vsel %vm313, %v1841, 0.0
    %1844 = vadd.xlane.f32.xlu0 %v1843
    %v1845 = vpop.xlane.xlu0 %1844
    %v1846 = vsel %vm313, %v1842, 0.0
    %1847 = vadd.xlane.f32.xlu0 %v1846
    %v1848 = vpop.xlane.xlu0 %1847
    %v1849 = vmul.f32 %v1845, %v1836
    %v1850 = vmul.f32 %v1848, %v1836
    %v1851 = vadd.f32 %v1849, 1e-05
    %v1852 = vadd.f32 %v1850, 1e-05
    %v1853 = vrsqrt.pop %v1851
    %v1854 = vrsqrt.pop %v1852
    %v1855 = vmul.f32 %v1839, %v1853
    %v1856 = vmul.f32 %v1840, %v1854
    %v1857 = vld [vmem:[%s21] sm:$0x1]
    %v1859 = vlaneseq
    %v1860 = vshrl.u32 %v1859, 7
    %v1861 = vsub.s32 0, %v1860
    %v1862 = vrot.slane %v1857, %v1861
    %v1864 = vmul.f32 %v1855, %v1862
    %v1865 = vmul.f32 %v1856, %v1862
    %v1866 = vld [vmem:[%s23] sm:$0x1]
    %v1868 = vlaneseq
    %v1869 = vshrl.u32 %v1868, 7
    %v1870 = vsub.s32 0, %v1869
    %v1871 = vrot.slane %v1866, %v1870
    %v1873 = vadd.f32 %v1864, %v1871
    %v1874 = vadd.f32 %v1865, %v1871
    %v1875 = vadd.f32 %v289, %v293
    %v1876 = vadd.f32 %v290, %v294
    %v1877 = vadd.f32 %v291, %v295
    %v1878 = vadd.f32 %v292, %v296
    %v1879 = vadd.f32 %v1873, %v297
    %v1880 = vadd.f32 %v1874, %v297
    %v1881 = vld [vmem:[%s25] sm:$0xff]
    %v1882 = vld [vmem:[%s25 + $0x8] sm:$0xff]
    %v1883 = vld [vmem:[%s25 + $0x10] sm:$0xff]
    %v1884 = vld [vmem:[%s25 + $0x18] sm:$0xff]
    %v1885 = vpack.c.bf16 %v1880, %v1879
    %v1886 = vpack.c.bf16 %v1882, %v1881
    %v1887 = vpack.c.bf16 %v1884, %v1883
    %v1888 = vld [vmem:[%s27] sm:$0x1]
    %v1890 = vlaneseq
    %v1891 = vshrl.u32 %v1890, 7
    %v1892 = vsub.s32 0, %v1891
    %v1893 = vrot.slane %v1888, %v1892
    %v1896 = vsel %vm313, %v1885, 0
    %1898 = vmatprep.subr.bf16.mxu0 0
    %1899 = vmatpush1.bf16.msra.mxu0 %v1886
    %1900 = vmatprep.subr.bf16.mxu0 0
    %1901 = vmatpush1.bf16.msra.mxu0 %v1887
    %1902 = vmatprep.subr.bf16.mxu0 0
    %1903 = vmatpush1.bf16.msra.mxu0 0
    %1904 = vmatprep.subr.bf16.mxu0 0
    %1905 = vmatpush1.bf16.msra.mxu0 0
    %1906 = vmatprep.subr.bf16.mxu0 0
    %1907 = vmatpush1.bf16.msra.mxu0 0
    %1908 = vmatprep.subr.bf16.mxu0 0
    %1909 = vmatpush1.bf16.msra.mxu0 0
    %1910 = vmatprep.subr.bf16.mxu0 0
    %1911 = vmatpush1.bf16.msra.mxu0 0
    %1912 = vmatprep.subr.bf16.mxu0 0
    %1913 = vmatpush1.bf16.msra.mxu0 0
    %1914 = vmatprep.subr.bf16.mxu0 0
    %1915 = vmatpush1.bf16.msra.mxu0 0
    %1916 = vmatprep.subr.bf16.mxu0 0
    %1917 = vmatpush1.bf16.msra.mxu0 0
    %1918 = vmatprep.subr.bf16.mxu0 0
    %1919 = vmatpush1.bf16.msra.mxu0 0
    %1920 = vmatprep.subr.bf16.mxu0 0
    %1921 = vmatpush1.bf16.msra.mxu0 0
    %1922 = vmatprep.subr.bf16.mxu0 0
    %1923 = vmatpush1.bf16.msra.mxu0 0
    %1924 = vmatprep.subr.bf16.mxu0 0
    %1925 = vmatpush1.bf16.msra.mxu0 0
    %1926 = vmatprep.subr.bf16.mxu0 0
    %1927 = vmatpush1.bf16.msra.mxu0 0
    %1928 = vmatprep.subr.bf16.mxu0 0
    %1929 = vmatpush1.bf16.msra.mxu0 0
    %1930 = vmatprep.mubr.bf16.mxu0 0
    %1931 = vmatmul.mubr.bf16.gmra.mrb[0].mxu0 %v1896
    %v1932 = vpop.f32.mrb[0].mxu0
    %v1933 = vadd.f32 %v1893, %v1932
    %v1934 = vpop.f32.mrb[0].mxu0
    %v1935 = vpop.f32.mrb[0].mxu0
    %v1936 = vadd.f32 %v1893, %v1935
    %v1937 = vpop.f32.mrb[0].mxu0
    %1938 = vdwg.mxu0
    %v1939 = vld [vmem:[%s29] sm:$0xff]
    %v1940 = vld [vmem:[%s29 + $0x8] sm:$0xff]
    %v1941 = vld [vmem:[%s29 + $0x10] sm:$0xff]
    %v1942 = vld [vmem:[%s29 + $0x18] sm:$0xff]
    %v1943 = vpack.c.bf16 %v1876, %v1875
    %v1944 = vpack.c.bf16 %v1878, %v1877
    %v1945 = vpack.c.bf16 %v1940, %v1939
    %v1946 = vpack.c.bf16 %v1942, %v1941
    %v1947 = vld [vmem:[%s31] sm:$0x1]
    %v1949 = vlaneseq
    %v1950 = vshrl.u32 %v1949, 7
    %v1951 = vsub.s32 0, %v1950
    %v1952 = vrot.slane %v1947, %v1951
    %v1955 = vsel %vm313, %v1943, 0
    %v1958 = vsel %vm313, %v1944, 0
    %1960 = vmatprep.subr.bf16.mxu0 0
    %1961 = vmatpush1.bf16.msra.mxu0 %v1945
    %1962 = vmatprep.subr.bf16.mxu0 0
    %1963 = vmatpush1.bf16.msra.mxu0 %v1946
    %1964 = vmatprep.subr.bf16.mxu0 0
    %1965 = vmatpush1.bf16.msra.mxu0 0
    %1966 = vmatprep.subr.bf16.mxu0 0
    %1967 = vmatpush1.bf16.msra.mxu0 0
    %1968 = vmatprep.subr.bf16.mxu0 0
    %1969 = vmatpush1.bf16.msra.mxu0 0
    %1970 = vmatprep.subr.bf16.mxu0 0
    %1971 = vmatpush1.bf16.msra.mxu0 0
    %1972 = vmatprep.subr.bf16.mxu0 0
    %1973 = vmatpush1.bf16.msra.mxu0 0
    %1974 = vmatprep.subr.bf16.mxu0 0
    %1975 = vmatpush1.bf16.msra.mxu0 0
    %1976 = vmatprep.subr.bf16.mxu0 0
    %1977 = vmatpush1.bf16.msra.mxu0 0
    %1978 = vmatprep.subr.bf16.mxu0 0
    %1979 = vmatpush1.bf16.msra.mxu0 0
    %1980 = vmatprep.subr.bf16.mxu0 0
    %1981 = vmatpush1.bf16.msra.mxu0 0
    %1982 = vmatprep.subr.bf16.mxu0 0
    %1983 = vmatpush1.bf16.msra.mxu0 0
    %1984 = vmatprep.subr.bf16.mxu0 0
    %1985 = vmatpush1.bf16.msra.mxu0 0
    %1986 = vmatprep.subr.bf16.mxu0 0
    %1987 = vmatpush1.bf16.msra.mxu0 0
    %1988 = vmatprep.subr.bf16.mxu0 0
    %1989 = vmatpush1.bf16.msra.mxu0 0
    %1990 = vmatprep.subr.bf16.mxu0 0
    %1991 = vmatpush1.bf16.msra.mxu0 0
    %1992 = vmatprep.mubr.bf16.mxu0 0
    %1993 = vmatmul.mubr.bf16.gmra.mrb[0].mxu0 %v1955
    %v1994 = vpop.f32.mrb[0].mxu0
    %v1995 = vadd.f32 %v1952, %v1994
    %v1996 = vpop.f32.mrb[0].mxu0
    %v1997 = vpop.f32.mrb[0].mxu0
    %v1998 = vadd.f32 %v1952, %v1997
    %v1999 = vpop.f32.mrb[0].mxu0
    %2000 = vmatprep.mubr.bf16.mxu0 0
    %2001 = vmatmul.mubr.bf16.gmra.mrb[0].mxu0 %v1958
    %v2002 = vpop.f32.mrb[0].mxu0
    %v2003 = vadd.f32 %v1952, %v2002
    %v2004 = vpop.f32.mrb[0].mxu0
    %v2005 = vpop.f32.mrb[0].mxu0
    %v2006 = vadd.f32 %v1952, %v2005
    %v2007 = vpop.f32.mrb[0].mxu0
    %2008 = vdwg.mxu0
    %v2009 = vld [vmem:[%s33] sm:$0xff]
    %v2010 = vld [vmem:[%s33 + $0x8] sm:$0xff]
    %v2011 = vld [vmem:[%s33 + $0x10] sm:$0xff]
    %v2012 = vld [vmem:[%s33 + $0x18] sm:$0xff]
    %v2013 = vpack.c.bf16 %v290, %v289
    %v2014 = vpack.c.bf16 %v292, %v291
    %v2015 = vpack.c.bf16 %v2010, %v2009
    %v2016 = vpack.c.bf16 %v2012, %v2011
    %v2017 = vld [vmem:[%s35] sm:$0x1]
    %v2019 = vlaneseq
    %v2020 = vshrl.u32 %v2019, 7
    %v2021 = vsub.s32 0, %v2020
    %v2022 = vrot.slane %v2017, %v2021
    %v2025 = vsel %vm313, %v2013, 0
    %v2028 = vsel %vm313, %v2014, 0
    %2030 = vmatprep.subr.bf16.mxu0 0
    %2031 = vmatpush1.bf16.msra.mxu0 %v2015
    %2032 = vmatprep.subr.bf16.mxu0 0
    %2033 = vmatpush1.bf16.msra.mxu0 %v2016
    %2034 = vmatprep.subr.bf16.mxu0 0
    %2035 = vmatpush1.bf16.msra.mxu0 0
    %2036 = vmatprep.subr.bf16.mxu0 0
    %2037 = vmatpush1.bf16.msra.mxu0 0
    %2038 = vmatprep.subr.bf16.mxu0 0
    %2039 = vmatpush1.bf16.msra.mxu0 0
    %2040 = vmatprep.subr.bf16.mxu0 0
    %2041 = vmatpush1.bf16.msra.mxu0 0
    %2042 = vmatprep.subr.bf16.mxu0 0
    %2043 = vmatpush1.bf16.msra.mxu0 0
    %2044 = vmatprep.subr.bf16.mxu0 0
    %2045 = vmatpush1.bf16.msra.mxu0 0
    %2046 = vmatprep.subr.bf16.mxu0 0
    %2047 = vmatpush1.bf16.msra.mxu0 0
    %2048 = vmatprep.subr.bf16.mxu0 0
    %2049 = vmatpush1.bf16.msra.mxu0 0
    %2050 = vmatprep.subr.bf16.mxu0 0
    %2051 = vmatpush1.bf16.msra.mxu0 0
    %2052 = vmatprep.subr.bf16.mxu0 0
    %2053 = vmatpush1.bf16.msra.mxu0 0
    %2054 = vmatprep.subr.bf16.mxu0 0
    %2055 = vmatpush1.bf16.msra.mxu0 0
    %2056 = vmatprep.subr.bf16.mxu0 0
    %2057 = vmatpush1.bf16.msra.mxu0 0
    %2058 = vmatprep.subr.bf16.mxu0 0
    %2059 = vmatpush1.bf16.msra.mxu0 0
    %2060 = vmatprep.subr.bf16.mxu0 0
    %2061 = vmatpush1.bf16.msra.mxu0 0
    %2062 = vmatprep.mubr.bf16.mxu0 0
    %2063 = vmatmul.mubr.bf16.gmra.mrb[0].mxu0 %v2025
    %v2064 = vpop.f32.mrb[0].mxu0
    %v2065 = vadd.f32 %v2022, %v2064
    %v2066 = vpop.f32.mrb[0].mxu0
    %v2067 = vpop.f32.mrb[0].mxu0
    %v2068 = vadd.f32 %v2022, %v2067
    %v2069 = vpop.f32.mrb[0].mxu0
    %2070 = vmatprep.mubr.bf16.mxu0 0
    %2071 = vmatmul.mubr.bf16.gmra.mrb[0].mxu0 %v2028
    %v2072 = vpop.f32.mrb[0].mxu0
    %v2073 = vadd.f32 %v2022, %v2072
    %v2074 = vpop.f32.mrb[0].mxu0
    %v2075 = vpop.f32.mrb[0].mxu0
    %v2076 = vadd.f32 %v2022, %v2075
    %v2077 = vpop.f32.mrb[0].mxu0
    %2078 = vdwg.mxu0
    %v2079 = vld [vmem:[%s5] sm:$0x3]
    %vm2080 = vcmp.gt.f32.partialorder %v2079, 0.0
    %v2081 = vsel %vm2080, 0.0, -1e+09
    %v2084 = vunpack.c.l.s4 1966171168
    %v2085 = vunpack.c.0.s8 %v2084
    %v2086 = vlaneseq
    %v2087 = vshrl.u32 %v2086, 7
    %v2088 = vsub.s32 %v2085, %v2087
    %v2089 = vrot.slane %v2081, %v2088
    %v2090 = vcombine.high %v2089, %v2089
    %v2092 = vunpack.c.l.s4 1966171168
    %v2093 = vunpack.c.0.s8 %v2092
    %v2094 = vlaneseq
    %v2095 = vshrl.u32 %v2094, 7
    %v2096 = vsub.s32 %v2093, %v2095
    %v2097 = vrot.slane %v2089, %v2096
    %v2099 = vunpack.c.l.s4 1966171168
    %v2100 = vunpack.c.0.s8 %v2099
    %v2101 = vlaneseq
    %v2102 = vshrl.u32 %v2101, 7
    %v2103 = vsub.s32 %v2100, %v2102
    %v2104 = vrot.slane %v2090, %v2103
    %v2106 = vsel %vm418, %v1933, 0
    %v2109 = vsel %vm418, %v1995, 0
    %v2112 = vsel %vm418, %v1998, 0
    %2114 = vmatprep.subr.mxu0 0.0
    %2115 = vmatpush1.xpose.msra.mxu0 %v2109
    %2116 = vmatprep.subr.mxu0 0.0
    %2117 = vmatpush1.xpose.msra.mxu0 %v2112
    %2118 = vmatprep.subr.mxu0 0.0
    %2119 = vmatpush1.xpose.msra.mxu0 0.0
    %2120 = vmatprep.subr.mxu0 0.0
    %2121 = vmatpush1.xpose.msra.mxu0 0.0
    %2122 = vmatprep.subr.mxu0 0.0
    %2123 = vmatpush1.xpose.msra.mxu0 0.0
    %2124 = vmatprep.subr.mxu0 0.0
    %2125 = vmatpush1.xpose.msra.mxu0 0.0
    %2126 = vmatprep.subr.mxu0 0.0
    %2127 = vmatpush1.xpose.msra.mxu0 0.0
    %2128 = vmatprep.subr.mxu0 0.0
    %2129 = vmatpush1.xpose.msra.mxu0 0.0
    %2130 = vmatprep.subr.mxu0 0.0
    %2131 = vmatpush1.xpose.msra.mxu0 0.0
    %2132 = vmatprep.subr.mxu0 0.0
    %2133 = vmatpush1.xpose.msra.mxu0 0.0
    %2134 = vmatprep.subr.mxu0 0.0
    %2135 = vmatpush1.xpose.msra.mxu0 0.0
    %2136 = vmatprep.subr.mxu0 0.0
    %2137 = vmatpush1.xpose.msra.mxu0 0.0
    %2138 = vmatprep.subr.mxu0 0.0
    %2139 = vmatpush1.xpose.msra.mxu0 0.0
    %2140 = vmatprep.subr.mxu0 0.0
    %2141 = vmatpush1.xpose.msra.mxu0 0.0
    %2142 = vmatprep.subr.mxu0 0.0
    %2143 = vmatpush1.xpose.msra.mxu0 0.0
    %2144 = vmatprep.subr.mxu0 0.0
    %2145 = vmatpush1.xpose.msra.mxu0 0.0
    %2146 = vmatprep.subr.mxu0 0.0
    %2147 = vmatpush1.xpose.msra.mxu0 0.0
    %2148 = vmatprep.subr.mxu0 0.0
    %2149 = vmatpush1.xpose.msra.mxu0 0.0
    %2150 = vmatprep.subr.mxu0 0.0
    %2151 = vmatpush1.xpose.msra.mxu0 0.0
    %2152 = vmatprep.subr.mxu0 0.0
    %2153 = vmatpush1.xpose.msra.mxu0 0.0
    %2154 = vmatprep.subr.mxu0 0.0
    %2155 = vmatpush1.xpose.msra.mxu0 0.0
    %2156 = vmatprep.subr.mxu0 0.0
    %2157 = vmatpush1.xpose.msra.mxu0 0.0
    %2158 = vmatprep.subr.mxu0 0.0
    %2159 = vmatpush1.xpose.msra.mxu0 0.0
    %2160 = vmatprep.subr.mxu0 0.0
    %2161 = vmatpush1.xpose.msra.mxu0 0.0
    %2162 = vmatprep.subr.mxu0 0.0
    %2163 = vmatpush1.xpose.msra.mxu0 0.0
    %2164 = vmatprep.subr.mxu0 0.0
    %2165 = vmatpush1.xpose.msra.mxu0 0.0
    %2166 = vmatprep.subr.mxu0 0.0
    %2167 = vmatpush1.xpose.msra.mxu0 0.0
    %2168 = vmatprep.subr.mxu0 0.0
    %2169 = vmatpush1.xpose.msra.mxu0 0.0
    %2170 = vmatprep.subr.mxu0 0.0
    %2171 = vmatpush1.xpose.msra.mxu0 0.0
    %2172 = vmatprep.subr.mxu0 0.0
    %2173 = vmatpush1.xpose.msra.mxu0 0.0
    %2174 = vmatprep.subr.mxu0 0.0
    %2175 = vmatpush1.xpose.msra.mxu0 0.0
    %2176 = vmatprep.subr.mxu0 0.0
    %2177 = vmatpush1.xpose.msra.mxu0 0.0
    %2178 = vmatprep.mubr.f32.mxu0 0.0
    %2179 = vmatmul.mubr.f32.gmra.mrb[0].mxu0 %v2106
    %v2180 = vpop.f32.mrb[0].mxu0
    %v2181 = vadd.f32 0.0, %v2180
    %v2182 = vpop.f32.mrb[0].mxu0
    %2183 = vdwg.mxu0
    %v2185 = vsel %vm418, %v1936, 0
    %v2188 = vsel %vm418, %v2003, 0
    %v2191 = vsel %vm418, %v2006, 0
    %2193 = vmatprep.subr.mxu0 0.0
    %2194 = vmatpush1.xpose.msra.mxu0 %v2188
    %2195 = vmatprep.subr.mxu0 0.0
    %2196 = vmatpush1.xpose.msra.mxu0 %v2191
    %2197 = vmatprep.subr.mxu0 0.0
    %2198 = vmatpush1.xpose.msra.mxu0 0.0
    %2199 = vmatprep.subr.mxu0 0.0
    %2200 = vmatpush1.xpose.msra.mxu0 0.0
    %2201 = vmatprep.subr.mxu0 0.0
    %2202 = vmatpush1.xpose.msra.mxu0 0.0
    %2203 = vmatprep.subr.mxu0 0.0
    %2204 = vmatpush1.xpose.msra.mxu0 0.0
    %2205 = vmatprep.subr.mxu0 0.0
    %2206 = vmatpush1.xpose.msra.mxu0 0.0
    %2207 = vmatprep.subr.mxu0 0.0
    %2208 = vmatpush1.xpose.msra.mxu0 0.0
    %2209 = vmatprep.subr.mxu0 0.0
    %2210 = vmatpush1.xpose.msra.mxu0 0.0
    %2211 = vmatprep.subr.mxu0 0.0
    %2212 = vmatpush1.xpose.msra.mxu0 0.0
    %2213 = vmatprep.subr.mxu0 0.0
    %2214 = vmatpush1.xpose.msra.mxu0 0.0
    %2215 = vmatprep.subr.mxu0 0.0
    %2216 = vmatpush1.xpose.msra.mxu0 0.0
    %2217 = vmatprep.subr.mxu0 0.0
    %2218 = vmatpush1.xpose.msra.mxu0 0.0
    %2219 = vmatprep.subr.mxu0 0.0
    %2220 = vmatpush1.xpose.msra.mxu0 0.0
    %2221 = vmatprep.subr.mxu0 0.0
    %2222 = vmatpush1.xpose.msra.mxu0 0.0
    %2223 = vmatprep.subr.mxu0 0.0
    %2224 = vmatpush1.xpose.msra.mxu0 0.0
    %2225 = vmatprep.subr.mxu0 0.0
    %2226 = vmatpush1.xpose.msra.mxu0 0.0
    %2227 = vmatprep.subr.mxu0 0.0
    %2228 = vmatpush1.xpose.msra.mxu0 0.0
    %2229 = vmatprep.subr.mxu0 0.0
    %2230 = vmatpush1.xpose.msra.mxu0 0.0
    %2231 = vmatprep.subr.mxu0 0.0
    %2232 = vmatpush1.xpose.msra.mxu0 0.0
    %2233 = vmatprep.subr.mxu0 0.0
    %2234 = vmatpush1.xpose.msra.mxu0 0.0
    %2235 = vmatprep.subr.mxu0 0.0
    %2236 = vmatpush1.xpose.msra.mxu0 0.0
    %2237 = vmatprep.subr.mxu0 0.0
    %2238 = vmatpush1.xpose.msra.mxu0 0.0
    %2239 = vmatprep.subr.mxu0 0.0
    %2240 = vmatpush1.xpose.msra.mxu0 0.0
    %2241 = vmatprep.subr.mxu0 0.0
    %2242 = vmatpush1.xpose.msra.mxu0 0.0
    %2243 = vmatprep.subr.mxu0 0.0
    %2244 = vmatpush1.xpose.msra.mxu0 0.0
    %2245 = vmatprep.subr.mxu0 0.0
    %2246 = vmatpush1.xpose.msra.mxu0 0.0
    %2247 = vmatprep.subr.mxu0 0.0
    %2248 = vmatpush1.xpose.msra.mxu0 0.0
    %2249 = vmatprep.subr.mxu0 0.0
    %2250 = vmatpush1.xpose.msra.mxu0 0.0
    %2251 = vmatprep.subr.mxu0 0.0
    %2252 = vmatpush1.xpose.msra.mxu0 0.0
    %2253 = vmatprep.subr.mxu0 0.0
    %2254 = vmatpush1.xpose.msra.mxu0 0.0
    %2255 = vmatprep.subr.mxu0 0.0
    %2256 = vmatpush1.xpose.msra.mxu0 0.0
    %2257 = vmatprep.mubr.f32.mxu0 0.0
    %2258 = vmatmul.mubr.f32.gmra.mrb[0].mxu0 %v2185
    %v2259 = vpop.f32.mrb[0].mxu0
    %v2260 = vadd.f32 0.0, %v2259
    %v2261 = vpop.f32.mrb[0].mxu0
    %2262 = vdwg.mxu0
    %v2263 = vmul.f32 %v2181, 0.35355338
    %v2264 = vmul.f32 %v2260, 0.35355338
    %v2265 = vlaneseq
    %v2266 = vshrl.u32 %v2265, 7
    %v2267 = vsub.s32 0, %v2266
    %v2268 = vrot.slane %v2097, %v2267
    %v2269 = vlaneseq
    %v2270 = vshrl.u32 %v2269, 7
    %v2271 = vsub.s32 0, %v2270
    %v2272 = vrot.slane %v2104, %v2271
    %v2275 = vadd.f32 %v2263, %v2268
    %v2276 = vadd.f32 %v2264, %v2272
    %v2277 = vsel %vm1764, %v2275, -inf
    %2278 = vmax.xlane.f32.xlu0 %v2277
    %v2279 = vpop.xlane.xlu0 %2278
    %v2280 = vsel %vm1764, %v2276, -inf
    %2281 = vmax.xlane.f32.xlu0 %v2280
    %v2282 = vpop.xlane.xlu0 %2281
    %v2283 = vsub.f32 %v2275, %v2279
    %v2284 = vsub.f32 %v2276, %v2282
    %v2285 = vmul.f32 %v2283, 1.442695
    %v2286 = vpow.pop %v2285
    %v2287 = vmul.f32 %v2284, 1.442695
    %v2288 = vpow.pop %v2287
    %v2289 = vsel %vm1764, %v2286, 0.0
    %2290 = vadd.xlane.f32.xlu0 %v2289
    %v2291 = vpop.xlane.xlu0 %2290
    %v2292 = vsel %vm1764, %v2288, 0.0
    %2293 = vadd.xlane.f32.xlu0 %v2292
    %v2294 = vpop.xlane.xlu0 %2293
    %v2295 = vrcp.pop %v2291
    %v2296 = vrcp.pop %v2294
    %v2297 = vmul.f32 %v2286, %v2295
    %v2298 = vmul.f32 %v2288, %v2296
    %v2300 = vsel %vm1764, %v2297, 0
    %2302 = vmatprep.subr.mxu0 0.0
    %2303 = vmatpush1.msra.mxu0 %v2065
    %2304 = vmatprep.subr.mxu0 0.0
    %2305 = vmatpush1.msra.mxu0 %v2068
    %2306 = vmatprep.subr.mxu0 0.0
    %2307 = vmatpush1.msra.mxu0 0.0
    %2308 = vmatprep.subr.mxu0 0.0
    %2309 = vmatpush1.msra.mxu0 0.0
    %2310 = vmatprep.subr.mxu0 0.0
    %2311 = vmatpush1.msra.mxu0 0.0
    %2312 = vmatprep.subr.mxu0 0.0
    %2313 = vmatpush1.msra.mxu0 0.0
    %2314 = vmatprep.subr.mxu0 0.0
    %2315 = vmatpush1.msra.mxu0 0.0
    %2316 = vmatprep.subr.mxu0 0.0
    %2317 = vmatpush1.msra.mxu0 0.0
    %2318 = vmatprep.subr.mxu0 0.0
    %2319 = vmatpush1.msra.mxu0 0.0
    %2320 = vmatprep.subr.mxu0 0.0
    %2321 = vmatpush1.msra.mxu0 0.0
    %2322 = vmatprep.subr.mxu0 0.0
    %2323 = vmatpush1.msra.mxu0 0.0
    %2324 = vmatprep.subr.mxu0 0.0
    %2325 = vmatpush1.msra.mxu0 0.0
    %2326 = vmatprep.subr.mxu0 0.0
    %2327 = vmatpush1.msra.mxu0 0.0
    %2328 = vmatprep.subr.mxu0 0.0
    %2329 = vmatpush1.msra.mxu0 0.0
    %2330 = vmatprep.subr.mxu0 0.0
    %2331 = vmatpush1.msra.mxu0 0.0
    %2332 = vmatprep.subr.mxu0 0.0
    %2333 = vmatpush1.msra.mxu0 0.0
    %2334 = vmatprep.subr.mxu0 0.0
    %2335 = vmatpush1.msra.mxu0 0.0
    %2336 = vmatprep.subr.mxu0 0.0
    %2337 = vmatpush1.msra.mxu0 0.0
    %2338 = vmatprep.subr.mxu0 0.0
    %2339 = vmatpush1.msra.mxu0 0.0
    %2340 = vmatprep.subr.mxu0 0.0
    %2341 = vmatpush1.msra.mxu0 0.0
    %2342 = vmatprep.subr.mxu0 0.0
    %2343 = vmatpush1.msra.mxu0 0.0
    %2344 = vmatprep.subr.mxu0 0.0
    %2345 = vmatpush1.msra.mxu0 0.0
    %2346 = vmatprep.subr.mxu0 0.0
    %2347 = vmatpush1.msra.mxu0 0.0
    %2348 = vmatprep.subr.mxu0 0.0
    %2349 = vmatpush1.msra.mxu0 0.0
    %2350 = vmatprep.subr.mxu0 0.0
    %2351 = vmatpush1.msra.mxu0 0.0
    %2352 = vmatprep.subr.mxu0 0.0
    %2353 = vmatpush1.msra.mxu0 0.0
    %2354 = vmatprep.subr.mxu0 0.0
    %2355 = vmatpush1.msra.mxu0 0.0
    %2356 = vmatprep.subr.mxu0 0.0
    %2357 = vmatpush1.msra.mxu0 0.0
    %2358 = vmatprep.subr.mxu0 0.0
    %2359 = vmatpush1.msra.mxu0 0.0
    %2360 = vmatprep.subr.mxu0 0.0
    %2361 = vmatpush1.msra.mxu0 0.0
    %2362 = vmatprep.subr.mxu0 0.0
    %2363 = vmatpush1.msra.mxu0 0.0
    %2364 = vmatprep.subr.mxu0 0.0
    %2365 = vmatpush1.msra.mxu0 0.0
    %2366 = vmatprep.mubr.f32.mxu0 0.0
    %2367 = vmatmul.mubr.f32.gmra.mrb[0].mxu0 %v2300
    %v2368 = vpop.f32.mrb[0].mxu0
    %v2369 = vadd.f32 0.0, %v2368
    %v2370 = vpop.f32.mrb[0].mxu0
    %2371 = vdwg.mxu0
    %v2373 = vsel %vm1764, %v2298, 0
    %2375 = vmatprep.subr.mxu0 0.0
    %2376 = vmatpush1.msra.mxu0 %v2073
    %2377 = vmatprep.subr.mxu0 0.0
    %2378 = vmatpush1.msra.mxu0 %v2076
    %2379 = vmatprep.subr.mxu0 0.0
    %2380 = vmatpush1.msra.mxu0 0.0
    %2381 = vmatprep.subr.mxu0 0.0
    %2382 = vmatpush1.msra.mxu0 0.0
    %2383 = vmatprep.subr.mxu0 0.0
    %2384 = vmatpush1.msra.mxu0 0.0
    %2385 = vmatprep.subr.mxu0 0.0
    %2386 = vmatpush1.msra.mxu0 0.0
    %2387 = vmatprep.subr.mxu0 0.0
    %2388 = vmatpush1.msra.mxu0 0.0
    %2389 = vmatprep.subr.mxu0 0.0
    %2390 = vmatpush1.msra.mxu0 0.0
    %2391 = vmatprep.subr.mxu0 0.0
    %2392 = vmatpush1.msra.mxu0 0.0
    %2393 = vmatprep.subr.mxu0 0.0
    %2394 = vmatpush1.msra.mxu0 0.0
    %2395 = vmatprep.subr.mxu0 0.0
    %2396 = vmatpush1.msra.mxu0 0.0
    %2397 = vmatprep.subr.mxu0 0.0
    %2398 = vmatpush1.msra.mxu0 0.0
    %2399 = vmatprep.subr.mxu0 0.0
    %2400 = vmatpush1.msra.mxu0 0.0
    %2401 = vmatprep.subr.mxu0 0.0
    %2402 = vmatpush1.msra.mxu0 0.0
    %2403 = vmatprep.subr.mxu0 0.0
    %2404 = vmatpush1.msra.mxu0 0.0
    %2405 = vmatprep.subr.mxu0 0.0
    %2406 = vmatpush1.msra.mxu0 0.0
    %2407 = vmatprep.subr.mxu0 0.0
    %2408 = vmatpush1.msra.mxu0 0.0
    %2409 = vmatprep.subr.mxu0 0.0
    %2410 = vmatpush1.msra.mxu0 0.0
    %2411 = vmatprep.subr.mxu0 0.0
    %2412 = vmatpush1.msra.mxu0 0.0
    %2413 = vmatprep.subr.mxu0 0.0
    %2414 = vmatpush1.msra.mxu0 0.0
    %2415 = vmatprep.subr.mxu0 0.0
    %2416 = vmatpush1.msra.mxu0 0.0
    %2417 = vmatprep.subr.mxu0 0.0
    %2418 = vmatpush1.msra.mxu0 0.0
    %2419 = vmatprep.subr.mxu0 0.0
    %2420 = vmatpush1.msra.mxu0 0.0
    %2421 = vmatprep.subr.mxu0 0.0
    %2422 = vmatpush1.msra.mxu0 0.0
    %2423 = vmatprep.subr.mxu0 0.0
    %2424 = vmatpush1.msra.mxu0 0.0
    %2425 = vmatprep.subr.mxu0 0.0
    %2426 = vmatpush1.msra.mxu0 0.0
    %2427 = vmatprep.subr.mxu0 0.0
    %2428 = vmatpush1.msra.mxu0 0.0
    %2429 = vmatprep.subr.mxu0 0.0
    %2430 = vmatpush1.msra.mxu0 0.0
    %2431 = vmatprep.subr.mxu0 0.0
    %2432 = vmatpush1.msra.mxu0 0.0
    %2433 = vmatprep.subr.mxu0 0.0
    %2434 = vmatpush1.msra.mxu0 0.0
    %2435 = vmatprep.subr.mxu0 0.0
    %2436 = vmatpush1.msra.mxu0 0.0
    %2437 = vmatprep.subr.mxu0 0.0
    %2438 = vmatpush1.msra.mxu0 0.0
    %2439 = vmatprep.mubr.f32.mxu0 0.0
    %2440 = vmatmul.mubr.f32.gmra.mrb[0].mxu0 %v2373
    %v2441 = vpop.f32.mrb[0].mxu0
    %v2442 = vadd.f32 0.0, %v2441
    %v2443 = vpop.f32.mrb[0].mxu0
    %2444 = vdwg.mxu0
    %2445 = vrot.lane.b32.xlu0 %v1933, 120
    %v2446 = vpop.permute.xlu0 %2445
    %2447 = vrot.lane.b32.xlu0 %v1995, 120
    %v2448 = vpop.permute.xlu0 %2447
    %2449 = vrot.lane.b32.xlu0 %v1998, 120
    %v2450 = vpop.permute.xlu0 %2449
    %v2451 = vsel %vm418, %v2446, 0
    %v2453 = vsel %vm418, %v2448, 0
    %v2455 = vsel %vm418, %v2450, 0
    %2457 = vmatprep.subr.mxu0 0.0
    %2458 = vmatpush1.xpose.msra.mxu0 %v2453
    %2459 = vmatprep.subr.mxu0 0.0
    %2460 = vmatpush1.xpose.msra.mxu0 %v2455
    %2461 = vmatprep.subr.mxu0 0.0
    %2462 = vmatpush1.xpose.msra.mxu0 0.0
    %2463 = vmatprep.subr.mxu0 0.0
    %2464 = vmatpush1.xpose.msra.mxu0 0.0
    %2465 = vmatprep.subr.mxu0 0.0
    %2466 = vmatpush1.xpose.msra.mxu0 0.0
    %2467 = vmatprep.subr.mxu0 0.0
    %2468 = vmatpush1.xpose.msra.mxu0 0.0
    %2469 = vmatprep.subr.mxu0 0.0
    %2470 = vmatpush1.xpose.msra.mxu0 0.0
    %2471 = vmatprep.subr.mxu0 0.0
    %2472 = vmatpush1.xpose.msra.mxu0 0.0
    %2473 = vmatprep.subr.mxu0 0.0
    %2474 = vmatpush1.xpose.msra.mxu0 0.0
    %2475 = vmatprep.subr.mxu0 0.0
    %2476 = vmatpush1.xpose.msra.mxu0 0.0
    %2477 = vmatprep.subr.mxu0 0.0
    %2478 = vmatpush1.xpose.msra.mxu0 0.0
    %2479 = vmatprep.subr.mxu0 0.0
    %2480 = vmatpush1.xpose.msra.mxu0 0.0
    %2481 = vmatprep.subr.mxu0 0.0
    %2482 = vmatpush1.xpose.msra.mxu0 0.0
    %2483 = vmatprep.subr.mxu0 0.0
    %2484 = vmatpush1.xpose.msra.mxu0 0.0
    %2485 = vmatprep.subr.mxu0 0.0
    %2486 = vmatpush1.xpose.msra.mxu0 0.0
    %2487 = vmatprep.subr.mxu0 0.0
    %2488 = vmatpush1.xpose.msra.mxu0 0.0
    %2489 = vmatprep.subr.mxu0 0.0
    %2490 = vmatpush1.xpose.msra.mxu0 0.0
    %2491 = vmatprep.subr.mxu0 0.0
    %2492 = vmatpush1.xpose.msra.mxu0 0.0
    %2493 = vmatprep.subr.mxu0 0.0
    %2494 = vmatpush1.xpose.msra.mxu0 0.0
    %2495 = vmatprep.subr.mxu0 0.0
    %2496 = vmatpush1.xpose.msra.mxu0 0.0
    %2497 = vmatprep.subr.mxu0 0.0
    %2498 = vmatpush1.xpose.msra.mxu0 0.0
    %2499 = vmatprep.subr.mxu0 0.0
    %2500 = vmatpush1.xpose.msra.mxu0 0.0
    %2501 = vmatprep.subr.mxu0 0.0
    %2502 = vmatpush1.xpose.msra.mxu0 0.0
    %2503 = vmatprep.subr.mxu0 0.0
    %2504 = vmatpush1.xpose.msra.mxu0 0.0
    %2505 = vmatprep.subr.mxu0 0.0
    %2506 = vmatpush1.xpose.msra.mxu0 0.0
    %2507 = vmatprep.subr.mxu0 0.0
    %2508 = vmatpush1.xpose.msra.mxu0 0.0
    %2509 = vmatprep.subr.mxu0 0.0
    %2510 = vmatpush1.xpose.msra.mxu0 0.0
    %2511 = vmatprep.subr.mxu0 0.0
    %2512 = vmatpush1.xpose.msra.mxu0 0.0
    %2513 = vmatprep.subr.mxu0 0.0
    %2514 = vmatpush1.xpose.msra.mxu0 0.0
    %2515 = vmatprep.subr.mxu0 0.0
    %2516 = vmatpush1.xpose.msra.mxu0 0.0
    %2517 = vmatprep.subr.mxu0 0.0
    %2518 = vmatpush1.xpose.msra.mxu0 0.0
    %2519 = vmatprep.subr.mxu0 0.0
    %2520 = vmatpush1.xpose.msra.mxu0 0.0
    %2521 = vmatprep.mubr.f32.mxu0 0.0
    %2522 = vmatmul.mubr.f32.gmra.mrb[0].mxu0 %v2451
    %v2523 = vpop.f32.mrb[0].mxu0
    %v2524 = vadd.f32 0.0, %v2523
    %v2525 = vpop.f32.mrb[0].mxu0
    %2526 = vdwg.mxu0
    %2527 = vrot.lane.b32.xlu0 %v1936, 120
    %v2528 = vpop.permute.xlu0 %2527
    %2529 = vrot.lane.b32.xlu0 %v2003, 120
    %v2530 = vpop.permute.xlu0 %2529
    %2531 = vrot.lane.b32.xlu0 %v2006, 120
    %v2532 = vpop.permute.xlu0 %2531
    %v2533 = vsel %vm418, %v2528, 0
    %v2535 = vsel %vm418, %v2530, 0
    %v2537 = vsel %vm418, %v2532, 0
    %2539 = vmatprep.subr.mxu0 0.0
    %2540 = vmatpush1.xpose.msra.mxu0 %v2535
    %2541 = vmatprep.subr.mxu0 0.0
    %2542 = vmatpush1.xpose.msra.mxu0 %v2537
    %2543 = vmatprep.subr.mxu0 0.0
    %2544 = vmatpush1.xpose.msra.mxu0 0.0
    %2545 = vmatprep.subr.mxu0 0.0
    %2546 = vmatpush1.xpose.msra.mxu0 0.0
    %2547 = vmatprep.subr.mxu0 0.0
    %2548 = vmatpush1.xpose.msra.mxu0 0.0
    %2549 = vmatprep.subr.mxu0 0.0
    %2550 = vmatpush1.xpose.msra.mxu0 0.0
    %2551 = vmatprep.subr.mxu0 0.0
    %2552 = vmatpush1.xpose.msra.mxu0 0.0
    %2553 = vmatprep.subr.mxu0 0.0
    %2554 = vmatpush1.xpose.msra.mxu0 0.0
    %2555 = vmatprep.subr.mxu0 0.0
    %2556 = vmatpush1.xpose.msra.mxu0 0.0
    %2557 = vmatprep.subr.mxu0 0.0
    %2558 = vmatpush1.xpose.msra.mxu0 0.0
    %2559 = vmatprep.subr.mxu0 0.0
    %2560 = vmatpush1.xpose.msra.mxu0 0.0
    %2561 = vmatprep.subr.mxu0 0.0
    %2562 = vmatpush1.xpose.msra.mxu0 0.0
    %2563 = vmatprep.subr.mxu0 0.0
    %2564 = vmatpush1.xpose.msra.mxu0 0.0
    %2565 = vmatprep.subr.mxu0 0.0
    %2566 = vmatpush1.xpose.msra.mxu0 0.0
    %2567 = vmatprep.subr.mxu0 0.0
    %2568 = vmatpush1.xpose.msra.mxu0 0.0
    %2569 = vmatprep.subr.mxu0 0.0
    %2570 = vmatpush1.xpose.msra.mxu0 0.0
    %2571 = vmatprep.subr.mxu0 0.0
    %2572 = vmatpush1.xpose.msra.mxu0 0.0
    %2573 = vmatprep.subr.mxu0 0.0
    %2574 = vmatpush1.xpose.msra.mxu0 0.0
    %2575 = vmatprep.subr.mxu0 0.0
    %2576 = vmatpush1.xpose.msra.mxu0 0.0
    %2577 = vmatprep.subr.mxu0 0.0
    %2578 = vmatpush1.xpose.msra.mxu0 0.0
    %2579 = vmatprep.subr.mxu0 0.0
    %2580 = vmatpush1.xpose.msra.mxu0 0.0
    %2581 = vmatprep.subr.mxu0 0.0
    %2582 = vmatpush1.xpose.msra.mxu0 0.0
    %2583 = vmatprep.subr.mxu0 0.0
    %2584 = vmatpush1.xpose.msra.mxu0 0.0
    %2585 = vmatprep.subr.mxu0 0.0
    %2586 = vmatpush1.xpose.msra.mxu0 0.0
    %2587 = vmatprep.subr.mxu0 0.0
    %2588 = vmatpush1.xpose.msra.mxu0 0.0
    %2589 = vmatprep.subr.mxu0 0.0
    %2590 = vmatpush1.xpose.msra.mxu0 0.0
    %2591 = vmatprep.subr.mxu0 0.0
    %2592 = vmatpush1.xpose.msra.mxu0 0.0
    %2593 = vmatprep.subr.mxu0 0.0
    %2594 = vmatpush1.xpose.msra.mxu0 0.0
    %2595 = vmatprep.subr.mxu0 0.0
    %2596 = vmatpush1.xpose.msra.mxu0 0.0
    %2597 = vmatprep.subr.mxu0 0.0
    %2598 = vmatpush1.xpose.msra.mxu0 0.0
    %2599 = vmatprep.subr.mxu0 0.0
    %2600 = vmatpush1.xpose.msra.mxu0 0.0
    %2601 = vmatprep.subr.mxu0 0.0
    %2602 = vmatpush1.xpose.msra.mxu0 0.0
    %2603 = vmatprep.mubr.f32.mxu0 0.0
    %2604 = vmatmul.mubr.f32.gmra.mrb[0].mxu0 %v2533
    %v2605 = vpop.f32.mrb[0].mxu0
    %v2606 = vadd.f32 0.0, %v2605
    %v2607 = vpop.f32.mrb[0].mxu0
    %2608 = vdwg.mxu0
    %v2609 = vmul.f32 %v2524, 0.35355338
    %v2610 = vmul.f32 %v2606, 0.35355338
    %v2611 = vadd.f32 %v2609, %v2268
    %v2612 = vadd.f32 %v2610, %v2272
    %v2613 = vsel %vm1764, %v2611, -inf
    %2614 = vmax.xlane.f32.xlu0 %v2613
    %v2615 = vpop.xlane.xlu0 %2614
    %v2616 = vsel %vm1764, %v2612, -inf
    %2617 = vmax.xlane.f32.xlu0 %v2616
    %v2618 = vpop.xlane.xlu0 %2617
    %v2619 = vsub.f32 %v2611, %v2615
    %v2620 = vsub.f32 %v2612, %v2618
    %v2621 = vmul.f32 %v2619, 1.442695
    %v2622 = vpow.pop %v2621
    %v2623 = vmul.f32 %v2620, 1.442695
    %v2624 = vpow.pop %v2623
    %v2625 = vsel %vm1764, %v2622, 0.0
    %2626 = vadd.xlane.f32.xlu0 %v2625
    %v2627 = vpop.xlane.xlu0 %2626
    %v2628 = vsel %vm1764, %v2624, 0.0
    %2629 = vadd.xlane.f32.xlu0 %v2628
    %v2630 = vpop.xlane.xlu0 %2629
    %v2631 = vrcp.pop %v2627
    %v2632 = vrcp.pop %v2630
    %v2633 = vmul.f32 %v2622, %v2631
    %v2634 = vmul.f32 %v2624, %v2632
    %2637 = vrot.lane.b32.xlu0 %v2065, 120
    %v2638 = vpop.permute.xlu0 %2637
    %2639 = vrot.lane.b32.xlu0 %v2068, 120
    %v2640 = vpop.permute.xlu0 %2639
    %v2644 = vsel %vm1764, %v2633, 0
    %2646 = vmatprep.subr.mxu0 0.0
    %2647 = vmatpush1.msra.mxu0 %v2638
    %2648 = vmatprep.subr.mxu0 0.0
    %2649 = vmatpush1.msra.mxu0 %v2640
    %2650 = vmatprep.subr.mxu0 0.0
    %2651 = vmatpush1.msra.mxu0 0.0
    %2652 = vmatprep.subr.mxu0 0.0
    %2653 = vmatpush1.msra.mxu0 0.0
    %2654 = vmatprep.subr.mxu0 0.0
    %2655 = vmatpush1.msra.mxu0 0.0
    %2656 = vmatprep.subr.mxu0 0.0
    %2657 = vmatpush1.msra.mxu0 0.0
    %2658 = vmatprep.subr.mxu0 0.0
    %2659 = vmatpush1.msra.mxu0 0.0
    %2660 = vmatprep.subr.mxu0 0.0
    %2661 = vmatpush1.msra.mxu0 0.0
    %2662 = vmatprep.subr.mxu0 0.0
    %2663 = vmatpush1.msra.mxu0 0.0
    %2664 = vmatprep.subr.mxu0 0.0
    %2665 = vmatpush1.msra.mxu0 0.0
    %2666 = vmatprep.subr.mxu0 0.0
    %2667 = vmatpush1.msra.mxu0 0.0
    %2668 = vmatprep.subr.mxu0 0.0
    %2669 = vmatpush1.msra.mxu0 0.0
    %2670 = vmatprep.subr.mxu0 0.0
    %2671 = vmatpush1.msra.mxu0 0.0
    %2672 = vmatprep.subr.mxu0 0.0
    %2673 = vmatpush1.msra.mxu0 0.0
    %2674 = vmatprep.subr.mxu0 0.0
    %2675 = vmatpush1.msra.mxu0 0.0
    %2676 = vmatprep.subr.mxu0 0.0
    %2677 = vmatpush1.msra.mxu0 0.0
    %2678 = vmatprep.subr.mxu0 0.0
    %2679 = vmatpush1.msra.mxu0 0.0
    %2680 = vmatprep.subr.mxu0 0.0
    %2681 = vmatpush1.msra.mxu0 0.0
    %2682 = vmatprep.subr.mxu0 0.0
    %2683 = vmatpush1.msra.mxu0 0.0
    %2684 = vmatprep.subr.mxu0 0.0
    %2685 = vmatpush1.msra.mxu0 0.0
    %2686 = vmatprep.subr.mxu0 0.0
    %2687 = vmatpush1.msra.mxu0 0.0
    %2688 = vmatprep.subr.mxu0 0.0
    %2689 = vmatpush1.msra.mxu0 0.0
    %2690 = vmatprep.subr.mxu0 0.0
    %2691 = vmatpush1.msra.mxu0 0.0
    %2692 = vmatprep.subr.mxu0 0.0
    %2693 = vmatpush1.msra.mxu0 0.0
    %2694 = vmatprep.subr.mxu0 0.0
    %2695 = vmatpush1.msra.mxu0 0.0
    %2696 = vmatprep.subr.mxu0 0.0
    %2697 = vmatpush1.msra.mxu0 0.0
    %2698 = vmatprep.subr.mxu0 0.0
    %2699 = vmatpush1.msra.mxu0 0.0
    %2700 = vmatprep.subr.mxu0 0.0
    %2701 = vmatpush1.msra.mxu0 0.0
    %2702 = vmatprep.subr.mxu0 0.0
    %2703 = vmatpush1.msra.mxu0 0.0
    %2704 = vmatprep.subr.mxu0 0.0
    %2705 = vmatpush1.msra.mxu0 0.0
    %2706 = vmatprep.subr.mxu0 0.0
    %2707 = vmatpush1.msra.mxu0 0.0
    %2708 = vmatprep.subr.mxu0 0.0
    %2709 = vmatpush1.msra.mxu0 0.0
    %2710 = vmatprep.mubr.f32.mxu0 0.0
    %2711 = vmatmul.mubr.f32.gmra.mrb[0].mxu0 %v2644
    %v2712 = vpop.f32.mrb[0].mxu0
    %v2713 = vadd.f32 0.0, %v2712
    %v2714 = vpop.f32.mrb[0].mxu0
    %2715 = vdwg.mxu0
    %2718 = vrot.lane.b32.xlu0 %v2073, 120
    %v2719 = vpop.permute.xlu0 %2718
    %2720 = vrot.lane.b32.xlu0 %v2076, 120
    %v2721 = vpop.permute.xlu0 %2720
    %v2725 = vsel %vm1764, %v2634, 0
    %2727 = vmatprep.subr.mxu0 0.0
    %2728 = vmatpush1.msra.mxu0 %v2719
    %2729 = vmatprep.subr.mxu0 0.0
    %2730 = vmatpush1.msra.mxu0 %v2721
    %2731 = vmatprep.subr.mxu0 0.0
    %2732 = vmatpush1.msra.mxu0 0.0
    %2733 = vmatprep.subr.mxu0 0.0
    %2734 = vmatpush1.msra.mxu0 0.0
    %2735 = vmatprep.subr.mxu0 0.0
    %2736 = vmatpush1.msra.mxu0 0.0
    %2737 = vmatprep.subr.mxu0 0.0
    %2738 = vmatpush1.msra.mxu0 0.0
    %2739 = vmatprep.subr.mxu0 0.0
    %2740 = vmatpush1.msra.mxu0 0.0
    %2741 = vmatprep.subr.mxu0 0.0
    %2742 = vmatpush1.msra.mxu0 0.0
    %2743 = vmatprep.subr.mxu0 0.0
    %2744 = vmatpush1.msra.mxu0 0.0
    %2745 = vmatprep.subr.mxu0 0.0
    %2746 = vmatpush1.msra.mxu0 0.0
    %2747 = vmatprep.subr.mxu0 0.0
    %2748 = vmatpush1.msra.mxu0 0.0
    %2749 = vmatprep.subr.mxu0 0.0
    %2750 = vmatpush1.msra.mxu0 0.0
    %2751 = vmatprep.subr.mxu0 0.0
    %2752 = vmatpush1.msra.mxu0 0.0
    %2753 = vmatprep.subr.mxu0 0.0
    %2754 = vmatpush1.msra.mxu0 0.0
    %2755 = vmatprep.subr.mxu0 0.0
    %2756 = vmatpush1.msra.mxu0 0.0
    %2757 = vmatprep.subr.mxu0 0.0
    %2758 = vmatpush1.msra.mxu0 0.0
    %2759 = vmatprep.subr.mxu0 0.0
    %2760 = vmatpush1.msra.mxu0 0.0
    %2761 = vmatprep.subr.mxu0 0.0
    %2762 = vmatpush1.msra.mxu0 0.0
    %2763 = vmatprep.subr.mxu0 0.0
    %2764 = vmatpush1.msra.mxu0 0.0
    %2765 = vmatprep.subr.mxu0 0.0
    %2766 = vmatpush1.msra.mxu0 0.0
    %2767 = vmatprep.subr.mxu0 0.0
    %2768 = vmatpush1.msra.mxu0 0.0
    %2769 = vmatprep.subr.mxu0 0.0
    %2770 = vmatpush1.msra.mxu0 0.0
    %2771 = vmatprep.subr.mxu0 0.0
    %2772 = vmatpush1.msra.mxu0 0.0
    %2773 = vmatprep.subr.mxu0 0.0
    %2774 = vmatpush1.msra.mxu0 0.0
    %2775 = vmatprep.subr.mxu0 0.0
    %2776 = vmatpush1.msra.mxu0 0.0
    %2777 = vmatprep.subr.mxu0 0.0
    %2778 = vmatpush1.msra.mxu0 0.0
    %2779 = vmatprep.subr.mxu0 0.0
    %2780 = vmatpush1.msra.mxu0 0.0
    %2781 = vmatprep.subr.mxu0 0.0
    %2782 = vmatpush1.msra.mxu0 0.0
    %2783 = vmatprep.subr.mxu0 0.0
    %2784 = vmatpush1.msra.mxu0 0.0
    %2785 = vmatprep.subr.mxu0 0.0
    %2786 = vmatpush1.msra.mxu0 0.0
    %2787 = vmatprep.subr.mxu0 0.0
    %2788 = vmatpush1.msra.mxu0 0.0
    %2789 = vmatprep.subr.mxu0 0.0
    %2790 = vmatpush1.msra.mxu0 0.0
    %2791 = vmatprep.mubr.f32.mxu0 0.0
    %2792 = vmatmul.mubr.f32.gmra.mrb[0].mxu0 %v2725
    %v2793 = vpop.f32.mrb[0].mxu0
    %v2794 = vadd.f32 0.0, %v2793
    %v2795 = vpop.f32.mrb[0].mxu0
    %2796 = vdwg.mxu0
    %2797 = vrot.lane.b32.xlu0 %v1933, 112
    %v2798 = vpop.permute.xlu0 %2797
    %2799 = vrot.lane.b32.xlu0 %v1995, 112
    %v2800 = vpop.permute.xlu0 %2799
    %2801 = vrot.lane.b32.xlu0 %v1998, 112
    %v2802 = vpop.permute.xlu0 %2801
    %v2803 = vsel %vm418, %v2798, 0
    %v2805 = vsel %vm418, %v2800, 0
    %v2807 = vsel %vm418, %v2802, 0
    %2809 = vmatprep.subr.mxu0 0.0
    %2810 = vmatpush1.xpose.msra.mxu0 %v2805
    %2811 = vmatprep.subr.mxu0 0.0
    %2812 = vmatpush1.xpose.msra.mxu0 %v2807
    %2813 = vmatprep.subr.mxu0 0.0
    %2814 = vmatpush1.xpose.msra.mxu0 0.0
    %2815 = vmatprep.subr.mxu0 0.0
    %2816 = vmatpush1.xpose.msra.mxu0 0.0
    %2817 = vmatprep.subr.mxu0 0.0
    %2818 = vmatpush1.xpose.msra.mxu0 0.0
    %2819 = vmatprep.subr.mxu0 0.0
    %2820 = vmatpush1.xpose.msra.mxu0 0.0
    %2821 = vmatprep.subr.mxu0 0.0
    %2822 = vmatpush1.xpose.msra.mxu0 0.0
    %2823 = vmatprep.subr.mxu0 0.0
    %2824 = vmatpush1.xpose.msra.mxu0 0.0
    %2825 = vmatprep.subr.mxu0 0.0
    %2826 = vmatpush1.xpose.msra.mxu0 0.0
    %2827 = vmatprep.subr.mxu0 0.0
    %2828 = vmatpush1.xpose.msra.mxu0 0.0
    %2829 = vmatprep.subr.mxu0 0.0
    %2830 = vmatpush1.xpose.msra.mxu0 0.0
    %2831 = vmatprep.subr.mxu0 0.0
    %2832 = vmatpush1.xpose.msra.mxu0 0.0
    %2833 = vmatprep.subr.mxu0 0.0
    %2834 = vmatpush1.xpose.msra.mxu0 0.0
    %2835 = vmatprep.subr.mxu0 0.0
    %2836 = vmatpush1.xpose.msra.mxu0 0.0
    %2837 = vmatprep.subr.mxu0 0.0
    %2838 = vmatpush1.xpose.msra.mxu0 0.0
    %2839 = vmatprep.subr.mxu0 0.0
    %2840 = vmatpush1.xpose.msra.mxu0 0.0
    %2841 = vmatprep.subr.mxu0 0.0
    %2842 = vmatpush1.xpose.msra.mxu0 0.0
    %2843 = vmatprep.subr.mxu0 0.0
    %2844 = vmatpush1.xpose.msra.mxu0 0.0
    %2845 = vmatprep.subr.mxu0 0.0
    %2846 = vmatpush1.xpose.msra.mxu0 0.0
    %2847 = vmatprep.subr.mxu0 0.0
    %2848 = vmatpush1.xpose.msra.mxu0 0.0
    %2849 = vmatprep.subr.mxu0 0.0
    %2850 = vmatpush1.xpose.msra.mxu0 0.0
    %2851 = vmatprep.subr.mxu0 0.0
    %2852 = vmatpush1.xpose.msra.mxu0 0.0
    %2853 = vmatprep.subr.mxu0 0.0
    %2854 = vmatpush1.xpose.msra.mxu0 0.0
    %2855 = vmatprep.subr.mxu0 0.0
    %2856 = vmatpush1.xpose.msra.mxu0 0.0
    %2857 = vmatprep.subr.mxu0 0.0
    %2858 = vmatpush1.xpose.msra.mxu0 0.0
    %2859 = vmatprep.subr.mxu0 0.0
    %2860 = vmatpush1.xpose.msra.mxu0 0.0
    %2861 = vmatprep.subr.mxu0 0.0
    %2862 = vmatpush1.xpose.msra.mxu0 0.0
    %2863 = vmatprep.subr.mxu0 0.0
    %2864 = vmatpush1.xpose.msra.mxu0 0.0
    %2865 = vmatprep.subr.mxu0 0.0
    %2866 = vmatpush1.xpose.msra.mxu0 0.0
    %2867 = vmatprep.subr.mxu0 0.0
    %2868 = vmatpush1.xpose.msra.mxu0 0.0
    %2869 = vmatprep.subr.mxu0 0.0
    %2870 = vmatpush1.xpose.msra.mxu0 0.0
    %2871 = vmatprep.subr.mxu0 0.0
    %2872 = vmatpush1.xpose.msra.mxu0 0.0
    %2873 = vmatprep.mubr.f32.mxu0 0.0
    %2874 = vmatmul.mubr.f32.gmra.mrb[0].mxu0 %v2803
    %v2875 = vpop.f32.mrb[0].mxu0
    %v2876 = vadd.f32 0.0, %v2875
    %v2877 = vpop.f32.mrb[0].mxu0
    %2878 = vdwg.mxu0
    %2879 = vrot.lane.b32.xlu0 %v1936, 112
    %v2880 = vpop.permute.xlu0 %2879
    %2881 = vrot.lane.b32.xlu0 %v2003, 112
    %v2882 = vpop.permute.xlu0 %2881
    %2883 = vrot.lane.b32.xlu0 %v2006, 112
    %v2884 = vpop.permute.xlu0 %2883
    %v2885 = vsel %vm418, %v2880, 0
    %v2887 = vsel %vm418, %v2882, 0
    %v2889 = vsel %vm418, %v2884, 0
    %2891 = vmatprep.subr.mxu0 0.0
    %2892 = vmatpush1.xpose.msra.mxu0 %v2887
    %2893 = vmatprep.subr.mxu0 0.0
    %2894 = vmatpush1.xpose.msra.mxu0 %v2889
    %2895 = vmatprep.subr.mxu0 0.0
    %2896 = vmatpush1.xpose.msra.mxu0 0.0
    %2897 = vmatprep.subr.mxu0 0.0
    %2898 = vmatpush1.xpose.msra.mxu0 0.0
    %2899 = vmatprep.subr.mxu0 0.0
    %2900 = vmatpush1.xpose.msra.mxu0 0.0
    %2901 = vmatprep.subr.mxu0 0.0
    %2902 = vmatpush1.xpose.msra.mxu0 0.0
    %2903 = vmatprep.subr.mxu0 0.0
    %2904 = vmatpush1.xpose.msra.mxu0 0.0
    %2905 = vmatprep.subr.mxu0 0.0
    %2906 = vmatpush1.xpose.msra.mxu0 0.0
    %2907 = vmatprep.subr.mxu0 0.0
    %2908 = vmatpush1.xpose.msra.mxu0 0.0
    %2909 = vmatprep.subr.mxu0 0.0
    %2910 = vmatpush1.xpose.msra.mxu0 0.0
    %2911 = vmatprep.subr.mxu0 0.0
    %2912 = vmatpush1.xpose.msra.mxu0 0.0
    %2913 = vmatprep.subr.mxu0 0.0
    %2914 = vmatpush1.xpose.msra.mxu0 0.0
    %2915 = vmatprep.subr.mxu0 0.0
    %2916 = vmatpush1.xpose.msra.mxu0 0.0
    %2917 = vmatprep.subr.mxu0 0.0
    %2918 = vmatpush1.xpose.msra.mxu0 0.0
    %2919 = vmatprep.subr.mxu0 0.0
    %2920 = vmatpush1.xpose.msra.mxu0 0.0
    %2921 = vmatprep.subr.mxu0 0.0
    %2922 = vmatpush1.xpose.msra.mxu0 0.0
    %2923 = vmatprep.subr.mxu0 0.0
    %2924 = vmatpush1.xpose.msra.mxu0 0.0
    %2925 = vmatprep.subr.mxu0 0.0
    %2926 = vmatpush1.xpose.msra.mxu0 0.0
    %2927 = vmatprep.subr.mxu0 0.0
    %2928 = vmatpush1.xpose.msra.mxu0 0.0
    %2929 = vmatprep.subr.mxu0 0.0
    %2930 = vmatpush1.xpose.msra.mxu0 0.0
    %2931 = vmatprep.subr.mxu0 0.0
    %2932 = vmatpush1.xpose.msra.mxu0 0.0
    %2933 = vmatprep.subr.mxu0 0.0
    %2934 = vmatpush1.xpose.msra.mxu0 0.0
    %2935 = vmatprep.subr.mxu0 0.0
    %2936 = vmatpush1.xpose.msra.mxu0 0.0
    %2937 = vmatprep.subr.mxu0 0.0
    %2938 = vmatpush1.xpose.msra.mxu0 0.0
    %2939 = vmatprep.subr.mxu0 0.0
    %2940 = vmatpush1.xpose.msra.mxu0 0.0
    %2941 = vmatprep.subr.mxu0 0.0
    %2942 = vmatpush1.xpose.msra.mxu0 0.0
    %2943 = vmatprep.subr.mxu0 0.0
    %2944 = vmatpush1.xpose.msra.mxu0 0.0
    %2945 = vmatprep.subr.mxu0 0.0
    %2946 = vmatpush1.xpose.msra.mxu0 0.0
    %2947 = vmatprep.subr.mxu0 0.0
    %2948 = vmatpush1.xpose.msra.mxu0 0.0
    %2949 = vmatprep.subr.mxu0 0.0
    %2950 = vmatpush1.xpose.msra.mxu0 0.0
    %2951 = vmatprep.subr.mxu0 0.0
    %2952 = vmatpush1.xpose.msra.mxu0 0.0
    %2953 = vmatprep.subr.mxu0 0.0
    %2954 = vmatpush1.xpose.msra.mxu0 0.0
    %2955 = vmatprep.mubr.f32.mxu0 0.0
    %2956 = vmatmul.mubr.f32.gmra.mrb[0].mxu0 %v2885
    %v2957 = vpop.f32.mrb[0].mxu0
    %v2958 = vadd.f32 0.0, %v2957
    %v2959 = vpop.f32.mrb[0].mxu0
    %2960 = vdwg.mxu0
    %v2961 = vmul.f32 %v2876, 0.35355338
    %v2962 = vmul.f32 %v2958, 0.35355338
    %v2963 = vadd.f32 %v2961, %v2268
    %v2964 = vadd.f32 %v2962, %v2272
    %v2965 = vsel %vm1764, %v2963, -inf
    %2966 = vmax.xlane.f32.xlu0 %v2965
    %v2967 = vpop.xlane.xlu0 %2966
    %v2968 = vsel %vm1764, %v2964, -inf
    %2969 = vmax.xlane.f32.xlu0 %v2968
    %v2970 = vpop.xlane.xlu0 %2969
    %v2971 = vsub.f32 %v2963, %v2967
    %v2972 = vsub.f32 %v2964, %v2970
    %v2973 = vmul.f32 %v2971, 1.442695
    %v2974 = vpow.pop %v2973
    %v2975 = vmul.f32 %v2972, 1.442695
    %v2976 = vpow.pop %v2975
    %v2977 = vsel %vm1764, %v2974, 0.0
    %2978 = vadd.xlane.f32.xlu0 %v2977
    %v2979 = vpop.xlane.xlu0 %2978
    %v2980 = vsel %vm1764, %v2976, 0.0
    %2981 = vadd.xlane.f32.xlu0 %v2980
    %v2982 = vpop.xlane.xlu0 %2981
    %v2983 = vrcp.pop %v2979
    %v2984 = vrcp.pop %v2982
    %v2985 = vmul.f32 %v2974, %v2983
    %v2986 = vmul.f32 %v2976, %v2984
    %2987 = vrot.lane.b32.xlu0 %v2065, 112
    %v2988 = vpop.permute.xlu0 %2987
    %2989 = vrot.lane.b32.xlu0 %v2068, 112
    %v2990 = vpop.permute.xlu0 %2989
    %v2994 = vsel %vm1764, %v2985, 0
    %2996 = vmatprep.subr.mxu0 0.0
    %2997 = vmatpush1.msra.mxu0 %v2988
    %2998 = vmatprep.subr.mxu0 0.0
    %2999 = vmatpush1.msra.mxu0 %v2990
    %3000 = vmatprep.subr.mxu0 0.0
    %3001 = vmatpush1.msra.mxu0 0.0
    %3002 = vmatprep.subr.mxu0 0.0
    %3003 = vmatpush1.msra.mxu0 0.0
    %3004 = vmatprep.subr.mxu0 0.0
    %3005 = vmatpush1.msra.mxu0 0.0
    %3006 = vmatprep.subr.mxu0 0.0
    %3007 = vmatpush1.msra.mxu0 0.0
    %3008 = vmatprep.subr.mxu0 0.0
    %3009 = vmatpush1.msra.mxu0 0.0
    %3010 = vmatprep.subr.mxu0 0.0
    %3011 = vmatpush1.msra.mxu0 0.0
    %3012 = vmatprep.subr.mxu0 0.0
    %3013 = vmatpush1.msra.mxu0 0.0
    %3014 = vmatprep.subr.mxu0 0.0
    %3015 = vmatpush1.msra.mxu0 0.0
    %3016 = vmatprep.subr.mxu0 0.0
    %3017 = vmatpush1.msra.mxu0 0.0
    %3018 = vmatprep.subr.mxu0 0.0
    %3019 = vmatpush1.msra.mxu0 0.0
    %3020 = vmatprep.subr.mxu0 0.0
    %3021 = vmatpush1.msra.mxu0 0.0
    %3022 = vmatprep.subr.mxu0 0.0
    %3023 = vmatpush1.msra.mxu0 0.0
    %3024 = vmatprep.subr.mxu0 0.0
    %3025 = vmatpush1.msra.mxu0 0.0
    %3026 = vmatprep.subr.mxu0 0.0
    %3027 = vmatpush1.msra.mxu0 0.0
    %3028 = vmatprep.subr.mxu0 0.0
    %3029 = vmatpush1.msra.mxu0 0.0
    %3030 = vmatprep.subr.mxu0 0.0
    %3031 = vmatpush1.msra.mxu0 0.0
    %3032 = vmatprep.subr.mxu0 0.0
    %3033 = vmatpush1.msra.mxu0 0.0
    %3034 = vmatprep.subr.mxu0 0.0
    %3035 = vmatpush1.msra.mxu0 0.0
    %3036 = vmatprep.subr.mxu0 0.0
    %3037 = vmatpush1.msra.mxu0 0.0
    %3038 = vmatprep.subr.mxu0 0.0
    %3039 = vmatpush1.msra.mxu0 0.0
    %3040 = vmatprep.subr.mxu0 0.0
    %3041 = vmatpush1.msra.mxu0 0.0
    %3042 = vmatprep.subr.mxu0 0.0
    %3043 = vmatpush1.msra.mxu0 0.0
    %3044 = vmatprep.subr.mxu0 0.0
    %3045 = vmatpush1.msra.mxu0 0.0
    %3046 = vmatprep.subr.mxu0 0.0
    %3047 = vmatpush1.msra.mxu0 0.0
    %3048 = vmatprep.subr.mxu0 0.0
    %3049 = vmatpush1.msra.mxu0 0.0
    %3050 = vmatprep.subr.mxu0 0.0
    %3051 = vmatpush1.msra.mxu0 0.0
    %3052 = vmatprep.subr.mxu0 0.0
    %3053 = vmatpush1.msra.mxu0 0.0
    %3054 = vmatprep.subr.mxu0 0.0
    %3055 = vmatpush1.msra.mxu0 0.0
    %3056 = vmatprep.subr.mxu0 0.0
    %3057 = vmatpush1.msra.mxu0 0.0
    %3058 = vmatprep.subr.mxu0 0.0
    %3059 = vmatpush1.msra.mxu0 0.0
    %3060 = vmatprep.mubr.f32.mxu0 0.0
    %3061 = vmatmul.mubr.f32.gmra.mrb[0].mxu0 %v2994
    %v3062 = vpop.f32.mrb[0].mxu0
    %v3063 = vadd.f32 0.0, %v3062
    %v3064 = vpop.f32.mrb[0].mxu0
    %3065 = vdwg.mxu0
    %3066 = vrot.lane.b32.xlu0 %v2073, 112
    %v3067 = vpop.permute.xlu0 %3066
    %3068 = vrot.lane.b32.xlu0 %v2076, 112
    %v3069 = vpop.permute.xlu0 %3068
    %v3073 = vsel %vm1764, %v2986, 0
    %3075 = vmatprep.subr.mxu0 0.0
    %3076 = vmatpush1.msra.mxu0 %v3067
    %3077 = vmatprep.subr.mxu0 0.0
    %3078 = vmatpush1.msra.mxu0 %v3069
    %3079 = vmatprep.subr.mxu0 0.0
    %3080 = vmatpush1.msra.mxu0 0.0
    %3081 = vmatprep.subr.mxu0 0.0
    %3082 = vmatpush1.msra.mxu0 0.0
    %3083 = vmatprep.subr.mxu0 0.0
    %3084 = vmatpush1.msra.mxu0 0.0
    %3085 = vmatprep.subr.mxu0 0.0
    %3086 = vmatpush1.msra.mxu0 0.0
    %3087 = vmatprep.subr.mxu0 0.0
    %3088 = vmatpush1.msra.mxu0 0.0
    %3089 = vmatprep.subr.mxu0 0.0
    %3090 = vmatpush1.msra.mxu0 0.0
    %3091 = vmatprep.subr.mxu0 0.0
    %3092 = vmatpush1.msra.mxu0 0.0
    %3093 = vmatprep.subr.mxu0 0.0
    %3094 = vmatpush1.msra.mxu0 0.0
    %3095 = vmatprep.subr.mxu0 0.0
    %3096 = vmatpush1.msra.mxu0 0.0
    %3097 = vmatprep.subr.mxu0 0.0
    %3098 = vmatpush1.msra.mxu0 0.0
    %3099 = vmatprep.subr.mxu0 0.0
    %3100 = vmatpush1.msra.mxu0 0.0
    %3101 = vmatprep.subr.mxu0 0.0
    %3102 = vmatpush1.msra.mxu0 0.0
    %3103 = vmatprep.subr.mxu0 0.0
    %3104 = vmatpush1.msra.mxu0 0.0
    %3105 = vmatprep.subr.mxu0 0.0
    %3106 = vmatpush1.msra.mxu0 0.0
    %3107 = vmatprep.subr.mxu0 0.0
    %3108 = vmatpush1.msra.mxu0 0.0
    %3109 = vmatprep.subr.mxu0 0.0
    %3110 = vmatpush1.msra.mxu0 0.0
    %3111 = vmatprep.subr.mxu0 0.0
    %3112 = vmatpush1.msra.mxu0 0.0
    %3113 = vmatprep.subr.mxu0 0.0
    %3114 = vmatpush1.msra.mxu0 0.0
    %3115 = vmatprep.subr.mxu0 0.0
    %3116 = vmatpush1.msra.mxu0 0.0
    %3117 = vmatprep.subr.mxu0 0.0
    %3118 = vmatpush1.msra.mxu0 0.0
    %3119 = vmatprep.subr.mxu0 0.0
    %3120 = vmatpush1.msra.mxu0 0.0
    %3121 = vmatprep.subr.mxu0 0.0
    %3122 = vmatpush1.msra.mxu0 0.0
    %3123 = vmatprep.subr.mxu0 0.0
    %3124 = vmatpush1.msra.mxu0 0.0
    %3125 = vmatprep.subr.mxu0 0.0
    %3126 = vmatpush1.msra.mxu0 0.0
    %3127 = vmatprep.subr.mxu0 0.0
    %3128 = vmatpush1.msra.mxu0 0.0
    %3129 = vmatprep.subr.mxu0 0.0
    %3130 = vmatpush1.msra.mxu0 0.0
    %3131 = vmatprep.subr.mxu0 0.0
    %3132 = vmatpush1.msra.mxu0 0.0
    %3133 = vmatprep.subr.mxu0 0.0
    %3134 = vmatpush1.msra.mxu0 0.0
    %3135 = vmatprep.subr.mxu0 0.0
    %3136 = vmatpush1.msra.mxu0 0.0
    %3137 = vmatprep.subr.mxu0 0.0
    %3138 = vmatpush1.msra.mxu0 0.0
    %3139 = vmatprep.mubr.f32.mxu0 0.0
    %3140 = vmatmul.mubr.f32.gmra.mrb[0].mxu0 %v3073
    %v3141 = vpop.f32.mrb[0].mxu0
    %v3142 = vadd.f32 0.0, %v3141
    %v3143 = vpop.f32.mrb[0].mxu0
    %3144 = vdwg.mxu0
    %3145 = vrot.lane.b32.xlu0 %v1933, 104
    %v3146 = vpop.permute.xlu0 %3145
    %3147 = vrot.lane.b32.xlu0 %v1995, 104
    %v3148 = vpop.permute.xlu0 %3147
    %3149 = vrot.lane.b32.xlu0 %v1998, 104
    %v3150 = vpop.permute.xlu0 %3149
    %v3151 = vsel %vm418, %v3146, 0
    %v3153 = vsel %vm418, %v3148, 0
    %v3155 = vsel %vm418, %v3150, 0
    %3157 = vmatprep.subr.mxu0 0.0
    %3158 = vmatpush1.xpose.msra.mxu0 %v3153
    %3159 = vmatprep.subr.mxu0 0.0
    %3160 = vmatpush1.xpose.msra.mxu0 %v3155
    %3161 = vmatprep.subr.mxu0 0.0
    %3162 = vmatpush1.xpose.msra.mxu0 0.0
    %3163 = vmatprep.subr.mxu0 0.0
    %3164 = vmatpush1.xpose.msra.mxu0 0.0
    %3165 = vmatprep.subr.mxu0 0.0
    %3166 = vmatpush1.xpose.msra.mxu0 0.0
    %3167 = vmatprep.subr.mxu0 0.0
    %3168 = vmatpush1.xpose.msra.mxu0 0.0
    %3169 = vmatprep.subr.mxu0 0.0
    %3170 = vmatpush1.xpose.msra.mxu0 0.0
    %3171 = vmatprep.subr.mxu0 0.0
    %3172 = vmatpush1.xpose.msra.mxu0 0.0
    %3173 = vmatprep.subr.mxu0 0.0
    %3174 = vmatpush1.xpose.msra.mxu0 0.0
    %3175 = vmatprep.subr.mxu0 0.0
    %3176 = vmatpush1.xpose.msra.mxu0 0.0
    %3177 = vmatprep.subr.mxu0 0.0
    %3178 = vmatpush1.xpose.msra.mxu0 0.0
    %3179 = vmatprep.subr.mxu0 0.0
    %3180 = vmatpush1.xpose.msra.mxu0 0.0
    %3181 = vmatprep.subr.mxu0 0.0
    %3182 = vmatpush1.xpose.msra.mxu0 0.0
    %3183 = vmatprep.subr.mxu0 0.0
    %3184 = vmatpush1.xpose.msra.mxu0 0.0
    %3185 = vmatprep.subr.mxu0 0.0
    %3186 = vmatpush1.xpose.msra.mxu0 0.0
    %3187 = vmatprep.subr.mxu0 0.0
    %3188 = vmatpush1.xpose.msra.mxu0 0.0
    %3189 = vmatprep.subr.mxu0 0.0
    %3190 = vmatpush1.xpose.msra.mxu0 0.0
    %3191 = vmatprep.subr.mxu0 0.0
    %3192 = vmatpush1.xpose.msra.mxu0 0.0
    %3193 = vmatprep.subr.mxu0 0.0
    %3194 = vmatpush1.xpose.msra.mxu0 0.0
    %3195 = vmatprep.subr.mxu0 0.0
    %3196 = vmatpush1.xpose.msra.mxu0 0.0
    %3197 = vmatprep.subr.mxu0 0.0
    %3198 = vmatpush1.xpose.msra.mxu0 0.0
    %3199 = vmatprep.subr.mxu0 0.0
    %3200 = vmatpush1.xpose.msra.mxu0 0.0
    %3201 = vmatprep.subr.mxu0 0.0
    %3202 = vmatpush1.xpose.msra.mxu0 0.0
    %3203 = vmatprep.subr.mxu0 0.0
    %3204 = vmatpush1.xpose.msra.mxu0 0.0
    %3205 = vmatprep.subr.mxu0 0.0
    %3206 = vmatpush1.xpose.msra.mxu0 0.0
    %3207 = vmatprep.subr.mxu0 0.0
    %3208 = vmatpush1.xpose.msra.mxu0 0.0
    %3209 = vmatprep.subr.mxu0 0.0
    %3210 = vmatpush1.xpose.msra.mxu0 0.0
    %3211 = vmatprep.subr.mxu0 0.0
    %3212 = vmatpush1.xpose.msra.mxu0 0.0
    %3213 = vmatprep.subr.mxu0 0.0
    %3214 = vmatpush1.xpose.msra.mxu0 0.0
    %3215 = vmatprep.subr.mxu0 0.0
    %3216 = vmatpush1.xpose.msra.mxu0 0.0
    %3217 = vmatprep.subr.mxu0 0.0
    %3218 = vmatpush1.xpose.msra.mxu0 0.0
    %3219 = vmatprep.subr.mxu0 0.0
    %3220 = vmatpush1.xpose.msra.mxu0 0.0
    %3221 = vmatprep.mubr.f32.mxu0 0.0
    %3222 = vmatmul.mubr.f32.gmra.mrb[0].mxu0 %v3151
    %v3223 = vpop.f32.mrb[0].mxu0
    %v3224 = vadd.f32 0.0, %v3223
    %v3225 = vpop.f32.mrb[0].mxu0
    %3226 = vdwg.mxu0
    %3227 = vrot.lane.b32.xlu0 %v1936, 104
    %v3228 = vpop.permute.xlu0 %3227
    %3229 = vrot.lane.b32.xlu0 %v2003, 104
    %v3230 = vpop.permute.xlu0 %3229
    %3231 = vrot.lane.b32.xlu0 %v2006, 104
    %v3232 = vpop.permute.xlu0 %3231
    %v3233 = vsel %vm418, %v3228, 0
    %v3235 = vsel %vm418, %v3230, 0
    %v3237 = vsel %vm418, %v3232, 0
    %3239 = vmatprep.subr.mxu0 0.0
    %3240 = vmatpush1.xpose.msra.mxu0 %v3235
    %3241 = vmatprep.subr.mxu0 0.0
    %3242 = vmatpush1.xpose.msra.mxu0 %v3237
    %3243 = vmatprep.subr.mxu0 0.0
    %3244 = vmatpush1.xpose.msra.mxu0 0.0
    %3245 = vmatprep.subr.mxu0 0.0
    %3246 = vmatpush1.xpose.msra.mxu0 0.0
    %3247 = vmatprep.subr.mxu0 0.0
    %3248 = vmatpush1.xpose.msra.mxu0 0.0
    %3249 = vmatprep.subr.mxu0 0.0
    %3250 = vmatpush1.xpose.msra.mxu0 0.0
    %3251 = vmatprep.subr.mxu0 0.0
    %3252 = vmatpush1.xpose.msra.mxu0 0.0
    %3253 = vmatprep.subr.mxu0 0.0
    %3254 = vmatpush1.xpose.msra.mxu0 0.0
    %3255 = vmatprep.subr.mxu0 0.0
    %3256 = vmatpush1.xpose.msra.mxu0 0.0
    %3257 = vmatprep.subr.mxu0 0.0
    %3258 = vmatpush1.xpose.msra.mxu0 0.0
    %3259 = vmatprep.subr.mxu0 0.0
    %3260 = vmatpush1.xpose.msra.mxu0 0.0
    %3261 = vmatprep.subr.mxu0 0.0
    %3262 = vmatpush1.xpose.msra.mxu0 0.0
    %3263 = vmatprep.subr.mxu0 0.0
    %3264 = vmatpush1.xpose.msra.mxu0 0.0
    %3265 = vmatprep.subr.mxu0 0.0
    %3266 = vmatpush1.xpose.msra.mxu0 0.0
    %3267 = vmatprep.subr.mxu0 0.0
    %3268 = vmatpush1.xpose.msra.mxu0 0.0
    %3269 = vmatprep.subr.mxu0 0.0
    %3270 = vmatpush1.xpose.msra.mxu0 0.0
    %3271 = vmatprep.subr.mxu0 0.0
    %3272 = vmatpush1.xpose.msra.mxu0 0.0
    %3273 = vmatprep.subr.mxu0 0.0
    %3274 = vmatpush1.xpose.msra.mxu0 0.0
    %3275 = vmatprep.subr.mxu0 0.0
    %3276 = vmatpush1.xpose.msra.mxu0 0.0
    %3277 = vmatprep.subr.mxu0 0.0
    %3278 = vmatpush1.xpose.msra.mxu0 0.0
    %3279 = vmatprep.subr.mxu0 0.0
    %3280 = vmatpush1.xpose.msra.mxu0 0.0
    %3281 = vmatprep.subr.mxu0 0.0
    %3282 = vmatpush1.xpose.msra.mxu0 0.0
    %3283 = vmatprep.subr.mxu0 0.0
    %3284 = vmatpush1.xpose.msra.mxu0 0.0
    %3285 = vmatprep.subr.mxu0 0.0
    %3286 = vmatpush1.xpose.msra.mxu0 0.0
    %3287 = vmatprep.subr.mxu0 0.0
    %3288 = vmatpush1.xpose.msra.mxu0 0.0
    %3289 = vmatprep.subr.mxu0 0.0
    %3290 = vmatpush1.xpose.msra.mxu0 0.0
    %3291 = vmatprep.subr.mxu0 0.0
    %3292 = vmatpush1.xpose.msra.mxu0 0.0
    %3293 = vmatprep.subr.mxu0 0.0
    %3294 = vmatpush1.xpose.msra.mxu0 0.0
    %3295 = vmatprep.subr.mxu0 0.0
    %3296 = vmatpush1.xpose.msra.mxu0 0.0
    %3297 = vmatprep.subr.mxu0 0.0
    %3298 = vmatpush1.xpose.msra.mxu0 0.0
    %3299 = vmatprep.subr.mxu0 0.0
    %3300 = vmatpush1.xpose.msra.mxu0 0.0
    %3301 = vmatprep.subr.mxu0 0.0
    %3302 = vmatpush1.xpose.msra.mxu0 0.0
    %3303 = vmatprep.mubr.f32.mxu0 0.0
    %3304 = vmatmul.mubr.f32.gmra.mrb[0].mxu0 %v3233
    %v3305 = vpop.f32.mrb[0].mxu0
    %v3306 = vadd.f32 0.0, %v3305
    %v3307 = vpop.f32.mrb[0].mxu0
    %3308 = vdwg.mxu0
    %v3309 = vmul.f32 %v3224, 0.35355338
    %v3310 = vmul.f32 %v3306, 0.35355338
    %v3311 = vadd.f32 %v3309, %v2268
    %v3312 = vadd.f32 %v3310, %v2272
    %v3313 = vsel %vm1764, %v3311, -inf
    %3314 = vmax.xlane.f32.xlu0 %v3313
    %v3315 = vpop.xlane.xlu0 %3314
    %v3316 = vsel %vm1764, %v3312, -inf
    %3317 = vmax.xlane.f32.xlu0 %v3316
    %v3318 = vpop.xlane.xlu0 %3317
    %v3319 = vsub.f32 %v3311, %v3315
    %v3320 = vsub.f32 %v3312, %v3318
    %v3321 = vmul.f32 %v3319, 1.442695
    %v3322 = vpow.pop %v3321
    %v3323 = vmul.f32 %v3320, 1.442695
    %v3324 = vpow.pop %v3323
    %v3325 = vsel %vm1764, %v3322, 0.0
    %3326 = vadd.xlane.f32.xlu0 %v3325
    %v3327 = vpop.xlane.xlu0 %3326
    %v3328 = vsel %vm1764, %v3324, 0.0
    %3329 = vadd.xlane.f32.xlu0 %v3328
    %v3330 = vpop.xlane.xlu0 %3329
    %v3331 = vrcp.pop %v3327
    %v3332 = vrcp.pop %v3330
    %v3333 = vmul.f32 %v3322, %v3331
    %v3334 = vmul.f32 %v3324, %v3332
    %3335 = vrot.lane.b32.xlu0 %v2065, 104
    %v3336 = vpop.permute.xlu0 %3335
    %3337 = vrot.lane.b32.xlu0 %v2068, 104
    %v3338 = vpop.permute.xlu0 %3337
    %v3342 = vsel %vm1764, %v3333, 0
    %3344 = vmatprep.subr.mxu0 0.0
    %3345 = vmatpush1.msra.mxu0 %v3336
    %3346 = vmatprep.subr.mxu0 0.0
    %3347 = vmatpush1.msra.mxu0 %v3338
    %3348 = vmatprep.subr.mxu0 0.0
    %3349 = vmatpush1.msra.mxu0 0.0
    %3350 = vmatprep.subr.mxu0 0.0
    %3351 = vmatpush1.msra.mxu0 0.0
    %3352 = vmatprep.subr.mxu0 0.0
    %3353 = vmatpush1.msra.mxu0 0.0
    %3354 = vmatprep.subr.mxu0 0.0
    %3355 = vmatpush1.msra.mxu0 0.0
    %3356 = vmatprep.subr.mxu0 0.0
    %3357 = vmatpush1.msra.mxu0 0.0
    %3358 = vmatprep.subr.mxu0 0.0
    %3359 = vmatpush1.msra.mxu0 0.0
    %3360 = vmatprep.subr.mxu0 0.0
    %3361 = vmatpush1.msra.mxu0 0.0
    %3362 = vmatprep.subr.mxu0 0.0
    %3363 = vmatpush1.msra.mxu0 0.0
    %3364 = vmatprep.subr.mxu0 0.0
    %3365 = vmatpush1.msra.mxu0 0.0
    %3366 = vmatprep.subr.mxu0 0.0
    %3367 = vmatpush1.msra.mxu0 0.0
    %3368 = vmatprep.subr.mxu0 0.0
    %3369 = vmatpush1.msra.mxu0 0.0
    %3370 = vmatprep.subr.mxu0 0.0
    %3371 = vmatpush1.msra.mxu0 0.0
    %3372 = vmatprep.subr.mxu0 0.0
    %3373 = vmatpush1.msra.mxu0 0.0
    %3374 = vmatprep.subr.mxu0 0.0
    %3375 = vmatpush1.msra.mxu0 0.0
    %3376 = vmatprep.subr.mxu0 0.0
    %3377 = vmatpush1.msra.mxu0 0.0
    %3378 = vmatprep.subr.mxu0 0.0
    %3379 = vmatpush1.msra.mxu0 0.0
    %3380 = vmatprep.subr.mxu0 0.0
    %3381 = vmatpush1.msra.mxu0 0.0
    %3382 = vmatprep.subr.mxu0 0.0
    %3383 = vmatpush1.msra.mxu0 0.0
    %3384 = vmatprep.subr.mxu0 0.0
    %3385 = vmatpush1.msra.mxu0 0.0
    %3386 = vmatprep.subr.mxu0 0.0
    %3387 = vmatpush1.msra.mxu0 0.0
    %3388 = vmatprep.subr.mxu0 0.0
    %3389 = vmatpush1.msra.mxu0 0.0
    %3390 = vmatprep.subr.mxu0 0.0
    %3391 = vmatpush1.msra.mxu0 0.0
    %3392 = vmatprep.subr.mxu0 0.0
    %3393 = vmatpush1.msra.mxu0 0.0
    %3394 = vmatprep.subr.mxu0 0.0
    %3395 = vmatpush1.msra.mxu0 0.0
    %3396 = vmatprep.subr.mxu0 0.0
    %3397 = vmatpush1.msra.mxu0 0.0
    %3398 = vmatprep.subr.mxu0 0.0
    %3399 = vmatpush1.msra.mxu0 0.0
    %3400 = vmatprep.subr.mxu0 0.0
    %3401 = vmatpush1.msra.mxu0 0.0
    %3402 = vmatprep.subr.mxu0 0.0
    %3403 = vmatpush1.msra.mxu0 0.0
    %3404 = vmatprep.subr.mxu0 0.0
    %3405 = vmatpush1.msra.mxu0 0.0
    %3406 = vmatprep.subr.mxu0 0.0
    %3407 = vmatpush1.msra.mxu0 0.0
    %3408 = vmatprep.mubr.f32.mxu0 0.0
    %3409 = vmatmul.mubr.f32.gmra.mrb[0].mxu0 %v3342
    %v3410 = vpop.f32.mrb[0].mxu0
    %v3411 = vadd.f32 0.0, %v3410
    %v3412 = vpop.f32.mrb[0].mxu0
    %3413 = vdwg.mxu0
    %3414 = vrot.lane.b32.xlu0 %v2073, 104
    %v3415 = vpop.permute.xlu0 %3414
    %3416 = vrot.lane.b32.xlu0 %v2076, 104
    %v3417 = vpop.permute.xlu0 %3416
    %v3421 = vsel %vm1764, %v3334, 0
    %3423 = vmatprep.subr.mxu0 0.0
    %3424 = vmatpush1.msra.mxu0 %v3415
    %3425 = vmatprep.subr.mxu0 0.0
    %3426 = vmatpush1.msra.mxu0 %v3417
    %3427 = vmatprep.subr.mxu0 0.0
    %3428 = vmatpush1.msra.mxu0 0.0
    %3429 = vmatprep.subr.mxu0 0.0
    %3430 = vmatpush1.msra.mxu0 0.0
    %3431 = vmatprep.subr.mxu0 0.0
    %3432 = vmatpush1.msra.mxu0 0.0
    %3433 = vmatprep.subr.mxu0 0.0
    %3434 = vmatpush1.msra.mxu0 0.0
    %3435 = vmatprep.subr.mxu0 0.0
    %3436 = vmatpush1.msra.mxu0 0.0
    %3437 = vmatprep.subr.mxu0 0.0
    %3438 = vmatpush1.msra.mxu0 0.0
    %3439 = vmatprep.subr.mxu0 0.0
    %3440 = vmatpush1.msra.mxu0 0.0
    %3441 = vmatprep.subr.mxu0 0.0
    %3442 = vmatpush1.msra.mxu0 0.0
    %3443 = vmatprep.subr.mxu0 0.0
    %3444 = vmatpush1.msra.mxu0 0.0
    %3445 = vmatprep.subr.mxu0 0.0
    %3446 = vmatpush1.msra.mxu0 0.0
    %3447 = vmatprep.subr.mxu0 0.0
    %3448 = vmatpush1.msra.mxu0 0.0
    %3449 = vmatprep.subr.mxu0 0.0
    %3450 = vmatpush1.msra.mxu0 0.0
    %3451 = vmatprep.subr.mxu0 0.0
    %3452 = vmatpush1.msra.mxu0 0.0
    %3453 = vmatprep.subr.mxu0 0.0
    %3454 = vmatpush1.msra.mxu0 0.0
    %3455 = vmatprep.subr.mxu0 0.0
    %3456 = vmatpush1.msra.mxu0 0.0
    %3457 = vmatprep.subr.mxu0 0.0
    %3458 = vmatpush1.msra.mxu0 0.0
    %3459 = vmatprep.subr.mxu0 0.0
    %3460 = vmatpush1.msra.mxu0 0.0
    %3461 = vmatprep.subr.mxu0 0.0
    %3462 = vmatpush1.msra.mxu0 0.0
    %3463 = vmatprep.subr.mxu0 0.0
    %3464 = vmatpush1.msra.mxu0 0.0
    %3465 = vmatprep.subr.mxu0 0.0
    %3466 = vmatpush1.msra.mxu0 0.0
    %3467 = vmatprep.subr.mxu0 0.0
    %3468 = vmatpush1.msra.mxu0 0.0
    %3469 = vmatprep.subr.mxu0 0.0
    %3470 = vmatpush1.msra.mxu0 0.0
    %3471 = vmatprep.subr.mxu0 0.0
    %3472 = vmatpush1.msra.mxu0 0.0
    %3473 = vmatprep.subr.mxu0 0.0
    %3474 = vmatpush1.msra.mxu0 0.0
    %3475 = vmatprep.subr.mxu0 0.0
    %3476 = vmatpush1.msra.mxu0 0.0
    %3477 = vmatprep.subr.mxu0 0.0
    %3478 = vmatpush1.msra.mxu0 0.0
    %3479 = vmatprep.subr.mxu0 0.0
    %3480 = vmatpush1.msra.mxu0 0.0
    %3481 = vmatprep.subr.mxu0 0.0
    %3482 = vmatpush1.msra.mxu0 0.0
    %3483 = vmatprep.subr.mxu0 0.0
    %3484 = vmatpush1.msra.mxu0 0.0
    %3485 = vmatprep.subr.mxu0 0.0
    %3486 = vmatpush1.msra.mxu0 0.0
    %3487 = vmatprep.mubr.f32.mxu0 0.0
    %3488 = vmatmul.mubr.f32.gmra.mrb[0].mxu0 %v3421
    %v3489 = vpop.f32.mrb[0].mxu0
    %v3490 = vadd.f32 0.0, %v3489
    %v3491 = vpop.f32.mrb[0].mxu0
    %3492 = vdwg.mxu0
    %3495 = vrot.lane.b32.xlu0 %v2713, 8
    %v3496 = vpop.permute.xlu0 %3495
    %3497 = vrot.lane.b32.xlu0 %v2794, 8
    %v3498 = vpop.permute.xlu0 %3497
    %3503 = vrot.lane.b32.xlu0 %v3063, 16
    %v3504 = vpop.permute.xlu0 %3503
    %3505 = vrot.lane.b32.xlu0 %v3142, 16
    %v3506 = vpop.permute.xlu0 %3505
    %3511 = vrot.lane.b32.xlu0 %v3411, 24
    %v3512 = vpop.permute.xlu0 %3511
    %3513 = vrot.lane.b32.xlu0 %v3490, 24
    %v3514 = vpop.permute.xlu0 %3513
    %v3517 = vsel %vm418, %v2369, %v3496
    %v3518 = vsel %vm418, %v2442, %v3498
    %v3519 = vsel %vm1764, %v3517, %v3504
    %v3520 = vsel %vm1764, %v3518, %v3506
    %v3521 = vsel %vm1767, %v3519, %v3512
    %v3522 = vsel %vm1767, %v3520, %v3514
    %v3523 = vld [vmem:[%s37] sm:$0xff]
    %v3524 = vld [vmem:[%s37 + $0x8] sm:$0xff]
    %v3525 = vld [vmem:[%s37 + $0x10] sm:$0xff]
    %v3526 = vld [vmem:[%s37 + $0x18] sm:$0xff]
    %v3527 = vpack.c.bf16 %v3522, %v3521
    %v3528 = vpack.c.bf16 %v3524, %v3523
    %v3529 = vpack.c.bf16 %v3526, %v3525
    %v3530 = vld [vmem:[%s39] sm:$0x1]
    %v3532 = vlaneseq
    %v3533 = vshrl.u32 %v3532, 7
    %v3534 = vsub.s32 0, %v3533
    %v3535 = vrot.slane %v3530, %v3534
    %v3538 = vsel %vm313, %v3527, 0
    %3540 = vmatprep.subr.bf16.mxu0 0
    %3541 = vmatpush1.bf16.msra.mxu0 %v3528
    %3542 = vmatprep.subr.bf16.mxu0 0
    %3543 = vmatpush1.bf16.msra.mxu0 %v3529
    %3544 = vmatprep.subr.bf16.mxu0 0
    %3545 = vmatpush1.bf16.msra.mxu0 0
    %3546 = vmatprep.subr.bf16.mxu0 0
    %3547 = vmatpush1.bf16.msra.mxu0 0
    %3548 = vmatprep.subr.bf16.mxu0 0
    %3549 = vmatpush1.bf16.msra.mxu0 0
    %3550 = vmatprep.subr.bf16.mxu0 0
    %3551 = vmatpush1.bf16.msra.mxu0 0
    %3552 = vmatprep.subr.bf16.mxu0 0
    %3553 = vmatpush1.bf16.msra.mxu0 0
    %3554 = vmatprep.subr.bf16.mxu0 0
    %3555 = vmatpush1.bf16.msra.mxu0 0
    %3556 = vmatprep.subr.bf16.mxu0 0
    %3557 = vmatpush1.bf16.msra.mxu0 0
    %3558 = vmatprep.subr.bf16.mxu0 0
    %3559 = vmatpush1.bf16.msra.mxu0 0
    %3560 = vmatprep.subr.bf16.mxu0 0
    %3561 = vmatpush1.bf16.msra.mxu0 0
    %3562 = vmatprep.subr.bf16.mxu0 0
    %3563 = vmatpush1.bf16.msra.mxu0 0
    %3564 = vmatprep.subr.bf16.mxu0 0
    %3565 = vmatpush1.bf16.msra.mxu0 0
    %3566 = vmatprep.subr.bf16.mxu0 0
    %3567 = vmatpush1.bf16.msra.mxu0 0
    %3568 = vmatprep.subr.bf16.mxu0 0
    %3569 = vmatpush1.bf16.msra.mxu0 0
    %3570 = vmatprep.subr.bf16.mxu0 0
    %3571 = vmatpush1.bf16.msra.mxu0 0
    %3572 = vmatprep.mubr.bf16.mxu0 0
    %3573 = vmatmul.mubr.bf16.gmra.mrb[0].mxu0 %v3538
    %v3574 = vpop.f32.mrb[0].mxu0
    %v3575 = vadd.f32 %v3535, %v3574
    %v3576 = vpop.f32.mrb[0].mxu0
    %v3577 = vpop.f32.mrb[0].mxu0
    %v3578 = vadd.f32 %v3535, %v3577
    %v3579 = vpop.f32.mrb[0].mxu0
    %3580 = vdwg.mxu0
    %v3581 = vadd.f32 %v1873, %v3575
    %v3582 = vadd.f32 %v1874, %v3578
    %v3583 = vsel %vm313, %v3581, 0.0
    %3584 = vadd.xlane.f32.xlu0 %v3583
    %v3585 = vpop.xlane.xlu0 %3584
    %v3586 = vsel %vm313, %v3582, 0.0
    %3587 = vadd.xlane.f32.xlu0 %v3586
    %v3588 = vpop.xlane.xlu0 %3587
    %v3589 = vmul.f32 %v3585, %v1836
    %v3590 = vmul.f32 %v3588, %v1836
    %v3591 = vsub.f32 %v3581, %v3589
    %v3592 = vsub.f32 %v3582, %v3590
    %v3593 = vmul.f32 %v3591, %v3591
    %v3594 = vmul.f32 %v3592, %v3592
    %v3595 = vsel %vm313, %v3593, 0.0
    %3596 = vadd.xlane.f32.xlu0 %v3595
    %v3597 = vpop.xlane.xlu0 %3596
    %v3598 = vsel %vm313, %v3594, 0.0
    %3599 = vadd.xlane.f32.xlu0 %v3598
    %v3600 = vpop.xlane.xlu0 %3599
    %v3601 = vmul.f32 %v3597, %v1836
    %v3602 = vmul.f32 %v3600, %v1836
    %v3603 = vadd.f32 %v3601, 1e-05
    %v3604 = vadd.f32 %v3602, 1e-05
    %v3605 = vrsqrt.pop %v3603
    %v3606 = vrsqrt.pop %v3604
    %v3607 = vmul.f32 %v3591, %v3605
    %v3608 = vmul.f32 %v3592, %v3606
    %v3609 = vld [vmem:[%s41] sm:$0x1]
    %v3611 = vlaneseq
    %v3612 = vshrl.u32 %v3611, 7
    %v3613 = vsub.s32 0, %v3612
    %v3614 = vrot.slane %v3609, %v3613
    %v3616 = vmul.f32 %v3607, %v3614
    %v3617 = vmul.f32 %v3608, %v3614
    %v3618 = vld [vmem:[#allocation2] sm:$0x1]
    %v3620 = vlaneseq
    %v3621 = vshrl.u32 %v3620, 7
    %v3622 = vsub.s32 0, %v3621
    %v3623 = vrot.slane %v3618, %v3622
    %v3625 = vadd.f32 %v3616, %v3623
    %v3626 = vadd.f32 %v3617, %v3623
    %v3627 = vld [vmem:[%s45] sm:$0xff]
    %v3628 = vld [vmem:[%s45 + $0x8] sm:$0xff]
    %v3629 = vld [vmem:[%s45 + $0x10] sm:$0xff]
    %v3630 = vld [vmem:[%s45 + $0x18] sm:$0xff]
    %v3631 = vpack.c.bf16 %v3626, %v3625
    %v3632 = vpack.c.bf16 %v3628, %v3627
    %v3633 = vpack.c.bf16 %v3630, %v3629
    %v3634 = vld [vmem:[#allocation4] sm:$0x1]
    %v3636 = vlaneseq
    %v3637 = vshrl.u32 %v3636, 7
    %v3638 = vsub.s32 0, %v3637
    %v3639 = vrot.slane %v3634, %v3638
    %v3642 = vsel %vm313, %v3631, 0
    %3644 = vmatprep.subr.bf16.mxu0 0
    %3645 = vmatpush1.bf16.msra.mxu0 %v3632
    %3646 = vmatprep.subr.bf16.mxu0 0
    %3647 = vmatpush1.bf16.msra.mxu0 %v3633
    %3648 = vmatprep.subr.bf16.mxu0 0
    %3649 = vmatpush1.bf16.msra.mxu0 0
    %3650 = vmatprep.subr.bf16.mxu0 0
    %3651 = vmatpush1.bf16.msra.mxu0 0
    %3652 = vmatprep.subr.bf16.mxu0 0
    %3653 = vmatpush1.bf16.msra.mxu0 0
    %3654 = vmatprep.subr.bf16.mxu0 0
    %3655 = vmatpush1.bf16.msra.mxu0 0
    %3656 = vmatprep.subr.bf16.mxu0 0
    %3657 = vmatpush1.bf16.msra.mxu0 0
    %3658 = vmatprep.subr.bf16.mxu0 0
    %3659 = vmatpush1.bf16.msra.mxu0 0
    %3660 = vmatprep.subr.bf16.mxu0 0
    %3661 = vmatpush1.bf16.msra.mxu0 0
    %3662 = vmatprep.subr.bf16.mxu0 0
    %3663 = vmatpush1.bf16.msra.mxu0 0
    %3664 = vmatprep.subr.bf16.mxu0 0
    %3665 = vmatpush1.bf16.msra.mxu0 0
    %3666 = vmatprep.subr.bf16.mxu0 0
    %3667 = vmatpush1.bf16.msra.mxu0 0
    %3668 = vmatprep.subr.bf16.mxu0 0
    %3669 = vmatpush1.bf16.msra.mxu0 0
    %3670 = vmatprep.subr.bf16.mxu0 0
    %3671 = vmatpush1.bf16.msra.mxu0 0
    %3672 = vmatprep.subr.bf16.mxu0 0
    %3673 = vmatpush1.bf16.msra.mxu0 0
    %3674 = vmatprep.subr.bf16.mxu0 0
    %3675 = vmatpush1.bf16.msra.mxu0 0
    %3676 = vmatprep.mubr.bf16.mxu0 0
    %3677 = vmatmul.mubr.bf16.gmra.mrb[0].mxu0 %v3642
    %v3678 = vpop.f32.mrb[0].mxu0
    %v3679 = vadd.f32 %v3639, %v3678
    %v3680 = vpop.f32.mrb[0].mxu0
    %v3681 = vpop.f32.mrb[0].mxu0
    %v3682 = vadd.f32 %v3639, %v3681
    %v3683 = vpop.f32.mrb[0].mxu0
    %3684 = vdwg.mxu0
    %v3685 = vmax.f32 %v3679, 0.0
    %v3686 = vmax.f32 %v3682, 0.0
    %v3687 = vld [vmem:[%s49] sm:$0xff]
    %v3688 = vld [vmem:[%s49 + $0x8] sm:$0xff]
    %v3689 = vld [vmem:[%s49 + $0x10] sm:$0xff]
    %v3690 = vld [vmem:[%s49 + $0x18] sm:$0xff]
    %v3691 = vld [vmem:[%s49 + $0x20] sm:$0xff]
    %v3692 = vld [vmem:[%s49 + $0x28] sm:$0xff]
    %v3693 = vld [vmem:[%s49 + $0x30] sm:$0xff]
    %v3694 = vld [vmem:[%s49 + $0x38] sm:$0xff]
    %v3695 = vpack.c.bf16 %v3686, %v3685
    %v3696 = vpack.c.bf16 %v3688, %v3687
    %v3697 = vpack.c.bf16 %v3690, %v3689
    %v3698 = vpack.c.bf16 %v3692, %v3691
    %v3699 = vpack.c.bf16 %v3694, %v3693
    %v3700 = vld [vmem:[#allocation6] sm:$0x1]
    %v3702 = vlaneseq
    %v3703 = vshrl.u32 %v3702, 7
    %v3704 = vsub.s32 0, %v3703
    %v3705 = vrot.slane %v3700, %v3704
    %vm3707 = vcmask 523264
    %v3709 = vsel %vm3707, %v3695, 0
    %3711 = vmatprep.subr.bf16.mxu0 0
    %3712 = vmatpush1.bf16.msra.mxu0 %v3696
    %3713 = vmatprep.subr.bf16.mxu0 0
    %3714 = vmatpush1.bf16.msra.mxu0 %v3697
    %3715 = vmatprep.subr.bf16.mxu0 0
    %3716 = vmatpush1.bf16.msra.mxu0 %v3698
    %3717 = vmatprep.subr.bf16.mxu0 0
    %3718 = vmatpush1.bf16.msra.mxu0 %v3699
    %3719 = vmatprep.subr.bf16.mxu0 0
    %3720 = vmatpush1.bf16.msra.mxu0 0
    %3721 = vmatprep.subr.bf16.mxu0 0
    %3722 = vmatpush1.bf16.msra.mxu0 0
    %3723 = vmatprep.subr.bf16.mxu0 0
    %3724 = vmatpush1.bf16.msra.mxu0 0
    %3725 = vmatprep.subr.bf16.mxu0 0
    %3726 = vmatpush1.bf16.msra.mxu0 0
    %3727 = vmatprep.subr.bf16.mxu0 0
    %3728 = vmatpush1.bf16.msra.mxu0 0
    %3729 = vmatprep.subr.bf16.mxu0 0
    %3730 = vmatpush1.bf16.msra.mxu0 0
    %3731 = vmatprep.subr.bf16.mxu0 0
    %3732 = vmatpush1.bf16.msra.mxu0 0
    %3733 = vmatprep.subr.bf16.mxu0 0
    %3734 = vmatpush1.bf16.msra.mxu0 0
    %3735 = vmatprep.subr.bf16.mxu0 0
    %3736 = vmatpush1.bf16.msra.mxu0 0
    %3737 = vmatprep.subr.bf16.mxu0 0
    %3738 = vmatpush1.bf16.msra.mxu0 0
    %3739 = vmatprep.subr.bf16.mxu0 0
    %3740 = vmatpush1.bf16.msra.mxu0 0
    %3741 = vmatprep.subr.bf16.mxu0 0
    %3742 = vmatpush1.bf16.msra.mxu0 0
    %3743 = vmatprep.mubr.bf16.mxu0 0
    %3744 = vmatmul.mubr.bf16.gmra.mrb[0].mxu0 %v3709
    %v3745 = vpop.f32.mrb[0].mxu0
    %v3746 = vadd.f32 %v3705, %v3745
    %v3747 = vpop.f32.mrb[0].mxu0
    %v3748 = vpop.f32.mrb[0].mxu0
    %v3749 = vadd.f32 %v3705, %v3748
    %v3750 = vpop.f32.mrb[0].mxu0
    %3751 = vdwg.mxu0
    %v3752 = vadd.f32 %v3625, %v3746
    %v3753 = vadd.f32 %v3626, %v3749
    %v3754 = vsel %vm313, %v3752, 0.0
    %3755 = vadd.xlane.f32.xlu0 %v3754
    %v3756 = vpop.xlane.xlu0 %3755
    %v3757 = vsel %vm313, %v3753, 0.0
    %3758 = vadd.xlane.f32.xlu0 %v3757
    %v3759 = vpop.xlane.xlu0 %3758
    %v3760 = vmul.f32 %v3756, %v1836
    %v3761 = vmul.f32 %v3759, %v1836
    %v3762 = vsub.f32 %v3752, %v3760
    %v3763 = vsub.f32 %v3753, %v3761
    %v3764 = vmul.f32 %v3762, %v3762
    %v3765 = vmul.f32 %v3763, %v3763
    %v3766 = vsel %vm313, %v3764, 0.0
    %3767 = vadd.xlane.f32.xlu0 %v3766
    %v3768 = vpop.xlane.xlu0 %3767
    %v3769 = vsel %vm313, %v3765, 0.0
    %3770 = vadd.xlane.f32.xlu0 %v3769
    %v3771 = vpop.xlane.xlu0 %3770
    %v3772 = vmul.f32 %v3768, %v1836
    %v3773 = vmul.f32 %v3771, %v1836
    %v3774 = vadd.f32 %v3772, 1e-05
    %v3775 = vadd.f32 %v3773, 1e-05
    %v3776 = vrsqrt.pop %v3774
    %v3777 = vrsqrt.pop %v3775
    %v3778 = vmul.f32 %v3762, %v3776
    %v3779 = vmul.f32 %v3763, %v3777
    %v3780 = vld [vmem:[#allocation7] sm:$0x1]
    %v3782 = vlaneseq
    %v3783 = vshrl.u32 %v3782, 7
    %v3784 = vsub.s32 0, %v3783
    %v3785 = vrot.slane %v3780, %v3784
    %v3787 = vmul.f32 %v3778, %v3785
    %v3788 = vmul.f32 %v3779, %v3785
    %v3789 = vld [vmem:[#allocation9] sm:$0x1]
    %v3791 = vlaneseq
    %v3792 = vshrl.u32 %v3791, 7
    %v3793 = vsub.s32 0, %v3792
    %v3794 = vrot.slane %v3789, %v3793
    %v3796 = vadd.f32 %v3787, %v3794
    %v3797 = vadd.f32 %v3788, %v3794
    %v3798 = vsel %vm313, %v3796, 0.0
    %3799 = vadd.xlane.f32.xlu0 %v3798
    %v3800 = vpop.xlane.xlu0 %3799
    %v3801 = vsel %vm313, %v3797, 0.0
    %3802 = vadd.xlane.f32.xlu0 %v3801
    %v3803 = vpop.xlane.xlu0 %3802
    %v3804 = vmul.f32 %v3800, %v1836
    %v3805 = vmul.f32 %v3803, %v1836
    %v3806 = vsub.f32 %v3796, %v3804
    %v3807 = vsub.f32 %v3797, %v3805
    %v3808 = vmul.f32 %v3806, %v3806
    %v3809 = vmul.f32 %v3807, %v3807
    %v3810 = vsel %vm313, %v3808, 0.0
    %3811 = vadd.xlane.f32.xlu0 %v3810
    %v3812 = vpop.xlane.xlu0 %3811
    %v3813 = vsel %vm313, %v3809, 0.0
    %3814 = vadd.xlane.f32.xlu0 %v3813
    %v3815 = vpop.xlane.xlu0 %3814
    %v3816 = vmul.f32 %v3812, %v1836
    %v3817 = vmul.f32 %v3815, %v1836
    %v3818 = vadd.f32 %v3816, 1e-05
    %v3819 = vadd.f32 %v3817, 1e-05
    %v3820 = vrsqrt.pop %v3818
    %v3821 = vrsqrt.pop %v3819
    %v3822 = vmul.f32 %v3806, %v3820
    %v3823 = vmul.f32 %v3807, %v3821
    %v3824 = vld [vmem:[#allocation10] sm:$0x1]
    %v3826 = vlaneseq
    %v3827 = vshrl.u32 %v3826, 7
    %v3828 = vsub.s32 0, %v3827
    %v3829 = vrot.slane %v3824, %v3828
    %v3831 = vmul.f32 %v3822, %v3829
    %v3832 = vmul.f32 %v3823, %v3829
    %v3833 = vld [vmem:[#allocation12] sm:$0x1]
    %v3835 = vlaneseq
    %v3836 = vshrl.u32 %v3835, 7
    %v3837 = vsub.s32 0, %v3836
    %v3838 = vrot.slane %v3833, %v3837
    %v3840 = vadd.f32 %v3831, %v3838
    %v3841 = vadd.f32 %v3832, %v3838
    %v3842 = vld [vmem:[%s61] sm:$0xff]
    %v3843 = vld [vmem:[%s61 + $0x8] sm:$0xff]
    %v3844 = vld [vmem:[%s61 + $0x10] sm:$0xff]
    %v3845 = vld [vmem:[%s61 + $0x18] sm:$0xff]
    %v3846 = vpack.c.bf16 %v3841, %v3840
    %v3847 = vpack.c.bf16 %v3843, %v3842
    %v3848 = vpack.c.bf16 %v3845, %v3844
    %v3849 = vld [vmem:[#allocation13] sm:$0x1]
    %v3851 = vlaneseq
    %v3852 = vshrl.u32 %v3851, 7
    %v3853 = vsub.s32 0, %v3852
    %v3854 = vrot.slane %v3849, %v3853
    %v3857 = vsel %vm313, %v3846, 0
    %3859 = vmatprep.subr.bf16.mxu0 0
    %3860 = vmatpush1.bf16.msra.mxu0 %v3847
    %3861 = vmatprep.subr.bf16.mxu0 0
    %3862 = vmatpush1.bf16.msra.mxu0 %v3848
    %3863 = vmatprep.subr.bf16.mxu0 0
    %3864 = vmatpush1.bf16.msra.mxu0 0
    %3865 = vmatprep.subr.bf16.mxu0 0
    %3866 = vmatpush1.bf16.msra.mxu0 0
    %3867 = vmatprep.subr.bf16.mxu0 0
    %3868 = vmatpush1.bf16.msra.mxu0 0
    %3869 = vmatprep.subr.bf16.mxu0 0
    %3870 = vmatpush1.bf16.msra.mxu0 0
    %3871 = vmatprep.subr.bf16.mxu0 0
    %3872 = vmatpush1.bf16.msra.mxu0 0
    %3873 = vmatprep.subr.bf16.mxu0 0
    %3874 = vmatpush1.bf16.msra.mxu0 0
    %3875 = vmatprep.subr.bf16.mxu0 0
    %3876 = vmatpush1.bf16.msra.mxu0 0
    %3877 = vmatprep.subr.bf16.mxu0 0
    %3878 = vmatpush1.bf16.msra.mxu0 0
    %3879 = vmatprep.subr.bf16.mxu0 0
    %3880 = vmatpush1.bf16.msra.mxu0 0
    %3881 = vmatprep.subr.bf16.mxu0 0
    %3882 = vmatpush1.bf16.msra.mxu0 0
    %3883 = vmatprep.subr.bf16.mxu0 0
    %3884 = vmatpush1.bf16.msra.mxu0 0
    %3885 = vmatprep.subr.bf16.mxu0 0
    %3886 = vmatpush1.bf16.msra.mxu0 0
    %3887 = vmatprep.subr.bf16.mxu0 0
    %3888 = vmatpush1.bf16.msra.mxu0 0
    %3889 = vmatprep.subr.bf16.mxu0 0
    %3890 = vmatpush1.bf16.msra.mxu0 0
    %3891 = vmatprep.mubr.bf16.mxu0 0
    %3892 = vmatmul.mubr.bf16.gmra.mrb[0].mxu0 %v3857
    %v3893 = vpop.f32.mrb[0].mxu0
    %v3894 = vadd.f32 %v3854, %v3893
    %v3895 = vpop.f32.mrb[0].mxu0
    %v3896 = vpop.f32.mrb[0].mxu0
    %v3897 = vadd.f32 %v3854, %v3896
    %v3898 = vpop.f32.mrb[0].mxu0
    %3899 = vdwg.mxu0
    %v3900 = vld [vmem:[%s65] sm:$0xff]
    %v3901 = vld [vmem:[%s65 + $0x8] sm:$0xff]
    %v3902 = vld [vmem:[%s65 + $0x10] sm:$0xff]
    %v3903 = vld [vmem:[%s65 + $0x18] sm:$0xff]
    %v3904 = vpack.c.bf16 %v3901, %v3900
    %v3905 = vpack.c.bf16 %v3903, %v3902
    %v3906 = vld [vmem:[#allocation15] sm:$0x1]
    %v3908 = vlaneseq
    %v3909 = vshrl.u32 %v3908, 7
    %v3910 = vsub.s32 0, %v3909
    %v3911 = vrot.slane %v3906, %v3910
    %3913 = vmatprep.subr.bf16.mxu0 0
    %3914 = vmatpush1.bf16.msra.mxu0 %v3904
    %3915 = vmatprep.subr.bf16.mxu0 0
    %3916 = vmatpush1.bf16.msra.mxu0 %v3905
    %3917 = vmatprep.subr.bf16.mxu0 0
    %3918 = vmatpush1.bf16.msra.mxu0 0
    %3919 = vmatprep.subr.bf16.mxu0 0
    %3920 = vmatpush1.bf16.msra.mxu0 0
    %3921 = vmatprep.subr.bf16.mxu0 0
    %3922 = vmatpush1.bf16.msra.mxu0 0
    %3923 = vmatprep.subr.bf16.mxu0 0
    %3924 = vmatpush1.bf16.msra.mxu0 0
    %3925 = vmatprep.subr.bf16.mxu0 0
    %3926 = vmatpush1.bf16.msra.mxu0 0
    %3927 = vmatprep.subr.bf16.mxu0 0
    %3928 = vmatpush1.bf16.msra.mxu0 0
    %3929 = vmatprep.subr.bf16.mxu0 0
    %3930 = vmatpush1.bf16.msra.mxu0 0
    %3931 = vmatprep.subr.bf16.mxu0 0
    %3932 = vmatpush1.bf16.msra.mxu0 0
    %3933 = vmatprep.subr.bf16.mxu0 0
    %3934 = vmatpush1.bf16.msra.mxu0 0
    %3935 = vmatprep.subr.bf16.mxu0 0
    %3936 = vmatpush1.bf16.msra.mxu0 0
    %3937 = vmatprep.subr.bf16.mxu0 0
    %3938 = vmatpush1.bf16.msra.mxu0 0
    %3939 = vmatprep.subr.bf16.mxu0 0
    %3940 = vmatpush1.bf16.msra.mxu0 0
    %3941 = vmatprep.subr.bf16.mxu0 0
    %3942 = vmatpush1.bf16.msra.mxu0 0
    %3943 = vmatprep.subr.bf16.mxu0 0
    %3944 = vmatpush1.bf16.msra.mxu0 0
    %3945 = vmatprep.mubr.bf16.mxu0 0
    %3946 = vmatmul.mubr.bf16.gmra.mrb[0].mxu0 %v3857
    %v3947 = vpop.f32.mrb[0].mxu0
    %v3948 = vadd.f32 %v3911, %v3947
    %v3949 = vpop.f32.mrb[0].mxu0
    %v3950 = vpop.f32.mrb[0].mxu0
    %v3951 = vadd.f32 %v3911, %v3950
    %v3952 = vpop.f32.mrb[0].mxu0
    %3953 = vdwg.mxu0
    %v3954 = vmax.f32 %v3948, 0.0
    %v3955 = vmax.f32 %v3951, 0.0
    %v3956 = vld [vmem:[%s69] sm:$0xff]
    %v3957 = vld [vmem:[%s69 + $0x8] sm:$0xff]
    %v3958 = vld [vmem:[%s69 + $0x10] sm:$0xff]
    %v3959 = vld [vmem:[%s69 + $0x18] sm:$0xff]
    %v3960 = vpack.c.bf16 %v3955, %v3954
    %v3961 = vpack.c.bf16 %v3957, %v3956
    %v3962 = vpack.c.bf16 %v3959, %v3958
    %v3963 = vld [vmem:[#allocation16] sm:$0x1]
    %v3965 = vlaneseq
    %v3966 = vshrl.u32 %v3965, 7
    %v3967 = vsub.s32 0, %v3966
    %v3968 = vrot.slane %v3963, %v3967
    %v3971 = vsel %vm313, %v3960, 0
    %3973 = vmatprep.subr.bf16.mxu0 0
    %3974 = vmatpush1.bf16.msra.mxu0 %v3961
    %3975 = vmatprep.subr.bf16.mxu0 0
    %3976 = vmatpush1.bf16.msra.mxu0 %v3962
    %3977 = vmatprep.subr.bf16.mxu0 0
    %3978 = vmatpush1.bf16.msra.mxu0 0
    %3979 = vmatprep.subr.bf16.mxu0 0
    %3980 = vmatpush1.bf16.msra.mxu0 0
    %3981 = vmatprep.subr.bf16.mxu0 0
    %3982 = vmatpush1.bf16.msra.mxu0 0
    %3983 = vmatprep.subr.bf16.mxu0 0
    %3984 = vmatpush1.bf16.msra.mxu0 0
    %3985 = vmatprep.subr.bf16.mxu0 0
    %3986 = vmatpush1.bf16.msra.mxu0 0
    %3987 = vmatprep.subr.bf16.mxu0 0
    %3988 = vmatpush1.bf16.msra.mxu0 0
    %3989 = vmatprep.subr.bf16.mxu0 0
    %3990 = vmatpush1.bf16.msra.mxu0 0
    %3991 = vmatprep.subr.bf16.mxu0 0
    %3992 = vmatpush1.bf16.msra.mxu0 0
    %3993 = vmatprep.subr.bf16.mxu0 0
    %3994 = vmatpush1.bf16.msra.mxu0 0
    %3995 = vmatprep.subr.bf16.mxu0 0
    %3996 = vmatpush1.bf16.msra.mxu0 0
    %3997 = vmatprep.subr.bf16.mxu0 0
    %3998 = vmatpush1.bf16.msra.mxu0 0
    %3999 = vmatprep.subr.bf16.mxu0 0
    %4000 = vmatpush1.bf16.msra.mxu0 0
    %4001 = vmatprep.subr.bf16.mxu0 0
    %4002 = vmatpush1.bf16.msra.mxu0 0
    %4003 = vmatprep.subr.bf16.mxu0 0
    %4004 = vmatpush1.bf16.msra.mxu0 0
    %4005 = vmatprep.mubr.bf16.mxu0 0
    %4006 = vmatmul.mubr.bf16.gmra.mrb[0].mxu0 %v3971
    %v4007 = vpop.f32.mrb[0].mxu0
    %v4008 = vadd.f32 %v3968, %v4007
    %v4009 = vpop.f32.mrb[0].mxu0
    %v4010 = vpop.f32.mrb[0].mxu0
    %v4011 = vadd.f32 %v3968, %v4010
    %v4012 = vpop.f32.mrb[0].mxu0
    %4013 = vdwg.mxu0
    %v4014 = vmax.f32 %v4008, 0.0
    %v4015 = vmax.f32 %v4011, 0.0
    %v4016 = vld [vmem:[%s73] sm:$0xff]
    %v4017 = vld [vmem:[%s73 + $0x8] sm:$0xff]
    %v4018 = vld [vmem:[%s73 + $0x10] sm:$0xff]
    %v4019 = vld [vmem:[%s73 + $0x18] sm:$0xff]
    %v4020 = vpack.c.bf16 %v4015, %v4014
    %v4021 = vpack.c.bf16 %v4017, %v4016
    %v4022 = vpack.c.bf16 %v4019, %v4018
    %v4023 = vld [vmem:[#allocation18] sm:$0x1]
    %v4025 = vlaneseq
    %v4026 = vshrl.u32 %v4025, 7
    %v4027 = vsub.s32 0, %v4026
    %v4028 = vrot.slane %v4023, %v4027
    %v4031 = vsel %vm313, %v4020, 0
    %4033 = vmatprep.subr.bf16.mxu0 0
    %4034 = vmatpush1.bf16.msra.mxu0 %v4021
    %4035 = vmatprep.subr.bf16.mxu0 0
    %4036 = vmatpush1.bf16.msra.mxu0 %v4022
    %4037 = vmatprep.subr.bf16.mxu0 0
    %4038 = vmatpush1.bf16.msra.mxu0 0
    %4039 = vmatprep.subr.bf16.mxu0 0
    %4040 = vmatpush1.bf16.msra.mxu0 0
    %4041 = vmatprep.subr.bf16.mxu0 0
    %4042 = vmatpush1.bf16.msra.mxu0 0
    %4043 = vmatprep.subr.bf16.mxu0 0
    %4044 = vmatpush1.bf16.msra.mxu0 0
    %4045 = vmatprep.subr.bf16.mxu0 0
    %4046 = vmatpush1.bf16.msra.mxu0 0
    %4047 = vmatprep.subr.bf16.mxu0 0
    %4048 = vmatpush1.bf16.msra.mxu0 0
    %4049 = vmatprep.subr.bf16.mxu0 0
    %4050 = vmatpush1.bf16.msra.mxu0 0
    %4051 = vmatprep.subr.bf16.mxu0 0
    %4052 = vmatpush1.bf16.msra.mxu0 0
    %4053 = vmatprep.subr.bf16.mxu0 0
    %4054 = vmatpush1.bf16.msra.mxu0 0
    %4055 = vmatprep.subr.bf16.mxu0 0
    %4056 = vmatpush1.bf16.msra.mxu0 0
    %4057 = vmatprep.subr.bf16.mxu0 0
    %4058 = vmatpush1.bf16.msra.mxu0 0
    %4059 = vmatprep.subr.bf16.mxu0 0
    %4060 = vmatpush1.bf16.msra.mxu0 0
    %4061 = vmatprep.subr.bf16.mxu0 0
    %4062 = vmatpush1.bf16.msra.mxu0 0
    %4063 = vmatprep.subr.bf16.mxu0 0
    %4064 = vmatpush1.bf16.msra.mxu0 0
    %4065 = vmatprep.mubr.bf16.mxu0 0
    %4066 = vmatmul.mubr.bf16.gmra.mrb[0].mxu0 %v4031
    %v4067 = vpop.f32.mrb[0].mxu0
    %v4068 = vadd.f32 %v4028, %v4067
    %v4069 = vpop.f32.mrb[0].mxu0
    %v4070 = vpop.f32.mrb[0].mxu0
    %v4071 = vadd.f32 %v4028, %v4070
    %v4072 = vpop.f32.mrb[0].mxu0
    %4073 = vdwg.mxu0
    %v4074 = vsub.f32 0.0, %v4068
    %v4075 = vsub.f32 0.0, %v4071
    %v4076 = vmul.f32 %v4074, 1.442695
    %v4077 = vpow.pop %v4076
    %v4078 = vmul.f32 %v4075, 1.442695
    %v4079 = vpow.pop %v4078
    %v4080 = vadd.f32 %v4077, 1.0
    %v4081 = vadd.f32 %v4079, 1.0
    %v4082 = vrcp.pop %v4080
    %v4083 = vmul.f32 1.0, %v4082
    %v4084 = vrcp.pop %v4081
    %v4085 = vmul.f32 1.0, %v4084
    %vm4086 = vcmask 39936
    %4087 = vst.msk [vmem:[%s77] sm:$0xff] %vm4086, %v3894
    %4088 = vst.msk [vmem:[%s77 + $0x8] sm:$0xff] %vm4086, %v3897
    %vm4089 = vcmask 31744
    %4090 = vst.msk [vmem:[%s79] sm:$0xff] %vm4089, %v4083
    %4091 = vst.msk [vmem:[%s79 + $0x8] sm:$0xff] %vm4089, %v4085
    // Predicated region
    $region198: #{detr_forward.5} parent=1 // pred_check
      _
    $region199: #{detr_forward.5} parent=1 // pred_check_branch
      %4093 = sbr.rel (0) target = $region201
    $region200: #{detr_forward.5} parent=1 // pred_region
      _
    $region201: #{detr_forward.5} parent=1 // pred_fallthru
      _
    // Predicated region
    $region202: #{detr_forward.5} parent=1 // pred_check
      _
    $region203: #{detr_forward.5} parent=1 // pred_check_branch
      %4095 = sbr.rel (0) target = $region205
    $region204: #{detr_forward.5} parent=1 // pred_region
      _
    $region205: #{detr_forward.5} parent=1 // pred_fallthru
      _
    // Predicated region
    $region206: #{detr_forward.5} parent=1 // pred_check
      _
    $region207: #{detr_forward.5} parent=1 // pred_check_branch
      %4097 = sbr.rel (0) target = $region209
    $region208: #{detr_forward.5} parent=1 // pred_region
      _
    $region209: #{detr_forward.5} parent=1 // pred_fallthru
      _
    // Predicated region
    $region210: #{detr_forward.5} parent=1 // pred_check
      _
    $region211: #{detr_forward.5} parent=1 // pred_check_branch
      %4099 = sbr.rel (0) target = $region213
    $region212: #{detr_forward.5} parent=1 // pred_region
      _
    $region213: #{detr_forward.5} parent=1 // pred_fallthru
      _
    %4100 = vsyncpa [#allocation3], 1
    %4101 = vsyncpa [#allocation5], 1
    %4102 = vsyncpa [#allocation8], 1
    %4103 = vsyncpa [#allocation11], 1
    %4104 = vsyncpa [#allocation14], 1
    %4105 = vsyncpa [#allocation17], 1

</llo_original>
